<compile_context>
chip_gen: v7x
topology: tpu7x:2x2x1
jax: 0.10.0
libtpu: 0.0.40
codegen_flags: <defaults>
</compile_context>

<pallas_src>
import functools

import jax
import jax.numpy as jnp
from jax.experimental import pallas as pl
from jax.experimental.pallas import tpu as pltpu

LEAKY_SLOPE = 0.1
BN_EPS = 1e-5
FILTER_SIZE = 21
PAD = FILTER_SIZE // 2


def _leaky(x):
    return jnp.maximum(x, LEAKY_SLOPE * x)   # valid since 0 < slope < 1


# ---------------------------------------------------------------------------
# Fused kernel: entire netD forward (single grid-less pallas_call)
# ---------------------------------------------------------------------------
def _netd_fused_kernel(*refs, batch, n_layers):
    """refs = [x_flat, (convm, bias, ind, indt, gamma, beta) * n_layers,
               finalm, blin, out].

    x_flat : (B, C0*L0)                    flattened input, channel-major
    convm_i: (Cin_i*Lin_i, Cout_i*Lout_i)  decimate(::2)+same-pad+conv as one matrix
    bias_i : (1, Cout_i*Lout_i)            conv bias, repeated per channel block
    ind_i  : (Cout_i*Lout_i, Cout_i)       0/1 lanes->channel reduction matrix
    indt_i : (Cout_i, Cout_i*Lout_i)       0/1 channel->lanes broadcast matrix
    gamma_i/beta_i : (1, Cout_i)           BatchNorm affine parameters
    finalm : (C_last*L_last, 5)            final ::2 + flatten + Linear weight
    blin   : (1, 5)
    out    : (B, 5)
    """
    x_ref = refs[0]
    finalm_ref, blin_ref, o_ref = refs[1 + 6 * n_layers:]
    hp = jax.lax.Precision.HIGHEST

    act = x_ref[...]                                       # (B, C*L) lane-dense
    for li in range(n_layers):
        m_ref, b_ref, ind_ref, indt_ref, g_ref, be_ref = refs[1 + 6 * li: 7 + 6 * li]

        # decimate(::2 of prev output) + zero same-pad + Conv1d(k=21) == ONE MXU matmul
        y = jnp.dot(act, m_ref[...], precision=hp,
                    preferred_element_type=jnp.float32) + b_ref[...]      # (B, C*L)

        # BatchNorm1d training-mode batch statistics (per channel, over batch+length).
        yy = y * y
        s1 = y[0:1, :]
        s2 = yy[0:1, :]
        for bb in range(1, batch):                          # static unroll over B rows
            s1 = s1 + y[bb:bb + 1, :]
            s2 = s2 + yy[bb:bb + 1, :]
        stats = jnp.dot(jnp.concatenate([s1, s2], axis=0), ind_ref[...],
                        precision=hp, preferred_element_type=jnp.float32)  # (2, C)

        cl = m_ref.shape[1]                                 # C * L   (static)
        c = ind_ref.shape[1]                                # C       (static)
        inv_n = 1.0 / float(batch * (cl // c))
        mu = stats[0:1, :] * inv_n
        var = stats[1:2, :] * inv_n - mu * mu               # biased variance
        scale = g_ref[...] * jax.lax.rsqrt(var + BN_EPS)    # (1, C)
        shift = be_ref[...] - mu * scale                    # (1, C)

        # broadcast per-channel affine back to lanes with one tiny matmul
        aff = jnp.dot(jnp.concatenate([scale, shift], axis=0), indt_ref[...],
                      precision=hp, preferred_element_type=jnp.float32)    # (2, C*L)
        act = _leaky(y * aff[0:1, :] + aff[1:2, :])         # BN affine + LeakyReLU(0.1)

    # Final ::2 decimation + channel-major flatten + Linear(., 5) + LeakyReLU.
    out = jnp.dot(act, finalm_ref[...], precision=hp,
                  preferred_element_type=jnp.float32) + blin_ref[...]
    o_ref[...] = _leaky(out)


# ---------------------------------------------------------------------------
# Wrapper (all matrix folding happens here, inside the same jit)
# ---------------------------------------------------------------------------
def _shift_matrix(n_in, n_out, stride, pad):
    """M[i, j] = 1 iff i == stride*(j - pad): decimate-by-stride then zero-pad by `pad`."""
    r = jnp.arange(n_in, dtype=jnp.int32)[:, None]
    c = jnp.arange(n_out, dtype=jnp.int32)[None, :]
    return (r == stride * (c - pad)).astype(jnp.float32)


def netd_forward(x, layers, out_w, out_b):
    batch, c0, l0 = x.shape
    ksize = layers[0][0].shape[2]
    pad = ksize // 2

    operands = [x.reshape(batch, c0 * l0)]
    c_in, l_in = c0, l0                      # full-length (pre-decimation) previous stage
    for idx, (w, b, g, be) in enumerate(layers):
        cout, cin, _ = w.shape
        assert cin == c_in, "conv in-channel mismatch"
        stride = 1 if idx == 0 else 2
        l_out = l_in if idx == 0 else (l_in + 1) // 2       # ::2 then stride-1 same conv

        # (decimate prev ::2) + zero same-pad as a 0/1 matrix ...
        tmat = _shift_matrix(l_in, l_out + 2 * pad, stride, pad)     # (l_in, l_out+2p)
        # ... folded with the conv taps into one (cin*l_in, cout*l_out) matrix.
        patches = jnp.stack([tmat[:, k:k + l_out] for k in range(ksize)], axis=0)
        convm = jnp.einsum('oik,knj->inoj', w, patches).reshape(c_in * l_in,
                                                                cout * l_out)
        bias = jnp.repeat(b, l_out).reshape(1, cout * l_out)
        ind = jnp.kron(jnp.eye(cout, dtype=jnp.float32),
                       jnp.ones((l_out, 1), jnp.float32))            # (cout*l_out, cout)
        operands += [convm, bias, ind, ind.T,
                     g.reshape(1, cout), be.reshape(1, cout)]
        c_in, l_in = cout, l_out

    c_last, l_last = c_in, l_in
    l_fin = (l_last + 1) // 2
    out_dim = out_w.shape[0]
    assert out_w.shape[1] == c_last * l_fin, "Linear in-features mismatch"

    # final ::2 + channel-major flatten + Linear folded into one matrix
    dec = _shift_matrix(l_last, l_fin, 2, 0)                          # (l_last, l_fin)
    w3 = out_w.reshape(out_dim, c_last, l_fin)
    finalm = jnp.einsum('nq,ocq->cno', dec, w3).reshape(c_last * l_last, out_dim)
    operands += [finalm, out_b.reshape(1, out_dim)]

    kern = functools.partial(_netd_fused_kernel, batch=batch, n_layers=len(layers))
    vmem = pl.BlockSpec(memory_space=pltpu.MemorySpace.VMEM)
    return pl.pallas_call(
        kern,
        out_shape=jax.ShapeDtypeStruct((batch, out_dim), jnp.float32),
        in_specs=[vmem] * len(operands),
        out_specs=vmem,
    )(*operands)


# ---------------------------------------------------------------------------
# Deterministic parameter construction (mirrors netD.__init__ shapes)
# ---------------------------------------------------------------------------
def init_params(key, num_layers, res_ch_no, fs, t):
    nefilters = 1
    echannelin = [res_ch_no] + [(i + res_ch_no) * nefilters
                                for i in range(num_layers - 1)]
    echannelout = [(i + res_ch_no) * nefilters for i in range(num_layers)]
    linear_in = int(num_layers * (t * fs) / 2 ** num_layers)

    layers = []
    for i in range(num_layers):
        key, kw, kb, kg, kbe = jax.random.split(key, 5)
        cin, cout = echannelin[i], echannelout[i]
        scale = 1.0 / (cin * FILTER_SIZE) ** 0.5
        w = jax.random.uniform(kw, (cout, cin, FILTER_SIZE), jnp.float32,
                               -scale, scale)
        b = jax.random.uniform(kb, (cout,), jnp.float32, -scale, scale)
        g = 1.0 + 0.1 * jax.random.normal(kg, (cout,), jnp.float32)
        be = 0.1 * jax.random.normal(kbe, (cout,), jnp.float32)
        layers.append((w, b, g, be))

    key, kw, kb = jax.random.split(key, 3)
    scale = 1.0 / linear_in ** 0.5
    out_w = jax.random.uniform(kw, (5, linear_in), jnp.float32, -scale, scale)
    out_b = jax.random.uniform(kb, (5,), jnp.float32, -scale, scale)
    return layers, out_w, out_b


# Pure-JAX reference of the same forward, for a sanity check.
def netd_reference(x, layers, out_w, out_b):
    pad = FILTER_SIZE // 2
    for (w, b, g, be) in layers:
        y = jax.lax.conv_general_dilated(
            x, w, window_strides=(1,), padding=[(pad, pad)],
            dimension_numbers=('NCH', 'OIH', 'NCH'))
        y = y + b[None, :, None]
        mu = jnp.mean(y, axis=(0, 2), keepdims=True)
        var = jnp.mean((y - mu) ** 2, axis=(0, 2), keepdims=True)
        y = (y - mu) * jax.lax.rsqrt(var + BN_EPS) * g[None, :, None] + be[None, :, None]
        y = jnp.where(y >= 0, y, LEAKY_SLOPE * y)
        x = y[:, :, ::2]
    x = x.reshape(x.shape[0], -1)
    y = x @ out_w.T + out_b
    return jnp.where(y >= 0, y, LEAKY_SLOPE * y)


if __name__ == "__main__":
    # Small, self-consistent hyper-parameters.
    # Note: netD's linearInFeaNo formula is only consistent when ResCHNo == 1.
    NUM_LAYERS = 4
    RES_CH_NO = 1
    FS, T = 16, 8            # sequence length = FS * T = 128
    BATCH = 2

    key = jax.random.PRNGKey(0)
    key, kx = jax.random.split(key)
    x = jax.random.normal(kx, (BATCH, RES_CH_NO, FS * T), jnp.float32)

    layers, out_w, out_b = init_params(key, NUM_LAYERS, RES_CH_NO, FS, T)

    fwd = jax.jit(netd_forward)                 # single dispatch incl. matrix folding
    out = jax.block_until_ready(fwd(x, layers, out_w, out_b))
    ref = jax.block_until_ready(netd_reference(x, layers, out_w, out_b))

    assert out.shape == (BATCH, 5), out.shape
    assert jnp.allclose(out, ref, rtol=5e-2, atol=5e-3), (out, ref)
    print("KERNEL_OK")
</pallas_src>

<mosaic_0001>
module attributes {stable_mosaic.version = 11 : i64} {
  func.func @_netd_fused_kernel(%arg0: memref<2x128xf32, #tpu.memory_space<vmem>>, %arg1: memref<128x128xf32, #tpu.memory_space<vmem>>, %arg2: memref<1x128xf32, #tpu.memory_space<vmem>>, %arg3: memref<128x1xf32, #tpu.memory_space<vmem>>, %arg4: memref<1x128xf32, #tpu.memory_space<vmem>>, %arg5: memref<1x1xf32, #tpu.memory_space<vmem>>, %arg6: memref<1x1xf32, #tpu.memory_space<vmem>>, %arg7: memref<128x128xf32, #tpu.memory_space<vmem>>, %arg8: memref<1x128xf32, #tpu.memory_space<vmem>>, %arg9: memref<128x2xf32, #tpu.memory_space<vmem>>, %arg10: memref<2x128xf32, #tpu.memory_space<vmem>>, %arg11: memref<1x2xf32, #tpu.memory_space<vmem>>, %arg12: memref<1x2xf32, #tpu.memory_space<vmem>>, %arg13: memref<128x96xf32, #tpu.memory_space<vmem>>, %arg14: memref<1x96xf32, #tpu.memory_space<vmem>>, %arg15: memref<96x3xf32, #tpu.memory_space<vmem>>, %arg16: memref<3x96xf32, #tpu.memory_space<vmem>>, %arg17: memref<1x3xf32, #tpu.memory_space<vmem>>, %arg18: memref<1x3xf32, #tpu.memory_space<vmem>>, %arg19: memref<96x64xf32, #tpu.memory_space<vmem>>, %arg20: memref<1x64xf32, #tpu.memory_space<vmem>>, %arg21: memref<64x4xf32, #tpu.memory_space<vmem>>, %arg22: memref<4x64xf32, #tpu.memory_space<vmem>>, %arg23: memref<1x4xf32, #tpu.memory_space<vmem>>, %arg24: memref<1x4xf32, #tpu.memory_space<vmem>>, %arg25: memref<64x5xf32, #tpu.memory_space<vmem>>, %arg26: memref<1x5xf32, #tpu.memory_space<vmem>>, %arg27: memref<2x5xf32, #tpu.memory_space<vmem>>) attributes {dimension_semantics = [], scalar_prefetch = 0 : i64, scratch_operands = 0 : i64, tpu.core_type = #tpu.core_type<tc>} {
    %c0 = arith.constant 0 : index
    %c0_0 = arith.constant 0 : index
    %0 = vector.load %arg0[%c0, %c0_0] : memref<2x128xf32, #tpu.memory_space<vmem>>, vector<2x128xf32>
    %c0_1 = arith.constant 0 : index
    %c0_2 = arith.constant 0 : index
    %1 = vector.load %arg1[%c0_1, %c0_2] : memref<128x128xf32, #tpu.memory_space<vmem>>, vector<128x128xf32>
    %cst = arith.constant dense<0.000000e+00> : vector<2x128xf32>
    %2 = tpu.matmul %0, %1, %cst {dimension_numbers = #tpu.dot_dimension_numbers<[1], [0], [0], [1], [0, 0, 1, 1], [], []>, precision = #tpu.contract_precision<fp32>} : vector<2x128xf32>, vector<128x128xf32>, vector<2x128xf32> -> vector<2x128xf32>
    %c0_3 = arith.constant 0 : index
    %c0_4 = arith.constant 0 : index
    %3 = vector.load %arg2[%c0_3, %c0_4] : memref<1x128xf32, #tpu.memory_space<vmem>>, vector<1x128xf32>
    %4 = vector.broadcast %3 : vector<1x128xf32> to vector<2x128xf32>
    %5 = arith.addf %2, %4 : vector<2x128xf32>
    %6 = arith.mulf %5, %5 : vector<2x128xf32>
    %7 = vector.extract_strided_slice %5 {offsets = [0, 0], sizes = [1, 128], strides = [1, 1]} : vector<2x128xf32> to vector<1x128xf32>
    %8 = vector.extract_strided_slice %6 {offsets = [0, 0], sizes = [1, 128], strides = [1, 1]} : vector<2x128xf32> to vector<1x128xf32>
    %9 = vector.extract_strided_slice %5 {offsets = [1, 0], sizes = [1, 128], strides = [1, 1]} : vector<2x128xf32> to vector<1x128xf32>
    %10 = arith.addf %7, %9 : vector<1x128xf32>
    %11 = vector.extract_strided_slice %6 {offsets = [1, 0], sizes = [1, 128], strides = [1, 1]} : vector<2x128xf32> to vector<1x128xf32>
    %12 = arith.addf %8, %11 : vector<1x128xf32>
    %13 = tpu.concatenate %10, %12 in 0 : vector<1x128xf32>, vector<1x128xf32> -> vector<2x128xf32>
    %c0_5 = arith.constant 0 : index
    %c0_6 = arith.constant 0 : index
    %14 = vector.load %arg3[%c0_5, %c0_6] : memref<128x1xf32, #tpu.memory_space<vmem>>, vector<128x1xf32>
    %cst_7 = arith.constant dense<0.000000e+00> : vector<2x1xf32>
    %15 = tpu.matmul %13, %14, %cst_7 {dimension_numbers = #tpu.dot_dimension_numbers<[1], [0], [0], [1], [0, 0, 1, 1], [], []>, precision = #tpu.contract_precision<fp32>} : vector<2x128xf32>, vector<128x1xf32>, vector<2x1xf32> -> vector<2x1xf32>
    %16 = vector.extract_strided_slice %15 {offsets = [0, 0], sizes = [1, 1], strides = [1, 1]} : vector<2x1xf32> to vector<1x1xf32>
    %cst_8 = arith.constant 3.906250e-03 : f32
    %17 = vector.broadcast %cst_8 : f32 to vector<1x1xf32>
    %18 = arith.mulf %16, %17 : vector<1x1xf32>
    %19 = vector.extract_strided_slice %15 {offsets = [1, 0], sizes = [1, 1], strides = [1, 1]} : vector<2x1xf32> to vector<1x1xf32>
    %cst_9 = arith.constant 3.906250e-03 : f32
    %20 = vector.broadcast %cst_9 : f32 to vector<1x1xf32>
    %21 = arith.mulf %19, %20 : vector<1x1xf32>
    %22 = arith.mulf %18, %18 : vector<1x1xf32>
    %23 = arith.subf %21, %22 : vector<1x1xf32>
    %c0_10 = arith.constant 0 : index
    %c0_11 = arith.constant 0 : index
    %24 = vector.load %arg5[%c0_10, %c0_11] : memref<1x1xf32, #tpu.memory_space<vmem>>, vector<1x1xf32>
    %cst_12 = arith.constant 9.99999974E-6 : f32
    %25 = vector.broadcast %cst_12 : f32 to vector<1x1xf32>
    %26 = arith.addf %23, %25 : vector<1x1xf32>
    %27 = math.rsqrt %26 : vector<1x1xf32>
    %28 = arith.mulf %24, %27 : vector<1x1xf32>
    %c0_13 = arith.constant 0 : index
    %c0_14 = arith.constant 0 : index
    %29 = vector.load %arg6[%c0_13, %c0_14] : memref<1x1xf32, #tpu.memory_space<vmem>>, vector<1x1xf32>
    %30 = arith.mulf %18, %28 : vector<1x1xf32>
    %31 = arith.subf %29, %30 : vector<1x1xf32>
    %32 = tpu.concatenate %28, %31 in 0 : vector<1x1xf32>, vector<1x1xf32> -> vector<2x1xf32>
    %c0_15 = arith.constant 0 : index
    %c0_16 = arith.constant 0 : index
    %33 = vector.load %arg4[%c0_15, %c0_16] : memref<1x128xf32, #tpu.memory_space<vmem>>, vector<1x128xf32>
    %cst_17 = arith.constant dense<0.000000e+00> : vector<2x128xf32>
    %34 = tpu.matmul %32, %33, %cst_17 {dimension_numbers = #tpu.dot_dimension_numbers<[1], [0], [0], [1], [0, 0, 1, 1], [], []>, precision = #tpu.contract_precision<fp32>} : vector<2x1xf32>, vector<1x128xf32>, vector<2x128xf32> -> vector<2x128xf32>
    %35 = vector.extract_strided_slice %34 {offsets = [0, 0], sizes = [1, 128], strides = [1, 1]} : vector<2x128xf32> to vector<1x128xf32>
    %36 = vector.broadcast %35 : vector<1x128xf32> to vector<2x128xf32>
    %37 = arith.mulf %5, %36 : vector<2x128xf32>
    %38 = vector.extract_strided_slice %34 {offsets = [1, 0], sizes = [1, 128], strides = [1, 1]} : vector<2x128xf32> to vector<1x128xf32>
    %39 = vector.broadcast %38 : vector<1x128xf32> to vector<2x128xf32>
    %40 = arith.addf %37, %39 : vector<2x128xf32>
    %cst_18 = arith.constant 1.000000e-01 : f32
    %41 = vector.broadcast %cst_18 : f32 to vector<2x128xf32>
    %42 = arith.mulf %41, %40 : vector<2x128xf32>
    %43 = arith.maximumf %40, %42 : vector<2x128xf32>
    %c0_19 = arith.constant 0 : index
    %c0_20 = arith.constant 0 : index
    %44 = vector.load %arg7[%c0_19, %c0_20] : memref<128x128xf32, #tpu.memory_space<vmem>>, vector<128x128xf32>
    %cst_21 = arith.constant dense<0.000000e+00> : vector<2x128xf32>
    %45 = tpu.matmul %43, %44, %cst_21 {dimension_numbers = #tpu.dot_dimension_numbers<[1], [0], [0], [1], [0, 0, 1, 1], [], []>, precision = #tpu.contract_precision<fp32>} : vector<2x128xf32>, vector<128x128xf32>, vector<2x128xf32> -> vector<2x128xf32>
    %c0_22 = arith.constant 0 : index
    %c0_23 = arith.constant 0 : index
    %46 = vector.load %arg8[%c0_22, %c0_23] : memref<1x128xf32, #tpu.memory_space<vmem>>, vector<1x128xf32>
    %47 = vector.broadcast %46 : vector<1x128xf32> to vector<2x128xf32>
    %48 = arith.addf %45, %47 : vector<2x128xf32>
    %49 = arith.mulf %48, %48 : vector<2x128xf32>
    %50 = vector.extract_strided_slice %48 {offsets = [0, 0], sizes = [1, 128], strides = [1, 1]} : vector<2x128xf32> to vector<1x128xf32>
    %51 = vector.extract_strided_slice %49 {offsets = [0, 0], sizes = [1, 128], strides = [1, 1]} : vector<2x128xf32> to vector<1x128xf32>
    %52 = vector.extract_strided_slice %48 {offsets = [1, 0], sizes = [1, 128], strides = [1, 1]} : vector<2x128xf32> to vector<1x128xf32>
    %53 = arith.addf %50, %52 : vector<1x128xf32>
    %54 = vector.extract_strided_slice %49 {offsets = [1, 0], sizes = [1, 128], strides = [1, 1]} : vector<2x128xf32> to vector<1x128xf32>
    %55 = arith.addf %51, %54 : vector<1x128xf32>
    %56 = tpu.concatenate %53, %55 in 0 : vector<1x128xf32>, vector<1x128xf32> -> vector<2x128xf32>
    %c0_24 = arith.constant 0 : index
    %c0_25 = arith.constant 0 : index
    %57 = vector.load %arg9[%c0_24, %c0_25] : memref<128x2xf32, #tpu.memory_space<vmem>>, vector<128x2xf32>
    %cst_26 = arith.constant dense<0.000000e+00> : vector<2x2xf32>
    %58 = tpu.matmul %56, %57, %cst_26 {dimension_numbers = #tpu.dot_dimension_numbers<[1], [0], [0], [1], [0, 0, 1, 1], [], []>, precision = #tpu.contract_precision<fp32>} : vector<2x128xf32>, vector<128x2xf32>, vector<2x2xf32> -> vector<2x2xf32>
    %59 = vector.extract_strided_slice %58 {offsets = [0, 0], sizes = [1, 2], strides = [1, 1]} : vector<2x2xf32> to vector<1x2xf32>
    %cst_27 = arith.constant 7.812500e-03 : f32
    %60 = vector.broadcast %cst_27 : f32 to vector<1x2xf32>
    %61 = arith.mulf %59, %60 : vector<1x2xf32>
    %62 = vector.extract_strided_slice %58 {offsets = [1, 0], sizes = [1, 2], strides = [1, 1]} : vector<2x2xf32> to vector<1x2xf32>
    %cst_28 = arith.constant 7.812500e-03 : f32
    %63 = vector.broadcast %cst_28 : f32 to vector<1x2xf32>
    %64 = arith.mulf %62, %63 : vector<1x2xf32>
    %65 = arith.mulf %61, %61 : vector<1x2xf32>
    %66 = arith.subf %64, %65 : vector<1x2xf32>
    %c0_29 = arith.constant 0 : index
    %c0_30 = arith.constant 0 : index
    %67 = vector.load %arg11[%c0_29, %c0_30] : memref<1x2xf32, #tpu.memory_space<vmem>>, vector<1x2xf32>
    %cst_31 = arith.constant 9.99999974E-6 : f32
    %68 = vector.broadcast %cst_31 : f32 to vector<1x2xf32>
    %69 = arith.addf %66, %68 : vector<1x2xf32>
    %70 = math.rsqrt %69 : vector<1x2xf32>
    %71 = arith.mulf %67, %70 : vector<1x2xf32>
    %c0_32 = arith.constant 0 : index
    %c0_33 = arith.constant 0 : index
    %72 = vector.load %arg12[%c0_32, %c0_33] : memref<1x2xf32, #tpu.memory_space<vmem>>, vector<1x2xf32>
    %73 = arith.mulf %61, %71 : vector<1x2xf32>
    %74 = arith.subf %72, %73 : vector<1x2xf32>
    %75 = tpu.concatenate %71, %74 in 0 : vector<1x2xf32>, vector<1x2xf32> -> vector<2x2xf32>
    %c0_34 = arith.constant 0 : index
    %c0_35 = arith.constant 0 : index
    %76 = vector.load %arg10[%c0_34, %c0_35] : memref<2x128xf32, #tpu.memory_space<vmem>>, vector<2x128xf32>
    %cst_36 = arith.constant dense<0.000000e+00> : vector<2x128xf32>
    %77 = tpu.matmul %75, %76, %cst_36 {dimension_numbers = #tpu.dot_dimension_numbers<[1], [0], [0], [1], [0, 0, 1, 1], [], []>, precision = #tpu.contract_precision<fp32>} : vector<2x2xf32>, vector<2x128xf32>, vector<2x128xf32> -> vector<2x128xf32>
    %78 = vector.extract_strided_slice %77 {offsets = [0, 0], sizes = [1, 128], strides = [1, 1]} : vector<2x128xf32> to vector<1x128xf32>
    %79 = vector.broadcast %78 : vector<1x128xf32> to vector<2x128xf32>
    %80 = arith.mulf %48, %79 : vector<2x128xf32>
    %81 = vector.extract_strided_slice %77 {offsets = [1, 0], sizes = [1, 128], strides = [1, 1]} : vector<2x128xf32> to vector<1x128xf32>
    %82 = vector.broadcast %81 : vector<1x128xf32> to vector<2x128xf32>
    %83 = arith.addf %80, %82 : vector<2x128xf32>
    %cst_37 = arith.constant 1.000000e-01 : f32
    %84 = vector.broadcast %cst_37 : f32 to vector<2x128xf32>
    %85 = arith.mulf %84, %83 : vector<2x128xf32>
    %86 = arith.maximumf %83, %85 : vector<2x128xf32>
    %c0_38 = arith.constant 0 : index
    %c0_39 = arith.constant 0 : index
    %87 = vector.load %arg13[%c0_38, %c0_39] : memref<128x96xf32, #tpu.memory_space<vmem>>, vector<128x96xf32>
    %cst_40 = arith.constant dense<0.000000e+00> : vector<2x96xf32>
    %88 = tpu.matmul %86, %87, %cst_40 {dimension_numbers = #tpu.dot_dimension_numbers<[1], [0], [0], [1], [0, 0, 1, 1], [], []>, precision = #tpu.contract_precision<fp32>} : vector<2x128xf32>, vector<128x96xf32>, vector<2x96xf32> -> vector<2x96xf32>
    %c0_41 = arith.constant 0 : index
    %c0_42 = arith.constant 0 : index
    %89 = vector.load %arg14[%c0_41, %c0_42] : memref<1x96xf32, #tpu.memory_space<vmem>>, vector<1x96xf32>
    %90 = vector.broadcast %89 : vector<1x96xf32> to vector<2x96xf32>
    %91 = arith.addf %88, %90 : vector<2x96xf32>
    %92 = arith.mulf %91, %91 : vector<2x96xf32>
    %93 = vector.extract_strided_slice %91 {offsets = [0, 0], sizes = [1, 96], strides = [1, 1]} : vector<2x96xf32> to vector<1x96xf32>
    %94 = vector.extract_strided_slice %92 {offsets = [0, 0], sizes = [1, 96], strides = [1, 1]} : vector<2x96xf32> to vector<1x96xf32>
    %95 = vector.extract_strided_slice %91 {offsets = [1, 0], sizes = [1, 96], strides = [1, 1]} : vector<2x96xf32> to vector<1x96xf32>
    %96 = arith.addf %93, %95 : vector<1x96xf32>
    %97 = vector.extract_strided_slice %92 {offsets = [1, 0], sizes = [1, 96], strides = [1, 1]} : vector<2x96xf32> to vector<1x96xf32>
    %98 = arith.addf %94, %97 : vector<1x96xf32>
    %99 = tpu.concatenate %96, %98 in 0 : vector<1x96xf32>, vector<1x96xf32> -> vector<2x96xf32>
    %c0_43 = arith.constant 0 : index
    %c0_44 = arith.constant 0 : index
    %100 = vector.load %arg15[%c0_43, %c0_44] : memref<96x3xf32, #tpu.memory_space<vmem>>, vector<96x3xf32>
    %cst_45 = arith.constant dense<0.000000e+00> : vector<2x3xf32>
    %101 = tpu.matmul %99, %100, %cst_45 {dimension_numbers = #tpu.dot_dimension_numbers<[1], [0], [0], [1], [0, 0, 1, 1], [], []>, precision = #tpu.contract_precision<fp32>} : vector<2x96xf32>, vector<96x3xf32>, vector<2x3xf32> -> vector<2x3xf32>
    %102 = vector.extract_strided_slice %101 {offsets = [0, 0], sizes = [1, 3], strides = [1, 1]} : vector<2x3xf32> to vector<1x3xf32>
    %cst_46 = arith.constant 1.562500e-02 : f32
    %103 = vector.broadcast %cst_46 : f32 to vector<1x3xf32>
    %104 = arith.mulf %102, %103 : vector<1x3xf32>
    %105 = vector.extract_strided_slice %101 {offsets = [1, 0], sizes = [1, 3], strides = [1, 1]} : vector<2x3xf32> to vector<1x3xf32>
    %cst_47 = arith.constant 1.562500e-02 : f32
    %106 = vector.broadcast %cst_47 : f32 to vector<1x3xf32>
    %107 = arith.mulf %105, %106 : vector<1x3xf32>
    %108 = arith.mulf %104, %104 : vector<1x3xf32>
    %109 = arith.subf %107, %108 : vector<1x3xf32>
    %c0_48 = arith.constant 0 : index
    %c0_49 = arith.constant 0 : index
    %110 = vector.load %arg17[%c0_48, %c0_49] : memref<1x3xf32, #tpu.memory_space<vmem>>, vector<1x3xf32>
    %cst_50 = arith.constant 9.99999974E-6 : f32
    %111 = vector.broadcast %cst_50 : f32 to vector<1x3xf32>
    %112 = arith.addf %109, %111 : vector<1x3xf32>
    %113 = math.rsqrt %112 : vector<1x3xf32>
    %114 = arith.mulf %110, %113 : vector<1x3xf32>
    %c0_51 = arith.constant 0 : index
    %c0_52 = arith.constant 0 : index
    %115 = vector.load %arg18[%c0_51, %c0_52] : memref<1x3xf32, #tpu.memory_space<vmem>>, vector<1x3xf32>
    %116 = arith.mulf %104, %114 : vector<1x3xf32>
    %117 = arith.subf %115, %116 : vector<1x3xf32>
    %118 = tpu.concatenate %114, %117 in 0 : vector<1x3xf32>, vector<1x3xf32> -> vector<2x3xf32>
    %c0_53 = arith.constant 0 : index
    %c0_54 = arith.constant 0 : index
    %119 = vector.load %arg16[%c0_53, %c0_54] : memref<3x96xf32, #tpu.memory_space<vmem>>, vector<3x96xf32>
    %cst_55 = arith.constant dense<0.000000e+00> : vector<2x96xf32>
    %120 = tpu.matmul %118, %119, %cst_55 {dimension_numbers = #tpu.dot_dimension_numbers<[1], [0], [0], [1], [0, 0, 1, 1], [], []>, precision = #tpu.contract_precision<fp32>} : vector<2x3xf32>, vector<3x96xf32>, vector<2x96xf32> -> vector<2x96xf32>
    %121 = vector.extract_strided_slice %120 {offsets = [0, 0], sizes = [1, 96], strides = [1, 1]} : vector<2x96xf32> to vector<1x96xf32>
    %122 = vector.broadcast %121 : vector<1x96xf32> to vector<2x96xf32>
    %123 = arith.mulf %91, %122 : vector<2x96xf32>
    %124 = vector.extract_strided_slice %120 {offsets = [1, 0], sizes = [1, 96], strides = [1, 1]} : vector<2x96xf32> to vector<1x96xf32>
    %125 = vector.broadcast %124 : vector<1x96xf32> to vector<2x96xf32>
    %126 = arith.addf %123, %125 : vector<2x96xf32>
    %cst_56 = arith.constant 1.000000e-01 : f32
    %127 = vector.broadcast %cst_56 : f32 to vector<2x96xf32>
    %128 = arith.mulf %127, %126 : vector<2x96xf32>
    %129 = arith.maximumf %126, %128 : vector<2x96xf32>
    %c0_57 = arith.constant 0 : index
    %c0_58 = arith.constant 0 : index
    %130 = vector.load %arg19[%c0_57, %c0_58] : memref<96x64xf32, #tpu.memory_space<vmem>>, vector<96x64xf32>
    %cst_59 = arith.constant dense<0.000000e+00> : vector<2x64xf32>
    %131 = tpu.matmul %129, %130, %cst_59 {dimension_numbers = #tpu.dot_dimension_numbers<[1], [0], [0], [1], [0, 0, 1, 1], [], []>, precision = #tpu.contract_precision<fp32>} : vector<2x96xf32>, vector<96x64xf32>, vector<2x64xf32> -> vector<2x64xf32>
    %c0_60 = arith.constant 0 : index
    %c0_61 = arith.constant 0 : index
    %132 = vector.load %arg20[%c0_60, %c0_61] : memref<1x64xf32, #tpu.memory_space<vmem>>, vector<1x64xf32>
    %133 = vector.broadcast %132 : vector<1x64xf32> to vector<2x64xf32>
    %134 = arith.addf %131, %133 : vector<2x64xf32>
    %135 = arith.mulf %134, %134 : vector<2x64xf32>
    %136 = vector.extract_strided_slice %134 {offsets = [0, 0], sizes = [1, 64], strides = [1, 1]} : vector<2x64xf32> to vector<1x64xf32>
    %137 = vector.extract_strided_slice %135 {offsets = [0, 0], sizes = [1, 64], strides = [1, 1]} : vector<2x64xf32> to vector<1x64xf32>
    %138 = vector.extract_strided_slice %134 {offsets = [1, 0], sizes = [1, 64], strides = [1, 1]} : vector<2x64xf32> to vector<1x64xf32>
    %139 = arith.addf %136, %138 : vector<1x64xf32>
    %140 = vector.extract_strided_slice %135 {offsets = [1, 0], sizes = [1, 64], strides = [1, 1]} : vector<2x64xf32> to vector<1x64xf32>
    %141 = arith.addf %137, %140 : vector<1x64xf32>
    %142 = tpu.concatenate %139, %141 in 0 : vector<1x64xf32>, vector<1x64xf32> -> vector<2x64xf32>
    %c0_62 = arith.constant 0 : index
    %c0_63 = arith.constant 0 : index
    %143 = vector.load %arg21[%c0_62, %c0_63] : memref<64x4xf32, #tpu.memory_space<vmem>>, vector<64x4xf32>
    %cst_64 = arith.constant dense<0.000000e+00> : vector<2x4xf32>
    %144 = tpu.matmul %142, %143, %cst_64 {dimension_numbers = #tpu.dot_dimension_numbers<[1], [0], [0], [1], [0, 0, 1, 1], [], []>, precision = #tpu.contract_precision<fp32>} : vector<2x64xf32>, vector<64x4xf32>, vector<2x4xf32> -> vector<2x4xf32>
    %145 = vector.extract_strided_slice %144 {offsets = [0, 0], sizes = [1, 4], strides = [1, 1]} : vector<2x4xf32> to vector<1x4xf32>
    %cst_65 = arith.constant 3.125000e-02 : f32
    %146 = vector.broadcast %cst_65 : f32 to vector<1x4xf32>
    %147 = arith.mulf %145, %146 : vector<1x4xf32>
    %148 = vector.extract_strided_slice %144 {offsets = [1, 0], sizes = [1, 4], strides = [1, 1]} : vector<2x4xf32> to vector<1x4xf32>
    %cst_66 = arith.constant 3.125000e-02 : f32
    %149 = vector.broadcast %cst_66 : f32 to vector<1x4xf32>
    %150 = arith.mulf %148, %149 : vector<1x4xf32>
    %151 = arith.mulf %147, %147 : vector<1x4xf32>
    %152 = arith.subf %150, %151 : vector<1x4xf32>
    %c0_67 = arith.constant 0 : index
    %c0_68 = arith.constant 0 : index
    %153 = vector.load %arg23[%c0_67, %c0_68] : memref<1x4xf32, #tpu.memory_space<vmem>>, vector<1x4xf32>
    %cst_69 = arith.constant 9.99999974E-6 : f32
    %154 = vector.broadcast %cst_69 : f32 to vector<1x4xf32>
    %155 = arith.addf %152, %154 : vector<1x4xf32>
    %156 = math.rsqrt %155 : vector<1x4xf32>
    %157 = arith.mulf %153, %156 : vector<1x4xf32>
    %c0_70 = arith.constant 0 : index
    %c0_71 = arith.constant 0 : index
    %158 = vector.load %arg24[%c0_70, %c0_71] : memref<1x4xf32, #tpu.memory_space<vmem>>, vector<1x4xf32>
    %159 = arith.mulf %147, %157 : vector<1x4xf32>
    %160 = arith.subf %158, %159 : vector<1x4xf32>
    %161 = tpu.concatenate %157, %160 in 0 : vector<1x4xf32>, vector<1x4xf32> -> vector<2x4xf32>
    %c0_72 = arith.constant 0 : index
    %c0_73 = arith.constant 0 : index
    %162 = vector.load %arg22[%c0_72, %c0_73] : memref<4x64xf32, #tpu.memory_space<vmem>>, vector<4x64xf32>
    %cst_74 = arith.constant dense<0.000000e+00> : vector<2x64xf32>
    %163 = tpu.matmul %161, %162, %cst_74 {dimension_numbers = #tpu.dot_dimension_numbers<[1], [0], [0], [1], [0, 0, 1, 1], [], []>, precision = #tpu.contract_precision<fp32>} : vector<2x4xf32>, vector<4x64xf32>, vector<2x64xf32> -> vector<2x64xf32>
    %164 = vector.extract_strided_slice %163 {offsets = [0, 0], sizes = [1, 64], strides = [1, 1]} : vector<2x64xf32> to vector<1x64xf32>
    %165 = vector.broadcast %164 : vector<1x64xf32> to vector<2x64xf32>
    %166 = arith.mulf %134, %165 : vector<2x64xf32>
    %167 = vector.extract_strided_slice %163 {offsets = [1, 0], sizes = [1, 64], strides = [1, 1]} : vector<2x64xf32> to vector<1x64xf32>
    %168 = vector.broadcast %167 : vector<1x64xf32> to vector<2x64xf32>
    %169 = arith.addf %166, %168 : vector<2x64xf32>
    %cst_75 = arith.constant 1.000000e-01 : f32
    %170 = vector.broadcast %cst_75 : f32 to vector<2x64xf32>
    %171 = arith.mulf %170, %169 : vector<2x64xf32>
    %172 = arith.maximumf %169, %171 : vector<2x64xf32>
    %c0_76 = arith.constant 0 : index
    %c0_77 = arith.constant 0 : index
    %173 = vector.load %arg25[%c0_76, %c0_77] : memref<64x5xf32, #tpu.memory_space<vmem>>, vector<64x5xf32>
    %cst_78 = arith.constant dense<0.000000e+00> : vector<2x5xf32>
    %174 = tpu.matmul %172, %173, %cst_78 {dimension_numbers = #tpu.dot_dimension_numbers<[1], [0], [0], [1], [0, 0, 1, 1], [], []>, precision = #tpu.contract_precision<fp32>} : vector<2x64xf32>, vector<64x5xf32>, vector<2x5xf32> -> vector<2x5xf32>
    %c0_79 = arith.constant 0 : index
    %c0_80 = arith.constant 0 : index
    %175 = vector.load %arg26[%c0_79, %c0_80] : memref<1x5xf32, #tpu.memory_space<vmem>>, vector<1x5xf32>
    %176 = vector.broadcast %175 : vector<1x5xf32> to vector<2x5xf32>
    %177 = arith.addf %174, %176 : vector<2x5xf32>
    %cst_81 = arith.constant 1.000000e-01 : f32
    %178 = vector.broadcast %cst_81 : f32 to vector<2x5xf32>
    %179 = arith.mulf %178, %177 : vector<2x5xf32>
    %180 = arith.maximumf %177, %179 : vector<2x5xf32>
    %c0_82 = arith.constant 0 : index
    %c0_83 = arith.constant 0 : index
    %181 = vector.load %arg27[%c0_82, %c0_83] : memref<2x5xf32, #tpu.memory_space<vmem>>, vector<2x5xf32>
    tpu.vector_store %arg27[%c0_82, %c0_83], %180 {strides = array<i32>} : memref<2x5xf32, #tpu.memory_space<vmem>>, vector<2x5xf32>,
    return
  }
}

</mosaic_0001>

<llo_original>
// kernel: netd_forward.1
$region0: #{netd_forward.1}
  #allocation0 [shape = 'u32[]', space=smem, size = 0x4, offset = 0x4, fixed_abs, tag = 'smem constant byte address 0x4 - core index']
  #allocation1 [shape = 'u32[144,128]{1,0:T(1,128)}', space=vmem, size = 0x12000, scoped, tag = 'internal scratch']
  #allocation2 [shape = 'f32[1,1]{1,0:T(1,128)S(1)}', space=vmem, size = 0x200, scoped, tag = 'scoped memory for netd_forward.1']
  #allocation3 [shape = 'f32[1,1]{1,0:T(1,128)S(1)}', space=vmem, size = 0x200, scoped, tag = 'scoped memory for netd_forward.1']
  %s0 = inlined_call_operand.vmem [shape: f32[2,128], index: 0, kind: input, shape index: {}]
  %s1 = inlined_call_operand.vmem [shape: f32[128,128], index: 1, kind: input, shape index: {}]
  %s2 = inlined_call_operand.vmem [shape: f32[1,128], index: 2, kind: input, shape index: {}]
  %s3 = inlined_call_operand.vmem [shape: f32[128,1], index: 3, kind: input, shape index: {}]
  %s4 = inlined_call_operand.vmem [shape: f32[1,128], index: 4, kind: input, shape index: {}]
  %s5 = inlined_call_operand.<no memory space> [shape: f32[1,1], index: 5, kind: input, shape index: {}]
  %s6 = inlined_call_operand.<no memory space> [shape: f32[1,1], index: 6, kind: input, shape index: {}]
  %s7 = inlined_call_operand.vmem [shape: f32[128,128], index: 7, kind: input, shape index: {}]
  %s8 = inlined_call_operand.vmem [shape: f32[1,128], index: 8, kind: input, shape index: {}]
  %s9 = inlined_call_operand.vmem [shape: f32[128,2], index: 9, kind: input, shape index: {}]
  %s10 = inlined_call_operand.vmem [shape: f32[2,128], index: 10, kind: input, shape index: {}]
  %s11 = inlined_call_operand.vmem [shape: f32[1,2], index: 11, kind: input, shape index: {}]
  %s12 = inlined_call_operand.vmem [shape: f32[1,2], index: 12, kind: input, shape index: {}]
  %s13 = inlined_call_operand.vmem [shape: f32[128,96], index: 13, kind: input, shape index: {}]
  %s14 = inlined_call_operand.vmem [shape: f32[1,96], index: 14, kind: input, shape index: {}]
  %s15 = inlined_call_operand.vmem [shape: f32[96,3], index: 15, kind: input, shape index: {}]
  %s16 = inlined_call_operand.vmem [shape: f32[3,96], index: 16, kind: input, shape index: {}]
  %s17 = inlined_call_operand.vmem [shape: f32[1,3], index: 17, kind: input, shape index: {}]
  %s18 = inlined_call_operand.vmem [shape: f32[1,3], index: 18, kind: input, shape index: {}]
  %s19 = inlined_call_operand.vmem [shape: f32[96,64], index: 19, kind: input, shape index: {}]
  %s20 = inlined_call_operand.vmem [shape: f32[1,64], index: 20, kind: input, shape index: {}]
  %s21 = inlined_call_operand.vmem [shape: f32[64,4], index: 21, kind: input, shape index: {}]
  %s22 = inlined_call_operand.vmem [shape: f32[4,64], index: 22, kind: input, shape index: {}]
  %s23 = inlined_call_operand.vmem [shape: f32[1,4], index: 23, kind: input, shape index: {}]
  %s24 = inlined_call_operand.vmem [shape: f32[1,4], index: 24, kind: input, shape index: {}]
  %s25 = inlined_call_operand.vmem [shape: f32[64,5], index: 25, kind: input, shape index: {}]
  %s26 = inlined_call_operand.vmem [shape: f32[1,5], index: 26, kind: input, shape index: {}]
  %s27 = inlined_call_operand.hbm [shape: f32[2,5], index: 27, kind: output, shape index: {}]
  %s28 = sld [smem:[#allocation0]]
  $region118: #{netd_forward.1} parent=0
    _
  %s30 = ssub.s32 1, %s28
  %s31 = scalar_select 0, %s30, %s28
  %v32 = vstv %s5
  %33 = vst [vmem:[#allocation2] sm:$0x1] %v32
  %v34 = vstv %s6
  %35 = vst [vmem:[#allocation3] sm:$0x1] %v34
  $region1: #{netd_forward.1} parent=0
    #allocation4 [shape = 'u8[1024]{0}', space=vmem, size = 0x400, scoped, tag = 'output window, operand 0, single buffered']
    #allocation5 [shape = 's32[1]{0}', space=sflag, size = 0x4, scoped, tag = 'scoped memory for netd_forward.1']
    %36 = vsyncpa [#allocation5], 0
    // Predicated region
    $region2: #{netd_forward.1} parent=1 // pred_check
      _
    $region3: #{netd_forward.1} parent=1 // pred_check_branch
      %38 = sbr.rel (0) target = $region5
    $region4: #{netd_forward.1} parent=1 // pred_region
      _
    $region5: #{netd_forward.1} parent=1 // pred_fallthru
      _
    // Predicated region
    $region6: #{netd_forward.1} parent=1 // pred_check
      _
    $region7: #{netd_forward.1} parent=1 // pred_check_branch
      %40 = sbr.rel (0) target = $region9
    $region8: #{netd_forward.1} parent=1 // pred_region
      _
    $region9: #{netd_forward.1} parent=1 // pred_fallthru
      _
    // Predicated region
    $region10: #{netd_forward.1} parent=1 // pred_check
      _
    $region11: #{netd_forward.1} parent=1 // pred_check_branch
      %42 = sbr.rel (0) target = $region13
    $region12: #{netd_forward.1} parent=1 // pred_region
      _
    $region13: #{netd_forward.1} parent=1 // pred_fallthru
      _
    // Predicated region
    $region14: #{netd_forward.1} parent=1 // pred_check
      _
    $region15: #{netd_forward.1} parent=1 // pred_check_branch
      %44 = sbr.rel (0) target = $region17
    $region16: #{netd_forward.1} parent=1 // pred_region
      _
    $region17: #{netd_forward.1} parent=1 // pred_fallthru
      _
    // Predicated region
    $region18: #{netd_forward.1} parent=1 // pred_check
      _
    $region19: #{netd_forward.1} parent=1 // pred_check_branch
      %46 = sbr.rel (0) target = $region21
    $region20: #{netd_forward.1} parent=1 // pred_region
      _
    $region21: #{netd_forward.1} parent=1 // pred_fallthru
      _
    // Predicated region
    $region22: #{netd_forward.1} parent=1 // pred_check
      _
    $region23: #{netd_forward.1} parent=1 // pred_check_branch
      %48 = sbr.rel (0) target = $region25
    $region24: #{netd_forward.1} parent=1 // pred_region
      _
    $region25: #{netd_forward.1} parent=1 // pred_fallthru
      _
    // Predicated region
    $region26: #{netd_forward.1} parent=1 // pred_check
      _
    $region27: #{netd_forward.1} parent=1 // pred_check_branch
      %50 = sbr.rel (0) target = $region29
    $region28: #{netd_forward.1} parent=1 // pred_region
      _
    $region29: #{netd_forward.1} parent=1 // pred_fallthru
      _
    // Predicated region
    $region30: #{netd_forward.1} parent=1 // pred_check
      _
    $region31: #{netd_forward.1} parent=1 // pred_check_branch
      %52 = sbr.rel (0) target = $region33
    $region32: #{netd_forward.1} parent=1 // pred_region
      _
    $region33: #{netd_forward.1} parent=1 // pred_fallthru
      _
    // Predicated region
    $region34: #{netd_forward.1} parent=1 // pred_check
      _
    $region35: #{netd_forward.1} parent=1 // pred_check_branch
      %54 = sbr.rel (0) target = $region37
    $region36: #{netd_forward.1} parent=1 // pred_region
      _
    $region37: #{netd_forward.1} parent=1 // pred_fallthru
      _
    // Predicated region
    $region38: #{netd_forward.1} parent=1 // pred_check
      _
    $region39: #{netd_forward.1} parent=1 // pred_check_branch
      %56 = sbr.rel (0) target = $region41
    $region40: #{netd_forward.1} parent=1 // pred_region
      _
    $region41: #{netd_forward.1} parent=1 // pred_fallthru
      _
    // Predicated region
    $region42: #{netd_forward.1} parent=1 // pred_check
      _
    $region43: #{netd_forward.1} parent=1 // pred_check_branch
      %58 = sbr.rel (0) target = $region45
    $region44: #{netd_forward.1} parent=1 // pred_region
      _
    $region45: #{netd_forward.1} parent=1 // pred_fallthru
      _
    // Predicated region
    $region46: #{netd_forward.1} parent=1 // pred_check
      _
    $region47: #{netd_forward.1} parent=1 // pred_check_branch
      %60 = sbr.rel (0) target = $region49
    $region48: #{netd_forward.1} parent=1 // pred_region
      _
    $region49: #{netd_forward.1} parent=1 // pred_fallthru
      _
    // Predicated region
    $region50: #{netd_forward.1} parent=1 // pred_check
      _
    $region51: #{netd_forward.1} parent=1 // pred_check_branch
      %62 = sbr.rel (0) target = $region53
    $region52: #{netd_forward.1} parent=1 // pred_region
      _
    $region53: #{netd_forward.1} parent=1 // pred_fallthru
      _
    // Predicated region
    $region54: #{netd_forward.1} parent=1 // pred_check
      _
    $region55: #{netd_forward.1} parent=1 // pred_check_branch
      %64 = sbr.rel (0) target = $region57
    $region56: #{netd_forward.1} parent=1 // pred_region
      _
    $region57: #{netd_forward.1} parent=1 // pred_fallthru
      _
    // Predicated region
    $region58: #{netd_forward.1} parent=1 // pred_check
      _
    $region59: #{netd_forward.1} parent=1 // pred_check_branch
      %66 = sbr.rel (0) target = $region61
    $region60: #{netd_forward.1} parent=1 // pred_region
      _
    $region61: #{netd_forward.1} parent=1 // pred_fallthru
      _
    // Predicated region
    $region62: #{netd_forward.1} parent=1 // pred_check
      _
    $region63: #{netd_forward.1} parent=1 // pred_check_branch
      %68 = sbr.rel (0) target = $region65
    $region64: #{netd_forward.1} parent=1 // pred_region
      _
    $region65: #{netd_forward.1} parent=1 // pred_fallthru
      _
    // Predicated region
    $region66: #{netd_forward.1} parent=1 // pred_check
      _
    $region67: #{netd_forward.1} parent=1 // pred_check_branch
      %70 = sbr.rel (0) target = $region69
    $region68: #{netd_forward.1} parent=1 // pred_region
      _
    $region69: #{netd_forward.1} parent=1 // pred_fallthru
      _
    // Predicated region
    $region70: #{netd_forward.1} parent=1 // pred_check
      _
    $region71: #{netd_forward.1} parent=1 // pred_check_branch
      %72 = sbr.rel (0) target = $region73
    $region72: #{netd_forward.1} parent=1 // pred_region
      _
    $region73: #{netd_forward.1} parent=1 // pred_fallthru
      _
    // Predicated region
    $region74: #{netd_forward.1} parent=1 // pred_check
      _
    $region75: #{netd_forward.1} parent=1 // pred_check_branch
      %74 = sbr.rel (0) target = $region77
    $region76: #{netd_forward.1} parent=1 // pred_region
      _
    $region77: #{netd_forward.1} parent=1 // pred_fallthru
      _
    // Predicated region
    $region78: #{netd_forward.1} parent=1 // pred_check
      _
    $region79: #{netd_forward.1} parent=1 // pred_check_branch
      %76 = sbr.rel (0) target = $region81
    $region80: #{netd_forward.1} parent=1 // pred_region
      _
    $region81: #{netd_forward.1} parent=1 // pred_fallthru
      _
    // Predicated region
    $region82: #{netd_forward.1} parent=1 // pred_check
      _
    $region83: #{netd_forward.1} parent=1 // pred_check_branch
      %78 = sbr.rel (0) target = $region85
    $region84: #{netd_forward.1} parent=1 // pred_region
      _
    $region85: #{netd_forward.1} parent=1 // pred_fallthru
      _
    // Predicated region
    $region86: #{netd_forward.1} parent=1 // pred_check
      _
    $region87: #{netd_forward.1} parent=1 // pred_check_branch
      %80 = sbr.rel (0) target = $region89
    $region88: #{netd_forward.1} parent=1 // pred_region
      _
    $region89: #{netd_forward.1} parent=1 // pred_fallthru
      _
    // Predicated region
    $region90: #{netd_forward.1} parent=1 // pred_check
      _
    $region91: #{netd_forward.1} parent=1 // pred_check_branch
      %82 = sbr.rel (0) target = $region93
    $region92: #{netd_forward.1} parent=1 // pred_region
      _
    $region93: #{netd_forward.1} parent=1 // pred_fallthru
      _
    // Predicated region
    $region94: #{netd_forward.1} parent=1 // pred_check
      _
    $region95: #{netd_forward.1} parent=1 // pred_check_branch
      %84 = sbr.rel (0) target = $region97
    $region96: #{netd_forward.1} parent=1 // pred_region
      _
    $region97: #{netd_forward.1} parent=1 // pred_fallthru
      _
    // Predicated region
    $region98: #{netd_forward.1} parent=1 // pred_check
      _
    $region99: #{netd_forward.1} parent=1 // pred_check_branch
      %86 = sbr.rel (0) target = $region101
    $region100: #{netd_forward.1} parent=1 // pred_region
      _
    $region101: #{netd_forward.1} parent=1 // pred_fallthru
      _
    // Predicated region
    $region102: #{netd_forward.1} parent=1 // pred_check
      _
    $region103: #{netd_forward.1} parent=1 // pred_check_branch
      %88 = sbr.rel (0) target = $region105
    $region104: #{netd_forward.1} parent=1 // pred_region
      _
    $region105: #{netd_forward.1} parent=1 // pred_fallthru
      _
    // Predicated region
    $region106: #{netd_forward.1} parent=1 // pred_check
      _
    $region107: #{netd_forward.1} parent=1 // pred_check_branch
      %90 = sbr.rel (0) target = $region109
    $region108: #{netd_forward.1} parent=1 // pred_region
      _
    $region109: #{netd_forward.1} parent=1 // pred_fallthru
      _
    %v91 = vld [vmem:[%s0] sm:$0x3]
    %v92 = vld [vmem:[%s1] sm:$0xff]
    %v93 = vld [vmem:[%s1 + $0x8] sm:$0xff]
    %v94 = vld [vmem:[%s1 + $0x10] sm:$0xff]
    %v95 = vld [vmem:[%s1 + $0x18] sm:$0xff]
    %v96 = vld [vmem:[%s1 + $0x20] sm:$0xff]
    %v97 = vld [vmem:[%s1 + $0x28] sm:$0xff]
    %v98 = vld [vmem:[%s1 + $0x30] sm:$0xff]
    %v99 = vld [vmem:[%s1 + $0x38] sm:$0xff]
    %v100 = vld [vmem:[%s1 + $0x40] sm:$0xff]
    %v101 = vld [vmem:[%s1 + $0x48] sm:$0xff]
    %v102 = vld [vmem:[%s1 + $0x50] sm:$0xff]
    %v103 = vld [vmem:[%s1 + $0x58] sm:$0xff]
    %v104 = vld [vmem:[%s1 + $0x60] sm:$0xff]
    %v105 = vld [vmem:[%s1 + $0x68] sm:$0xff]
    %v106 = vld [vmem:[%s1 + $0x70] sm:$0xff]
    %v107 = vld [vmem:[%s1 + $0x78] sm:$0xff]
    %v108 = vld [vmem:[%s2] sm:$0x1]
    %v110 = vlaneseq
    %v111 = vshrl.u32 %v110, 7
    %v112 = vsub.s32 0, %v111
    %v113 = vrot.slane %v108, %v112
    %115 = vmatprep.subr.mxu0 0.0
    %v116 = vand.u32 %v92, 4294901760
    %117 = vmatpush1.msra.mxu0 %v116
    %118 = vmatprep.subr.mxu0 0.0
    %v119 = vand.u32 %v93, 4294901760
    %120 = vmatpush1.msra.mxu0 %v119
    %121 = vmatprep.subr.mxu0 0.0
    %v122 = vand.u32 %v94, 4294901760
    %123 = vmatpush1.msra.mxu0 %v122
    %124 = vmatprep.subr.mxu0 0.0
    %v125 = vand.u32 %v95, 4294901760
    %126 = vmatpush1.msra.mxu0 %v125
    %127 = vmatprep.subr.mxu0 0.0
    %v128 = vand.u32 %v96, 4294901760
    %129 = vmatpush1.msra.mxu0 %v128
    %130 = vmatprep.subr.mxu0 0.0
    %v131 = vand.u32 %v97, 4294901760
    %132 = vmatpush1.msra.mxu0 %v131
    %133 = vmatprep.subr.mxu0 0.0
    %v134 = vand.u32 %v98, 4294901760
    %135 = vmatpush1.msra.mxu0 %v134
    %136 = vmatprep.subr.mxu0 0.0
    %v137 = vand.u32 %v99, 4294901760
    %138 = vmatpush1.msra.mxu0 %v137
    %139 = vmatprep.subr.mxu0 0.0
    %v140 = vand.u32 %v100, 4294901760
    %141 = vmatpush1.msra.mxu0 %v140
    %142 = vmatprep.subr.mxu0 0.0
    %v143 = vand.u32 %v101, 4294901760
    %144 = vmatpush1.msra.mxu0 %v143
    %145 = vmatprep.subr.mxu0 0.0
    %v146 = vand.u32 %v102, 4294901760
    %147 = vmatpush1.msra.mxu0 %v146
    %148 = vmatprep.subr.mxu0 0.0
    %v149 = vand.u32 %v103, 4294901760
    %150 = vmatpush1.msra.mxu0 %v149
    %151 = vmatprep.subr.mxu0 0.0
    %v152 = vand.u32 %v104, 4294901760
    %153 = vmatpush1.msra.mxu0 %v152
    %154 = vmatprep.subr.mxu0 0.0
    %v155 = vand.u32 %v105, 4294901760
    %156 = vmatpush1.msra.mxu0 %v155
    %157 = vmatprep.subr.mxu0 0.0
    %v158 = vand.u32 %v106, 4294901760
    %159 = vmatpush1.msra.mxu0 %v158
    %160 = vmatprep.subr.mxu0 0.0
    %v161 = vand.u32 %v107, 4294901760
    %162 = vmatpush1.msra.mxu0 %v161
    %163 = vmatprep.subr.mxu0 0.0
    %164 = vmatpush1.msra.mxu0 0.0
    %165 = vmatprep.subr.mxu0 0.0
    %166 = vmatpush1.msra.mxu0 0.0
    %167 = vmatprep.subr.mxu0 0.0
    %168 = vmatpush1.msra.mxu0 0.0
    %169 = vmatprep.subr.mxu0 0.0
    %170 = vmatpush1.msra.mxu0 0.0
    %171 = vmatprep.subr.mxu0 0.0
    %172 = vmatpush1.msra.mxu0 0.0
    %173 = vmatprep.subr.mxu0 0.0
    %174 = vmatpush1.msra.mxu0 0.0
    %175 = vmatprep.subr.mxu0 0.0
    %176 = vmatpush1.msra.mxu0 0.0
    %177 = vmatprep.subr.mxu0 0.0
    %178 = vmatpush1.msra.mxu0 0.0
    %179 = vmatprep.subr.mxu0 0.0
    %180 = vmatpush1.msra.mxu0 0.0
    %181 = vmatprep.subr.mxu0 0.0
    %182 = vmatpush1.msra.mxu0 0.0
    %183 = vmatprep.subr.mxu0 0.0
    %184 = vmatpush1.msra.mxu0 0.0
    %185 = vmatprep.subr.mxu0 0.0
    %186 = vmatpush1.msra.mxu0 0.0
    %187 = vmatprep.subr.mxu0 0.0
    %188 = vmatpush1.msra.mxu0 0.0
    %189 = vmatprep.subr.mxu0 0.0
    %190 = vmatpush1.msra.mxu0 0.0
    %191 = vmatprep.subr.mxu0 0.0
    %192 = vmatpush1.msra.mxu0 0.0
    %193 = vmatprep.subr.mxu0 0.0
    %194 = vmatpush1.msra.mxu0 0.0
    %195 = vmatprep.mubr.f32.mxu0 0.0
    %v196 = vand.u32 %v91, 4294901760
    %v197 = vsub.f32 %v91, %v196
    %v198 = vand.u32 %v197, 4294901760
    %v199 = vsub.f32 %v197, %v198
    %v200 = vand.u32 %v199, 4294901760
    %201 = vmatmul.mubr.f32.gmra.mrb[0].mxu0 %v200
    %v202 = vpop.f32.mrb[0].mxu0
    %v203 = vadd.f32 %v113, %v202
    %v204 = vpop.f32.mrb[0].mxu0
    %205 = vdwg.mxu0
    %206 = vmatprep.subr.mxu0 0.0
    %v207 = vand.u32 %v92, 4294901760
    %v208 = vsub.f32 %v92, %v207
    %v209 = vand.u32 %v208, 4294901760
    %v210 = vsub.f32 %v208, %v209
    %v211 = vand.u32 %v210, 4294901760
    %212 = vmatpush1.msra.mxu0 %v211
    %213 = vmatprep.subr.mxu0 0.0
    %v214 = vand.u32 %v93, 4294901760
    %v215 = vsub.f32 %v93, %v214
    %v216 = vand.u32 %v215, 4294901760
    %v217 = vsub.f32 %v215, %v216
    %v218 = vand.u32 %v217, 4294901760
    %219 = vmatpush1.msra.mxu0 %v218
    %220 = vmatprep.subr.mxu0 0.0
    %v221 = vand.u32 %v94, 4294901760
    %v222 = vsub.f32 %v94, %v221
    %v223 = vand.u32 %v222, 4294901760
    %v224 = vsub.f32 %v222, %v223
    %v225 = vand.u32 %v224, 4294901760
    %226 = vmatpush1.msra.mxu0 %v225
    %227 = vmatprep.subr.mxu0 0.0
    %v228 = vand.u32 %v95, 4294901760
    %v229 = vsub.f32 %v95, %v228
    %v230 = vand.u32 %v229, 4294901760
    %v231 = vsub.f32 %v229, %v230
    %v232 = vand.u32 %v231, 4294901760
    %233 = vmatpush1.msra.mxu0 %v232
    %234 = vmatprep.subr.mxu0 0.0
    %v235 = vand.u32 %v96, 4294901760
    %v236 = vsub.f32 %v96, %v235
    %v237 = vand.u32 %v236, 4294901760
    %v238 = vsub.f32 %v236, %v237
    %v239 = vand.u32 %v238, 4294901760
    %240 = vmatpush1.msra.mxu0 %v239
    %241 = vmatprep.subr.mxu0 0.0
    %v242 = vand.u32 %v97, 4294901760
    %v243 = vsub.f32 %v97, %v242
    %v244 = vand.u32 %v243, 4294901760
    %v245 = vsub.f32 %v243, %v244
    %v246 = vand.u32 %v245, 4294901760
    %247 = vmatpush1.msra.mxu0 %v246
    %248 = vmatprep.subr.mxu0 0.0
    %v249 = vand.u32 %v98, 4294901760
    %v250 = vsub.f32 %v98, %v249
    %v251 = vand.u32 %v250, 4294901760
    %v252 = vsub.f32 %v250, %v251
    %v253 = vand.u32 %v252, 4294901760
    %254 = vmatpush1.msra.mxu0 %v253
    %255 = vmatprep.subr.mxu0 0.0
    %v256 = vand.u32 %v99, 4294901760
    %v257 = vsub.f32 %v99, %v256
    %v258 = vand.u32 %v257, 4294901760
    %v259 = vsub.f32 %v257, %v258
    %v260 = vand.u32 %v259, 4294901760
    %261 = vmatpush1.msra.mxu0 %v260
    %262 = vmatprep.subr.mxu0 0.0
    %v263 = vand.u32 %v100, 4294901760
    %v264 = vsub.f32 %v100, %v263
    %v265 = vand.u32 %v264, 4294901760
    %v266 = vsub.f32 %v264, %v265
    %v267 = vand.u32 %v266, 4294901760
    %268 = vmatpush1.msra.mxu0 %v267
    %269 = vmatprep.subr.mxu0 0.0
    %v270 = vand.u32 %v101, 4294901760
    %v271 = vsub.f32 %v101, %v270
    %v272 = vand.u32 %v271, 4294901760
    %v273 = vsub.f32 %v271, %v272
    %v274 = vand.u32 %v273, 4294901760
    %275 = vmatpush1.msra.mxu0 %v274
    %276 = vmatprep.subr.mxu0 0.0
    %v277 = vand.u32 %v102, 4294901760
    %v278 = vsub.f32 %v102, %v277
    %v279 = vand.u32 %v278, 4294901760
    %v280 = vsub.f32 %v278, %v279
    %v281 = vand.u32 %v280, 4294901760
    %282 = vmatpush1.msra.mxu0 %v281
    %283 = vmatprep.subr.mxu0 0.0
    %v284 = vand.u32 %v103, 4294901760
    %v285 = vsub.f32 %v103, %v284
    %v286 = vand.u32 %v285, 4294901760
    %v287 = vsub.f32 %v285, %v286
    %v288 = vand.u32 %v287, 4294901760
    %289 = vmatpush1.msra.mxu0 %v288
    %290 = vmatprep.subr.mxu0 0.0
    %v291 = vand.u32 %v104, 4294901760
    %v292 = vsub.f32 %v104, %v291
    %v293 = vand.u32 %v292, 4294901760
    %v294 = vsub.f32 %v292, %v293
    %v295 = vand.u32 %v294, 4294901760
    %296 = vmatpush1.msra.mxu0 %v295
    %297 = vmatprep.subr.mxu0 0.0
    %v298 = vand.u32 %v105, 4294901760
    %v299 = vsub.f32 %v105, %v298
    %v300 = vand.u32 %v299, 4294901760
    %v301 = vsub.f32 %v299, %v300
    %v302 = vand.u32 %v301, 4294901760
    %303 = vmatpush1.msra.mxu0 %v302
    %304 = vmatprep.subr.mxu0 0.0
    %v305 = vand.u32 %v106, 4294901760
    %v306 = vsub.f32 %v106, %v305
    %v307 = vand.u32 %v306, 4294901760
    %v308 = vsub.f32 %v306, %v307
    %v309 = vand.u32 %v308, 4294901760
    %310 = vmatpush1.msra.mxu0 %v309
    %311 = vmatprep.subr.mxu0 0.0
    %v312 = vand.u32 %v107, 4294901760
    %v313 = vsub.f32 %v107, %v312
    %v314 = vand.u32 %v313, 4294901760
    %v315 = vsub.f32 %v313, %v314
    %v316 = vand.u32 %v315, 4294901760
    %317 = vmatpush1.msra.mxu0 %v316
    %318 = vmatprep.subr.mxu0 0.0
    %319 = vmatpush1.msra.mxu0 0.0
    %320 = vmatprep.subr.mxu0 0.0
    %321 = vmatpush1.msra.mxu0 0.0
    %322 = vmatprep.subr.mxu0 0.0
    %323 = vmatpush1.msra.mxu0 0.0
    %324 = vmatprep.subr.mxu0 0.0
    %325 = vmatpush1.msra.mxu0 0.0
    %326 = vmatprep.subr.mxu0 0.0
    %327 = vmatpush1.msra.mxu0 0.0
    %328 = vmatprep.subr.mxu0 0.0
    %329 = vmatpush1.msra.mxu0 0.0
    %330 = vmatprep.subr.mxu0 0.0
    %331 = vmatpush1.msra.mxu0 0.0
    %332 = vmatprep.subr.mxu0 0.0
    %333 = vmatpush1.msra.mxu0 0.0
    %334 = vmatprep.subr.mxu0 0.0
    %335 = vmatpush1.msra.mxu0 0.0
    %336 = vmatprep.subr.mxu0 0.0
    %337 = vmatpush1.msra.mxu0 0.0
    %338 = vmatprep.subr.mxu0 0.0
    %339 = vmatpush1.msra.mxu0 0.0
    %340 = vmatprep.subr.mxu0 0.0
    %341 = vmatpush1.msra.mxu0 0.0
    %342 = vmatprep.subr.mxu0 0.0
    %343 = vmatpush1.msra.mxu0 0.0
    %344 = vmatprep.subr.mxu0 0.0
    %345 = vmatpush1.msra.mxu0 0.0
    %346 = vmatprep.subr.mxu0 0.0
    %347 = vmatpush1.msra.mxu0 0.0
    %348 = vmatprep.subr.mxu0 0.0
    %349 = vmatpush1.msra.mxu0 0.0
    %350 = vmatprep.mubr.f32.mxu0 0.0
    %v351 = vand.u32 %v91, 4294901760
    %352 = vmatmul.mubr.f32.gmra.mrb[0].mxu0 %v351
    %v353 = vpop.f32.mrb[0].mxu0
    %v354 = vadd.f32 %v203, %v353
    %v355 = vpop.f32.mrb[0].mxu0
    %356 = vdwg.mxu0
    %357 = vmatprep.subr.mxu0 0.0
    %v358 = vand.u32 %v92, 4294901760
    %v359 = vsub.f32 %v92, %v358
    %360 = vmatpush1.msra.mxu0 %v359
    %361 = vmatprep.subr.mxu0 0.0
    %v362 = vand.u32 %v93, 4294901760
    %v363 = vsub.f32 %v93, %v362
    %364 = vmatpush1.msra.mxu0 %v363
    %365 = vmatprep.subr.mxu0 0.0
    %v366 = vand.u32 %v94, 4294901760
    %v367 = vsub.f32 %v94, %v366
    %368 = vmatpush1.msra.mxu0 %v367
    %369 = vmatprep.subr.mxu0 0.0
    %v370 = vand.u32 %v95, 4294901760
    %v371 = vsub.f32 %v95, %v370
    %372 = vmatpush1.msra.mxu0 %v371
    %373 = vmatprep.subr.mxu0 0.0
    %v374 = vand.u32 %v96, 4294901760
    %v375 = vsub.f32 %v96, %v374
    %376 = vmatpush1.msra.mxu0 %v375
    %377 = vmatprep.subr.mxu0 0.0
    %v378 = vand.u32 %v97, 4294901760
    %v379 = vsub.f32 %v97, %v378
    %380 = vmatpush1.msra.mxu0 %v379
    %381 = vmatprep.subr.mxu0 0.0
    %v382 = vand.u32 %v98, 4294901760
    %v383 = vsub.f32 %v98, %v382
    %384 = vmatpush1.msra.mxu0 %v383
    %385 = vmatprep.subr.mxu0 0.0
    %v386 = vand.u32 %v99, 4294901760
    %v387 = vsub.f32 %v99, %v386
    %388 = vmatpush1.msra.mxu0 %v387
    %389 = vmatprep.subr.mxu0 0.0
    %v390 = vand.u32 %v100, 4294901760
    %v391 = vsub.f32 %v100, %v390
    %392 = vmatpush1.msra.mxu0 %v391
    %393 = vmatprep.subr.mxu0 0.0
    %v394 = vand.u32 %v101, 4294901760
    %v395 = vsub.f32 %v101, %v394
    %396 = vmatpush1.msra.mxu0 %v395
    %397 = vmatprep.subr.mxu0 0.0
    %v398 = vand.u32 %v102, 4294901760
    %v399 = vsub.f32 %v102, %v398
    %400 = vmatpush1.msra.mxu0 %v399
    %401 = vmatprep.subr.mxu0 0.0
    %v402 = vand.u32 %v103, 4294901760
    %v403 = vsub.f32 %v103, %v402
    %404 = vmatpush1.msra.mxu0 %v403
    %405 = vmatprep.subr.mxu0 0.0
    %v406 = vand.u32 %v104, 4294901760
    %v407 = vsub.f32 %v104, %v406
    %408 = vmatpush1.msra.mxu0 %v407
    %409 = vmatprep.subr.mxu0 0.0
    %v410 = vand.u32 %v105, 4294901760
    %v411 = vsub.f32 %v105, %v410
    %412 = vmatpush1.msra.mxu0 %v411
    %413 = vmatprep.subr.mxu0 0.0
    %v414 = vand.u32 %v106, 4294901760
    %v415 = vsub.f32 %v106, %v414
    %416 = vmatpush1.msra.mxu0 %v415
    %417 = vmatprep.subr.mxu0 0.0
    %v418 = vand.u32 %v107, 4294901760
    %v419 = vsub.f32 %v107, %v418
    %420 = vmatpush1.msra.mxu0 %v419
    %421 = vmatprep.subr.mxu0 0.0
    %422 = vmatpush1.msra.mxu0 0.0
    %423 = vmatprep.subr.mxu0 0.0
    %424 = vmatpush1.msra.mxu0 0.0
    %425 = vmatprep.subr.mxu0 0.0
    %426 = vmatpush1.msra.mxu0 0.0
    %427 = vmatprep.subr.mxu0 0.0
    %428 = vmatpush1.msra.mxu0 0.0
    %429 = vmatprep.subr.mxu0 0.0
    %430 = vmatpush1.msra.mxu0 0.0
    %431 = vmatprep.subr.mxu0 0.0
    %432 = vmatpush1.msra.mxu0 0.0
    %433 = vmatprep.subr.mxu0 0.0
    %434 = vmatpush1.msra.mxu0 0.0
    %435 = vmatprep.subr.mxu0 0.0
    %436 = vmatpush1.msra.mxu0 0.0
    %437 = vmatprep.subr.mxu0 0.0
    %438 = vmatpush1.msra.mxu0 0.0
    %439 = vmatprep.subr.mxu0 0.0
    %440 = vmatpush1.msra.mxu0 0.0
    %441 = vmatprep.subr.mxu0 0.0
    %442 = vmatpush1.msra.mxu0 0.0
    %443 = vmatprep.subr.mxu0 0.0
    %444 = vmatpush1.msra.mxu0 0.0
    %445 = vmatprep.subr.mxu0 0.0
    %446 = vmatpush1.msra.mxu0 0.0
    %447 = vmatprep.subr.mxu0 0.0
    %448 = vmatpush1.msra.mxu0 0.0
    %449 = vmatprep.subr.mxu0 0.0
    %450 = vmatpush1.msra.mxu0 0.0
    %451 = vmatprep.subr.mxu0 0.0
    %452 = vmatpush1.msra.mxu0 0.0
    %453 = vmatprep.mubr.f32.mxu0 0.0
    %v454 = vand.u32 %v91, 4294901760
    %v455 = vsub.f32 %v91, %v454
    %456 = vmatmul.mubr.f32.gmra.mrb[0].mxu0 %v455
    %v457 = vpop.f32.mrb[0].mxu0
    %v458 = vadd.f32 %v354, %v457
    %v459 = vpop.f32.mrb[0].mxu0
    %460 = vdwg.mxu0
    %461 = vmatprep.subr.mxu0 0.0
    %v462 = vand.u32 %v92, 4294901760
    %463 = vmatpush1.msra.mxu0 %v462
    %464 = vmatprep.subr.mxu0 0.0
    %v465 = vand.u32 %v93, 4294901760
    %466 = vmatpush1.msra.mxu0 %v465
    %467 = vmatprep.subr.mxu0 0.0
    %v468 = vand.u32 %v94, 4294901760
    %469 = vmatpush1.msra.mxu0 %v468
    %470 = vmatprep.subr.mxu0 0.0
    %v471 = vand.u32 %v95, 4294901760
    %472 = vmatpush1.msra.mxu0 %v471
    %473 = vmatprep.subr.mxu0 0.0
    %v474 = vand.u32 %v96, 4294901760
    %475 = vmatpush1.msra.mxu0 %v474
    %476 = vmatprep.subr.mxu0 0.0
    %v477 = vand.u32 %v97, 4294901760
    %478 = vmatpush1.msra.mxu0 %v477
    %479 = vmatprep.subr.mxu0 0.0
    %v480 = vand.u32 %v98, 4294901760
    %481 = vmatpush1.msra.mxu0 %v480
    %482 = vmatprep.subr.mxu0 0.0
    %v483 = vand.u32 %v99, 4294901760
    %484 = vmatpush1.msra.mxu0 %v483
    %485 = vmatprep.subr.mxu0 0.0
    %v486 = vand.u32 %v100, 4294901760
    %487 = vmatpush1.msra.mxu0 %v486
    %488 = vmatprep.subr.mxu0 0.0
    %v489 = vand.u32 %v101, 4294901760
    %490 = vmatpush1.msra.mxu0 %v489
    %491 = vmatprep.subr.mxu0 0.0
    %v492 = vand.u32 %v102, 4294901760
    %493 = vmatpush1.msra.mxu0 %v492
    %494 = vmatprep.subr.mxu0 0.0
    %v495 = vand.u32 %v103, 4294901760
    %496 = vmatpush1.msra.mxu0 %v495
    %497 = vmatprep.subr.mxu0 0.0
    %v498 = vand.u32 %v104, 4294901760
    %499 = vmatpush1.msra.mxu0 %v498
    %500 = vmatprep.subr.mxu0 0.0
    %v501 = vand.u32 %v105, 4294901760
    %502 = vmatpush1.msra.mxu0 %v501
    %503 = vmatprep.subr.mxu0 0.0
    %v504 = vand.u32 %v106, 4294901760
    %505 = vmatpush1.msra.mxu0 %v504
    %506 = vmatprep.subr.mxu0 0.0
    %v507 = vand.u32 %v107, 4294901760
    %508 = vmatpush1.msra.mxu0 %v507
    %509 = vmatprep.subr.mxu0 0.0
    %510 = vmatpush1.msra.mxu0 0.0
    %511 = vmatprep.subr.mxu0 0.0
    %512 = vmatpush1.msra.mxu0 0.0
    %513 = vmatprep.subr.mxu0 0.0
    %514 = vmatpush1.msra.mxu0 0.0
    %515 = vmatprep.subr.mxu0 0.0
    %516 = vmatpush1.msra.mxu0 0.0
    %517 = vmatprep.subr.mxu0 0.0
    %518 = vmatpush1.msra.mxu0 0.0
    %519 = vmatprep.subr.mxu0 0.0
    %520 = vmatpush1.msra.mxu0 0.0
    %521 = vmatprep.subr.mxu0 0.0
    %522 = vmatpush1.msra.mxu0 0.0
    %523 = vmatprep.subr.mxu0 0.0
    %524 = vmatpush1.msra.mxu0 0.0
    %525 = vmatprep.subr.mxu0 0.0
    %526 = vmatpush1.msra.mxu0 0.0
    %527 = vmatprep.subr.mxu0 0.0
    %528 = vmatpush1.msra.mxu0 0.0
    %529 = vmatprep.subr.mxu0 0.0
    %530 = vmatpush1.msra.mxu0 0.0
    %531 = vmatprep.subr.mxu0 0.0
    %532 = vmatpush1.msra.mxu0 0.0
    %533 = vmatprep.subr.mxu0 0.0
    %534 = vmatpush1.msra.mxu0 0.0
    %535 = vmatprep.subr.mxu0 0.0
    %536 = vmatpush1.msra.mxu0 0.0
    %537 = vmatprep.subr.mxu0 0.0
    %538 = vmatpush1.msra.mxu0 0.0
    %539 = vmatprep.subr.mxu0 0.0
    %540 = vmatpush1.msra.mxu0 0.0
    %541 = vmatprep.mubr.f32.mxu0 0.0
    %v542 = vand.u32 %v91, 4294901760
    %v543 = vsub.f32 %v91, %v542
    %v544 = vand.u32 %v543, 4294901760
    %545 = vmatmul.mubr.f32.gmra.mrb[0].mxu0 %v544
    %v546 = vpop.f32.mrb[0].mxu0
    %v547 = vadd.f32 %v458, %v546
    %v548 = vpop.f32.mrb[0].mxu0
    %549 = vdwg.mxu0
    %550 = vmatprep.subr.mxu0 0.0
    %v551 = vand.u32 %v92, 4294901760
    %v552 = vsub.f32 %v92, %v551
    %v553 = vand.u32 %v552, 4294901760
    %554 = vmatpush1.msra.mxu0 %v553
    %555 = vmatprep.subr.mxu0 0.0
    %v556 = vand.u32 %v93, 4294901760
    %v557 = vsub.f32 %v93, %v556
    %v558 = vand.u32 %v557, 4294901760
    %559 = vmatpush1.msra.mxu0 %v558
    %560 = vmatprep.subr.mxu0 0.0
    %v561 = vand.u32 %v94, 4294901760
    %v562 = vsub.f32 %v94, %v561
    %v563 = vand.u32 %v562, 4294901760
    %564 = vmatpush1.msra.mxu0 %v563
    %565 = vmatprep.subr.mxu0 0.0
    %v566 = vand.u32 %v95, 4294901760
    %v567 = vsub.f32 %v95, %v566
    %v568 = vand.u32 %v567, 4294901760
    %569 = vmatpush1.msra.mxu0 %v568
    %570 = vmatprep.subr.mxu0 0.0
    %v571 = vand.u32 %v96, 4294901760
    %v572 = vsub.f32 %v96, %v571
    %v573 = vand.u32 %v572, 4294901760
    %574 = vmatpush1.msra.mxu0 %v573
    %575 = vmatprep.subr.mxu0 0.0
    %v576 = vand.u32 %v97, 4294901760
    %v577 = vsub.f32 %v97, %v576
    %v578 = vand.u32 %v577, 4294901760
    %579 = vmatpush1.msra.mxu0 %v578
    %580 = vmatprep.subr.mxu0 0.0
    %v581 = vand.u32 %v98, 4294901760
    %v582 = vsub.f32 %v98, %v581
    %v583 = vand.u32 %v582, 4294901760
    %584 = vmatpush1.msra.mxu0 %v583
    %585 = vmatprep.subr.mxu0 0.0
    %v586 = vand.u32 %v99, 4294901760
    %v587 = vsub.f32 %v99, %v586
    %v588 = vand.u32 %v587, 4294901760
    %589 = vmatpush1.msra.mxu0 %v588
    %590 = vmatprep.subr.mxu0 0.0
    %v591 = vand.u32 %v100, 4294901760
    %v592 = vsub.f32 %v100, %v591
    %v593 = vand.u32 %v592, 4294901760
    %594 = vmatpush1.msra.mxu0 %v593
    %595 = vmatprep.subr.mxu0 0.0
    %v596 = vand.u32 %v101, 4294901760
    %v597 = vsub.f32 %v101, %v596
    %v598 = vand.u32 %v597, 4294901760
    %599 = vmatpush1.msra.mxu0 %v598
    %600 = vmatprep.subr.mxu0 0.0
    %v601 = vand.u32 %v102, 4294901760
    %v602 = vsub.f32 %v102, %v601
    %v603 = vand.u32 %v602, 4294901760
    %604 = vmatpush1.msra.mxu0 %v603
    %605 = vmatprep.subr.mxu0 0.0
    %v606 = vand.u32 %v103, 4294901760
    %v607 = vsub.f32 %v103, %v606
    %v608 = vand.u32 %v607, 4294901760
    %609 = vmatpush1.msra.mxu0 %v608
    %610 = vmatprep.subr.mxu0 0.0
    %v611 = vand.u32 %v104, 4294901760
    %v612 = vsub.f32 %v104, %v611
    %v613 = vand.u32 %v612, 4294901760
    %614 = vmatpush1.msra.mxu0 %v613
    %615 = vmatprep.subr.mxu0 0.0
    %v616 = vand.u32 %v105, 4294901760
    %v617 = vsub.f32 %v105, %v616
    %v618 = vand.u32 %v617, 4294901760
    %619 = vmatpush1.msra.mxu0 %v618
    %620 = vmatprep.subr.mxu0 0.0
    %v621 = vand.u32 %v106, 4294901760
    %v622 = vsub.f32 %v106, %v621
    %v623 = vand.u32 %v622, 4294901760
    %624 = vmatpush1.msra.mxu0 %v623
    %625 = vmatprep.subr.mxu0 0.0
    %v626 = vand.u32 %v107, 4294901760
    %v627 = vsub.f32 %v107, %v626
    %v628 = vand.u32 %v627, 4294901760
    %629 = vmatpush1.msra.mxu0 %v628
    %630 = vmatprep.subr.mxu0 0.0
    %631 = vmatpush1.msra.mxu0 0.0
    %632 = vmatprep.subr.mxu0 0.0
    %633 = vmatpush1.msra.mxu0 0.0
    %634 = vmatprep.subr.mxu0 0.0
    %635 = vmatpush1.msra.mxu0 0.0
    %636 = vmatprep.subr.mxu0 0.0
    %637 = vmatpush1.msra.mxu0 0.0
    %638 = vmatprep.subr.mxu0 0.0
    %639 = vmatpush1.msra.mxu0 0.0
    %640 = vmatprep.subr.mxu0 0.0
    %641 = vmatpush1.msra.mxu0 0.0
    %642 = vmatprep.subr.mxu0 0.0
    %643 = vmatpush1.msra.mxu0 0.0
    %644 = vmatprep.subr.mxu0 0.0
    %645 = vmatpush1.msra.mxu0 0.0
    %646 = vmatprep.subr.mxu0 0.0
    %647 = vmatpush1.msra.mxu0 0.0
    %648 = vmatprep.subr.mxu0 0.0
    %649 = vmatpush1.msra.mxu0 0.0
    %650 = vmatprep.subr.mxu0 0.0
    %651 = vmatpush1.msra.mxu0 0.0
    %652 = vmatprep.subr.mxu0 0.0
    %653 = vmatpush1.msra.mxu0 0.0
    %654 = vmatprep.subr.mxu0 0.0
    %655 = vmatpush1.msra.mxu0 0.0
    %656 = vmatprep.subr.mxu0 0.0
    %657 = vmatpush1.msra.mxu0 0.0
    %658 = vmatprep.subr.mxu0 0.0
    %659 = vmatpush1.msra.mxu0 0.0
    %660 = vmatprep.subr.mxu0 0.0
    %661 = vmatpush1.msra.mxu0 0.0
    %662 = vmatprep.mubr.f32.mxu0 0.0
    %v663 = vand.u32 %v91, 4294901760
    %664 = vmatmul.mubr.f32.gmra.mrb[0].mxu0 %v663
    %v665 = vpop.f32.mrb[0].mxu0
    %v666 = vadd.f32 %v547, %v665
    %v667 = vpop.f32.mrb[0].mxu0
    %668 = vdwg.mxu0
    %669 = vmatprep.subr.mxu0 0.0
    %v670 = vand.u32 %v92, 4294901760
    %671 = vmatpush1.msra.mxu0 %v670
    %672 = vmatprep.subr.mxu0 0.0
    %v673 = vand.u32 %v93, 4294901760
    %674 = vmatpush1.msra.mxu0 %v673
    %675 = vmatprep.subr.mxu0 0.0
    %v676 = vand.u32 %v94, 4294901760
    %677 = vmatpush1.msra.mxu0 %v676
    %678 = vmatprep.subr.mxu0 0.0
    %v679 = vand.u32 %v95, 4294901760
    %680 = vmatpush1.msra.mxu0 %v679
    %681 = vmatprep.subr.mxu0 0.0
    %v682 = vand.u32 %v96, 4294901760
    %683 = vmatpush1.msra.mxu0 %v682
    %684 = vmatprep.subr.mxu0 0.0
    %v685 = vand.u32 %v97, 4294901760
    %686 = vmatpush1.msra.mxu0 %v685
    %687 = vmatprep.subr.mxu0 0.0
    %v688 = vand.u32 %v98, 4294901760
    %689 = vmatpush1.msra.mxu0 %v688
    %690 = vmatprep.subr.mxu0 0.0
    %v691 = vand.u32 %v99, 4294901760
    %692 = vmatpush1.msra.mxu0 %v691
    %693 = vmatprep.subr.mxu0 0.0
    %v694 = vand.u32 %v100, 4294901760
    %695 = vmatpush1.msra.mxu0 %v694
    %696 = vmatprep.subr.mxu0 0.0
    %v697 = vand.u32 %v101, 4294901760
    %698 = vmatpush1.msra.mxu0 %v697
    %699 = vmatprep.subr.mxu0 0.0
    %v700 = vand.u32 %v102, 4294901760
    %701 = vmatpush1.msra.mxu0 %v700
    %702 = vmatprep.subr.mxu0 0.0
    %v703 = vand.u32 %v103, 4294901760
    %704 = vmatpush1.msra.mxu0 %v703
    %705 = vmatprep.subr.mxu0 0.0
    %v706 = vand.u32 %v104, 4294901760
    %707 = vmatpush1.msra.mxu0 %v706
    %708 = vmatprep.subr.mxu0 0.0
    %v709 = vand.u32 %v105, 4294901760
    %710 = vmatpush1.msra.mxu0 %v709
    %711 = vmatprep.subr.mxu0 0.0
    %v712 = vand.u32 %v106, 4294901760
    %713 = vmatpush1.msra.mxu0 %v712
    %714 = vmatprep.subr.mxu0 0.0
    %v715 = vand.u32 %v107, 4294901760
    %716 = vmatpush1.msra.mxu0 %v715
    %717 = vmatprep.subr.mxu0 0.0
    %718 = vmatpush1.msra.mxu0 0.0
    %719 = vmatprep.subr.mxu0 0.0
    %720 = vmatpush1.msra.mxu0 0.0
    %721 = vmatprep.subr.mxu0 0.0
    %722 = vmatpush1.msra.mxu0 0.0
    %723 = vmatprep.subr.mxu0 0.0
    %724 = vmatpush1.msra.mxu0 0.0
    %725 = vmatprep.subr.mxu0 0.0
    %726 = vmatpush1.msra.mxu0 0.0
    %727 = vmatprep.subr.mxu0 0.0
    %728 = vmatpush1.msra.mxu0 0.0
    %729 = vmatprep.subr.mxu0 0.0
    %730 = vmatpush1.msra.mxu0 0.0
    %731 = vmatprep.subr.mxu0 0.0
    %732 = vmatpush1.msra.mxu0 0.0
    %733 = vmatprep.subr.mxu0 0.0
    %734 = vmatpush1.msra.mxu0 0.0
    %735 = vmatprep.subr.mxu0 0.0
    %736 = vmatpush1.msra.mxu0 0.0
    %737 = vmatprep.subr.mxu0 0.0
    %738 = vmatpush1.msra.mxu0 0.0
    %739 = vmatprep.subr.mxu0 0.0
    %740 = vmatpush1.msra.mxu0 0.0
    %741 = vmatprep.subr.mxu0 0.0
    %742 = vmatpush1.msra.mxu0 0.0
    %743 = vmatprep.subr.mxu0 0.0
    %744 = vmatpush1.msra.mxu0 0.0
    %745 = vmatprep.subr.mxu0 0.0
    %746 = vmatpush1.msra.mxu0 0.0
    %747 = vmatprep.subr.mxu0 0.0
    %748 = vmatpush1.msra.mxu0 0.0
    %749 = vmatprep.mubr.f32.mxu0 0.0
    %v750 = vand.u32 %v91, 4294901760
    %751 = vmatmul.mubr.f32.gmra.mrb[0].mxu0 %v750
    %v752 = vpop.f32.mrb[0].mxu0
    %v753 = vadd.f32 %v666, %v752
    %v754 = vpop.f32.mrb[0].mxu0
    %755 = vdwg.mxu0
    %v756 = vmul.f32 %v753, %v753
    %v758 = vrot.slane %v753, 1
    %v760 = vadd.f32 %v753, %v758
    %v762 = vrot.slane %v756, 1
    %v764 = vadd.f32 %v756, %v762
    %v766 = vrot.slane %v764, 7
    %vm768 = vcmask 1040384
    %v769 = vsel %vm768, %v760, %v766
    %v770 = vld [vmem:[%s3] sm:$0xff]
    %v771 = vld [vmem:[%s3 + $0x8] sm:$0xff]
    %v772 = vld [vmem:[%s3 + $0x10] sm:$0xff]
    %v773 = vld [vmem:[%s3 + $0x18] sm:$0xff]
    %v774 = vld [vmem:[%s3 + $0x20] sm:$0xff]
    %v775 = vld [vmem:[%s3 + $0x28] sm:$0xff]
    %v776 = vld [vmem:[%s3 + $0x30] sm:$0xff]
    %v777 = vld [vmem:[%s3 + $0x38] sm:$0xff]
    %v778 = vld [vmem:[%s3 + $0x40] sm:$0xff]
    %v779 = vld [vmem:[%s3 + $0x48] sm:$0xff]
    %v780 = vld [vmem:[%s3 + $0x50] sm:$0xff]
    %v781 = vld [vmem:[%s3 + $0x58] sm:$0xff]
    %v782 = vld [vmem:[%s3 + $0x60] sm:$0xff]
    %v783 = vld [vmem:[%s3 + $0x68] sm:$0xff]
    %v784 = vld [vmem:[%s3 + $0x70] sm:$0xff]
    %v785 = vld [vmem:[%s3 + $0x78] sm:$0xff]
    %786 = vmatprep.subr.mxu0 0.0
    %v787 = vand.u32 %v770, 4294901760
    %788 = vmatpush1.msra.mxu0 %v787
    %789 = vmatprep.subr.mxu0 0.0
    %v790 = vand.u32 %v771, 4294901760
    %791 = vmatpush1.msra.mxu0 %v790
    %792 = vmatprep.subr.mxu0 0.0
    %v793 = vand.u32 %v772, 4294901760
    %794 = vmatpush1.msra.mxu0 %v793
    %795 = vmatprep.subr.mxu0 0.0
    %v796 = vand.u32 %v773, 4294901760
    %797 = vmatpush1.msra.mxu0 %v796
    %798 = vmatprep.subr.mxu0 0.0
    %v799 = vand.u32 %v774, 4294901760
    %800 = vmatpush1.msra.mxu0 %v799
    %801 = vmatprep.subr.mxu0 0.0
    %v802 = vand.u32 %v775, 4294901760
    %803 = vmatpush1.msra.mxu0 %v802
    %804 = vmatprep.subr.mxu0 0.0
    %v805 = vand.u32 %v776, 4294901760
    %806 = vmatpush1.msra.mxu0 %v805
    %807 = vmatprep.subr.mxu0 0.0
    %v808 = vand.u32 %v777, 4294901760
    %809 = vmatpush1.msra.mxu0 %v808
    %810 = vmatprep.subr.mxu0 0.0
    %v811 = vand.u32 %v778, 4294901760
    %812 = vmatpush1.msra.mxu0 %v811
    %813 = vmatprep.subr.mxu0 0.0
    %v814 = vand.u32 %v779, 4294901760
    %815 = vmatpush1.msra.mxu0 %v814
    %816 = vmatprep.subr.mxu0 0.0
    %v817 = vand.u32 %v780, 4294901760
    %818 = vmatpush1.msra.mxu0 %v817
    %819 = vmatprep.subr.mxu0 0.0
    %v820 = vand.u32 %v781, 4294901760
    %821 = vmatpush1.msra.mxu0 %v820
    %822 = vmatprep.subr.mxu0 0.0
    %v823 = vand.u32 %v782, 4294901760
    %824 = vmatpush1.msra.mxu0 %v823
    %825 = vmatprep.subr.mxu0 0.0
    %v826 = vand.u32 %v783, 4294901760
    %827 = vmatpush1.msra.mxu0 %v826
    %828 = vmatprep.subr.mxu0 0.0
    %v829 = vand.u32 %v784, 4294901760
    %830 = vmatpush1.msra.mxu0 %v829
    %831 = vmatprep.subr.mxu0 0.0
    %v832 = vand.u32 %v785, 4294901760
    %833 = vmatpush1.msra.mxu0 %v832
    %834 = vmatprep.subr.mxu0 0.0
    %835 = vmatpush1.msra.mxu0 0.0
    %836 = vmatprep.subr.mxu0 0.0
    %837 = vmatpush1.msra.mxu0 0.0
    %838 = vmatprep.subr.mxu0 0.0
    %839 = vmatpush1.msra.mxu0 0.0
    %840 = vmatprep.subr.mxu0 0.0
    %841 = vmatpush1.msra.mxu0 0.0
    %842 = vmatprep.subr.mxu0 0.0
    %843 = vmatpush1.msra.mxu0 0.0
    %844 = vmatprep.subr.mxu0 0.0
    %845 = vmatpush1.msra.mxu0 0.0
    %846 = vmatprep.subr.mxu0 0.0
    %847 = vmatpush1.msra.mxu0 0.0
    %848 = vmatprep.subr.mxu0 0.0
    %849 = vmatpush1.msra.mxu0 0.0
    %850 = vmatprep.subr.mxu0 0.0
    %851 = vmatpush1.msra.mxu0 0.0
    %852 = vmatprep.subr.mxu0 0.0
    %853 = vmatpush1.msra.mxu0 0.0
    %854 = vmatprep.subr.mxu0 0.0
    %855 = vmatpush1.msra.mxu0 0.0
    %856 = vmatprep.subr.mxu0 0.0
    %857 = vmatpush1.msra.mxu0 0.0
    %858 = vmatprep.subr.mxu0 0.0
    %859 = vmatpush1.msra.mxu0 0.0
    %860 = vmatprep.subr.mxu0 0.0
    %861 = vmatpush1.msra.mxu0 0.0
    %862 = vmatprep.subr.mxu0 0.0
    %863 = vmatpush1.msra.mxu0 0.0
    %864 = vmatprep.subr.mxu0 0.0
    %865 = vmatpush1.msra.mxu0 0.0
    %866 = vmatprep.mubr.f32.mxu0 0.0
    %v867 = vand.u32 %v769, 4294901760
    %v868 = vsub.f32 %v769, %v867
    %v869 = vand.u32 %v868, 4294901760
    %v870 = vsub.f32 %v868, %v869
    %v871 = vand.u32 %v870, 4294901760
    %872 = vmatmul.mubr.f32.gmra.mrb[0].mxu0 %v871
    %v873 = vpop.f32.mrb[0].mxu0
    %v874 = vadd.f32 0.0, %v873
    %v875 = vpop.f32.mrb[0].mxu0
    %876 = vdwg.mxu0
    %877 = vmatprep.subr.mxu0 0.0
    %v878 = vand.u32 %v770, 4294901760
    %v879 = vsub.f32 %v770, %v878
    %v880 = vand.u32 %v879, 4294901760
    %v881 = vsub.f32 %v879, %v880
    %v882 = vand.u32 %v881, 4294901760
    %883 = vmatpush1.msra.mxu0 %v882
    %884 = vmatprep.subr.mxu0 0.0
    %v885 = vand.u32 %v771, 4294901760
    %v886 = vsub.f32 %v771, %v885
    %v887 = vand.u32 %v886, 4294901760
    %v888 = vsub.f32 %v886, %v887
    %v889 = vand.u32 %v888, 4294901760
    %890 = vmatpush1.msra.mxu0 %v889
    %891 = vmatprep.subr.mxu0 0.0
    %v892 = vand.u32 %v772, 4294901760
    %v893 = vsub.f32 %v772, %v892
    %v894 = vand.u32 %v893, 4294901760
    %v895 = vsub.f32 %v893, %v894
    %v896 = vand.u32 %v895, 4294901760
    %897 = vmatpush1.msra.mxu0 %v896
    %898 = vmatprep.subr.mxu0 0.0
    %v899 = vand.u32 %v773, 4294901760
    %v900 = vsub.f32 %v773, %v899
    %v901 = vand.u32 %v900, 4294901760
    %v902 = vsub.f32 %v900, %v901
    %v903 = vand.u32 %v902, 4294901760
    %904 = vmatpush1.msra.mxu0 %v903
    %905 = vmatprep.subr.mxu0 0.0
    %v906 = vand.u32 %v774, 4294901760
    %v907 = vsub.f32 %v774, %v906
    %v908 = vand.u32 %v907, 4294901760
    %v909 = vsub.f32 %v907, %v908
    %v910 = vand.u32 %v909, 4294901760
    %911 = vmatpush1.msra.mxu0 %v910
    %912 = vmatprep.subr.mxu0 0.0
    %v913 = vand.u32 %v775, 4294901760
    %v914 = vsub.f32 %v775, %v913
    %v915 = vand.u32 %v914, 4294901760
    %v916 = vsub.f32 %v914, %v915
    %v917 = vand.u32 %v916, 4294901760
    %918 = vmatpush1.msra.mxu0 %v917
    %919 = vmatprep.subr.mxu0 0.0
    %v920 = vand.u32 %v776, 4294901760
    %v921 = vsub.f32 %v776, %v920
    %v922 = vand.u32 %v921, 4294901760
    %v923 = vsub.f32 %v921, %v922
    %v924 = vand.u32 %v923, 4294901760
    %925 = vmatpush1.msra.mxu0 %v924
    %926 = vmatprep.subr.mxu0 0.0
    %v927 = vand.u32 %v777, 4294901760
    %v928 = vsub.f32 %v777, %v927
    %v929 = vand.u32 %v928, 4294901760
    %v930 = vsub.f32 %v928, %v929
    %v931 = vand.u32 %v930, 4294901760
    %932 = vmatpush1.msra.mxu0 %v931
    %933 = vmatprep.subr.mxu0 0.0
    %v934 = vand.u32 %v778, 4294901760
    %v935 = vsub.f32 %v778, %v934
    %v936 = vand.u32 %v935, 4294901760
    %v937 = vsub.f32 %v935, %v936
    %v938 = vand.u32 %v937, 4294901760
    %939 = vmatpush1.msra.mxu0 %v938
    %940 = vmatprep.subr.mxu0 0.0
    %v941 = vand.u32 %v779, 4294901760
    %v942 = vsub.f32 %v779, %v941
    %v943 = vand.u32 %v942, 4294901760
    %v944 = vsub.f32 %v942, %v943
    %v945 = vand.u32 %v944, 4294901760
    %946 = vmatpush1.msra.mxu0 %v945
    %947 = vmatprep.subr.mxu0 0.0
    %v948 = vand.u32 %v780, 4294901760
    %v949 = vsub.f32 %v780, %v948
    %v950 = vand.u32 %v949, 4294901760
    %v951 = vsub.f32 %v949, %v950
    %v952 = vand.u32 %v951, 4294901760
    %953 = vmatpush1.msra.mxu0 %v952
    %954 = vmatprep.subr.mxu0 0.0
    %v955 = vand.u32 %v781, 4294901760
    %v956 = vsub.f32 %v781, %v955
    %v957 = vand.u32 %v956, 4294901760
    %v958 = vsub.f32 %v956, %v957
    %v959 = vand.u32 %v958, 4294901760
    %960 = vmatpush1.msra.mxu0 %v959
    %961 = vmatprep.subr.mxu0 0.0
    %v962 = vand.u32 %v782, 4294901760
    %v963 = vsub.f32 %v782, %v962
    %v964 = vand.u32 %v963, 4294901760
    %v965 = vsub.f32 %v963, %v964
    %v966 = vand.u32 %v965, 4294901760
    %967 = vmatpush1.msra.mxu0 %v966
    %968 = vmatprep.subr.mxu0 0.0
    %v969 = vand.u32 %v783, 4294901760
    %v970 = vsub.f32 %v783, %v969
    %v971 = vand.u32 %v970, 4294901760
    %v972 = vsub.f32 %v970, %v971
    %v973 = vand.u32 %v972, 4294901760
    %974 = vmatpush1.msra.mxu0 %v973
    %975 = vmatprep.subr.mxu0 0.0
    %v976 = vand.u32 %v784, 4294901760
    %v977 = vsub.f32 %v784, %v976
    %v978 = vand.u32 %v977, 4294901760
    %v979 = vsub.f32 %v977, %v978
    %v980 = vand.u32 %v979, 4294901760
    %981 = vmatpush1.msra.mxu0 %v980
    %982 = vmatprep.subr.mxu0 0.0
    %v983 = vand.u32 %v785, 4294901760
    %v984 = vsub.f32 %v785, %v983
    %v985 = vand.u32 %v984, 4294901760
    %v986 = vsub.f32 %v984, %v985
    %v987 = vand.u32 %v986, 4294901760
    %988 = vmatpush1.msra.mxu0 %v987
    %989 = vmatprep.subr.mxu0 0.0
    %990 = vmatpush1.msra.mxu0 0.0
    %991 = vmatprep.subr.mxu0 0.0
    %992 = vmatpush1.msra.mxu0 0.0
    %993 = vmatprep.subr.mxu0 0.0
    %994 = vmatpush1.msra.mxu0 0.0
    %995 = vmatprep.subr.mxu0 0.0
    %996 = vmatpush1.msra.mxu0 0.0
    %997 = vmatprep.subr.mxu0 0.0
    %998 = vmatpush1.msra.mxu0 0.0
    %999 = vmatprep.subr.mxu0 0.0
    %1000 = vmatpush1.msra.mxu0 0.0
    %1001 = vmatprep.subr.mxu0 0.0
    %1002 = vmatpush1.msra.mxu0 0.0
    %1003 = vmatprep.subr.mxu0 0.0
    %1004 = vmatpush1.msra.mxu0 0.0
    %1005 = vmatprep.subr.mxu0 0.0
    %1006 = vmatpush1.msra.mxu0 0.0
    %1007 = vmatprep.subr.mxu0 0.0
    %1008 = vmatpush1.msra.mxu0 0.0
    %1009 = vmatprep.subr.mxu0 0.0
    %1010 = vmatpush1.msra.mxu0 0.0
    %1011 = vmatprep.subr.mxu0 0.0
    %1012 = vmatpush1.msra.mxu0 0.0
    %1013 = vmatprep.subr.mxu0 0.0
    %1014 = vmatpush1.msra.mxu0 0.0
    %1015 = vmatprep.subr.mxu0 0.0
    %1016 = vmatpush1.msra.mxu0 0.0
    %1017 = vmatprep.subr.mxu0 0.0
    %1018 = vmatpush1.msra.mxu0 0.0
    %1019 = vmatprep.subr.mxu0 0.0
    %1020 = vmatpush1.msra.mxu0 0.0
    %1021 = vmatprep.mubr.f32.mxu0 0.0
    %v1022 = vand.u32 %v769, 4294901760
    %1023 = vmatmul.mubr.f32.gmra.mrb[0].mxu0 %v1022
    %v1024 = vpop.f32.mrb[0].mxu0
    %v1025 = vadd.f32 %v874, %v1024
    %v1026 = vpop.f32.mrb[0].mxu0
    %1027 = vdwg.mxu0
    %1028 = vmatprep.subr.mxu0 0.0
    %v1029 = vand.u32 %v770, 4294901760
    %v1030 = vsub.f32 %v770, %v1029
    %1031 = vmatpush1.msra.mxu0 %v1030
    %1032 = vmatprep.subr.mxu0 0.0
    %v1033 = vand.u32 %v771, 4294901760
    %v1034 = vsub.f32 %v771, %v1033
    %1035 = vmatpush1.msra.mxu0 %v1034
    %1036 = vmatprep.subr.mxu0 0.0
    %v1037 = vand.u32 %v772, 4294901760
    %v1038 = vsub.f32 %v772, %v1037
    %1039 = vmatpush1.msra.mxu0 %v1038
    %1040 = vmatprep.subr.mxu0 0.0
    %v1041 = vand.u32 %v773, 4294901760
    %v1042 = vsub.f32 %v773, %v1041
    %1043 = vmatpush1.msra.mxu0 %v1042
    %1044 = vmatprep.subr.mxu0 0.0
    %v1045 = vand.u32 %v774, 4294901760
    %v1046 = vsub.f32 %v774, %v1045
    %1047 = vmatpush1.msra.mxu0 %v1046
    %1048 = vmatprep.subr.mxu0 0.0
    %v1049 = vand.u32 %v775, 4294901760
    %v1050 = vsub.f32 %v775, %v1049
    %1051 = vmatpush1.msra.mxu0 %v1050
    %1052 = vmatprep.subr.mxu0 0.0
    %v1053 = vand.u32 %v776, 4294901760
    %v1054 = vsub.f32 %v776, %v1053
    %1055 = vmatpush1.msra.mxu0 %v1054
    %1056 = vmatprep.subr.mxu0 0.0
    %v1057 = vand.u32 %v777, 4294901760
    %v1058 = vsub.f32 %v777, %v1057
    %1059 = vmatpush1.msra.mxu0 %v1058
    %1060 = vmatprep.subr.mxu0 0.0
    %v1061 = vand.u32 %v778, 4294901760
    %v1062 = vsub.f32 %v778, %v1061
    %1063 = vmatpush1.msra.mxu0 %v1062
    %1064 = vmatprep.subr.mxu0 0.0
    %v1065 = vand.u32 %v779, 4294901760
    %v1066 = vsub.f32 %v779, %v1065
    %1067 = vmatpush1.msra.mxu0 %v1066
    %1068 = vmatprep.subr.mxu0 0.0
    %v1069 = vand.u32 %v780, 4294901760
    %v1070 = vsub.f32 %v780, %v1069
    %1071 = vmatpush1.msra.mxu0 %v1070
    %1072 = vmatprep.subr.mxu0 0.0
    %v1073 = vand.u32 %v781, 4294901760
    %v1074 = vsub.f32 %v781, %v1073
    %1075 = vmatpush1.msra.mxu0 %v1074
    %1076 = vmatprep.subr.mxu0 0.0
    %v1077 = vand.u32 %v782, 4294901760
    %v1078 = vsub.f32 %v782, %v1077
    %1079 = vmatpush1.msra.mxu0 %v1078
    %1080 = vmatprep.subr.mxu0 0.0
    %v1081 = vand.u32 %v783, 4294901760
    %v1082 = vsub.f32 %v783, %v1081
    %1083 = vmatpush1.msra.mxu0 %v1082
    %1084 = vmatprep.subr.mxu0 0.0
    %v1085 = vand.u32 %v784, 4294901760
    %v1086 = vsub.f32 %v784, %v1085
    %1087 = vmatpush1.msra.mxu0 %v1086
    %1088 = vmatprep.subr.mxu0 0.0
    %v1089 = vand.u32 %v785, 4294901760
    %v1090 = vsub.f32 %v785, %v1089
    %1091 = vmatpush1.msra.mxu0 %v1090
    %1092 = vmatprep.subr.mxu0 0.0
    %1093 = vmatpush1.msra.mxu0 0.0
    %1094 = vmatprep.subr.mxu0 0.0
    %1095 = vmatpush1.msra.mxu0 0.0
    %1096 = vmatprep.subr.mxu0 0.0
    %1097 = vmatpush1.msra.mxu0 0.0
    %1098 = vmatprep.subr.mxu0 0.0
    %1099 = vmatpush1.msra.mxu0 0.0
    %1100 = vmatprep.subr.mxu0 0.0
    %1101 = vmatpush1.msra.mxu0 0.0
    %1102 = vmatprep.subr.mxu0 0.0
    %1103 = vmatpush1.msra.mxu0 0.0
    %1104 = vmatprep.subr.mxu0 0.0
    %1105 = vmatpush1.msra.mxu0 0.0
    %1106 = vmatprep.subr.mxu0 0.0
    %1107 = vmatpush1.msra.mxu0 0.0
    %1108 = vmatprep.subr.mxu0 0.0
    %1109 = vmatpush1.msra.mxu0 0.0
    %1110 = vmatprep.subr.mxu0 0.0
    %1111 = vmatpush1.msra.mxu0 0.0
    %1112 = vmatprep.subr.mxu0 0.0
    %1113 = vmatpush1.msra.mxu0 0.0
    %1114 = vmatprep.subr.mxu0 0.0
    %1115 = vmatpush1.msra.mxu0 0.0
    %1116 = vmatprep.subr.mxu0 0.0
    %1117 = vmatpush1.msra.mxu0 0.0
    %1118 = vmatprep.subr.mxu0 0.0
    %1119 = vmatpush1.msra.mxu0 0.0
    %1120 = vmatprep.subr.mxu0 0.0
    %1121 = vmatpush1.msra.mxu0 0.0
    %1122 = vmatprep.subr.mxu0 0.0
    %1123 = vmatpush1.msra.mxu0 0.0
    %1124 = vmatprep.mubr.f32.mxu0 0.0
    %v1125 = vand.u32 %v769, 4294901760
    %v1126 = vsub.f32 %v769, %v1125
    %1127 = vmatmul.mubr.f32.gmra.mrb[0].mxu0 %v1126
    %v1128 = vpop.f32.mrb[0].mxu0
    %v1129 = vadd.f32 %v1025, %v1128
    %v1130 = vpop.f32.mrb[0].mxu0
    %1131 = vdwg.mxu0
    %1132 = vmatprep.subr.mxu0 0.0
    %v1133 = vand.u32 %v770, 4294901760
    %1134 = vmatpush1.msra.mxu0 %v1133
    %1135 = vmatprep.subr.mxu0 0.0
    %v1136 = vand.u32 %v771, 4294901760
    %1137 = vmatpush1.msra.mxu0 %v1136
    %1138 = vmatprep.subr.mxu0 0.0
    %v1139 = vand.u32 %v772, 4294901760
    %1140 = vmatpush1.msra.mxu0 %v1139
    %1141 = vmatprep.subr.mxu0 0.0
    %v1142 = vand.u32 %v773, 4294901760
    %1143 = vmatpush1.msra.mxu0 %v1142
    %1144 = vmatprep.subr.mxu0 0.0
    %v1145 = vand.u32 %v774, 4294901760
    %1146 = vmatpush1.msra.mxu0 %v1145
    %1147 = vmatprep.subr.mxu0 0.0
    %v1148 = vand.u32 %v775, 4294901760
    %1149 = vmatpush1.msra.mxu0 %v1148
    %1150 = vmatprep.subr.mxu0 0.0
    %v1151 = vand.u32 %v776, 4294901760
    %1152 = vmatpush1.msra.mxu0 %v1151
    %1153 = vmatprep.subr.mxu0 0.0
    %v1154 = vand.u32 %v777, 4294901760
    %1155 = vmatpush1.msra.mxu0 %v1154
    %1156 = vmatprep.subr.mxu0 0.0
    %v1157 = vand.u32 %v778, 4294901760
    %1158 = vmatpush1.msra.mxu0 %v1157
    %1159 = vmatprep.subr.mxu0 0.0
    %v1160 = vand.u32 %v779, 4294901760
    %1161 = vmatpush1.msra.mxu0 %v1160
    %1162 = vmatprep.subr.mxu0 0.0
    %v1163 = vand.u32 %v780, 4294901760
    %1164 = vmatpush1.msra.mxu0 %v1163
    %1165 = vmatprep.subr.mxu0 0.0
    %v1166 = vand.u32 %v781, 4294901760
    %1167 = vmatpush1.msra.mxu0 %v1166
    %1168 = vmatprep.subr.mxu0 0.0
    %v1169 = vand.u32 %v782, 4294901760
    %1170 = vmatpush1.msra.mxu0 %v1169
    %1171 = vmatprep.subr.mxu0 0.0
    %v1172 = vand.u32 %v783, 4294901760
    %1173 = vmatpush1.msra.mxu0 %v1172
    %1174 = vmatprep.subr.mxu0 0.0
    %v1175 = vand.u32 %v784, 4294901760
    %1176 = vmatpush1.msra.mxu0 %v1175
    %1177 = vmatprep.subr.mxu0 0.0
    %v1178 = vand.u32 %v785, 4294901760
    %1179 = vmatpush1.msra.mxu0 %v1178
    %1180 = vmatprep.subr.mxu0 0.0
    %1181 = vmatpush1.msra.mxu0 0.0
    %1182 = vmatprep.subr.mxu0 0.0
    %1183 = vmatpush1.msra.mxu0 0.0
    %1184 = vmatprep.subr.mxu0 0.0
    %1185 = vmatpush1.msra.mxu0 0.0
    %1186 = vmatprep.subr.mxu0 0.0
    %1187 = vmatpush1.msra.mxu0 0.0
    %1188 = vmatprep.subr.mxu0 0.0
    %1189 = vmatpush1.msra.mxu0 0.0
    %1190 = vmatprep.subr.mxu0 0.0
    %1191 = vmatpush1.msra.mxu0 0.0
    %1192 = vmatprep.subr.mxu0 0.0
    %1193 = vmatpush1.msra.mxu0 0.0
    %1194 = vmatprep.subr.mxu0 0.0
    %1195 = vmatpush1.msra.mxu0 0.0
    %1196 = vmatprep.subr.mxu0 0.0
    %1197 = vmatpush1.msra.mxu0 0.0
    %1198 = vmatprep.subr.mxu0 0.0
    %1199 = vmatpush1.msra.mxu0 0.0
    %1200 = vmatprep.subr.mxu0 0.0
    %1201 = vmatpush1.msra.mxu0 0.0
    %1202 = vmatprep.subr.mxu0 0.0
    %1203 = vmatpush1.msra.mxu0 0.0
    %1204 = vmatprep.subr.mxu0 0.0
    %1205 = vmatpush1.msra.mxu0 0.0
    %1206 = vmatprep.subr.mxu0 0.0
    %1207 = vmatpush1.msra.mxu0 0.0
    %1208 = vmatprep.subr.mxu0 0.0
    %1209 = vmatpush1.msra.mxu0 0.0
    %1210 = vmatprep.subr.mxu0 0.0
    %1211 = vmatpush1.msra.mxu0 0.0
    %1212 = vmatprep.mubr.f32.mxu0 0.0
    %v1213 = vand.u32 %v769, 4294901760
    %v1214 = vsub.f32 %v769, %v1213
    %v1215 = vand.u32 %v1214, 4294901760
    %1216 = vmatmul.mubr.f32.gmra.mrb[0].mxu0 %v1215
    %v1217 = vpop.f32.mrb[0].mxu0
    %v1218 = vadd.f32 %v1129, %v1217
    %v1219 = vpop.f32.mrb[0].mxu0
    %1220 = vdwg.mxu0
    %1221 = vmatprep.subr.mxu0 0.0
    %v1222 = vand.u32 %v770, 4294901760
    %v1223 = vsub.f32 %v770, %v1222
    %v1224 = vand.u32 %v1223, 4294901760
    %1225 = vmatpush1.msra.mxu0 %v1224
    %1226 = vmatprep.subr.mxu0 0.0
    %v1227 = vand.u32 %v771, 4294901760
    %v1228 = vsub.f32 %v771, %v1227
    %v1229 = vand.u32 %v1228, 4294901760
    %1230 = vmatpush1.msra.mxu0 %v1229
    %1231 = vmatprep.subr.mxu0 0.0
    %v1232 = vand.u32 %v772, 4294901760
    %v1233 = vsub.f32 %v772, %v1232
    %v1234 = vand.u32 %v1233, 4294901760
    %1235 = vmatpush1.msra.mxu0 %v1234
    %1236 = vmatprep.subr.mxu0 0.0
    %v1237 = vand.u32 %v773, 4294901760
    %v1238 = vsub.f32 %v773, %v1237
    %v1239 = vand.u32 %v1238, 4294901760
    %1240 = vmatpush1.msra.mxu0 %v1239
    %1241 = vmatprep.subr.mxu0 0.0
    %v1242 = vand.u32 %v774, 4294901760
    %v1243 = vsub.f32 %v774, %v1242
    %v1244 = vand.u32 %v1243, 4294901760
    %1245 = vmatpush1.msra.mxu0 %v1244
    %1246 = vmatprep.subr.mxu0 0.0
    %v1247 = vand.u32 %v775, 4294901760
    %v1248 = vsub.f32 %v775, %v1247
    %v1249 = vand.u32 %v1248, 4294901760
    %1250 = vmatpush1.msra.mxu0 %v1249
    %1251 = vmatprep.subr.mxu0 0.0
    %v1252 = vand.u32 %v776, 4294901760
    %v1253 = vsub.f32 %v776, %v1252
    %v1254 = vand.u32 %v1253, 4294901760
    %1255 = vmatpush1.msra.mxu0 %v1254
    %1256 = vmatprep.subr.mxu0 0.0
    %v1257 = vand.u32 %v777, 4294901760
    %v1258 = vsub.f32 %v777, %v1257
    %v1259 = vand.u32 %v1258, 4294901760
    %1260 = vmatpush1.msra.mxu0 %v1259
    %1261 = vmatprep.subr.mxu0 0.0
    %v1262 = vand.u32 %v778, 4294901760
    %v1263 = vsub.f32 %v778, %v1262
    %v1264 = vand.u32 %v1263, 4294901760
    %1265 = vmatpush1.msra.mxu0 %v1264
    %1266 = vmatprep.subr.mxu0 0.0
    %v1267 = vand.u32 %v779, 4294901760
    %v1268 = vsub.f32 %v779, %v1267
    %v1269 = vand.u32 %v1268, 4294901760
    %1270 = vmatpush1.msra.mxu0 %v1269
    %1271 = vmatprep.subr.mxu0 0.0
    %v1272 = vand.u32 %v780, 4294901760
    %v1273 = vsub.f32 %v780, %v1272
    %v1274 = vand.u32 %v1273, 4294901760
    %1275 = vmatpush1.msra.mxu0 %v1274
    %1276 = vmatprep.subr.mxu0 0.0
    %v1277 = vand.u32 %v781, 4294901760
    %v1278 = vsub.f32 %v781, %v1277
    %v1279 = vand.u32 %v1278, 4294901760
    %1280 = vmatpush1.msra.mxu0 %v1279
    %1281 = vmatprep.subr.mxu0 0.0
    %v1282 = vand.u32 %v782, 4294901760
    %v1283 = vsub.f32 %v782, %v1282
    %v1284 = vand.u32 %v1283, 4294901760
    %1285 = vmatpush1.msra.mxu0 %v1284
    %1286 = vmatprep.subr.mxu0 0.0
    %v1287 = vand.u32 %v783, 4294901760
    %v1288 = vsub.f32 %v783, %v1287
    %v1289 = vand.u32 %v1288, 4294901760
    %1290 = vmatpush1.msra.mxu0 %v1289
    %1291 = vmatprep.subr.mxu0 0.0
    %v1292 = vand.u32 %v784, 4294901760
    %v1293 = vsub.f32 %v784, %v1292
    %v1294 = vand.u32 %v1293, 4294901760
    %1295 = vmatpush1.msra.mxu0 %v1294
    %1296 = vmatprep.subr.mxu0 0.0
    %v1297 = vand.u32 %v785, 4294901760
    %v1298 = vsub.f32 %v785, %v1297
    %v1299 = vand.u32 %v1298, 4294901760
    %1300 = vmatpush1.msra.mxu0 %v1299
    %1301 = vmatprep.subr.mxu0 0.0
    %1302 = vmatpush1.msra.mxu0 0.0
    %1303 = vmatprep.subr.mxu0 0.0
    %1304 = vmatpush1.msra.mxu0 0.0
    %1305 = vmatprep.subr.mxu0 0.0
    %1306 = vmatpush1.msra.mxu0 0.0
    %1307 = vmatprep.subr.mxu0 0.0
    %1308 = vmatpush1.msra.mxu0 0.0
    %1309 = vmatprep.subr.mxu0 0.0
    %1310 = vmatpush1.msra.mxu0 0.0
    %1311 = vmatprep.subr.mxu0 0.0
    %1312 = vmatpush1.msra.mxu0 0.0
    %1313 = vmatprep.subr.mxu0 0.0
    %1314 = vmatpush1.msra.mxu0 0.0
    %1315 = vmatprep.subr.mxu0 0.0
    %1316 = vmatpush1.msra.mxu0 0.0
    %1317 = vmatprep.subr.mxu0 0.0
    %1318 = vmatpush1.msra.mxu0 0.0
    %1319 = vmatprep.subr.mxu0 0.0
    %1320 = vmatpush1.msra.mxu0 0.0
    %1321 = vmatprep.subr.mxu0 0.0
    %1322 = vmatpush1.msra.mxu0 0.0
    %1323 = vmatprep.subr.mxu0 0.0
    %1324 = vmatpush1.msra.mxu0 0.0
    %1325 = vmatprep.subr.mxu0 0.0
    %1326 = vmatpush1.msra.mxu0 0.0
    %1327 = vmatprep.subr.mxu0 0.0
    %1328 = vmatpush1.msra.mxu0 0.0
    %1329 = vmatprep.subr.mxu0 0.0
    %1330 = vmatpush1.msra.mxu0 0.0
    %1331 = vmatprep.subr.mxu0 0.0
    %1332 = vmatpush1.msra.mxu0 0.0
    %1333 = vmatprep.mubr.f32.mxu0 0.0
    %v1334 = vand.u32 %v769, 4294901760
    %1335 = vmatmul.mubr.f32.gmra.mrb[0].mxu0 %v1334
    %v1336 = vpop.f32.mrb[0].mxu0
    %v1337 = vadd.f32 %v1218, %v1336
    %v1338 = vpop.f32.mrb[0].mxu0
    %1339 = vdwg.mxu0
    %1340 = vmatprep.subr.mxu0 0.0
    %v1341 = vand.u32 %v770, 4294901760
    %1342 = vmatpush1.msra.mxu0 %v1341
    %1343 = vmatprep.subr.mxu0 0.0
    %v1344 = vand.u32 %v771, 4294901760
    %1345 = vmatpush1.msra.mxu0 %v1344
    %1346 = vmatprep.subr.mxu0 0.0
    %v1347 = vand.u32 %v772, 4294901760
    %1348 = vmatpush1.msra.mxu0 %v1347
    %1349 = vmatprep.subr.mxu0 0.0
    %v1350 = vand.u32 %v773, 4294901760
    %1351 = vmatpush1.msra.mxu0 %v1350
    %1352 = vmatprep.subr.mxu0 0.0
    %v1353 = vand.u32 %v774, 4294901760
    %1354 = vmatpush1.msra.mxu0 %v1353
    %1355 = vmatprep.subr.mxu0 0.0
    %v1356 = vand.u32 %v775, 4294901760
    %1357 = vmatpush1.msra.mxu0 %v1356
    %1358 = vmatprep.subr.mxu0 0.0
    %v1359 = vand.u32 %v776, 4294901760
    %1360 = vmatpush1.msra.mxu0 %v1359
    %1361 = vmatprep.subr.mxu0 0.0
    %v1362 = vand.u32 %v777, 4294901760
    %1363 = vmatpush1.msra.mxu0 %v1362
    %1364 = vmatprep.subr.mxu0 0.0
    %v1365 = vand.u32 %v778, 4294901760
    %1366 = vmatpush1.msra.mxu0 %v1365
    %1367 = vmatprep.subr.mxu0 0.0
    %v1368 = vand.u32 %v779, 4294901760
    %1369 = vmatpush1.msra.mxu0 %v1368
    %1370 = vmatprep.subr.mxu0 0.0
    %v1371 = vand.u32 %v780, 4294901760
    %1372 = vmatpush1.msra.mxu0 %v1371
    %1373 = vmatprep.subr.mxu0 0.0
    %v1374 = vand.u32 %v781, 4294901760
    %1375 = vmatpush1.msra.mxu0 %v1374
    %1376 = vmatprep.subr.mxu0 0.0
    %v1377 = vand.u32 %v782, 4294901760
    %1378 = vmatpush1.msra.mxu0 %v1377
    %1379 = vmatprep.subr.mxu0 0.0
    %v1380 = vand.u32 %v783, 4294901760
    %1381 = vmatpush1.msra.mxu0 %v1380
    %1382 = vmatprep.subr.mxu0 0.0
    %v1383 = vand.u32 %v784, 4294901760
    %1384 = vmatpush1.msra.mxu0 %v1383
    %1385 = vmatprep.subr.mxu0 0.0
    %v1386 = vand.u32 %v785, 4294901760
    %1387 = vmatpush1.msra.mxu0 %v1386
    %1388 = vmatprep.subr.mxu0 0.0
    %1389 = vmatpush1.msra.mxu0 0.0
    %1390 = vmatprep.subr.mxu0 0.0
    %1391 = vmatpush1.msra.mxu0 0.0
    %1392 = vmatprep.subr.mxu0 0.0
    %1393 = vmatpush1.msra.mxu0 0.0
    %1394 = vmatprep.subr.mxu0 0.0
    %1395 = vmatpush1.msra.mxu0 0.0
    %1396 = vmatprep.subr.mxu0 0.0
    %1397 = vmatpush1.msra.mxu0 0.0
    %1398 = vmatprep.subr.mxu0 0.0
    %1399 = vmatpush1.msra.mxu0 0.0
    %1400 = vmatprep.subr.mxu0 0.0
    %1401 = vmatpush1.msra.mxu0 0.0
    %1402 = vmatprep.subr.mxu0 0.0
    %1403 = vmatpush1.msra.mxu0 0.0
    %1404 = vmatprep.subr.mxu0 0.0
    %1405 = vmatpush1.msra.mxu0 0.0
    %1406 = vmatprep.subr.mxu0 0.0
    %1407 = vmatpush1.msra.mxu0 0.0
    %1408 = vmatprep.subr.mxu0 0.0
    %1409 = vmatpush1.msra.mxu0 0.0
    %1410 = vmatprep.subr.mxu0 0.0
    %1411 = vmatpush1.msra.mxu0 0.0
    %1412 = vmatprep.subr.mxu0 0.0
    %1413 = vmatpush1.msra.mxu0 0.0
    %1414 = vmatprep.subr.mxu0 0.0
    %1415 = vmatpush1.msra.mxu0 0.0
    %1416 = vmatprep.subr.mxu0 0.0
    %1417 = vmatpush1.msra.mxu0 0.0
    %1418 = vmatprep.subr.mxu0 0.0
    %1419 = vmatpush1.msra.mxu0 0.0
    %1420 = vmatprep.mubr.f32.mxu0 0.0
    %v1421 = vand.u32 %v769, 4294901760
    %1422 = vmatmul.mubr.f32.gmra.mrb[0].mxu0 %v1421
    %v1423 = vpop.f32.mrb[0].mxu0
    %v1424 = vadd.f32 %v1337, %v1423
    %v1425 = vpop.f32.mrb[0].mxu0
    %1426 = vdwg.mxu0
    %v1427 = vmul.f32 %v1424, 0.00390625
    %v1428 = vmul.f32 %v1427, %v1427
    %v1430 = vrot.slane %v1428, 7
    %v1432 = vsub.f32 %v1427, %v1430
    %v1433 = vld [vmem:[#allocation2] sm:$0x1]
    %v1434 = vadd.f32 %v1432, 1e-05
    %v1435 = vrsqrt.pop %v1434
    %v1438 = vunpack.c.l.s4 1966171168
    %v1439 = vunpack.c.0.s8 %v1438
    %v1440 = vlaneseq
    %v1441 = vshrl.u32 %v1440, 7
    %v1442 = vsub.s32 %v1439, %v1441
    %v1443 = vrot.slane %v1435, %v1442
    %v1444 = vcombine.high %v1443, %v1443
    %v1446 = vunpack.c.l.s4 1966171168
    %v1447 = vunpack.c.0.s8 %v1446
    %v1448 = vlaneseq
    %v1449 = vshrl.u32 %v1448, 7
    %v1450 = vsub.s32 %v1447, %v1449
    %v1451 = vrot.slane %v1444, %v1450
    %v1453 = vmul.f32 %v1433, %v1451
    %v1454 = vld [vmem:[#allocation3] sm:$0x1]
    %v1455 = vmul.f32 %v1427, %v1453
    %v1456 = vsub.f32 %v1454, %v1455
    %v1458 = vlaneseq
    %v1459 = vshrl.u32 %v1458, 7
    %v1460 = vsub.s32 0, %v1459
    %v1461 = vrot.slane %v1456, %v1460
    %v1463 = vsel %vm768, %v1453, %v1461
    %v1464 = vld [vmem:[%s4] sm:$0x1]
    %vm1465 = vcmask 7168
    %v1467 = vsel %vm1465, %v1463, 0
    %v1470 = vsel %vm768, %v1464, 0
    %1472 = vmatprep.subr.mxu0 0.0
    %v1473 = vand.u32 %v1470, 4294901760
    %1474 = vmatpush1.msra.mxu0 %v1473
    %1475 = vmatprep.subr.mxu0 0.0
    %1476 = vmatpush1.msra.mxu0 0.0
    %1477 = vmatprep.subr.mxu0 0.0
    %1478 = vmatpush1.msra.mxu0 0.0
    %1479 = vmatprep.subr.mxu0 0.0
    %1480 = vmatpush1.msra.mxu0 0.0
    %1481 = vmatprep.subr.mxu0 0.0
    %1482 = vmatpush1.msra.mxu0 0.0
    %1483 = vmatprep.subr.mxu0 0.0
    %1484 = vmatpush1.msra.mxu0 0.0
    %1485 = vmatprep.subr.mxu0 0.0
    %1486 = vmatpush1.msra.mxu0 0.0
    %1487 = vmatprep.subr.mxu0 0.0
    %1488 = vmatpush1.msra.mxu0 0.0
    %1489 = vmatprep.subr.mxu0 0.0
    %1490 = vmatpush1.msra.mxu0 0.0
    %1491 = vmatprep.subr.mxu0 0.0
    %1492 = vmatpush1.msra.mxu0 0.0
    %1493 = vmatprep.subr.mxu0 0.0
    %1494 = vmatpush1.msra.mxu0 0.0
    %1495 = vmatprep.subr.mxu0 0.0
    %1496 = vmatpush1.msra.mxu0 0.0
    %1497 = vmatprep.subr.mxu0 0.0
    %1498 = vmatpush1.msra.mxu0 0.0
    %1499 = vmatprep.subr.mxu0 0.0
    %1500 = vmatpush1.msra.mxu0 0.0
    %1501 = vmatprep.subr.mxu0 0.0
    %1502 = vmatpush1.msra.mxu0 0.0
    %1503 = vmatprep.subr.mxu0 0.0
    %1504 = vmatpush1.msra.mxu0 0.0
    %1505 = vmatprep.subr.mxu0 0.0
    %1506 = vmatpush1.msra.mxu0 0.0
    %1507 = vmatprep.subr.mxu0 0.0
    %1508 = vmatpush1.msra.mxu0 0.0
    %1509 = vmatprep.subr.mxu0 0.0
    %1510 = vmatpush1.msra.mxu0 0.0
    %1511 = vmatprep.subr.mxu0 0.0
    %1512 = vmatpush1.msra.mxu0 0.0
    %1513 = vmatprep.subr.mxu0 0.0
    %1514 = vmatpush1.msra.mxu0 0.0
    %1515 = vmatprep.subr.mxu0 0.0
    %1516 = vmatpush1.msra.mxu0 0.0
    %1517 = vmatprep.subr.mxu0 0.0
    %1518 = vmatpush1.msra.mxu0 0.0
    %1519 = vmatprep.subr.mxu0 0.0
    %1520 = vmatpush1.msra.mxu0 0.0
    %1521 = vmatprep.subr.mxu0 0.0
    %1522 = vmatpush1.msra.mxu0 0.0
    %1523 = vmatprep.subr.mxu0 0.0
    %1524 = vmatpush1.msra.mxu0 0.0
    %1525 = vmatprep.subr.mxu0 0.0
    %1526 = vmatpush1.msra.mxu0 0.0
    %1527 = vmatprep.subr.mxu0 0.0
    %1528 = vmatpush1.msra.mxu0 0.0
    %1529 = vmatprep.subr.mxu0 0.0
    %1530 = vmatpush1.msra.mxu0 0.0
    %1531 = vmatprep.subr.mxu0 0.0
    %1532 = vmatpush1.msra.mxu0 0.0
    %1533 = vmatprep.subr.mxu0 0.0
    %1534 = vmatpush1.msra.mxu0 0.0
    %1535 = vmatprep.subr.mxu0 0.0
    %1536 = vmatpush1.msra.mxu0 0.0
    %1537 = vmatprep.mubr.f32.mxu0 0.0
    %v1538 = vand.u32 %v1467, 4294901760
    %v1539 = vsub.f32 %v1467, %v1538
    %v1540 = vand.u32 %v1539, 4294901760
    %v1541 = vsub.f32 %v1539, %v1540
    %v1542 = vand.u32 %v1541, 4294901760
    %1543 = vmatmul.mubr.f32.gmra.mrb[0].mxu0 %v1542
    %v1544 = vpop.f32.mrb[0].mxu0
    %v1545 = vadd.f32 0.0, %v1544
    %v1546 = vpop.f32.mrb[0].mxu0
    %1547 = vdwg.mxu0
    %1548 = vmatprep.subr.mxu0 0.0
    %v1549 = vand.u32 %v1470, 4294901760
    %v1550 = vsub.f32 %v1470, %v1549
    %v1551 = vand.u32 %v1550, 4294901760
    %v1552 = vsub.f32 %v1550, %v1551
    %v1553 = vand.u32 %v1552, 4294901760
    %1554 = vmatpush1.msra.mxu0 %v1553
    %1555 = vmatprep.subr.mxu0 0.0
    %1556 = vmatpush1.msra.mxu0 0.0
    %1557 = vmatprep.subr.mxu0 0.0
    %1558 = vmatpush1.msra.mxu0 0.0
    %1559 = vmatprep.subr.mxu0 0.0
    %1560 = vmatpush1.msra.mxu0 0.0
    %1561 = vmatprep.subr.mxu0 0.0
    %1562 = vmatpush1.msra.mxu0 0.0
    %1563 = vmatprep.subr.mxu0 0.0
    %1564 = vmatpush1.msra.mxu0 0.0
    %1565 = vmatprep.subr.mxu0 0.0
    %1566 = vmatpush1.msra.mxu0 0.0
    %1567 = vmatprep.subr.mxu0 0.0
    %1568 = vmatpush1.msra.mxu0 0.0
    %1569 = vmatprep.subr.mxu0 0.0
    %1570 = vmatpush1.msra.mxu0 0.0
    %1571 = vmatprep.subr.mxu0 0.0
    %1572 = vmatpush1.msra.mxu0 0.0
    %1573 = vmatprep.subr.mxu0 0.0
    %1574 = vmatpush1.msra.mxu0 0.0
    %1575 = vmatprep.subr.mxu0 0.0
    %1576 = vmatpush1.msra.mxu0 0.0
    %1577 = vmatprep.subr.mxu0 0.0
    %1578 = vmatpush1.msra.mxu0 0.0
    %1579 = vmatprep.subr.mxu0 0.0
    %1580 = vmatpush1.msra.mxu0 0.0
    %1581 = vmatprep.subr.mxu0 0.0
    %1582 = vmatpush1.msra.mxu0 0.0
    %1583 = vmatprep.subr.mxu0 0.0
    %1584 = vmatpush1.msra.mxu0 0.0
    %1585 = vmatprep.subr.mxu0 0.0
    %1586 = vmatpush1.msra.mxu0 0.0
    %1587 = vmatprep.subr.mxu0 0.0
    %1588 = vmatpush1.msra.mxu0 0.0
    %1589 = vmatprep.subr.mxu0 0.0
    %1590 = vmatpush1.msra.mxu0 0.0
    %1591 = vmatprep.subr.mxu0 0.0
    %1592 = vmatpush1.msra.mxu0 0.0
    %1593 = vmatprep.subr.mxu0 0.0
    %1594 = vmatpush1.msra.mxu0 0.0
    %1595 = vmatprep.subr.mxu0 0.0
    %1596 = vmatpush1.msra.mxu0 0.0
    %1597 = vmatprep.subr.mxu0 0.0
    %1598 = vmatpush1.msra.mxu0 0.0
    %1599 = vmatprep.subr.mxu0 0.0
    %1600 = vmatpush1.msra.mxu0 0.0
    %1601 = vmatprep.subr.mxu0 0.0
    %1602 = vmatpush1.msra.mxu0 0.0
    %1603 = vmatprep.subr.mxu0 0.0
    %1604 = vmatpush1.msra.mxu0 0.0
    %1605 = vmatprep.subr.mxu0 0.0
    %1606 = vmatpush1.msra.mxu0 0.0
    %1607 = vmatprep.subr.mxu0 0.0
    %1608 = vmatpush1.msra.mxu0 0.0
    %1609 = vmatprep.subr.mxu0 0.0
    %1610 = vmatpush1.msra.mxu0 0.0
    %1611 = vmatprep.subr.mxu0 0.0
    %1612 = vmatpush1.msra.mxu0 0.0
    %1613 = vmatprep.subr.mxu0 0.0
    %1614 = vmatpush1.msra.mxu0 0.0
    %1615 = vmatprep.subr.mxu0 0.0
    %1616 = vmatpush1.msra.mxu0 0.0
    %1617 = vmatprep.mubr.f32.mxu0 0.0
    %v1618 = vand.u32 %v1467, 4294901760
    %1619 = vmatmul.mubr.f32.gmra.mrb[0].mxu0 %v1618
    %v1620 = vpop.f32.mrb[0].mxu0
    %v1621 = vadd.f32 %v1545, %v1620
    %v1622 = vpop.f32.mrb[0].mxu0
    %1623 = vdwg.mxu0
    %1624 = vmatprep.subr.mxu0 0.0
    %v1625 = vand.u32 %v1470, 4294901760
    %v1626 = vsub.f32 %v1470, %v1625
    %1627 = vmatpush1.msra.mxu0 %v1626
    %1628 = vmatprep.subr.mxu0 0.0
    %1629 = vmatpush1.msra.mxu0 0.0
    %1630 = vmatprep.subr.mxu0 0.0
    %1631 = vmatpush1.msra.mxu0 0.0
    %1632 = vmatprep.subr.mxu0 0.0
    %1633 = vmatpush1.msra.mxu0 0.0
    %1634 = vmatprep.subr.mxu0 0.0
    %1635 = vmatpush1.msra.mxu0 0.0
    %1636 = vmatprep.subr.mxu0 0.0
    %1637 = vmatpush1.msra.mxu0 0.0
    %1638 = vmatprep.subr.mxu0 0.0
    %1639 = vmatpush1.msra.mxu0 0.0
    %1640 = vmatprep.subr.mxu0 0.0
    %1641 = vmatpush1.msra.mxu0 0.0
    %1642 = vmatprep.subr.mxu0 0.0
    %1643 = vmatpush1.msra.mxu0 0.0
    %1644 = vmatprep.subr.mxu0 0.0
    %1645 = vmatpush1.msra.mxu0 0.0
    %1646 = vmatprep.subr.mxu0 0.0
    %1647 = vmatpush1.msra.mxu0 0.0
    %1648 = vmatprep.subr.mxu0 0.0
    %1649 = vmatpush1.msra.mxu0 0.0
    %1650 = vmatprep.subr.mxu0 0.0
    %1651 = vmatpush1.msra.mxu0 0.0
    %1652 = vmatprep.subr.mxu0 0.0
    %1653 = vmatpush1.msra.mxu0 0.0
    %1654 = vmatprep.subr.mxu0 0.0
    %1655 = vmatpush1.msra.mxu0 0.0
    %1656 = vmatprep.subr.mxu0 0.0
    %1657 = vmatpush1.msra.mxu0 0.0
    %1658 = vmatprep.subr.mxu0 0.0
    %1659 = vmatpush1.msra.mxu0 0.0
    %1660 = vmatprep.subr.mxu0 0.0
    %1661 = vmatpush1.msra.mxu0 0.0
    %1662 = vmatprep.subr.mxu0 0.0
    %1663 = vmatpush1.msra.mxu0 0.0
    %1664 = vmatprep.subr.mxu0 0.0
    %1665 = vmatpush1.msra.mxu0 0.0
    %1666 = vmatprep.subr.mxu0 0.0
    %1667 = vmatpush1.msra.mxu0 0.0
    %1668 = vmatprep.subr.mxu0 0.0
    %1669 = vmatpush1.msra.mxu0 0.0
    %1670 = vmatprep.subr.mxu0 0.0
    %1671 = vmatpush1.msra.mxu0 0.0
    %1672 = vmatprep.subr.mxu0 0.0
    %1673 = vmatpush1.msra.mxu0 0.0
    %1674 = vmatprep.subr.mxu0 0.0
    %1675 = vmatpush1.msra.mxu0 0.0
    %1676 = vmatprep.subr.mxu0 0.0
    %1677 = vmatpush1.msra.mxu0 0.0
    %1678 = vmatprep.subr.mxu0 0.0
    %1679 = vmatpush1.msra.mxu0 0.0
    %1680 = vmatprep.subr.mxu0 0.0
    %1681 = vmatpush1.msra.mxu0 0.0
    %1682 = vmatprep.subr.mxu0 0.0
    %1683 = vmatpush1.msra.mxu0 0.0
    %1684 = vmatprep.subr.mxu0 0.0
    %1685 = vmatpush1.msra.mxu0 0.0
    %1686 = vmatprep.subr.mxu0 0.0
    %1687 = vmatpush1.msra.mxu0 0.0
    %1688 = vmatprep.subr.mxu0 0.0
    %1689 = vmatpush1.msra.mxu0 0.0
    %1690 = vmatprep.mubr.f32.mxu0 0.0
    %v1691 = vand.u32 %v1467, 4294901760
    %v1692 = vsub.f32 %v1467, %v1691
    %1693 = vmatmul.mubr.f32.gmra.mrb[0].mxu0 %v1692
    %v1694 = vpop.f32.mrb[0].mxu0
    %v1695 = vadd.f32 %v1621, %v1694
    %v1696 = vpop.f32.mrb[0].mxu0
    %1697 = vdwg.mxu0
    %1698 = vmatprep.subr.mxu0 0.0
    %v1699 = vand.u32 %v1470, 4294901760
    %1700 = vmatpush1.msra.mxu0 %v1699
    %1701 = vmatprep.subr.mxu0 0.0
    %1702 = vmatpush1.msra.mxu0 0.0
    %1703 = vmatprep.subr.mxu0 0.0
    %1704 = vmatpush1.msra.mxu0 0.0
    %1705 = vmatprep.subr.mxu0 0.0
    %1706 = vmatpush1.msra.mxu0 0.0
    %1707 = vmatprep.subr.mxu0 0.0
    %1708 = vmatpush1.msra.mxu0 0.0
    %1709 = vmatprep.subr.mxu0 0.0
    %1710 = vmatpush1.msra.mxu0 0.0
    %1711 = vmatprep.subr.mxu0 0.0
    %1712 = vmatpush1.msra.mxu0 0.0
    %1713 = vmatprep.subr.mxu0 0.0
    %1714 = vmatpush1.msra.mxu0 0.0
    %1715 = vmatprep.subr.mxu0 0.0
    %1716 = vmatpush1.msra.mxu0 0.0
    %1717 = vmatprep.subr.mxu0 0.0
    %1718 = vmatpush1.msra.mxu0 0.0
    %1719 = vmatprep.subr.mxu0 0.0
    %1720 = vmatpush1.msra.mxu0 0.0
    %1721 = vmatprep.subr.mxu0 0.0
    %1722 = vmatpush1.msra.mxu0 0.0
    %1723 = vmatprep.subr.mxu0 0.0
    %1724 = vmatpush1.msra.mxu0 0.0
    %1725 = vmatprep.subr.mxu0 0.0
    %1726 = vmatpush1.msra.mxu0 0.0
    %1727 = vmatprep.subr.mxu0 0.0
    %1728 = vmatpush1.msra.mxu0 0.0
    %1729 = vmatprep.subr.mxu0 0.0
    %1730 = vmatpush1.msra.mxu0 0.0
    %1731 = vmatprep.subr.mxu0 0.0
    %1732 = vmatpush1.msra.mxu0 0.0
    %1733 = vmatprep.subr.mxu0 0.0
    %1734 = vmatpush1.msra.mxu0 0.0
    %1735 = vmatprep.subr.mxu0 0.0
    %1736 = vmatpush1.msra.mxu0 0.0
    %1737 = vmatprep.subr.mxu0 0.0
    %1738 = vmatpush1.msra.mxu0 0.0
    %1739 = vmatprep.subr.mxu0 0.0
    %1740 = vmatpush1.msra.mxu0 0.0
    %1741 = vmatprep.subr.mxu0 0.0
    %1742 = vmatpush1.msra.mxu0 0.0
    %1743 = vmatprep.subr.mxu0 0.0
    %1744 = vmatpush1.msra.mxu0 0.0
    %1745 = vmatprep.subr.mxu0 0.0
    %1746 = vmatpush1.msra.mxu0 0.0
    %1747 = vmatprep.subr.mxu0 0.0
    %1748 = vmatpush1.msra.mxu0 0.0
    %1749 = vmatprep.subr.mxu0 0.0
    %1750 = vmatpush1.msra.mxu0 0.0
    %1751 = vmatprep.subr.mxu0 0.0
    %1752 = vmatpush1.msra.mxu0 0.0
    %1753 = vmatprep.subr.mxu0 0.0
    %1754 = vmatpush1.msra.mxu0 0.0
    %1755 = vmatprep.subr.mxu0 0.0
    %1756 = vmatpush1.msra.mxu0 0.0
    %1757 = vmatprep.subr.mxu0 0.0
    %1758 = vmatpush1.msra.mxu0 0.0
    %1759 = vmatprep.subr.mxu0 0.0
    %1760 = vmatpush1.msra.mxu0 0.0
    %1761 = vmatprep.subr.mxu0 0.0
    %1762 = vmatpush1.msra.mxu0 0.0
    %1763 = vmatprep.mubr.f32.mxu0 0.0
    %v1764 = vand.u32 %v1467, 4294901760
    %v1765 = vsub.f32 %v1467, %v1764
    %v1766 = vand.u32 %v1765, 4294901760
    %1767 = vmatmul.mubr.f32.gmra.mrb[0].mxu0 %v1766
    %v1768 = vpop.f32.mrb[0].mxu0
    %v1769 = vadd.f32 %v1695, %v1768
    %v1770 = vpop.f32.mrb[0].mxu0
    %1771 = vdwg.mxu0
    %1772 = vmatprep.subr.mxu0 0.0
    %v1773 = vand.u32 %v1470, 4294901760
    %v1774 = vsub.f32 %v1470, %v1773
    %v1775 = vand.u32 %v1774, 4294901760
    %1776 = vmatpush1.msra.mxu0 %v1775
    %1777 = vmatprep.subr.mxu0 0.0
    %1778 = vmatpush1.msra.mxu0 0.0
    %1779 = vmatprep.subr.mxu0 0.0
    %1780 = vmatpush1.msra.mxu0 0.0
    %1781 = vmatprep.subr.mxu0 0.0
    %1782 = vmatpush1.msra.mxu0 0.0
    %1783 = vmatprep.subr.mxu0 0.0
    %1784 = vmatpush1.msra.mxu0 0.0
    %1785 = vmatprep.subr.mxu0 0.0
    %1786 = vmatpush1.msra.mxu0 0.0
    %1787 = vmatprep.subr.mxu0 0.0
    %1788 = vmatpush1.msra.mxu0 0.0
    %1789 = vmatprep.subr.mxu0 0.0
    %1790 = vmatpush1.msra.mxu0 0.0
    %1791 = vmatprep.subr.mxu0 0.0
    %1792 = vmatpush1.msra.mxu0 0.0
    %1793 = vmatprep.subr.mxu0 0.0
    %1794 = vmatpush1.msra.mxu0 0.0
    %1795 = vmatprep.subr.mxu0 0.0
    %1796 = vmatpush1.msra.mxu0 0.0
    %1797 = vmatprep.subr.mxu0 0.0
    %1798 = vmatpush1.msra.mxu0 0.0
    %1799 = vmatprep.subr.mxu0 0.0
    %1800 = vmatpush1.msra.mxu0 0.0
    %1801 = vmatprep.subr.mxu0 0.0
    %1802 = vmatpush1.msra.mxu0 0.0
    %1803 = vmatprep.subr.mxu0 0.0
    %1804 = vmatpush1.msra.mxu0 0.0
    %1805 = vmatprep.subr.mxu0 0.0
    %1806 = vmatpush1.msra.mxu0 0.0
    %1807 = vmatprep.subr.mxu0 0.0
    %1808 = vmatpush1.msra.mxu0 0.0
    %1809 = vmatprep.subr.mxu0 0.0
    %1810 = vmatpush1.msra.mxu0 0.0
    %1811 = vmatprep.subr.mxu0 0.0
    %1812 = vmatpush1.msra.mxu0 0.0
    %1813 = vmatprep.subr.mxu0 0.0
    %1814 = vmatpush1.msra.mxu0 0.0
    %1815 = vmatprep.subr.mxu0 0.0
    %1816 = vmatpush1.msra.mxu0 0.0
    %1817 = vmatprep.subr.mxu0 0.0
    %1818 = vmatpush1.msra.mxu0 0.0
    %1819 = vmatprep.subr.mxu0 0.0
    %1820 = vmatpush1.msra.mxu0 0.0
    %1821 = vmatprep.subr.mxu0 0.0
    %1822 = vmatpush1.msra.mxu0 0.0
    %1823 = vmatprep.subr.mxu0 0.0
    %1824 = vmatpush1.msra.mxu0 0.0
    %1825 = vmatprep.subr.mxu0 0.0
    %1826 = vmatpush1.msra.mxu0 0.0
    %1827 = vmatprep.subr.mxu0 0.0
    %1828 = vmatpush1.msra.mxu0 0.0
    %1829 = vmatprep.subr.mxu0 0.0
    %1830 = vmatpush1.msra.mxu0 0.0
    %1831 = vmatprep.subr.mxu0 0.0
    %1832 = vmatpush1.msra.mxu0 0.0
    %1833 = vmatprep.subr.mxu0 0.0
    %1834 = vmatpush1.msra.mxu0 0.0
    %1835 = vmatprep.subr.mxu0 0.0
    %1836 = vmatpush1.msra.mxu0 0.0
    %1837 = vmatprep.subr.mxu0 0.0
    %1838 = vmatpush1.msra.mxu0 0.0
    %1839 = vmatprep.mubr.f32.mxu0 0.0
    %v1840 = vand.u32 %v1467, 4294901760
    %1841 = vmatmul.mubr.f32.gmra.mrb[0].mxu0 %v1840
    %v1842 = vpop.f32.mrb[0].mxu0
    %v1843 = vadd.f32 %v1769, %v1842
    %v1844 = vpop.f32.mrb[0].mxu0
    %1845 = vdwg.mxu0
    %1846 = vmatprep.subr.mxu0 0.0
    %v1847 = vand.u32 %v1470, 4294901760
    %1848 = vmatpush1.msra.mxu0 %v1847
    %1849 = vmatprep.subr.mxu0 0.0
    %1850 = vmatpush1.msra.mxu0 0.0
    %1851 = vmatprep.subr.mxu0 0.0
    %1852 = vmatpush1.msra.mxu0 0.0
    %1853 = vmatprep.subr.mxu0 0.0
    %1854 = vmatpush1.msra.mxu0 0.0
    %1855 = vmatprep.subr.mxu0 0.0
    %1856 = vmatpush1.msra.mxu0 0.0
    %1857 = vmatprep.subr.mxu0 0.0
    %1858 = vmatpush1.msra.mxu0 0.0
    %1859 = vmatprep.subr.mxu0 0.0
    %1860 = vmatpush1.msra.mxu0 0.0
    %1861 = vmatprep.subr.mxu0 0.0
    %1862 = vmatpush1.msra.mxu0 0.0
    %1863 = vmatprep.subr.mxu0 0.0
    %1864 = vmatpush1.msra.mxu0 0.0
    %1865 = vmatprep.subr.mxu0 0.0
    %1866 = vmatpush1.msra.mxu0 0.0
    %1867 = vmatprep.subr.mxu0 0.0
    %1868 = vmatpush1.msra.mxu0 0.0
    %1869 = vmatprep.subr.mxu0 0.0
    %1870 = vmatpush1.msra.mxu0 0.0
    %1871 = vmatprep.subr.mxu0 0.0
    %1872 = vmatpush1.msra.mxu0 0.0
    %1873 = vmatprep.subr.mxu0 0.0
    %1874 = vmatpush1.msra.mxu0 0.0
    %1875 = vmatprep.subr.mxu0 0.0
    %1876 = vmatpush1.msra.mxu0 0.0
    %1877 = vmatprep.subr.mxu0 0.0
    %1878 = vmatpush1.msra.mxu0 0.0
    %1879 = vmatprep.subr.mxu0 0.0
    %1880 = vmatpush1.msra.mxu0 0.0
    %1881 = vmatprep.subr.mxu0 0.0
    %1882 = vmatpush1.msra.mxu0 0.0
    %1883 = vmatprep.subr.mxu0 0.0
    %1884 = vmatpush1.msra.mxu0 0.0
    %1885 = vmatprep.subr.mxu0 0.0
    %1886 = vmatpush1.msra.mxu0 0.0
    %1887 = vmatprep.subr.mxu0 0.0
    %1888 = vmatpush1.msra.mxu0 0.0
    %1889 = vmatprep.subr.mxu0 0.0
    %1890 = vmatpush1.msra.mxu0 0.0
    %1891 = vmatprep.subr.mxu0 0.0
    %1892 = vmatpush1.msra.mxu0 0.0
    %1893 = vmatprep.subr.mxu0 0.0
    %1894 = vmatpush1.msra.mxu0 0.0
    %1895 = vmatprep.subr.mxu0 0.0
    %1896 = vmatpush1.msra.mxu0 0.0
    %1897 = vmatprep.subr.mxu0 0.0
    %1898 = vmatpush1.msra.mxu0 0.0
    %1899 = vmatprep.subr.mxu0 0.0
    %1900 = vmatpush1.msra.mxu0 0.0
    %1901 = vmatprep.subr.mxu0 0.0
    %1902 = vmatpush1.msra.mxu0 0.0
    %1903 = vmatprep.subr.mxu0 0.0
    %1904 = vmatpush1.msra.mxu0 0.0
    %1905 = vmatprep.subr.mxu0 0.0
    %1906 = vmatpush1.msra.mxu0 0.0
    %1907 = vmatprep.subr.mxu0 0.0
    %1908 = vmatpush1.msra.mxu0 0.0
    %1909 = vmatprep.subr.mxu0 0.0
    %1910 = vmatpush1.msra.mxu0 0.0
    %1911 = vmatprep.mubr.f32.mxu0 0.0
    %v1912 = vand.u32 %v1467, 4294901760
    %1913 = vmatmul.mubr.f32.gmra.mrb[0].mxu0 %v1912
    %v1914 = vpop.f32.mrb[0].mxu0
    %v1915 = vadd.f32 %v1843, %v1914
    %v1916 = vpop.f32.mrb[0].mxu0
    %1917 = vdwg.mxu0
    %v1918 = vlaneseq
    %v1919 = vshrl.u32 %v1918, 7
    %v1920 = vsub.s32 0, %v1919
    %v1921 = vrot.slane %v1915, %v1920
    %v1922 = vmul.f32 %v753, %v1921
    %v1923 = vlaneseq
    %v1924 = vshrl.u32 %v1923, 7
    %v1925 = vsub.s32 1, %v1924
    %v1926 = vrot.slane %v1915, %v1925
    %v1927 = vadd.f32 %v1922, %v1926
    %v1928 = vmul.f32 %v1927, 0.1
    %v1929 = vmax.f32 %v1927, %v1928
    %v1930 = vld [vmem:[%s7] sm:$0xff]
    %v1931 = vld [vmem:[%s7 + $0x8] sm:$0xff]
    %v1932 = vld [vmem:[%s7 + $0x10] sm:$0xff]
    %v1933 = vld [vmem:[%s7 + $0x18] sm:$0xff]
    %v1934 = vld [vmem:[%s7 + $0x20] sm:$0xff]
    %v1935 = vld [vmem:[%s7 + $0x28] sm:$0xff]
    %v1936 = vld [vmem:[%s7 + $0x30] sm:$0xff]
    %v1937 = vld [vmem:[%s7 + $0x38] sm:$0xff]
    %v1938 = vld [vmem:[%s7 + $0x40] sm:$0xff]
    %v1939 = vld [vmem:[%s7 + $0x48] sm:$0xff]
    %v1940 = vld [vmem:[%s7 + $0x50] sm:$0xff]
    %v1941 = vld [vmem:[%s7 + $0x58] sm:$0xff]
    %v1942 = vld [vmem:[%s7 + $0x60] sm:$0xff]
    %v1943 = vld [vmem:[%s7 + $0x68] sm:$0xff]
    %v1944 = vld [vmem:[%s7 + $0x70] sm:$0xff]
    %v1945 = vld [vmem:[%s7 + $0x78] sm:$0xff]
    %v1946 = vld [vmem:[%s8] sm:$0x1]
    %v1948 = vlaneseq
    %v1949 = vshrl.u32 %v1948, 7
    %v1950 = vsub.s32 0, %v1949
    %v1951 = vrot.slane %v1946, %v1950
    %1953 = vmatprep.subr.mxu0 0.0
    %v1954 = vand.u32 %v1930, 4294901760
    %1955 = vmatpush1.msra.mxu0 %v1954
    %1956 = vmatprep.subr.mxu0 0.0
    %v1957 = vand.u32 %v1931, 4294901760
    %1958 = vmatpush1.msra.mxu0 %v1957
    %1959 = vmatprep.subr.mxu0 0.0
    %v1960 = vand.u32 %v1932, 4294901760
    %1961 = vmatpush1.msra.mxu0 %v1960
    %1962 = vmatprep.subr.mxu0 0.0
    %v1963 = vand.u32 %v1933, 4294901760
    %1964 = vmatpush1.msra.mxu0 %v1963
    %1965 = vmatprep.subr.mxu0 0.0
    %v1966 = vand.u32 %v1934, 4294901760
    %1967 = vmatpush1.msra.mxu0 %v1966
    %1968 = vmatprep.subr.mxu0 0.0
    %v1969 = vand.u32 %v1935, 4294901760
    %1970 = vmatpush1.msra.mxu0 %v1969
    %1971 = vmatprep.subr.mxu0 0.0
    %v1972 = vand.u32 %v1936, 4294901760
    %1973 = vmatpush1.msra.mxu0 %v1972
    %1974 = vmatprep.subr.mxu0 0.0
    %v1975 = vand.u32 %v1937, 4294901760
    %1976 = vmatpush1.msra.mxu0 %v1975
    %1977 = vmatprep.subr.mxu0 0.0
    %v1978 = vand.u32 %v1938, 4294901760
    %1979 = vmatpush1.msra.mxu0 %v1978
    %1980 = vmatprep.subr.mxu0 0.0
    %v1981 = vand.u32 %v1939, 4294901760
    %1982 = vmatpush1.msra.mxu0 %v1981
    %1983 = vmatprep.subr.mxu0 0.0
    %v1984 = vand.u32 %v1940, 4294901760
    %1985 = vmatpush1.msra.mxu0 %v1984
    %1986 = vmatprep.subr.mxu0 0.0
    %v1987 = vand.u32 %v1941, 4294901760
    %1988 = vmatpush1.msra.mxu0 %v1987
    %1989 = vmatprep.subr.mxu0 0.0
    %v1990 = vand.u32 %v1942, 4294901760
    %1991 = vmatpush1.msra.mxu0 %v1990
    %1992 = vmatprep.subr.mxu0 0.0
    %v1993 = vand.u32 %v1943, 4294901760
    %1994 = vmatpush1.msra.mxu0 %v1993
    %1995 = vmatprep.subr.mxu0 0.0
    %v1996 = vand.u32 %v1944, 4294901760
    %1997 = vmatpush1.msra.mxu0 %v1996
    %1998 = vmatprep.subr.mxu0 0.0
    %v1999 = vand.u32 %v1945, 4294901760
    %2000 = vmatpush1.msra.mxu0 %v1999
    %2001 = vmatprep.subr.mxu0 0.0
    %2002 = vmatpush1.msra.mxu0 0.0
    %2003 = vmatprep.subr.mxu0 0.0
    %2004 = vmatpush1.msra.mxu0 0.0
    %2005 = vmatprep.subr.mxu0 0.0
    %2006 = vmatpush1.msra.mxu0 0.0
    %2007 = vmatprep.subr.mxu0 0.0
    %2008 = vmatpush1.msra.mxu0 0.0
    %2009 = vmatprep.subr.mxu0 0.0
    %2010 = vmatpush1.msra.mxu0 0.0
    %2011 = vmatprep.subr.mxu0 0.0
    %2012 = vmatpush1.msra.mxu0 0.0
    %2013 = vmatprep.subr.mxu0 0.0
    %2014 = vmatpush1.msra.mxu0 0.0
    %2015 = vmatprep.subr.mxu0 0.0
    %2016 = vmatpush1.msra.mxu0 0.0
    %2017 = vmatprep.subr.mxu0 0.0
    %2018 = vmatpush1.msra.mxu0 0.0
    %2019 = vmatprep.subr.mxu0 0.0
    %2020 = vmatpush1.msra.mxu0 0.0
    %2021 = vmatprep.subr.mxu0 0.0
    %2022 = vmatpush1.msra.mxu0 0.0
    %2023 = vmatprep.subr.mxu0 0.0
    %2024 = vmatpush1.msra.mxu0 0.0
    %2025 = vmatprep.subr.mxu0 0.0
    %2026 = vmatpush1.msra.mxu0 0.0
    %2027 = vmatprep.subr.mxu0 0.0
    %2028 = vmatpush1.msra.mxu0 0.0
    %2029 = vmatprep.subr.mxu0 0.0
    %2030 = vmatpush1.msra.mxu0 0.0
    %2031 = vmatprep.subr.mxu0 0.0
    %2032 = vmatpush1.msra.mxu0 0.0
    %2033 = vmatprep.mubr.f32.mxu0 0.0
    %v2034 = vand.u32 %v1929, 4294901760
    %v2035 = vsub.f32 %v1929, %v2034
    %v2036 = vand.u32 %v2035, 4294901760
    %v2037 = vsub.f32 %v2035, %v2036
    %v2038 = vand.u32 %v2037, 4294901760
    %2039 = vmatmul.mubr.f32.gmra.mrb[0].mxu0 %v2038
    %v2040 = vpop.f32.mrb[0].mxu0
    %v2041 = vadd.f32 %v1951, %v2040
    %v2042 = vpop.f32.mrb[0].mxu0
    %2043 = vdwg.mxu0
    %2044 = vmatprep.subr.mxu0 0.0
    %v2045 = vand.u32 %v1930, 4294901760
    %v2046 = vsub.f32 %v1930, %v2045
    %v2047 = vand.u32 %v2046, 4294901760
    %v2048 = vsub.f32 %v2046, %v2047
    %v2049 = vand.u32 %v2048, 4294901760
    %2050 = vmatpush1.msra.mxu0 %v2049
    %2051 = vmatprep.subr.mxu0 0.0
    %v2052 = vand.u32 %v1931, 4294901760
    %v2053 = vsub.f32 %v1931, %v2052
    %v2054 = vand.u32 %v2053, 4294901760
    %v2055 = vsub.f32 %v2053, %v2054
    %v2056 = vand.u32 %v2055, 4294901760
    %2057 = vmatpush1.msra.mxu0 %v2056
    %2058 = vmatprep.subr.mxu0 0.0
    %v2059 = vand.u32 %v1932, 4294901760
    %v2060 = vsub.f32 %v1932, %v2059
    %v2061 = vand.u32 %v2060, 4294901760
    %v2062 = vsub.f32 %v2060, %v2061
    %v2063 = vand.u32 %v2062, 4294901760
    %2064 = vmatpush1.msra.mxu0 %v2063
    %2065 = vmatprep.subr.mxu0 0.0
    %v2066 = vand.u32 %v1933, 4294901760
    %v2067 = vsub.f32 %v1933, %v2066
    %v2068 = vand.u32 %v2067, 4294901760
    %v2069 = vsub.f32 %v2067, %v2068
    %v2070 = vand.u32 %v2069, 4294901760
    %2071 = vmatpush1.msra.mxu0 %v2070
    %2072 = vmatprep.subr.mxu0 0.0
    %v2073 = vand.u32 %v1934, 4294901760
    %v2074 = vsub.f32 %v1934, %v2073
    %v2075 = vand.u32 %v2074, 4294901760
    %v2076 = vsub.f32 %v2074, %v2075
    %v2077 = vand.u32 %v2076, 4294901760
    %2078 = vmatpush1.msra.mxu0 %v2077
    %2079 = vmatprep.subr.mxu0 0.0
    %v2080 = vand.u32 %v1935, 4294901760
    %v2081 = vsub.f32 %v1935, %v2080
    %v2082 = vand.u32 %v2081, 4294901760
    %v2083 = vsub.f32 %v2081, %v2082
    %v2084 = vand.u32 %v2083, 4294901760
    %2085 = vmatpush1.msra.mxu0 %v2084
    %2086 = vmatprep.subr.mxu0 0.0
    %v2087 = vand.u32 %v1936, 4294901760
    %v2088 = vsub.f32 %v1936, %v2087
    %v2089 = vand.u32 %v2088, 4294901760
    %v2090 = vsub.f32 %v2088, %v2089
    %v2091 = vand.u32 %v2090, 4294901760
    %2092 = vmatpush1.msra.mxu0 %v2091
    %2093 = vmatprep.subr.mxu0 0.0
    %v2094 = vand.u32 %v1937, 4294901760
    %v2095 = vsub.f32 %v1937, %v2094
    %v2096 = vand.u32 %v2095, 4294901760
    %v2097 = vsub.f32 %v2095, %v2096
    %v2098 = vand.u32 %v2097, 4294901760
    %2099 = vmatpush1.msra.mxu0 %v2098
    %2100 = vmatprep.subr.mxu0 0.0
    %v2101 = vand.u32 %v1938, 4294901760
    %v2102 = vsub.f32 %v1938, %v2101
    %v2103 = vand.u32 %v2102, 4294901760
    %v2104 = vsub.f32 %v2102, %v2103
    %v2105 = vand.u32 %v2104, 4294901760
    %2106 = vmatpush1.msra.mxu0 %v2105
    %2107 = vmatprep.subr.mxu0 0.0
    %v2108 = vand.u32 %v1939, 4294901760
    %v2109 = vsub.f32 %v1939, %v2108
    %v2110 = vand.u32 %v2109, 4294901760
    %v2111 = vsub.f32 %v2109, %v2110
    %v2112 = vand.u32 %v2111, 4294901760
    %2113 = vmatpush1.msra.mxu0 %v2112
    %2114 = vmatprep.subr.mxu0 0.0
    %v2115 = vand.u32 %v1940, 4294901760
    %v2116 = vsub.f32 %v1940, %v2115
    %v2117 = vand.u32 %v2116, 4294901760
    %v2118 = vsub.f32 %v2116, %v2117
    %v2119 = vand.u32 %v2118, 4294901760
    %2120 = vmatpush1.msra.mxu0 %v2119
    %2121 = vmatprep.subr.mxu0 0.0
    %v2122 = vand.u32 %v1941, 4294901760
    %v2123 = vsub.f32 %v1941, %v2122
    %v2124 = vand.u32 %v2123, 4294901760
    %v2125 = vsub.f32 %v2123, %v2124
    %v2126 = vand.u32 %v2125, 4294901760
    %2127 = vmatpush1.msra.mxu0 %v2126
    %2128 = vmatprep.subr.mxu0 0.0
    %v2129 = vand.u32 %v1942, 4294901760
    %v2130 = vsub.f32 %v1942, %v2129
    %v2131 = vand.u32 %v2130, 4294901760
    %v2132 = vsub.f32 %v2130, %v2131
    %v2133 = vand.u32 %v2132, 4294901760
    %2134 = vmatpush1.msra.mxu0 %v2133
    %2135 = vmatprep.subr.mxu0 0.0
    %v2136 = vand.u32 %v1943, 4294901760
    %v2137 = vsub.f32 %v1943, %v2136
    %v2138 = vand.u32 %v2137, 4294901760
    %v2139 = vsub.f32 %v2137, %v2138
    %v2140 = vand.u32 %v2139, 4294901760
    %2141 = vmatpush1.msra.mxu0 %v2140
    %2142 = vmatprep.subr.mxu0 0.0
    %v2143 = vand.u32 %v1944, 4294901760
    %v2144 = vsub.f32 %v1944, %v2143
    %v2145 = vand.u32 %v2144, 4294901760
    %v2146 = vsub.f32 %v2144, %v2145
    %v2147 = vand.u32 %v2146, 4294901760
    %2148 = vmatpush1.msra.mxu0 %v2147
    %2149 = vmatprep.subr.mxu0 0.0
    %v2150 = vand.u32 %v1945, 4294901760
    %v2151 = vsub.f32 %v1945, %v2150
    %v2152 = vand.u32 %v2151, 4294901760
    %v2153 = vsub.f32 %v2151, %v2152
    %v2154 = vand.u32 %v2153, 4294901760
    %2155 = vmatpush1.msra.mxu0 %v2154
    %2156 = vmatprep.subr.mxu0 0.0
    %2157 = vmatpush1.msra.mxu0 0.0
    %2158 = vmatprep.subr.mxu0 0.0
    %2159 = vmatpush1.msra.mxu0 0.0
    %2160 = vmatprep.subr.mxu0 0.0
    %2161 = vmatpush1.msra.mxu0 0.0
    %2162 = vmatprep.subr.mxu0 0.0
    %2163 = vmatpush1.msra.mxu0 0.0
    %2164 = vmatprep.subr.mxu0 0.0
    %2165 = vmatpush1.msra.mxu0 0.0
    %2166 = vmatprep.subr.mxu0 0.0
    %2167 = vmatpush1.msra.mxu0 0.0
    %2168 = vmatprep.subr.mxu0 0.0
    %2169 = vmatpush1.msra.mxu0 0.0
    %2170 = vmatprep.subr.mxu0 0.0
    %2171 = vmatpush1.msra.mxu0 0.0
    %2172 = vmatprep.subr.mxu0 0.0
    %2173 = vmatpush1.msra.mxu0 0.0
    %2174 = vmatprep.subr.mxu0 0.0
    %2175 = vmatpush1.msra.mxu0 0.0
    %2176 = vmatprep.subr.mxu0 0.0
    %2177 = vmatpush1.msra.mxu0 0.0
    %2178 = vmatprep.subr.mxu0 0.0
    %2179 = vmatpush1.msra.mxu0 0.0
    %2180 = vmatprep.subr.mxu0 0.0
    %2181 = vmatpush1.msra.mxu0 0.0
    %2182 = vmatprep.subr.mxu0 0.0
    %2183 = vmatpush1.msra.mxu0 0.0
    %2184 = vmatprep.subr.mxu0 0.0
    %2185 = vmatpush1.msra.mxu0 0.0
    %2186 = vmatprep.subr.mxu0 0.0
    %2187 = vmatpush1.msra.mxu0 0.0
    %2188 = vmatprep.mubr.f32.mxu0 0.0
    %v2189 = vand.u32 %v1929, 4294901760
    %2190 = vmatmul.mubr.f32.gmra.mrb[0].mxu0 %v2189
    %v2191 = vpop.f32.mrb[0].mxu0
    %v2192 = vadd.f32 %v2041, %v2191
    %v2193 = vpop.f32.mrb[0].mxu0
    %2194 = vdwg.mxu0
    %2195 = vmatprep.subr.mxu0 0.0
    %v2196 = vand.u32 %v1930, 4294901760
    %v2197 = vsub.f32 %v1930, %v2196
    %2198 = vmatpush1.msra.mxu0 %v2197
    %2199 = vmatprep.subr.mxu0 0.0
    %v2200 = vand.u32 %v1931, 4294901760
    %v2201 = vsub.f32 %v1931, %v2200
    %2202 = vmatpush1.msra.mxu0 %v2201
    %2203 = vmatprep.subr.mxu0 0.0
    %v2204 = vand.u32 %v1932, 4294901760
    %v2205 = vsub.f32 %v1932, %v2204
    %2206 = vmatpush1.msra.mxu0 %v2205
    %2207 = vmatprep.subr.mxu0 0.0
    %v2208 = vand.u32 %v1933, 4294901760
    %v2209 = vsub.f32 %v1933, %v2208
    %2210 = vmatpush1.msra.mxu0 %v2209
    %2211 = vmatprep.subr.mxu0 0.0
    %v2212 = vand.u32 %v1934, 4294901760
    %v2213 = vsub.f32 %v1934, %v2212
    %2214 = vmatpush1.msra.mxu0 %v2213
    %2215 = vmatprep.subr.mxu0 0.0
    %v2216 = vand.u32 %v1935, 4294901760
    %v2217 = vsub.f32 %v1935, %v2216
    %2218 = vmatpush1.msra.mxu0 %v2217
    %2219 = vmatprep.subr.mxu0 0.0
    %v2220 = vand.u32 %v1936, 4294901760
    %v2221 = vsub.f32 %v1936, %v2220
    %2222 = vmatpush1.msra.mxu0 %v2221
    %2223 = vmatprep.subr.mxu0 0.0
    %v2224 = vand.u32 %v1937, 4294901760
    %v2225 = vsub.f32 %v1937, %v2224
    %2226 = vmatpush1.msra.mxu0 %v2225
    %2227 = vmatprep.subr.mxu0 0.0
    %v2228 = vand.u32 %v1938, 4294901760
    %v2229 = vsub.f32 %v1938, %v2228
    %2230 = vmatpush1.msra.mxu0 %v2229
    %2231 = vmatprep.subr.mxu0 0.0
    %v2232 = vand.u32 %v1939, 4294901760
    %v2233 = vsub.f32 %v1939, %v2232
    %2234 = vmatpush1.msra.mxu0 %v2233
    %2235 = vmatprep.subr.mxu0 0.0
    %v2236 = vand.u32 %v1940, 4294901760
    %v2237 = vsub.f32 %v1940, %v2236
    %2238 = vmatpush1.msra.mxu0 %v2237
    %2239 = vmatprep.subr.mxu0 0.0
    %v2240 = vand.u32 %v1941, 4294901760
    %v2241 = vsub.f32 %v1941, %v2240
    %2242 = vmatpush1.msra.mxu0 %v2241
    %2243 = vmatprep.subr.mxu0 0.0
    %v2244 = vand.u32 %v1942, 4294901760
    %v2245 = vsub.f32 %v1942, %v2244
    %2246 = vmatpush1.msra.mxu0 %v2245
    %2247 = vmatprep.subr.mxu0 0.0
    %v2248 = vand.u32 %v1943, 4294901760
    %v2249 = vsub.f32 %v1943, %v2248
    %2250 = vmatpush1.msra.mxu0 %v2249
    %2251 = vmatprep.subr.mxu0 0.0
    %v2252 = vand.u32 %v1944, 4294901760
    %v2253 = vsub.f32 %v1944, %v2252
    %2254 = vmatpush1.msra.mxu0 %v2253
    %2255 = vmatprep.subr.mxu0 0.0
    %v2256 = vand.u32 %v1945, 4294901760
    %v2257 = vsub.f32 %v1945, %v2256
    %2258 = vmatpush1.msra.mxu0 %v2257
    %2259 = vmatprep.subr.mxu0 0.0
    %2260 = vmatpush1.msra.mxu0 0.0
    %2261 = vmatprep.subr.mxu0 0.0
    %2262 = vmatpush1.msra.mxu0 0.0
    %2263 = vmatprep.subr.mxu0 0.0
    %2264 = vmatpush1.msra.mxu0 0.0
    %2265 = vmatprep.subr.mxu0 0.0
    %2266 = vmatpush1.msra.mxu0 0.0
    %2267 = vmatprep.subr.mxu0 0.0
    %2268 = vmatpush1.msra.mxu0 0.0
    %2269 = vmatprep.subr.mxu0 0.0
    %2270 = vmatpush1.msra.mxu0 0.0
    %2271 = vmatprep.subr.mxu0 0.0
    %2272 = vmatpush1.msra.mxu0 0.0
    %2273 = vmatprep.subr.mxu0 0.0
    %2274 = vmatpush1.msra.mxu0 0.0
    %2275 = vmatprep.subr.mxu0 0.0
    %2276 = vmatpush1.msra.mxu0 0.0
    %2277 = vmatprep.subr.mxu0 0.0
    %2278 = vmatpush1.msra.mxu0 0.0
    %2279 = vmatprep.subr.mxu0 0.0
    %2280 = vmatpush1.msra.mxu0 0.0
    %2281 = vmatprep.subr.mxu0 0.0
    %2282 = vmatpush1.msra.mxu0 0.0
    %2283 = vmatprep.subr.mxu0 0.0
    %2284 = vmatpush1.msra.mxu0 0.0
    %2285 = vmatprep.subr.mxu0 0.0
    %2286 = vmatpush1.msra.mxu0 0.0
    %2287 = vmatprep.subr.mxu0 0.0
    %2288 = vmatpush1.msra.mxu0 0.0
    %2289 = vmatprep.subr.mxu0 0.0
    %2290 = vmatpush1.msra.mxu0 0.0
    %2291 = vmatprep.mubr.f32.mxu0 0.0
    %v2292 = vand.u32 %v1929, 4294901760
    %v2293 = vsub.f32 %v1929, %v2292
    %2294 = vmatmul.mubr.f32.gmra.mrb[0].mxu0 %v2293
    %v2295 = vpop.f32.mrb[0].mxu0
    %v2296 = vadd.f32 %v2192, %v2295
    %v2297 = vpop.f32.mrb[0].mxu0
    %2298 = vdwg.mxu0
    %2299 = vmatprep.subr.mxu0 0.0
    %v2300 = vand.u32 %v1930, 4294901760
    %2301 = vmatpush1.msra.mxu0 %v2300
    %2302 = vmatprep.subr.mxu0 0.0
    %v2303 = vand.u32 %v1931, 4294901760
    %2304 = vmatpush1.msra.mxu0 %v2303
    %2305 = vmatprep.subr.mxu0 0.0
    %v2306 = vand.u32 %v1932, 4294901760
    %2307 = vmatpush1.msra.mxu0 %v2306
    %2308 = vmatprep.subr.mxu0 0.0
    %v2309 = vand.u32 %v1933, 4294901760
    %2310 = vmatpush1.msra.mxu0 %v2309
    %2311 = vmatprep.subr.mxu0 0.0
    %v2312 = vand.u32 %v1934, 4294901760
    %2313 = vmatpush1.msra.mxu0 %v2312
    %2314 = vmatprep.subr.mxu0 0.0
    %v2315 = vand.u32 %v1935, 4294901760
    %2316 = vmatpush1.msra.mxu0 %v2315
    %2317 = vmatprep.subr.mxu0 0.0
    %v2318 = vand.u32 %v1936, 4294901760
    %2319 = vmatpush1.msra.mxu0 %v2318
    %2320 = vmatprep.subr.mxu0 0.0
    %v2321 = vand.u32 %v1937, 4294901760
    %2322 = vmatpush1.msra.mxu0 %v2321
    %2323 = vmatprep.subr.mxu0 0.0
    %v2324 = vand.u32 %v1938, 4294901760
    %2325 = vmatpush1.msra.mxu0 %v2324
    %2326 = vmatprep.subr.mxu0 0.0
    %v2327 = vand.u32 %v1939, 4294901760
    %2328 = vmatpush1.msra.mxu0 %v2327
    %2329 = vmatprep.subr.mxu0 0.0
    %v2330 = vand.u32 %v1940, 4294901760
    %2331 = vmatpush1.msra.mxu0 %v2330
    %2332 = vmatprep.subr.mxu0 0.0
    %v2333 = vand.u32 %v1941, 4294901760
    %2334 = vmatpush1.msra.mxu0 %v2333
    %2335 = vmatprep.subr.mxu0 0.0
    %v2336 = vand.u32 %v1942, 4294901760
    %2337 = vmatpush1.msra.mxu0 %v2336
    %2338 = vmatprep.subr.mxu0 0.0
    %v2339 = vand.u32 %v1943, 4294901760
    %2340 = vmatpush1.msra.mxu0 %v2339
    %2341 = vmatprep.subr.mxu0 0.0
    %v2342 = vand.u32 %v1944, 4294901760
    %2343 = vmatpush1.msra.mxu0 %v2342
    %2344 = vmatprep.subr.mxu0 0.0
    %v2345 = vand.u32 %v1945, 4294901760
    %2346 = vmatpush1.msra.mxu0 %v2345
    %2347 = vmatprep.subr.mxu0 0.0
    %2348 = vmatpush1.msra.mxu0 0.0
    %2349 = vmatprep.subr.mxu0 0.0
    %2350 = vmatpush1.msra.mxu0 0.0
    %2351 = vmatprep.subr.mxu0 0.0
    %2352 = vmatpush1.msra.mxu0 0.0
    %2353 = vmatprep.subr.mxu0 0.0
    %2354 = vmatpush1.msra.mxu0 0.0
    %2355 = vmatprep.subr.mxu0 0.0
    %2356 = vmatpush1.msra.mxu0 0.0
    %2357 = vmatprep.subr.mxu0 0.0
    %2358 = vmatpush1.msra.mxu0 0.0
    %2359 = vmatprep.subr.mxu0 0.0
    %2360 = vmatpush1.msra.mxu0 0.0
    %2361 = vmatprep.subr.mxu0 0.0
    %2362 = vmatpush1.msra.mxu0 0.0
    %2363 = vmatprep.subr.mxu0 0.0
    %2364 = vmatpush1.msra.mxu0 0.0
    %2365 = vmatprep.subr.mxu0 0.0
    %2366 = vmatpush1.msra.mxu0 0.0
    %2367 = vmatprep.subr.mxu0 0.0
    %2368 = vmatpush1.msra.mxu0 0.0
    %2369 = vmatprep.subr.mxu0 0.0
    %2370 = vmatpush1.msra.mxu0 0.0
    %2371 = vmatprep.subr.mxu0 0.0
    %2372 = vmatpush1.msra.mxu0 0.0
    %2373 = vmatprep.subr.mxu0 0.0
    %2374 = vmatpush1.msra.mxu0 0.0
    %2375 = vmatprep.subr.mxu0 0.0
    %2376 = vmatpush1.msra.mxu0 0.0
    %2377 = vmatprep.subr.mxu0 0.0
    %2378 = vmatpush1.msra.mxu0 0.0
    %2379 = vmatprep.mubr.f32.mxu0 0.0
    %v2380 = vand.u32 %v1929, 4294901760
    %v2381 = vsub.f32 %v1929, %v2380
    %v2382 = vand.u32 %v2381, 4294901760
    %2383 = vmatmul.mubr.f32.gmra.mrb[0].mxu0 %v2382
    %v2384 = vpop.f32.mrb[0].mxu0
    %v2385 = vadd.f32 %v2296, %v2384
    %v2386 = vpop.f32.mrb[0].mxu0
    %2387 = vdwg.mxu0
    %2388 = vmatprep.subr.mxu0 0.0
    %v2389 = vand.u32 %v1930, 4294901760
    %v2390 = vsub.f32 %v1930, %v2389
    %v2391 = vand.u32 %v2390, 4294901760
    %2392 = vmatpush1.msra.mxu0 %v2391
    %2393 = vmatprep.subr.mxu0 0.0
    %v2394 = vand.u32 %v1931, 4294901760
    %v2395 = vsub.f32 %v1931, %v2394
    %v2396 = vand.u32 %v2395, 4294901760
    %2397 = vmatpush1.msra.mxu0 %v2396
    %2398 = vmatprep.subr.mxu0 0.0
    %v2399 = vand.u32 %v1932, 4294901760
    %v2400 = vsub.f32 %v1932, %v2399
    %v2401 = vand.u32 %v2400, 4294901760
    %2402 = vmatpush1.msra.mxu0 %v2401
    %2403 = vmatprep.subr.mxu0 0.0
    %v2404 = vand.u32 %v1933, 4294901760
    %v2405 = vsub.f32 %v1933, %v2404
    %v2406 = vand.u32 %v2405, 4294901760
    %2407 = vmatpush1.msra.mxu0 %v2406
    %2408 = vmatprep.subr.mxu0 0.0
    %v2409 = vand.u32 %v1934, 4294901760
    %v2410 = vsub.f32 %v1934, %v2409
    %v2411 = vand.u32 %v2410, 4294901760
    %2412 = vmatpush1.msra.mxu0 %v2411
    %2413 = vmatprep.subr.mxu0 0.0
    %v2414 = vand.u32 %v1935, 4294901760
    %v2415 = vsub.f32 %v1935, %v2414
    %v2416 = vand.u32 %v2415, 4294901760
    %2417 = vmatpush1.msra.mxu0 %v2416
    %2418 = vmatprep.subr.mxu0 0.0
    %v2419 = vand.u32 %v1936, 4294901760
    %v2420 = vsub.f32 %v1936, %v2419
    %v2421 = vand.u32 %v2420, 4294901760
    %2422 = vmatpush1.msra.mxu0 %v2421
    %2423 = vmatprep.subr.mxu0 0.0
    %v2424 = vand.u32 %v1937, 4294901760
    %v2425 = vsub.f32 %v1937, %v2424
    %v2426 = vand.u32 %v2425, 4294901760
    %2427 = vmatpush1.msra.mxu0 %v2426
    %2428 = vmatprep.subr.mxu0 0.0
    %v2429 = vand.u32 %v1938, 4294901760
    %v2430 = vsub.f32 %v1938, %v2429
    %v2431 = vand.u32 %v2430, 4294901760
    %2432 = vmatpush1.msra.mxu0 %v2431
    %2433 = vmatprep.subr.mxu0 0.0
    %v2434 = vand.u32 %v1939, 4294901760
    %v2435 = vsub.f32 %v1939, %v2434
    %v2436 = vand.u32 %v2435, 4294901760
    %2437 = vmatpush1.msra.mxu0 %v2436
    %2438 = vmatprep.subr.mxu0 0.0
    %v2439 = vand.u32 %v1940, 4294901760
    %v2440 = vsub.f32 %v1940, %v2439
    %v2441 = vand.u32 %v2440, 4294901760
    %2442 = vmatpush1.msra.mxu0 %v2441
    %2443 = vmatprep.subr.mxu0 0.0
    %v2444 = vand.u32 %v1941, 4294901760
    %v2445 = vsub.f32 %v1941, %v2444
    %v2446 = vand.u32 %v2445, 4294901760
    %2447 = vmatpush1.msra.mxu0 %v2446
    %2448 = vmatprep.subr.mxu0 0.0
    %v2449 = vand.u32 %v1942, 4294901760
    %v2450 = vsub.f32 %v1942, %v2449
    %v2451 = vand.u32 %v2450, 4294901760
    %2452 = vmatpush1.msra.mxu0 %v2451
    %2453 = vmatprep.subr.mxu0 0.0
    %v2454 = vand.u32 %v1943, 4294901760
    %v2455 = vsub.f32 %v1943, %v2454
    %v2456 = vand.u32 %v2455, 4294901760
    %2457 = vmatpush1.msra.mxu0 %v2456
    %2458 = vmatprep.subr.mxu0 0.0
    %v2459 = vand.u32 %v1944, 4294901760
    %v2460 = vsub.f32 %v1944, %v2459
    %v2461 = vand.u32 %v2460, 4294901760
    %2462 = vmatpush1.msra.mxu0 %v2461
    %2463 = vmatprep.subr.mxu0 0.0
    %v2464 = vand.u32 %v1945, 4294901760
    %v2465 = vsub.f32 %v1945, %v2464
    %v2466 = vand.u32 %v2465, 4294901760
    %2467 = vmatpush1.msra.mxu0 %v2466
    %2468 = vmatprep.subr.mxu0 0.0
    %2469 = vmatpush1.msra.mxu0 0.0
    %2470 = vmatprep.subr.mxu0 0.0
    %2471 = vmatpush1.msra.mxu0 0.0
    %2472 = vmatprep.subr.mxu0 0.0
    %2473 = vmatpush1.msra.mxu0 0.0
    %2474 = vmatprep.subr.mxu0 0.0
    %2475 = vmatpush1.msra.mxu0 0.0
    %2476 = vmatprep.subr.mxu0 0.0
    %2477 = vmatpush1.msra.mxu0 0.0
    %2478 = vmatprep.subr.mxu0 0.0
    %2479 = vmatpush1.msra.mxu0 0.0
    %2480 = vmatprep.subr.mxu0 0.0
    %2481 = vmatpush1.msra.mxu0 0.0
    %2482 = vmatprep.subr.mxu0 0.0
    %2483 = vmatpush1.msra.mxu0 0.0
    %2484 = vmatprep.subr.mxu0 0.0
    %2485 = vmatpush1.msra.mxu0 0.0
    %2486 = vmatprep.subr.mxu0 0.0
    %2487 = vmatpush1.msra.mxu0 0.0
    %2488 = vmatprep.subr.mxu0 0.0
    %2489 = vmatpush1.msra.mxu0 0.0
    %2490 = vmatprep.subr.mxu0 0.0
    %2491 = vmatpush1.msra.mxu0 0.0
    %2492 = vmatprep.subr.mxu0 0.0
    %2493 = vmatpush1.msra.mxu0 0.0
    %2494 = vmatprep.subr.mxu0 0.0
    %2495 = vmatpush1.msra.mxu0 0.0
    %2496 = vmatprep.subr.mxu0 0.0
    %2497 = vmatpush1.msra.mxu0 0.0
    %2498 = vmatprep.subr.mxu0 0.0
    %2499 = vmatpush1.msra.mxu0 0.0
    %2500 = vmatprep.mubr.f32.mxu0 0.0
    %v2501 = vand.u32 %v1929, 4294901760
    %2502 = vmatmul.mubr.f32.gmra.mrb[0].mxu0 %v2501
    %v2503 = vpop.f32.mrb[0].mxu0
    %v2504 = vadd.f32 %v2385, %v2503
    %v2505 = vpop.f32.mrb[0].mxu0
    %2506 = vdwg.mxu0
    %2507 = vmatprep.subr.mxu0 0.0
    %v2508 = vand.u32 %v1930, 4294901760
    %2509 = vmatpush1.msra.mxu0 %v2508
    %2510 = vmatprep.subr.mxu0 0.0
    %v2511 = vand.u32 %v1931, 4294901760
    %2512 = vmatpush1.msra.mxu0 %v2511
    %2513 = vmatprep.subr.mxu0 0.0
    %v2514 = vand.u32 %v1932, 4294901760
    %2515 = vmatpush1.msra.mxu0 %v2514
    %2516 = vmatprep.subr.mxu0 0.0
    %v2517 = vand.u32 %v1933, 4294901760
    %2518 = vmatpush1.msra.mxu0 %v2517
    %2519 = vmatprep.subr.mxu0 0.0
    %v2520 = vand.u32 %v1934, 4294901760
    %2521 = vmatpush1.msra.mxu0 %v2520
    %2522 = vmatprep.subr.mxu0 0.0
    %v2523 = vand.u32 %v1935, 4294901760
    %2524 = vmatpush1.msra.mxu0 %v2523
    %2525 = vmatprep.subr.mxu0 0.0
    %v2526 = vand.u32 %v1936, 4294901760
    %2527 = vmatpush1.msra.mxu0 %v2526
    %2528 = vmatprep.subr.mxu0 0.0
    %v2529 = vand.u32 %v1937, 4294901760
    %2530 = vmatpush1.msra.mxu0 %v2529
    %2531 = vmatprep.subr.mxu0 0.0
    %v2532 = vand.u32 %v1938, 4294901760
    %2533 = vmatpush1.msra.mxu0 %v2532
    %2534 = vmatprep.subr.mxu0 0.0
    %v2535 = vand.u32 %v1939, 4294901760
    %2536 = vmatpush1.msra.mxu0 %v2535
    %2537 = vmatprep.subr.mxu0 0.0
    %v2538 = vand.u32 %v1940, 4294901760
    %2539 = vmatpush1.msra.mxu0 %v2538
    %2540 = vmatprep.subr.mxu0 0.0
    %v2541 = vand.u32 %v1941, 4294901760
    %2542 = vmatpush1.msra.mxu0 %v2541
    %2543 = vmatprep.subr.mxu0 0.0
    %v2544 = vand.u32 %v1942, 4294901760
    %2545 = vmatpush1.msra.mxu0 %v2544
    %2546 = vmatprep.subr.mxu0 0.0
    %v2547 = vand.u32 %v1943, 4294901760
    %2548 = vmatpush1.msra.mxu0 %v2547
    %2549 = vmatprep.subr.mxu0 0.0
    %v2550 = vand.u32 %v1944, 4294901760
    %2551 = vmatpush1.msra.mxu0 %v2550
    %2552 = vmatprep.subr.mxu0 0.0
    %v2553 = vand.u32 %v1945, 4294901760
    %2554 = vmatpush1.msra.mxu0 %v2553
    %2555 = vmatprep.subr.mxu0 0.0
    %2556 = vmatpush1.msra.mxu0 0.0
    %2557 = vmatprep.subr.mxu0 0.0
    %2558 = vmatpush1.msra.mxu0 0.0
    %2559 = vmatprep.subr.mxu0 0.0
    %2560 = vmatpush1.msra.mxu0 0.0
    %2561 = vmatprep.subr.mxu0 0.0
    %2562 = vmatpush1.msra.mxu0 0.0
    %2563 = vmatprep.subr.mxu0 0.0
    %2564 = vmatpush1.msra.mxu0 0.0
    %2565 = vmatprep.subr.mxu0 0.0
    %2566 = vmatpush1.msra.mxu0 0.0
    %2567 = vmatprep.subr.mxu0 0.0
    %2568 = vmatpush1.msra.mxu0 0.0
    %2569 = vmatprep.subr.mxu0 0.0
    %2570 = vmatpush1.msra.mxu0 0.0
    %2571 = vmatprep.subr.mxu0 0.0
    %2572 = vmatpush1.msra.mxu0 0.0
    %2573 = vmatprep.subr.mxu0 0.0
    %2574 = vmatpush1.msra.mxu0 0.0
    %2575 = vmatprep.subr.mxu0 0.0
    %2576 = vmatpush1.msra.mxu0 0.0
    %2577 = vmatprep.subr.mxu0 0.0
    %2578 = vmatpush1.msra.mxu0 0.0
    %2579 = vmatprep.subr.mxu0 0.0
    %2580 = vmatpush1.msra.mxu0 0.0
    %2581 = vmatprep.subr.mxu0 0.0
    %2582 = vmatpush1.msra.mxu0 0.0
    %2583 = vmatprep.subr.mxu0 0.0
    %2584 = vmatpush1.msra.mxu0 0.0
    %2585 = vmatprep.subr.mxu0 0.0
    %2586 = vmatpush1.msra.mxu0 0.0
    %2587 = vmatprep.mubr.f32.mxu0 0.0
    %v2588 = vand.u32 %v1929, 4294901760
    %2589 = vmatmul.mubr.f32.gmra.mrb[0].mxu0 %v2588
    %v2590 = vpop.f32.mrb[0].mxu0
    %v2591 = vadd.f32 %v2504, %v2590
    %v2592 = vpop.f32.mrb[0].mxu0
    %2593 = vdwg.mxu0
    %v2594 = vmul.f32 %v2591, %v2591
    %v2596 = vrot.slane %v2591, 1
    %v2598 = vadd.f32 %v2591, %v2596
    %v2600 = vrot.slane %v2594, 1
    %v2602 = vadd.f32 %v2594, %v2600
    %v2604 = vrot.slane %v2602, 7
    %v2606 = vsel %vm768, %v2598, %v2604
    %v2607 = vld [vmem:[%s9] sm:$0xff]
    %v2608 = vld [vmem:[%s9 + $0x8] sm:$0xff]
    %v2609 = vld [vmem:[%s9 + $0x10] sm:$0xff]
    %v2610 = vld [vmem:[%s9 + $0x18] sm:$0xff]
    %v2611 = vld [vmem:[%s9 + $0x20] sm:$0xff]
    %v2612 = vld [vmem:[%s9 + $0x28] sm:$0xff]
    %v2613 = vld [vmem:[%s9 + $0x30] sm:$0xff]
    %v2614 = vld [vmem:[%s9 + $0x38] sm:$0xff]
    %v2615 = vld [vmem:[%s9 + $0x40] sm:$0xff]
    %v2616 = vld [vmem:[%s9 + $0x48] sm:$0xff]
    %v2617 = vld [vmem:[%s9 + $0x50] sm:$0xff]
    %v2618 = vld [vmem:[%s9 + $0x58] sm:$0xff]
    %v2619 = vld [vmem:[%s9 + $0x60] sm:$0xff]
    %v2620 = vld [vmem:[%s9 + $0x68] sm:$0xff]
    %v2621 = vld [vmem:[%s9 + $0x70] sm:$0xff]
    %v2622 = vld [vmem:[%s9 + $0x78] sm:$0xff]
    %2623 = vmatprep.subr.mxu0 0.0
    %v2624 = vand.u32 %v2607, 4294901760
    %2625 = vmatpush1.msra.mxu0 %v2624
    %2626 = vmatprep.subr.mxu0 0.0
    %v2627 = vand.u32 %v2608, 4294901760
    %2628 = vmatpush1.msra.mxu0 %v2627
    %2629 = vmatprep.subr.mxu0 0.0
    %v2630 = vand.u32 %v2609, 4294901760
    %2631 = vmatpush1.msra.mxu0 %v2630
    %2632 = vmatprep.subr.mxu0 0.0
    %v2633 = vand.u32 %v2610, 4294901760
    %2634 = vmatpush1.msra.mxu0 %v2633
    %2635 = vmatprep.subr.mxu0 0.0
    %v2636 = vand.u32 %v2611, 4294901760
    %2637 = vmatpush1.msra.mxu0 %v2636
    %2638 = vmatprep.subr.mxu0 0.0
    %v2639 = vand.u32 %v2612, 4294901760
    %2640 = vmatpush1.msra.mxu0 %v2639
    %2641 = vmatprep.subr.mxu0 0.0
    %v2642 = vand.u32 %v2613, 4294901760
    %2643 = vmatpush1.msra.mxu0 %v2642
    %2644 = vmatprep.subr.mxu0 0.0
    %v2645 = vand.u32 %v2614, 4294901760
    %2646 = vmatpush1.msra.mxu0 %v2645
    %2647 = vmatprep.subr.mxu0 0.0
    %v2648 = vand.u32 %v2615, 4294901760
    %2649 = vmatpush1.msra.mxu0 %v2648
    %2650 = vmatprep.subr.mxu0 0.0
    %v2651 = vand.u32 %v2616, 4294901760
    %2652 = vmatpush1.msra.mxu0 %v2651
    %2653 = vmatprep.subr.mxu0 0.0
    %v2654 = vand.u32 %v2617, 4294901760
    %2655 = vmatpush1.msra.mxu0 %v2654
    %2656 = vmatprep.subr.mxu0 0.0
    %v2657 = vand.u32 %v2618, 4294901760
    %2658 = vmatpush1.msra.mxu0 %v2657
    %2659 = vmatprep.subr.mxu0 0.0
    %v2660 = vand.u32 %v2619, 4294901760
    %2661 = vmatpush1.msra.mxu0 %v2660
    %2662 = vmatprep.subr.mxu0 0.0
    %v2663 = vand.u32 %v2620, 4294901760
    %2664 = vmatpush1.msra.mxu0 %v2663
    %2665 = vmatprep.subr.mxu0 0.0
    %v2666 = vand.u32 %v2621, 4294901760
    %2667 = vmatpush1.msra.mxu0 %v2666
    %2668 = vmatprep.subr.mxu0 0.0
    %v2669 = vand.u32 %v2622, 4294901760
    %2670 = vmatpush1.msra.mxu0 %v2669
    %2671 = vmatprep.subr.mxu0 0.0
    %2672 = vmatpush1.msra.mxu0 0.0
    %2673 = vmatprep.subr.mxu0 0.0
    %2674 = vmatpush1.msra.mxu0 0.0
    %2675 = vmatprep.subr.mxu0 0.0
    %2676 = vmatpush1.msra.mxu0 0.0
    %2677 = vmatprep.subr.mxu0 0.0
    %2678 = vmatpush1.msra.mxu0 0.0
    %2679 = vmatprep.subr.mxu0 0.0
    %2680 = vmatpush1.msra.mxu0 0.0
    %2681 = vmatprep.subr.mxu0 0.0
    %2682 = vmatpush1.msra.mxu0 0.0
    %2683 = vmatprep.subr.mxu0 0.0
    %2684 = vmatpush1.msra.mxu0 0.0
    %2685 = vmatprep.subr.mxu0 0.0
    %2686 = vmatpush1.msra.mxu0 0.0
    %2687 = vmatprep.subr.mxu0 0.0
    %2688 = vmatpush1.msra.mxu0 0.0
    %2689 = vmatprep.subr.mxu0 0.0
    %2690 = vmatpush1.msra.mxu0 0.0
    %2691 = vmatprep.subr.mxu0 0.0
    %2692 = vmatpush1.msra.mxu0 0.0
    %2693 = vmatprep.subr.mxu0 0.0
    %2694 = vmatpush1.msra.mxu0 0.0
    %2695 = vmatprep.subr.mxu0 0.0
    %2696 = vmatpush1.msra.mxu0 0.0
    %2697 = vmatprep.subr.mxu0 0.0
    %2698 = vmatpush1.msra.mxu0 0.0
    %2699 = vmatprep.subr.mxu0 0.0
    %2700 = vmatpush1.msra.mxu0 0.0
    %2701 = vmatprep.subr.mxu0 0.0
    %2702 = vmatpush1.msra.mxu0 0.0
    %2703 = vmatprep.mubr.f32.mxu0 0.0
    %v2704 = vand.u32 %v2606, 4294901760
    %v2705 = vsub.f32 %v2606, %v2704
    %v2706 = vand.u32 %v2705, 4294901760
    %v2707 = vsub.f32 %v2705, %v2706
    %v2708 = vand.u32 %v2707, 4294901760
    %2709 = vmatmul.mubr.f32.gmra.mrb[0].mxu0 %v2708
    %v2710 = vpop.f32.mrb[0].mxu0
    %v2711 = vadd.f32 0.0, %v2710
    %v2712 = vpop.f32.mrb[0].mxu0
    %2713 = vdwg.mxu0
    %2714 = vmatprep.subr.mxu0 0.0
    %v2715 = vand.u32 %v2607, 4294901760
    %v2716 = vsub.f32 %v2607, %v2715
    %v2717 = vand.u32 %v2716, 4294901760
    %v2718 = vsub.f32 %v2716, %v2717
    %v2719 = vand.u32 %v2718, 4294901760
    %2720 = vmatpush1.msra.mxu0 %v2719
    %2721 = vmatprep.subr.mxu0 0.0
    %v2722 = vand.u32 %v2608, 4294901760
    %v2723 = vsub.f32 %v2608, %v2722
    %v2724 = vand.u32 %v2723, 4294901760
    %v2725 = vsub.f32 %v2723, %v2724
    %v2726 = vand.u32 %v2725, 4294901760
    %2727 = vmatpush1.msra.mxu0 %v2726
    %2728 = vmatprep.subr.mxu0 0.0
    %v2729 = vand.u32 %v2609, 4294901760
    %v2730 = vsub.f32 %v2609, %v2729
    %v2731 = vand.u32 %v2730, 4294901760
    %v2732 = vsub.f32 %v2730, %v2731
    %v2733 = vand.u32 %v2732, 4294901760
    %2734 = vmatpush1.msra.mxu0 %v2733
    %2735 = vmatprep.subr.mxu0 0.0
    %v2736 = vand.u32 %v2610, 4294901760
    %v2737 = vsub.f32 %v2610, %v2736
    %v2738 = vand.u32 %v2737, 4294901760
    %v2739 = vsub.f32 %v2737, %v2738
    %v2740 = vand.u32 %v2739, 4294901760
    %2741 = vmatpush1.msra.mxu0 %v2740
    %2742 = vmatprep.subr.mxu0 0.0
    %v2743 = vand.u32 %v2611, 4294901760
    %v2744 = vsub.f32 %v2611, %v2743
    %v2745 = vand.u32 %v2744, 4294901760
    %v2746 = vsub.f32 %v2744, %v2745
    %v2747 = vand.u32 %v2746, 4294901760
    %2748 = vmatpush1.msra.mxu0 %v2747
    %2749 = vmatprep.subr.mxu0 0.0
    %v2750 = vand.u32 %v2612, 4294901760
    %v2751 = vsub.f32 %v2612, %v2750
    %v2752 = vand.u32 %v2751, 4294901760
    %v2753 = vsub.f32 %v2751, %v2752
    %v2754 = vand.u32 %v2753, 4294901760
    %2755 = vmatpush1.msra.mxu0 %v2754
    %2756 = vmatprep.subr.mxu0 0.0
    %v2757 = vand.u32 %v2613, 4294901760
    %v2758 = vsub.f32 %v2613, %v2757
    %v2759 = vand.u32 %v2758, 4294901760
    %v2760 = vsub.f32 %v2758, %v2759
    %v2761 = vand.u32 %v2760, 4294901760
    %2762 = vmatpush1.msra.mxu0 %v2761
    %2763 = vmatprep.subr.mxu0 0.0
    %v2764 = vand.u32 %v2614, 4294901760
    %v2765 = vsub.f32 %v2614, %v2764
    %v2766 = vand.u32 %v2765, 4294901760
    %v2767 = vsub.f32 %v2765, %v2766
    %v2768 = vand.u32 %v2767, 4294901760
    %2769 = vmatpush1.msra.mxu0 %v2768
    %2770 = vmatprep.subr.mxu0 0.0
    %v2771 = vand.u32 %v2615, 4294901760
    %v2772 = vsub.f32 %v2615, %v2771
    %v2773 = vand.u32 %v2772, 4294901760
    %v2774 = vsub.f32 %v2772, %v2773
    %v2775 = vand.u32 %v2774, 4294901760
    %2776 = vmatpush1.msra.mxu0 %v2775
    %2777 = vmatprep.subr.mxu0 0.0
    %v2778 = vand.u32 %v2616, 4294901760
    %v2779 = vsub.f32 %v2616, %v2778
    %v2780 = vand.u32 %v2779, 4294901760
    %v2781 = vsub.f32 %v2779, %v2780
    %v2782 = vand.u32 %v2781, 4294901760
    %2783 = vmatpush1.msra.mxu0 %v2782
    %2784 = vmatprep.subr.mxu0 0.0
    %v2785 = vand.u32 %v2617, 4294901760
    %v2786 = vsub.f32 %v2617, %v2785
    %v2787 = vand.u32 %v2786, 4294901760
    %v2788 = vsub.f32 %v2786, %v2787
    %v2789 = vand.u32 %v2788, 4294901760
    %2790 = vmatpush1.msra.mxu0 %v2789
    %2791 = vmatprep.subr.mxu0 0.0
    %v2792 = vand.u32 %v2618, 4294901760
    %v2793 = vsub.f32 %v2618, %v2792
    %v2794 = vand.u32 %v2793, 4294901760
    %v2795 = vsub.f32 %v2793, %v2794
    %v2796 = vand.u32 %v2795, 4294901760
    %2797 = vmatpush1.msra.mxu0 %v2796
    %2798 = vmatprep.subr.mxu0 0.0
    %v2799 = vand.u32 %v2619, 4294901760
    %v2800 = vsub.f32 %v2619, %v2799
    %v2801 = vand.u32 %v2800, 4294901760
    %v2802 = vsub.f32 %v2800, %v2801
    %v2803 = vand.u32 %v2802, 4294901760
    %2804 = vmatpush1.msra.mxu0 %v2803
    %2805 = vmatprep.subr.mxu0 0.0
    %v2806 = vand.u32 %v2620, 4294901760
    %v2807 = vsub.f32 %v2620, %v2806
    %v2808 = vand.u32 %v2807, 4294901760
    %v2809 = vsub.f32 %v2807, %v2808
    %v2810 = vand.u32 %v2809, 4294901760
    %2811 = vmatpush1.msra.mxu0 %v2810
    %2812 = vmatprep.subr.mxu0 0.0
    %v2813 = vand.u32 %v2621, 4294901760
    %v2814 = vsub.f32 %v2621, %v2813
    %v2815 = vand.u32 %v2814, 4294901760
    %v2816 = vsub.f32 %v2814, %v2815
    %v2817 = vand.u32 %v2816, 4294901760
    %2818 = vmatpush1.msra.mxu0 %v2817
    %2819 = vmatprep.subr.mxu0 0.0
    %v2820 = vand.u32 %v2622, 4294901760
    %v2821 = vsub.f32 %v2622, %v2820
    %v2822 = vand.u32 %v2821, 4294901760
    %v2823 = vsub.f32 %v2821, %v2822
    %v2824 = vand.u32 %v2823, 4294901760
    %2825 = vmatpush1.msra.mxu0 %v2824
    %2826 = vmatprep.subr.mxu0 0.0
    %2827 = vmatpush1.msra.mxu0 0.0
    %2828 = vmatprep.subr.mxu0 0.0
    %2829 = vmatpush1.msra.mxu0 0.0
    %2830 = vmatprep.subr.mxu0 0.0
    %2831 = vmatpush1.msra.mxu0 0.0
    %2832 = vmatprep.subr.mxu0 0.0
    %2833 = vmatpush1.msra.mxu0 0.0
    %2834 = vmatprep.subr.mxu0 0.0
    %2835 = vmatpush1.msra.mxu0 0.0
    %2836 = vmatprep.subr.mxu0 0.0
    %2837 = vmatpush1.msra.mxu0 0.0
    %2838 = vmatprep.subr.mxu0 0.0
    %2839 = vmatpush1.msra.mxu0 0.0
    %2840 = vmatprep.subr.mxu0 0.0
    %2841 = vmatpush1.msra.mxu0 0.0
    %2842 = vmatprep.subr.mxu0 0.0
    %2843 = vmatpush1.msra.mxu0 0.0
    %2844 = vmatprep.subr.mxu0 0.0
    %2845 = vmatpush1.msra.mxu0 0.0
    %2846 = vmatprep.subr.mxu0 0.0
    %2847 = vmatpush1.msra.mxu0 0.0
    %2848 = vmatprep.subr.mxu0 0.0
    %2849 = vmatpush1.msra.mxu0 0.0
    %2850 = vmatprep.subr.mxu0 0.0
    %2851 = vmatpush1.msra.mxu0 0.0
    %2852 = vmatprep.subr.mxu0 0.0
    %2853 = vmatpush1.msra.mxu0 0.0
    %2854 = vmatprep.subr.mxu0 0.0
    %2855 = vmatpush1.msra.mxu0 0.0
    %2856 = vmatprep.subr.mxu0 0.0
    %2857 = vmatpush1.msra.mxu0 0.0
    %2858 = vmatprep.mubr.f32.mxu0 0.0
    %v2859 = vand.u32 %v2606, 4294901760
    %2860 = vmatmul.mubr.f32.gmra.mrb[0].mxu0 %v2859
    %v2861 = vpop.f32.mrb[0].mxu0
    %v2862 = vadd.f32 %v2711, %v2861
    %v2863 = vpop.f32.mrb[0].mxu0
    %2864 = vdwg.mxu0
    %2865 = vmatprep.subr.mxu0 0.0
    %v2866 = vand.u32 %v2607, 4294901760
    %v2867 = vsub.f32 %v2607, %v2866
    %2868 = vmatpush1.msra.mxu0 %v2867
    %2869 = vmatprep.subr.mxu0 0.0
    %v2870 = vand.u32 %v2608, 4294901760
    %v2871 = vsub.f32 %v2608, %v2870
    %2872 = vmatpush1.msra.mxu0 %v2871
    %2873 = vmatprep.subr.mxu0 0.0
    %v2874 = vand.u32 %v2609, 4294901760
    %v2875 = vsub.f32 %v2609, %v2874
    %2876 = vmatpush1.msra.mxu0 %v2875
    %2877 = vmatprep.subr.mxu0 0.0
    %v2878 = vand.u32 %v2610, 4294901760
    %v2879 = vsub.f32 %v2610, %v2878
    %2880 = vmatpush1.msra.mxu0 %v2879
    %2881 = vmatprep.subr.mxu0 0.0
    %v2882 = vand.u32 %v2611, 4294901760
    %v2883 = vsub.f32 %v2611, %v2882
    %2884 = vmatpush1.msra.mxu0 %v2883
    %2885 = vmatprep.subr.mxu0 0.0
    %v2886 = vand.u32 %v2612, 4294901760
    %v2887 = vsub.f32 %v2612, %v2886
    %2888 = vmatpush1.msra.mxu0 %v2887
    %2889 = vmatprep.subr.mxu0 0.0
    %v2890 = vand.u32 %v2613, 4294901760
    %v2891 = vsub.f32 %v2613, %v2890
    %2892 = vmatpush1.msra.mxu0 %v2891
    %2893 = vmatprep.subr.mxu0 0.0
    %v2894 = vand.u32 %v2614, 4294901760
    %v2895 = vsub.f32 %v2614, %v2894
    %2896 = vmatpush1.msra.mxu0 %v2895
    %2897 = vmatprep.subr.mxu0 0.0
    %v2898 = vand.u32 %v2615, 4294901760
    %v2899 = vsub.f32 %v2615, %v2898
    %2900 = vmatpush1.msra.mxu0 %v2899
    %2901 = vmatprep.subr.mxu0 0.0
    %v2902 = vand.u32 %v2616, 4294901760
    %v2903 = vsub.f32 %v2616, %v2902
    %2904 = vmatpush1.msra.mxu0 %v2903
    %2905 = vmatprep.subr.mxu0 0.0
    %v2906 = vand.u32 %v2617, 4294901760
    %v2907 = vsub.f32 %v2617, %v2906
    %2908 = vmatpush1.msra.mxu0 %v2907
    %2909 = vmatprep.subr.mxu0 0.0
    %v2910 = vand.u32 %v2618, 4294901760
    %v2911 = vsub.f32 %v2618, %v2910
    %2912 = vmatpush1.msra.mxu0 %v2911
    %2913 = vmatprep.subr.mxu0 0.0
    %v2914 = vand.u32 %v2619, 4294901760
    %v2915 = vsub.f32 %v2619, %v2914
    %2916 = vmatpush1.msra.mxu0 %v2915
    %2917 = vmatprep.subr.mxu0 0.0
    %v2918 = vand.u32 %v2620, 4294901760
    %v2919 = vsub.f32 %v2620, %v2918
    %2920 = vmatpush1.msra.mxu0 %v2919
    %2921 = vmatprep.subr.mxu0 0.0
    %v2922 = vand.u32 %v2621, 4294901760
    %v2923 = vsub.f32 %v2621, %v2922
    %2924 = vmatpush1.msra.mxu0 %v2923
    %2925 = vmatprep.subr.mxu0 0.0
    %v2926 = vand.u32 %v2622, 4294901760
    %v2927 = vsub.f32 %v2622, %v2926
    %2928 = vmatpush1.msra.mxu0 %v2927
    %2929 = vmatprep.subr.mxu0 0.0
    %2930 = vmatpush1.msra.mxu0 0.0
    %2931 = vmatprep.subr.mxu0 0.0
    %2932 = vmatpush1.msra.mxu0 0.0
    %2933 = vmatprep.subr.mxu0 0.0
    %2934 = vmatpush1.msra.mxu0 0.0
    %2935 = vmatprep.subr.mxu0 0.0
    %2936 = vmatpush1.msra.mxu0 0.0
    %2937 = vmatprep.subr.mxu0 0.0
    %2938 = vmatpush1.msra.mxu0 0.0
    %2939 = vmatprep.subr.mxu0 0.0
    %2940 = vmatpush1.msra.mxu0 0.0
    %2941 = vmatprep.subr.mxu0 0.0
    %2942 = vmatpush1.msra.mxu0 0.0
    %2943 = vmatprep.subr.mxu0 0.0
    %2944 = vmatpush1.msra.mxu0 0.0
    %2945 = vmatprep.subr.mxu0 0.0
    %2946 = vmatpush1.msra.mxu0 0.0
    %2947 = vmatprep.subr.mxu0 0.0
    %2948 = vmatpush1.msra.mxu0 0.0
    %2949 = vmatprep.subr.mxu0 0.0
    %2950 = vmatpush1.msra.mxu0 0.0
    %2951 = vmatprep.subr.mxu0 0.0
    %2952 = vmatpush1.msra.mxu0 0.0
    %2953 = vmatprep.subr.mxu0 0.0
    %2954 = vmatpush1.msra.mxu0 0.0
    %2955 = vmatprep.subr.mxu0 0.0
    %2956 = vmatpush1.msra.mxu0 0.0
    %2957 = vmatprep.subr.mxu0 0.0
    %2958 = vmatpush1.msra.mxu0 0.0
    %2959 = vmatprep.subr.mxu0 0.0
    %2960 = vmatpush1.msra.mxu0 0.0
    %2961 = vmatprep.mubr.f32.mxu0 0.0
    %v2962 = vand.u32 %v2606, 4294901760
    %v2963 = vsub.f32 %v2606, %v2962
    %2964 = vmatmul.mubr.f32.gmra.mrb[0].mxu0 %v2963
    %v2965 = vpop.f32.mrb[0].mxu0
    %v2966 = vadd.f32 %v2862, %v2965
    %v2967 = vpop.f32.mrb[0].mxu0
    %2968 = vdwg.mxu0
    %2969 = vmatprep.subr.mxu0 0.0
    %v2970 = vand.u32 %v2607, 4294901760
    %2971 = vmatpush1.msra.mxu0 %v2970
    %2972 = vmatprep.subr.mxu0 0.0
    %v2973 = vand.u32 %v2608, 4294901760
    %2974 = vmatpush1.msra.mxu0 %v2973
    %2975 = vmatprep.subr.mxu0 0.0
    %v2976 = vand.u32 %v2609, 4294901760
    %2977 = vmatpush1.msra.mxu0 %v2976
    %2978 = vmatprep.subr.mxu0 0.0
    %v2979 = vand.u32 %v2610, 4294901760
    %2980 = vmatpush1.msra.mxu0 %v2979
    %2981 = vmatprep.subr.mxu0 0.0
    %v2982 = vand.u32 %v2611, 4294901760
    %2983 = vmatpush1.msra.mxu0 %v2982
    %2984 = vmatprep.subr.mxu0 0.0
    %v2985 = vand.u32 %v2612, 4294901760
    %2986 = vmatpush1.msra.mxu0 %v2985
    %2987 = vmatprep.subr.mxu0 0.0
    %v2988 = vand.u32 %v2613, 4294901760
    %2989 = vmatpush1.msra.mxu0 %v2988
    %2990 = vmatprep.subr.mxu0 0.0
    %v2991 = vand.u32 %v2614, 4294901760
    %2992 = vmatpush1.msra.mxu0 %v2991
    %2993 = vmatprep.subr.mxu0 0.0
    %v2994 = vand.u32 %v2615, 4294901760
    %2995 = vmatpush1.msra.mxu0 %v2994
    %2996 = vmatprep.subr.mxu0 0.0
    %v2997 = vand.u32 %v2616, 4294901760
    %2998 = vmatpush1.msra.mxu0 %v2997
    %2999 = vmatprep.subr.mxu0 0.0
    %v3000 = vand.u32 %v2617, 4294901760
    %3001 = vmatpush1.msra.mxu0 %v3000
    %3002 = vmatprep.subr.mxu0 0.0
    %v3003 = vand.u32 %v2618, 4294901760
    %3004 = vmatpush1.msra.mxu0 %v3003
    %3005 = vmatprep.subr.mxu0 0.0
    %v3006 = vand.u32 %v2619, 4294901760
    %3007 = vmatpush1.msra.mxu0 %v3006
    %3008 = vmatprep.subr.mxu0 0.0
    %v3009 = vand.u32 %v2620, 4294901760
    %3010 = vmatpush1.msra.mxu0 %v3009
    %3011 = vmatprep.subr.mxu0 0.0
    %v3012 = vand.u32 %v2621, 4294901760
    %3013 = vmatpush1.msra.mxu0 %v3012
    %3014 = vmatprep.subr.mxu0 0.0
    %v3015 = vand.u32 %v2622, 4294901760
    %3016 = vmatpush1.msra.mxu0 %v3015
    %3017 = vmatprep.subr.mxu0 0.0
    %3018 = vmatpush1.msra.mxu0 0.0
    %3019 = vmatprep.subr.mxu0 0.0
    %3020 = vmatpush1.msra.mxu0 0.0
    %3021 = vmatprep.subr.mxu0 0.0
    %3022 = vmatpush1.msra.mxu0 0.0
    %3023 = vmatprep.subr.mxu0 0.0
    %3024 = vmatpush1.msra.mxu0 0.0
    %3025 = vmatprep.subr.mxu0 0.0
    %3026 = vmatpush1.msra.mxu0 0.0
    %3027 = vmatprep.subr.mxu0 0.0
    %3028 = vmatpush1.msra.mxu0 0.0
    %3029 = vmatprep.subr.mxu0 0.0
    %3030 = vmatpush1.msra.mxu0 0.0
    %3031 = vmatprep.subr.mxu0 0.0
    %3032 = vmatpush1.msra.mxu0 0.0
    %3033 = vmatprep.subr.mxu0 0.0
    %3034 = vmatpush1.msra.mxu0 0.0
    %3035 = vmatprep.subr.mxu0 0.0
    %3036 = vmatpush1.msra.mxu0 0.0
    %3037 = vmatprep.subr.mxu0 0.0
    %3038 = vmatpush1.msra.mxu0 0.0
    %3039 = vmatprep.subr.mxu0 0.0
    %3040 = vmatpush1.msra.mxu0 0.0
    %3041 = vmatprep.subr.mxu0 0.0
    %3042 = vmatpush1.msra.mxu0 0.0
    %3043 = vmatprep.subr.mxu0 0.0
    %3044 = vmatpush1.msra.mxu0 0.0
    %3045 = vmatprep.subr.mxu0 0.0
    %3046 = vmatpush1.msra.mxu0 0.0
    %3047 = vmatprep.subr.mxu0 0.0
    %3048 = vmatpush1.msra.mxu0 0.0
    %3049 = vmatprep.mubr.f32.mxu0 0.0
    %v3050 = vand.u32 %v2606, 4294901760
    %v3051 = vsub.f32 %v2606, %v3050
    %v3052 = vand.u32 %v3051, 4294901760
    %3053 = vmatmul.mubr.f32.gmra.mrb[0].mxu0 %v3052
    %v3054 = vpop.f32.mrb[0].mxu0
    %v3055 = vadd.f32 %v2966, %v3054
    %v3056 = vpop.f32.mrb[0].mxu0
    %3057 = vdwg.mxu0
    %3058 = vmatprep.subr.mxu0 0.0
    %v3059 = vand.u32 %v2607, 4294901760
    %v3060 = vsub.f32 %v2607, %v3059
    %v3061 = vand.u32 %v3060, 4294901760
    %3062 = vmatpush1.msra.mxu0 %v3061
    %3063 = vmatprep.subr.mxu0 0.0
    %v3064 = vand.u32 %v2608, 4294901760
    %v3065 = vsub.f32 %v2608, %v3064
    %v3066 = vand.u32 %v3065, 4294901760
    %3067 = vmatpush1.msra.mxu0 %v3066
    %3068 = vmatprep.subr.mxu0 0.0
    %v3069 = vand.u32 %v2609, 4294901760
    %v3070 = vsub.f32 %v2609, %v3069
    %v3071 = vand.u32 %v3070, 4294901760
    %3072 = vmatpush1.msra.mxu0 %v3071
    %3073 = vmatprep.subr.mxu0 0.0
    %v3074 = vand.u32 %v2610, 4294901760
    %v3075 = vsub.f32 %v2610, %v3074
    %v3076 = vand.u32 %v3075, 4294901760
    %3077 = vmatpush1.msra.mxu0 %v3076
    %3078 = vmatprep.subr.mxu0 0.0
    %v3079 = vand.u32 %v2611, 4294901760
    %v3080 = vsub.f32 %v2611, %v3079
    %v3081 = vand.u32 %v3080, 4294901760
    %3082 = vmatpush1.msra.mxu0 %v3081
    %3083 = vmatprep.subr.mxu0 0.0
    %v3084 = vand.u32 %v2612, 4294901760
    %v3085 = vsub.f32 %v2612, %v3084
    %v3086 = vand.u32 %v3085, 4294901760
    %3087 = vmatpush1.msra.mxu0 %v3086
    %3088 = vmatprep.subr.mxu0 0.0
    %v3089 = vand.u32 %v2613, 4294901760
    %v3090 = vsub.f32 %v2613, %v3089
    %v3091 = vand.u32 %v3090, 4294901760
    %3092 = vmatpush1.msra.mxu0 %v3091
    %3093 = vmatprep.subr.mxu0 0.0
    %v3094 = vand.u32 %v2614, 4294901760
    %v3095 = vsub.f32 %v2614, %v3094
    %v3096 = vand.u32 %v3095, 4294901760
    %3097 = vmatpush1.msra.mxu0 %v3096
    %3098 = vmatprep.subr.mxu0 0.0
    %v3099 = vand.u32 %v2615, 4294901760
    %v3100 = vsub.f32 %v2615, %v3099
    %v3101 = vand.u32 %v3100, 4294901760
    %3102 = vmatpush1.msra.mxu0 %v3101
    %3103 = vmatprep.subr.mxu0 0.0
    %v3104 = vand.u32 %v2616, 4294901760
    %v3105 = vsub.f32 %v2616, %v3104
    %v3106 = vand.u32 %v3105, 4294901760
    %3107 = vmatpush1.msra.mxu0 %v3106
    %3108 = vmatprep.subr.mxu0 0.0
    %v3109 = vand.u32 %v2617, 4294901760
    %v3110 = vsub.f32 %v2617, %v3109
    %v3111 = vand.u32 %v3110, 4294901760
    %3112 = vmatpush1.msra.mxu0 %v3111
    %3113 = vmatprep.subr.mxu0 0.0
    %v3114 = vand.u32 %v2618, 4294901760
    %v3115 = vsub.f32 %v2618, %v3114
    %v3116 = vand.u32 %v3115, 4294901760
    %3117 = vmatpush1.msra.mxu0 %v3116
    %3118 = vmatprep.subr.mxu0 0.0
    %v3119 = vand.u32 %v2619, 4294901760
    %v3120 = vsub.f32 %v2619, %v3119
    %v3121 = vand.u32 %v3120, 4294901760
    %3122 = vmatpush1.msra.mxu0 %v3121
    %3123 = vmatprep.subr.mxu0 0.0
    %v3124 = vand.u32 %v2620, 4294901760
    %v3125 = vsub.f32 %v2620, %v3124
    %v3126 = vand.u32 %v3125, 4294901760
    %3127 = vmatpush1.msra.mxu0 %v3126
    %3128 = vmatprep.subr.mxu0 0.0
    %v3129 = vand.u32 %v2621, 4294901760
    %v3130 = vsub.f32 %v2621, %v3129
    %v3131 = vand.u32 %v3130, 4294901760
    %3132 = vmatpush1.msra.mxu0 %v3131
    %3133 = vmatprep.subr.mxu0 0.0
    %v3134 = vand.u32 %v2622, 4294901760
    %v3135 = vsub.f32 %v2622, %v3134
    %v3136 = vand.u32 %v3135, 4294901760
    %3137 = vmatpush1.msra.mxu0 %v3136
    %3138 = vmatprep.subr.mxu0 0.0
    %3139 = vmatpush1.msra.mxu0 0.0
    %3140 = vmatprep.subr.mxu0 0.0
    %3141 = vmatpush1.msra.mxu0 0.0
    %3142 = vmatprep.subr.mxu0 0.0
    %3143 = vmatpush1.msra.mxu0 0.0
    %3144 = vmatprep.subr.mxu0 0.0
    %3145 = vmatpush1.msra.mxu0 0.0
    %3146 = vmatprep.subr.mxu0 0.0
    %3147 = vmatpush1.msra.mxu0 0.0
    %3148 = vmatprep.subr.mxu0 0.0
    %3149 = vmatpush1.msra.mxu0 0.0
    %3150 = vmatprep.subr.mxu0 0.0
    %3151 = vmatpush1.msra.mxu0 0.0
    %3152 = vmatprep.subr.mxu0 0.0
    %3153 = vmatpush1.msra.mxu0 0.0
    %3154 = vmatprep.subr.mxu0 0.0
    %3155 = vmatpush1.msra.mxu0 0.0
    %3156 = vmatprep.subr.mxu0 0.0
    %3157 = vmatpush1.msra.mxu0 0.0
    %3158 = vmatprep.subr.mxu0 0.0
    %3159 = vmatpush1.msra.mxu0 0.0
    %3160 = vmatprep.subr.mxu0 0.0
    %3161 = vmatpush1.msra.mxu0 0.0
    %3162 = vmatprep.subr.mxu0 0.0
    %3163 = vmatpush1.msra.mxu0 0.0
    %3164 = vmatprep.subr.mxu0 0.0
    %3165 = vmatpush1.msra.mxu0 0.0
    %3166 = vmatprep.subr.mxu0 0.0
    %3167 = vmatpush1.msra.mxu0 0.0
    %3168 = vmatprep.subr.mxu0 0.0
    %3169 = vmatpush1.msra.mxu0 0.0
    %3170 = vmatprep.mubr.f32.mxu0 0.0
    %v3171 = vand.u32 %v2606, 4294901760
    %3172 = vmatmul.mubr.f32.gmra.mrb[0].mxu0 %v3171
    %v3173 = vpop.f32.mrb[0].mxu0
    %v3174 = vadd.f32 %v3055, %v3173
    %v3175 = vpop.f32.mrb[0].mxu0
    %3176 = vdwg.mxu0
    %3177 = vmatprep.subr.mxu0 0.0
    %v3178 = vand.u32 %v2607, 4294901760
    %3179 = vmatpush1.msra.mxu0 %v3178
    %3180 = vmatprep.subr.mxu0 0.0
    %v3181 = vand.u32 %v2608, 4294901760
    %3182 = vmatpush1.msra.mxu0 %v3181
    %3183 = vmatprep.subr.mxu0 0.0
    %v3184 = vand.u32 %v2609, 4294901760
    %3185 = vmatpush1.msra.mxu0 %v3184
    %3186 = vmatprep.subr.mxu0 0.0
    %v3187 = vand.u32 %v2610, 4294901760
    %3188 = vmatpush1.msra.mxu0 %v3187
    %3189 = vmatprep.subr.mxu0 0.0
    %v3190 = vand.u32 %v2611, 4294901760
    %3191 = vmatpush1.msra.mxu0 %v3190
    %3192 = vmatprep.subr.mxu0 0.0
    %v3193 = vand.u32 %v2612, 4294901760
    %3194 = vmatpush1.msra.mxu0 %v3193
    %3195 = vmatprep.subr.mxu0 0.0
    %v3196 = vand.u32 %v2613, 4294901760
    %3197 = vmatpush1.msra.mxu0 %v3196
    %3198 = vmatprep.subr.mxu0 0.0
    %v3199 = vand.u32 %v2614, 4294901760
    %3200 = vmatpush1.msra.mxu0 %v3199
    %3201 = vmatprep.subr.mxu0 0.0
    %v3202 = vand.u32 %v2615, 4294901760
    %3203 = vmatpush1.msra.mxu0 %v3202
    %3204 = vmatprep.subr.mxu0 0.0
    %v3205 = vand.u32 %v2616, 4294901760
    %3206 = vmatpush1.msra.mxu0 %v3205
    %3207 = vmatprep.subr.mxu0 0.0
    %v3208 = vand.u32 %v2617, 4294901760
    %3209 = vmatpush1.msra.mxu0 %v3208
    %3210 = vmatprep.subr.mxu0 0.0
    %v3211 = vand.u32 %v2618, 4294901760
    %3212 = vmatpush1.msra.mxu0 %v3211
    %3213 = vmatprep.subr.mxu0 0.0
    %v3214 = vand.u32 %v2619, 4294901760
    %3215 = vmatpush1.msra.mxu0 %v3214
    %3216 = vmatprep.subr.mxu0 0.0
    %v3217 = vand.u32 %v2620, 4294901760
    %3218 = vmatpush1.msra.mxu0 %v3217
    %3219 = vmatprep.subr.mxu0 0.0
    %v3220 = vand.u32 %v2621, 4294901760
    %3221 = vmatpush1.msra.mxu0 %v3220
    %3222 = vmatprep.subr.mxu0 0.0
    %v3223 = vand.u32 %v2622, 4294901760
    %3224 = vmatpush1.msra.mxu0 %v3223
    %3225 = vmatprep.subr.mxu0 0.0
    %3226 = vmatpush1.msra.mxu0 0.0
    %3227 = vmatprep.subr.mxu0 0.0
    %3228 = vmatpush1.msra.mxu0 0.0
    %3229 = vmatprep.subr.mxu0 0.0
    %3230 = vmatpush1.msra.mxu0 0.0
    %3231 = vmatprep.subr.mxu0 0.0
    %3232 = vmatpush1.msra.mxu0 0.0
    %3233 = vmatprep.subr.mxu0 0.0
    %3234 = vmatpush1.msra.mxu0 0.0
    %3235 = vmatprep.subr.mxu0 0.0
    %3236 = vmatpush1.msra.mxu0 0.0
    %3237 = vmatprep.subr.mxu0 0.0
    %3238 = vmatpush1.msra.mxu0 0.0
    %3239 = vmatprep.subr.mxu0 0.0
    %3240 = vmatpush1.msra.mxu0 0.0
    %3241 = vmatprep.subr.mxu0 0.0
    %3242 = vmatpush1.msra.mxu0 0.0
    %3243 = vmatprep.subr.mxu0 0.0
    %3244 = vmatpush1.msra.mxu0 0.0
    %3245 = vmatprep.subr.mxu0 0.0
    %3246 = vmatpush1.msra.mxu0 0.0
    %3247 = vmatprep.subr.mxu0 0.0
    %3248 = vmatpush1.msra.mxu0 0.0
    %3249 = vmatprep.subr.mxu0 0.0
    %3250 = vmatpush1.msra.mxu0 0.0
    %3251 = vmatprep.subr.mxu0 0.0
    %3252 = vmatpush1.msra.mxu0 0.0
    %3253 = vmatprep.subr.mxu0 0.0
    %3254 = vmatpush1.msra.mxu0 0.0
    %3255 = vmatprep.subr.mxu0 0.0
    %3256 = vmatpush1.msra.mxu0 0.0
    %3257 = vmatprep.mubr.f32.mxu0 0.0
    %v3258 = vand.u32 %v2606, 4294901760
    %3259 = vmatmul.mubr.f32.gmra.mrb[0].mxu0 %v3258
    %v3260 = vpop.f32.mrb[0].mxu0
    %v3261 = vadd.f32 %v3174, %v3260
    %v3262 = vpop.f32.mrb[0].mxu0
    %3263 = vdwg.mxu0
    %v3264 = vmul.f32 %v3261, 0.0078125
    %v3265 = vmul.f32 %v3264, %v3264
    %v3267 = vrot.slane %v3265, 7
    %v3269 = vsub.f32 %v3264, %v3267
    %v3270 = vld [vmem:[%s11] sm:$0x1]
    %v3271 = vadd.f32 %v3269, 1e-05
    %v3272 = vrsqrt.pop %v3271
    %v3275 = vunpack.c.l.s4 1966171168
    %v3276 = vunpack.c.0.s8 %v3275
    %v3277 = vlaneseq
    %v3278 = vshrl.u32 %v3277, 7
    %v3279 = vsub.s32 %v3276, %v3278
    %v3280 = vrot.slane %v3272, %v3279
    %v3281 = vcombine.high %v3280, %v3280
    %v3283 = vunpack.c.l.s4 1966171168
    %v3284 = vunpack.c.0.s8 %v3283
    %v3285 = vlaneseq
    %v3286 = vshrl.u32 %v3285, 7
    %v3287 = vsub.s32 %v3284, %v3286
    %v3288 = vrot.slane %v3281, %v3287
    %v3290 = vmul.f32 %v3270, %v3288
    %v3291 = vld [vmem:[%s12] sm:$0x1]
    %v3292 = vmul.f32 %v3264, %v3290
    %v3293 = vsub.f32 %v3291, %v3292
    %v3295 = vlaneseq
    %v3296 = vshrl.u32 %v3295, 7
    %v3297 = vsub.s32 0, %v3296
    %v3298 = vrot.slane %v3293, %v3297
    %v3300 = vsel %vm768, %v3290, %v3298
    %v3301 = vld [vmem:[%s10] sm:$0x3]
    %vm3302 = vcmask 15360
    %v3304 = vsel %vm3302, %v3300, 0
    %vm3306 = vcmask 1041408
    %v3308 = vsel %vm3306, %v3301, 0
    %3310 = vmatprep.subr.mxu0 0.0
    %v3311 = vand.u32 %v3308, 4294901760
    %3312 = vmatpush1.msra.mxu0 %v3311
    %3313 = vmatprep.subr.mxu0 0.0
    %3314 = vmatpush1.msra.mxu0 0.0
    %3315 = vmatprep.subr.mxu0 0.0
    %3316 = vmatpush1.msra.mxu0 0.0
    %3317 = vmatprep.subr.mxu0 0.0
    %3318 = vmatpush1.msra.mxu0 0.0
    %3319 = vmatprep.subr.mxu0 0.0
    %3320 = vmatpush1.msra.mxu0 0.0
    %3321 = vmatprep.subr.mxu0 0.0
    %3322 = vmatpush1.msra.mxu0 0.0
    %3323 = vmatprep.subr.mxu0 0.0
    %3324 = vmatpush1.msra.mxu0 0.0
    %3325 = vmatprep.subr.mxu0 0.0
    %3326 = vmatpush1.msra.mxu0 0.0
    %3327 = vmatprep.subr.mxu0 0.0
    %3328 = vmatpush1.msra.mxu0 0.0
    %3329 = vmatprep.subr.mxu0 0.0
    %3330 = vmatpush1.msra.mxu0 0.0
    %3331 = vmatprep.subr.mxu0 0.0
    %3332 = vmatpush1.msra.mxu0 0.0
    %3333 = vmatprep.subr.mxu0 0.0
    %3334 = vmatpush1.msra.mxu0 0.0
    %3335 = vmatprep.subr.mxu0 0.0
    %3336 = vmatpush1.msra.mxu0 0.0
    %3337 = vmatprep.subr.mxu0 0.0
    %3338 = vmatpush1.msra.mxu0 0.0
    %3339 = vmatprep.subr.mxu0 0.0
    %3340 = vmatpush1.msra.mxu0 0.0
    %3341 = vmatprep.subr.mxu0 0.0
    %3342 = vmatpush1.msra.mxu0 0.0
    %3343 = vmatprep.subr.mxu0 0.0
    %3344 = vmatpush1.msra.mxu0 0.0
    %3345 = vmatprep.subr.mxu0 0.0
    %3346 = vmatpush1.msra.mxu0 0.0
    %3347 = vmatprep.subr.mxu0 0.0
    %3348 = vmatpush1.msra.mxu0 0.0
    %3349 = vmatprep.subr.mxu0 0.0
    %3350 = vmatpush1.msra.mxu0 0.0
    %3351 = vmatprep.subr.mxu0 0.0
    %3352 = vmatpush1.msra.mxu0 0.0
    %3353 = vmatprep.subr.mxu0 0.0
    %3354 = vmatpush1.msra.mxu0 0.0
    %3355 = vmatprep.subr.mxu0 0.0
    %3356 = vmatpush1.msra.mxu0 0.0
    %3357 = vmatprep.subr.mxu0 0.0
    %3358 = vmatpush1.msra.mxu0 0.0
    %3359 = vmatprep.subr.mxu0 0.0
    %3360 = vmatpush1.msra.mxu0 0.0
    %3361 = vmatprep.subr.mxu0 0.0
    %3362 = vmatpush1.msra.mxu0 0.0
    %3363 = vmatprep.subr.mxu0 0.0
    %3364 = vmatpush1.msra.mxu0 0.0
    %3365 = vmatprep.subr.mxu0 0.0
    %3366 = vmatpush1.msra.mxu0 0.0
    %3367 = vmatprep.subr.mxu0 0.0
    %3368 = vmatpush1.msra.mxu0 0.0
    %3369 = vmatprep.subr.mxu0 0.0
    %3370 = vmatpush1.msra.mxu0 0.0
    %3371 = vmatprep.subr.mxu0 0.0
    %3372 = vmatpush1.msra.mxu0 0.0
    %3373 = vmatprep.subr.mxu0 0.0
    %3374 = vmatpush1.msra.mxu0 0.0
    %3375 = vmatprep.mubr.f32.mxu0 0.0
    %v3376 = vand.u32 %v3304, 4294901760
    %v3377 = vsub.f32 %v3304, %v3376
    %v3378 = vand.u32 %v3377, 4294901760
    %v3379 = vsub.f32 %v3377, %v3378
    %v3380 = vand.u32 %v3379, 4294901760
    %3381 = vmatmul.mubr.f32.gmra.mrb[0].mxu0 %v3380
    %v3382 = vpop.f32.mrb[0].mxu0
    %v3383 = vadd.f32 0.0, %v3382
    %v3384 = vpop.f32.mrb[0].mxu0
    %3385 = vdwg.mxu0
    %3386 = vmatprep.subr.mxu0 0.0
    %v3387 = vand.u32 %v3308, 4294901760
    %v3388 = vsub.f32 %v3308, %v3387
    %v3389 = vand.u32 %v3388, 4294901760
    %v3390 = vsub.f32 %v3388, %v3389
    %v3391 = vand.u32 %v3390, 4294901760
    %3392 = vmatpush1.msra.mxu0 %v3391
    %3393 = vmatprep.subr.mxu0 0.0
    %3394 = vmatpush1.msra.mxu0 0.0
    %3395 = vmatprep.subr.mxu0 0.0
    %3396 = vmatpush1.msra.mxu0 0.0
    %3397 = vmatprep.subr.mxu0 0.0
    %3398 = vmatpush1.msra.mxu0 0.0
    %3399 = vmatprep.subr.mxu0 0.0
    %3400 = vmatpush1.msra.mxu0 0.0
    %3401 = vmatprep.subr.mxu0 0.0
    %3402 = vmatpush1.msra.mxu0 0.0
    %3403 = vmatprep.subr.mxu0 0.0
    %3404 = vmatpush1.msra.mxu0 0.0
    %3405 = vmatprep.subr.mxu0 0.0
    %3406 = vmatpush1.msra.mxu0 0.0
    %3407 = vmatprep.subr.mxu0 0.0
    %3408 = vmatpush1.msra.mxu0 0.0
    %3409 = vmatprep.subr.mxu0 0.0
    %3410 = vmatpush1.msra.mxu0 0.0
    %3411 = vmatprep.subr.mxu0 0.0
    %3412 = vmatpush1.msra.mxu0 0.0
    %3413 = vmatprep.subr.mxu0 0.0
    %3414 = vmatpush1.msra.mxu0 0.0
    %3415 = vmatprep.subr.mxu0 0.0
    %3416 = vmatpush1.msra.mxu0 0.0
    %3417 = vmatprep.subr.mxu0 0.0
    %3418 = vmatpush1.msra.mxu0 0.0
    %3419 = vmatprep.subr.mxu0 0.0
    %3420 = vmatpush1.msra.mxu0 0.0
    %3421 = vmatprep.subr.mxu0 0.0
    %3422 = vmatpush1.msra.mxu0 0.0
    %3423 = vmatprep.subr.mxu0 0.0
    %3424 = vmatpush1.msra.mxu0 0.0
    %3425 = vmatprep.subr.mxu0 0.0
    %3426 = vmatpush1.msra.mxu0 0.0
    %3427 = vmatprep.subr.mxu0 0.0
    %3428 = vmatpush1.msra.mxu0 0.0
    %3429 = vmatprep.subr.mxu0 0.0
    %3430 = vmatpush1.msra.mxu0 0.0
    %3431 = vmatprep.subr.mxu0 0.0
    %3432 = vmatpush1.msra.mxu0 0.0
    %3433 = vmatprep.subr.mxu0 0.0
    %3434 = vmatpush1.msra.mxu0 0.0
    %3435 = vmatprep.subr.mxu0 0.0
    %3436 = vmatpush1.msra.mxu0 0.0
    %3437 = vmatprep.subr.mxu0 0.0
    %3438 = vmatpush1.msra.mxu0 0.0
    %3439 = vmatprep.subr.mxu0 0.0
    %3440 = vmatpush1.msra.mxu0 0.0
    %3441 = vmatprep.subr.mxu0 0.0
    %3442 = vmatpush1.msra.mxu0 0.0
    %3443 = vmatprep.subr.mxu0 0.0
    %3444 = vmatpush1.msra.mxu0 0.0
    %3445 = vmatprep.subr.mxu0 0.0
    %3446 = vmatpush1.msra.mxu0 0.0
    %3447 = vmatprep.subr.mxu0 0.0
    %3448 = vmatpush1.msra.mxu0 0.0
    %3449 = vmatprep.subr.mxu0 0.0
    %3450 = vmatpush1.msra.mxu0 0.0
    %3451 = vmatprep.subr.mxu0 0.0
    %3452 = vmatpush1.msra.mxu0 0.0
    %3453 = vmatprep.subr.mxu0 0.0
    %3454 = vmatpush1.msra.mxu0 0.0
    %3455 = vmatprep.mubr.f32.mxu0 0.0
    %v3456 = vand.u32 %v3304, 4294901760
    %3457 = vmatmul.mubr.f32.gmra.mrb[0].mxu0 %v3456
    %v3458 = vpop.f32.mrb[0].mxu0
    %v3459 = vadd.f32 %v3383, %v3458
    %v3460 = vpop.f32.mrb[0].mxu0
    %3461 = vdwg.mxu0
    %3462 = vmatprep.subr.mxu0 0.0
    %v3463 = vand.u32 %v3308, 4294901760
    %v3464 = vsub.f32 %v3308, %v3463
    %3465 = vmatpush1.msra.mxu0 %v3464
    %3466 = vmatprep.subr.mxu0 0.0
    %3467 = vmatpush1.msra.mxu0 0.0
    %3468 = vmatprep.subr.mxu0 0.0
    %3469 = vmatpush1.msra.mxu0 0.0
    %3470 = vmatprep.subr.mxu0 0.0
    %3471 = vmatpush1.msra.mxu0 0.0
    %3472 = vmatprep.subr.mxu0 0.0
    %3473 = vmatpush1.msra.mxu0 0.0
    %3474 = vmatprep.subr.mxu0 0.0
    %3475 = vmatpush1.msra.mxu0 0.0
    %3476 = vmatprep.subr.mxu0 0.0
    %3477 = vmatpush1.msra.mxu0 0.0
    %3478 = vmatprep.subr.mxu0 0.0
    %3479 = vmatpush1.msra.mxu0 0.0
    %3480 = vmatprep.subr.mxu0 0.0
    %3481 = vmatpush1.msra.mxu0 0.0
    %3482 = vmatprep.subr.mxu0 0.0
    %3483 = vmatpush1.msra.mxu0 0.0
    %3484 = vmatprep.subr.mxu0 0.0
    %3485 = vmatpush1.msra.mxu0 0.0
    %3486 = vmatprep.subr.mxu0 0.0
    %3487 = vmatpush1.msra.mxu0 0.0
    %3488 = vmatprep.subr.mxu0 0.0
    %3489 = vmatpush1.msra.mxu0 0.0
    %3490 = vmatprep.subr.mxu0 0.0
    %3491 = vmatpush1.msra.mxu0 0.0
    %3492 = vmatprep.subr.mxu0 0.0
    %3493 = vmatpush1.msra.mxu0 0.0
    %3494 = vmatprep.subr.mxu0 0.0
    %3495 = vmatpush1.msra.mxu0 0.0
    %3496 = vmatprep.subr.mxu0 0.0
    %3497 = vmatpush1.msra.mxu0 0.0
    %3498 = vmatprep.subr.mxu0 0.0
    %3499 = vmatpush1.msra.mxu0 0.0
    %3500 = vmatprep.subr.mxu0 0.0
    %3501 = vmatpush1.msra.mxu0 0.0
    %3502 = vmatprep.subr.mxu0 0.0
    %3503 = vmatpush1.msra.mxu0 0.0
    %3504 = vmatprep.subr.mxu0 0.0
    %3505 = vmatpush1.msra.mxu0 0.0
    %3506 = vmatprep.subr.mxu0 0.0
    %3507 = vmatpush1.msra.mxu0 0.0
    %3508 = vmatprep.subr.mxu0 0.0
    %3509 = vmatpush1.msra.mxu0 0.0
    %3510 = vmatprep.subr.mxu0 0.0
    %3511 = vmatpush1.msra.mxu0 0.0
    %3512 = vmatprep.subr.mxu0 0.0
    %3513 = vmatpush1.msra.mxu0 0.0
    %3514 = vmatprep.subr.mxu0 0.0
    %3515 = vmatpush1.msra.mxu0 0.0
    %3516 = vmatprep.subr.mxu0 0.0
    %3517 = vmatpush1.msra.mxu0 0.0
    %3518 = vmatprep.subr.mxu0 0.0
    %3519 = vmatpush1.msra.mxu0 0.0
    %3520 = vmatprep.subr.mxu0 0.0
    %3521 = vmatpush1.msra.mxu0 0.0
    %3522 = vmatprep.subr.mxu0 0.0
    %3523 = vmatpush1.msra.mxu0 0.0
    %3524 = vmatprep.subr.mxu0 0.0
    %3525 = vmatpush1.msra.mxu0 0.0
    %3526 = vmatprep.subr.mxu0 0.0
    %3527 = vmatpush1.msra.mxu0 0.0
    %3528 = vmatprep.mubr.f32.mxu0 0.0
    %v3529 = vand.u32 %v3304, 4294901760
    %v3530 = vsub.f32 %v3304, %v3529
    %3531 = vmatmul.mubr.f32.gmra.mrb[0].mxu0 %v3530
    %v3532 = vpop.f32.mrb[0].mxu0
    %v3533 = vadd.f32 %v3459, %v3532
    %v3534 = vpop.f32.mrb[0].mxu0
    %3535 = vdwg.mxu0
    %3536 = vmatprep.subr.mxu0 0.0
    %v3537 = vand.u32 %v3308, 4294901760
    %3538 = vmatpush1.msra.mxu0 %v3537
    %3539 = vmatprep.subr.mxu0 0.0
    %3540 = vmatpush1.msra.mxu0 0.0
    %3541 = vmatprep.subr.mxu0 0.0
    %3542 = vmatpush1.msra.mxu0 0.0
    %3543 = vmatprep.subr.mxu0 0.0
    %3544 = vmatpush1.msra.mxu0 0.0
    %3545 = vmatprep.subr.mxu0 0.0
    %3546 = vmatpush1.msra.mxu0 0.0
    %3547 = vmatprep.subr.mxu0 0.0
    %3548 = vmatpush1.msra.mxu0 0.0
    %3549 = vmatprep.subr.mxu0 0.0
    %3550 = vmatpush1.msra.mxu0 0.0
    %3551 = vmatprep.subr.mxu0 0.0
    %3552 = vmatpush1.msra.mxu0 0.0
    %3553 = vmatprep.subr.mxu0 0.0
    %3554 = vmatpush1.msra.mxu0 0.0
    %3555 = vmatprep.subr.mxu0 0.0
    %3556 = vmatpush1.msra.mxu0 0.0
    %3557 = vmatprep.subr.mxu0 0.0
    %3558 = vmatpush1.msra.mxu0 0.0
    %3559 = vmatprep.subr.mxu0 0.0
    %3560 = vmatpush1.msra.mxu0 0.0
    %3561 = vmatprep.subr.mxu0 0.0
    %3562 = vmatpush1.msra.mxu0 0.0
    %3563 = vmatprep.subr.mxu0 0.0
    %3564 = vmatpush1.msra.mxu0 0.0
    %3565 = vmatprep.subr.mxu0 0.0
    %3566 = vmatpush1.msra.mxu0 0.0
    %3567 = vmatprep.subr.mxu0 0.0
    %3568 = vmatpush1.msra.mxu0 0.0
    %3569 = vmatprep.subr.mxu0 0.0
    %3570 = vmatpush1.msra.mxu0 0.0
    %3571 = vmatprep.subr.mxu0 0.0
    %3572 = vmatpush1.msra.mxu0 0.0
    %3573 = vmatprep.subr.mxu0 0.0
    %3574 = vmatpush1.msra.mxu0 0.0
    %3575 = vmatprep.subr.mxu0 0.0
    %3576 = vmatpush1.msra.mxu0 0.0
    %3577 = vmatprep.subr.mxu0 0.0
    %3578 = vmatpush1.msra.mxu0 0.0
    %3579 = vmatprep.subr.mxu0 0.0
    %3580 = vmatpush1.msra.mxu0 0.0
    %3581 = vmatprep.subr.mxu0 0.0
    %3582 = vmatpush1.msra.mxu0 0.0
    %3583 = vmatprep.subr.mxu0 0.0
    %3584 = vmatpush1.msra.mxu0 0.0
    %3585 = vmatprep.subr.mxu0 0.0
    %3586 = vmatpush1.msra.mxu0 0.0
    %3587 = vmatprep.subr.mxu0 0.0
    %3588 = vmatpush1.msra.mxu0 0.0
    %3589 = vmatprep.subr.mxu0 0.0
    %3590 = vmatpush1.msra.mxu0 0.0
    %3591 = vmatprep.subr.mxu0 0.0
    %3592 = vmatpush1.msra.mxu0 0.0
    %3593 = vmatprep.subr.mxu0 0.0
    %3594 = vmatpush1.msra.mxu0 0.0
    %3595 = vmatprep.subr.mxu0 0.0
    %3596 = vmatpush1.msra.mxu0 0.0
    %3597 = vmatprep.subr.mxu0 0.0
    %3598 = vmatpush1.msra.mxu0 0.0
    %3599 = vmatprep.subr.mxu0 0.0
    %3600 = vmatpush1.msra.mxu0 0.0
    %3601 = vmatprep.mubr.f32.mxu0 0.0
    %v3602 = vand.u32 %v3304, 4294901760
    %v3603 = vsub.f32 %v3304, %v3602
    %v3604 = vand.u32 %v3603, 4294901760
    %3605 = vmatmul.mubr.f32.gmra.mrb[0].mxu0 %v3604
    %v3606 = vpop.f32.mrb[0].mxu0
    %v3607 = vadd.f32 %v3533, %v3606
    %v3608 = vpop.f32.mrb[0].mxu0
    %3609 = vdwg.mxu0
    %3610 = vmatprep.subr.mxu0 0.0
    %v3611 = vand.u32 %v3308, 4294901760
    %v3612 = vsub.f32 %v3308, %v3611
    %v3613 = vand.u32 %v3612, 4294901760
    %3614 = vmatpush1.msra.mxu0 %v3613
    %3615 = vmatprep.subr.mxu0 0.0
    %3616 = vmatpush1.msra.mxu0 0.0
    %3617 = vmatprep.subr.mxu0 0.0
    %3618 = vmatpush1.msra.mxu0 0.0
    %3619 = vmatprep.subr.mxu0 0.0
    %3620 = vmatpush1.msra.mxu0 0.0
    %3621 = vmatprep.subr.mxu0 0.0
    %3622 = vmatpush1.msra.mxu0 0.0
    %3623 = vmatprep.subr.mxu0 0.0
    %3624 = vmatpush1.msra.mxu0 0.0
    %3625 = vmatprep.subr.mxu0 0.0
    %3626 = vmatpush1.msra.mxu0 0.0
    %3627 = vmatprep.subr.mxu0 0.0
    %3628 = vmatpush1.msra.mxu0 0.0
    %3629 = vmatprep.subr.mxu0 0.0
    %3630 = vmatpush1.msra.mxu0 0.0
    %3631 = vmatprep.subr.mxu0 0.0
    %3632 = vmatpush1.msra.mxu0 0.0
    %3633 = vmatprep.subr.mxu0 0.0
    %3634 = vmatpush1.msra.mxu0 0.0
    %3635 = vmatprep.subr.mxu0 0.0
    %3636 = vmatpush1.msra.mxu0 0.0
    %3637 = vmatprep.subr.mxu0 0.0
    %3638 = vmatpush1.msra.mxu0 0.0
    %3639 = vmatprep.subr.mxu0 0.0
    %3640 = vmatpush1.msra.mxu0 0.0
    %3641 = vmatprep.subr.mxu0 0.0
    %3642 = vmatpush1.msra.mxu0 0.0
    %3643 = vmatprep.subr.mxu0 0.0
    %3644 = vmatpush1.msra.mxu0 0.0
    %3645 = vmatprep.subr.mxu0 0.0
    %3646 = vmatpush1.msra.mxu0 0.0
    %3647 = vmatprep.subr.mxu0 0.0
    %3648 = vmatpush1.msra.mxu0 0.0
    %3649 = vmatprep.subr.mxu0 0.0
    %3650 = vmatpush1.msra.mxu0 0.0
    %3651 = vmatprep.subr.mxu0 0.0
    %3652 = vmatpush1.msra.mxu0 0.0
    %3653 = vmatprep.subr.mxu0 0.0
    %3654 = vmatpush1.msra.mxu0 0.0
    %3655 = vmatprep.subr.mxu0 0.0
    %3656 = vmatpush1.msra.mxu0 0.0
    %3657 = vmatprep.subr.mxu0 0.0
    %3658 = vmatpush1.msra.mxu0 0.0
    %3659 = vmatprep.subr.mxu0 0.0
    %3660 = vmatpush1.msra.mxu0 0.0
    %3661 = vmatprep.subr.mxu0 0.0
    %3662 = vmatpush1.msra.mxu0 0.0
    %3663 = vmatprep.subr.mxu0 0.0
    %3664 = vmatpush1.msra.mxu0 0.0
    %3665 = vmatprep.subr.mxu0 0.0
    %3666 = vmatpush1.msra.mxu0 0.0
    %3667 = vmatprep.subr.mxu0 0.0
    %3668 = vmatpush1.msra.mxu0 0.0
    %3669 = vmatprep.subr.mxu0 0.0
    %3670 = vmatpush1.msra.mxu0 0.0
    %3671 = vmatprep.subr.mxu0 0.0
    %3672 = vmatpush1.msra.mxu0 0.0
    %3673 = vmatprep.subr.mxu0 0.0
    %3674 = vmatpush1.msra.mxu0 0.0
    %3675 = vmatprep.subr.mxu0 0.0
    %3676 = vmatpush1.msra.mxu0 0.0
    %3677 = vmatprep.mubr.f32.mxu0 0.0
    %v3678 = vand.u32 %v3304, 4294901760
    %3679 = vmatmul.mubr.f32.gmra.mrb[0].mxu0 %v3678
    %v3680 = vpop.f32.mrb[0].mxu0
    %v3681 = vadd.f32 %v3607, %v3680
    %v3682 = vpop.f32.mrb[0].mxu0
    %3683 = vdwg.mxu0
    %3684 = vmatprep.subr.mxu0 0.0
    %v3685 = vand.u32 %v3308, 4294901760
    %3686 = vmatpush1.msra.mxu0 %v3685
    %3687 = vmatprep.subr.mxu0 0.0
    %3688 = vmatpush1.msra.mxu0 0.0
    %3689 = vmatprep.subr.mxu0 0.0
    %3690 = vmatpush1.msra.mxu0 0.0
    %3691 = vmatprep.subr.mxu0 0.0
    %3692 = vmatpush1.msra.mxu0 0.0
    %3693 = vmatprep.subr.mxu0 0.0
    %3694 = vmatpush1.msra.mxu0 0.0
    %3695 = vmatprep.subr.mxu0 0.0
    %3696 = vmatpush1.msra.mxu0 0.0
    %3697 = vmatprep.subr.mxu0 0.0
    %3698 = vmatpush1.msra.mxu0 0.0
    %3699 = vmatprep.subr.mxu0 0.0
    %3700 = vmatpush1.msra.mxu0 0.0
    %3701 = vmatprep.subr.mxu0 0.0
    %3702 = vmatpush1.msra.mxu0 0.0
    %3703 = vmatprep.subr.mxu0 0.0
    %3704 = vmatpush1.msra.mxu0 0.0
    %3705 = vmatprep.subr.mxu0 0.0
    %3706 = vmatpush1.msra.mxu0 0.0
    %3707 = vmatprep.subr.mxu0 0.0
    %3708 = vmatpush1.msra.mxu0 0.0
    %3709 = vmatprep.subr.mxu0 0.0
    %3710 = vmatpush1.msra.mxu0 0.0
    %3711 = vmatprep.subr.mxu0 0.0
    %3712 = vmatpush1.msra.mxu0 0.0
    %3713 = vmatprep.subr.mxu0 0.0
    %3714 = vmatpush1.msra.mxu0 0.0
    %3715 = vmatprep.subr.mxu0 0.0
    %3716 = vmatpush1.msra.mxu0 0.0
    %3717 = vmatprep.subr.mxu0 0.0
    %3718 = vmatpush1.msra.mxu0 0.0
    %3719 = vmatprep.subr.mxu0 0.0
    %3720 = vmatpush1.msra.mxu0 0.0
    %3721 = vmatprep.subr.mxu0 0.0
    %3722 = vmatpush1.msra.mxu0 0.0
    %3723 = vmatprep.subr.mxu0 0.0
    %3724 = vmatpush1.msra.mxu0 0.0
    %3725 = vmatprep.subr.mxu0 0.0
    %3726 = vmatpush1.msra.mxu0 0.0
    %3727 = vmatprep.subr.mxu0 0.0
    %3728 = vmatpush1.msra.mxu0 0.0
    %3729 = vmatprep.subr.mxu0 0.0
    %3730 = vmatpush1.msra.mxu0 0.0
    %3731 = vmatprep.subr.mxu0 0.0
    %3732 = vmatpush1.msra.mxu0 0.0
    %3733 = vmatprep.subr.mxu0 0.0
    %3734 = vmatpush1.msra.mxu0 0.0
    %3735 = vmatprep.subr.mxu0 0.0
    %3736 = vmatpush1.msra.mxu0 0.0
    %3737 = vmatprep.subr.mxu0 0.0
    %3738 = vmatpush1.msra.mxu0 0.0
    %3739 = vmatprep.subr.mxu0 0.0
    %3740 = vmatpush1.msra.mxu0 0.0
    %3741 = vmatprep.subr.mxu0 0.0
    %3742 = vmatpush1.msra.mxu0 0.0
    %3743 = vmatprep.subr.mxu0 0.0
    %3744 = vmatpush1.msra.mxu0 0.0
    %3745 = vmatprep.subr.mxu0 0.0
    %3746 = vmatpush1.msra.mxu0 0.0
    %3747 = vmatprep.subr.mxu0 0.0
    %3748 = vmatpush1.msra.mxu0 0.0
    %3749 = vmatprep.mubr.f32.mxu0 0.0
    %v3750 = vand.u32 %v3304, 4294901760
    %3751 = vmatmul.mubr.f32.gmra.mrb[0].mxu0 %v3750
    %v3752 = vpop.f32.mrb[0].mxu0
    %v3753 = vadd.f32 %v3681, %v3752
    %v3754 = vpop.f32.mrb[0].mxu0
    %3755 = vdwg.mxu0
    %v3756 = vlaneseq
    %v3757 = vshrl.u32 %v3756, 7
    %v3758 = vsub.s32 0, %v3757
    %v3759 = vrot.slane %v3753, %v3758
    %v3760 = vmul.f32 %v2591, %v3759
    %v3761 = vlaneseq
    %v3762 = vshrl.u32 %v3761, 7
    %v3763 = vsub.s32 1, %v3762
    %v3764 = vrot.slane %v3753, %v3763
    %v3765 = vadd.f32 %v3760, %v3764
    %v3766 = vmul.f32 %v3765, 0.1
    %v3767 = vmax.f32 %v3765, %v3766
    %v3768 = vld [vmem:[%s13] sm:$0xff]
    %v3769 = vld [vmem:[%s13 + $0x8] sm:$0xff]
    %v3770 = vld [vmem:[%s13 + $0x10] sm:$0xff]
    %v3771 = vld [vmem:[%s13 + $0x18] sm:$0xff]
    %v3772 = vld [vmem:[%s13 + $0x20] sm:$0xff]
    %v3773 = vld [vmem:[%s13 + $0x28] sm:$0xff]
    %v3774 = vld [vmem:[%s13 + $0x30] sm:$0xff]
    %v3775 = vld [vmem:[%s13 + $0x38] sm:$0xff]
    %v3776 = vld [vmem:[%s13 + $0x40] sm:$0xff]
    %v3777 = vld [vmem:[%s13 + $0x48] sm:$0xff]
    %v3778 = vld [vmem:[%s13 + $0x50] sm:$0xff]
    %v3779 = vld [vmem:[%s13 + $0x58] sm:$0xff]
    %v3780 = vld [vmem:[%s13 + $0x60] sm:$0xff]
    %v3781 = vld [vmem:[%s13 + $0x68] sm:$0xff]
    %v3782 = vld [vmem:[%s13 + $0x70] sm:$0xff]
    %v3783 = vld [vmem:[%s13 + $0x78] sm:$0xff]
    %v3784 = vld [vmem:[%s14] sm:$0x1]
    %v3786 = vlaneseq
    %v3787 = vshrl.u32 %v3786, 7
    %v3788 = vsub.s32 0, %v3787
    %v3789 = vrot.slane %v3784, %v3788
    %3791 = vmatprep.subr.mxu0 0.0
    %v3792 = vand.u32 %v3768, 4294901760
    %3793 = vmatpush1.msra.mxu0 %v3792
    %3794 = vmatprep.subr.mxu0 0.0
    %v3795 = vand.u32 %v3769, 4294901760
    %3796 = vmatpush1.msra.mxu0 %v3795
    %3797 = vmatprep.subr.mxu0 0.0
    %v3798 = vand.u32 %v3770, 4294901760
    %3799 = vmatpush1.msra.mxu0 %v3798
    %3800 = vmatprep.subr.mxu0 0.0
    %v3801 = vand.u32 %v3771, 4294901760
    %3802 = vmatpush1.msra.mxu0 %v3801
    %3803 = vmatprep.subr.mxu0 0.0
    %v3804 = vand.u32 %v3772, 4294901760
    %3805 = vmatpush1.msra.mxu0 %v3804
    %3806 = vmatprep.subr.mxu0 0.0
    %v3807 = vand.u32 %v3773, 4294901760
    %3808 = vmatpush1.msra.mxu0 %v3807
    %3809 = vmatprep.subr.mxu0 0.0
    %v3810 = vand.u32 %v3774, 4294901760
    %3811 = vmatpush1.msra.mxu0 %v3810
    %3812 = vmatprep.subr.mxu0 0.0
    %v3813 = vand.u32 %v3775, 4294901760
    %3814 = vmatpush1.msra.mxu0 %v3813
    %3815 = vmatprep.subr.mxu0 0.0
    %v3816 = vand.u32 %v3776, 4294901760
    %3817 = vmatpush1.msra.mxu0 %v3816
    %3818 = vmatprep.subr.mxu0 0.0
    %v3819 = vand.u32 %v3777, 4294901760
    %3820 = vmatpush1.msra.mxu0 %v3819
    %3821 = vmatprep.subr.mxu0 0.0
    %v3822 = vand.u32 %v3778, 4294901760
    %3823 = vmatpush1.msra.mxu0 %v3822
    %3824 = vmatprep.subr.mxu0 0.0
    %v3825 = vand.u32 %v3779, 4294901760
    %3826 = vmatpush1.msra.mxu0 %v3825
    %3827 = vmatprep.subr.mxu0 0.0
    %v3828 = vand.u32 %v3780, 4294901760
    %3829 = vmatpush1.msra.mxu0 %v3828
    %3830 = vmatprep.subr.mxu0 0.0
    %v3831 = vand.u32 %v3781, 4294901760
    %3832 = vmatpush1.msra.mxu0 %v3831
    %3833 = vmatprep.subr.mxu0 0.0
    %v3834 = vand.u32 %v3782, 4294901760
    %3835 = vmatpush1.msra.mxu0 %v3834
    %3836 = vmatprep.subr.mxu0 0.0
    %v3837 = vand.u32 %v3783, 4294901760
    %3838 = vmatpush1.msra.mxu0 %v3837
    %3839 = vmatprep.subr.mxu0 0.0
    %3840 = vmatpush1.msra.mxu0 0.0
    %3841 = vmatprep.subr.mxu0 0.0
    %3842 = vmatpush1.msra.mxu0 0.0
    %3843 = vmatprep.subr.mxu0 0.0
    %3844 = vmatpush1.msra.mxu0 0.0
    %3845 = vmatprep.subr.mxu0 0.0
    %3846 = vmatpush1.msra.mxu0 0.0
    %3847 = vmatprep.subr.mxu0 0.0
    %3848 = vmatpush1.msra.mxu0 0.0
    %3849 = vmatprep.subr.mxu0 0.0
    %3850 = vmatpush1.msra.mxu0 0.0
    %3851 = vmatprep.subr.mxu0 0.0
    %3852 = vmatpush1.msra.mxu0 0.0
    %3853 = vmatprep.subr.mxu0 0.0
    %3854 = vmatpush1.msra.mxu0 0.0
    %3855 = vmatprep.subr.mxu0 0.0
    %3856 = vmatpush1.msra.mxu0 0.0
    %3857 = vmatprep.subr.mxu0 0.0
    %3858 = vmatpush1.msra.mxu0 0.0
    %3859 = vmatprep.subr.mxu0 0.0
    %3860 = vmatpush1.msra.mxu0 0.0
    %3861 = vmatprep.subr.mxu0 0.0
    %3862 = vmatpush1.msra.mxu0 0.0
    %3863 = vmatprep.subr.mxu0 0.0
    %3864 = vmatpush1.msra.mxu0 0.0
    %3865 = vmatprep.subr.mxu0 0.0
    %3866 = vmatpush1.msra.mxu0 0.0
    %3867 = vmatprep.subr.mxu0 0.0
    %3868 = vmatpush1.msra.mxu0 0.0
    %3869 = vmatprep.subr.mxu0 0.0
    %3870 = vmatpush1.msra.mxu0 0.0
    %3871 = vmatprep.mubr.f32.mxu0 0.0
    %v3872 = vand.u32 %v3767, 4294901760
    %v3873 = vsub.f32 %v3767, %v3872
    %v3874 = vand.u32 %v3873, 4294901760
    %v3875 = vsub.f32 %v3873, %v3874
    %v3876 = vand.u32 %v3875, 4294901760
    %3877 = vmatmul.mubr.f32.gmra.mrb[0].mxu0 %v3876
    %v3878 = vpop.f32.mrb[0].mxu0
    %v3879 = vadd.f32 %v3789, %v3878
    %v3880 = vpop.f32.mrb[0].mxu0
    %3881 = vdwg.mxu0
    %3882 = vmatprep.subr.mxu0 0.0
    %v3883 = vand.u32 %v3768, 4294901760
    %v3884 = vsub.f32 %v3768, %v3883
    %v3885 = vand.u32 %v3884, 4294901760
    %v3886 = vsub.f32 %v3884, %v3885
    %v3887 = vand.u32 %v3886, 4294901760
    %3888 = vmatpush1.msra.mxu0 %v3887
    %3889 = vmatprep.subr.mxu0 0.0
    %v3890 = vand.u32 %v3769, 4294901760
    %v3891 = vsub.f32 %v3769, %v3890
    %v3892 = vand.u32 %v3891, 4294901760
    %v3893 = vsub.f32 %v3891, %v3892
    %v3894 = vand.u32 %v3893, 4294901760
    %3895 = vmatpush1.msra.mxu0 %v3894
    %3896 = vmatprep.subr.mxu0 0.0
    %v3897 = vand.u32 %v3770, 4294901760
    %v3898 = vsub.f32 %v3770, %v3897
    %v3899 = vand.u32 %v3898, 4294901760
    %v3900 = vsub.f32 %v3898, %v3899
    %v3901 = vand.u32 %v3900, 4294901760
    %3902 = vmatpush1.msra.mxu0 %v3901
    %3903 = vmatprep.subr.mxu0 0.0
    %v3904 = vand.u32 %v3771, 4294901760
    %v3905 = vsub.f32 %v3771, %v3904
    %v3906 = vand.u32 %v3905, 4294901760
    %v3907 = vsub.f32 %v3905, %v3906
    %v3908 = vand.u32 %v3907, 4294901760
    %3909 = vmatpush1.msra.mxu0 %v3908
    %3910 = vmatprep.subr.mxu0 0.0
    %v3911 = vand.u32 %v3772, 4294901760
    %v3912 = vsub.f32 %v3772, %v3911
    %v3913 = vand.u32 %v3912, 4294901760
    %v3914 = vsub.f32 %v3912, %v3913
    %v3915 = vand.u32 %v3914, 4294901760
    %3916 = vmatpush1.msra.mxu0 %v3915
    %3917 = vmatprep.subr.mxu0 0.0
    %v3918 = vand.u32 %v3773, 4294901760
    %v3919 = vsub.f32 %v3773, %v3918
    %v3920 = vand.u32 %v3919, 4294901760
    %v3921 = vsub.f32 %v3919, %v3920
    %v3922 = vand.u32 %v3921, 4294901760
    %3923 = vmatpush1.msra.mxu0 %v3922
    %3924 = vmatprep.subr.mxu0 0.0
    %v3925 = vand.u32 %v3774, 4294901760
    %v3926 = vsub.f32 %v3774, %v3925
    %v3927 = vand.u32 %v3926, 4294901760
    %v3928 = vsub.f32 %v3926, %v3927
    %v3929 = vand.u32 %v3928, 4294901760
    %3930 = vmatpush1.msra.mxu0 %v3929
    %3931 = vmatprep.subr.mxu0 0.0
    %v3932 = vand.u32 %v3775, 4294901760
    %v3933 = vsub.f32 %v3775, %v3932
    %v3934 = vand.u32 %v3933, 4294901760
    %v3935 = vsub.f32 %v3933, %v3934
    %v3936 = vand.u32 %v3935, 4294901760
    %3937 = vmatpush1.msra.mxu0 %v3936
    %3938 = vmatprep.subr.mxu0 0.0
    %v3939 = vand.u32 %v3776, 4294901760
    %v3940 = vsub.f32 %v3776, %v3939
    %v3941 = vand.u32 %v3940, 4294901760
    %v3942 = vsub.f32 %v3940, %v3941
    %v3943 = vand.u32 %v3942, 4294901760
    %3944 = vmatpush1.msra.mxu0 %v3943
    %3945 = vmatprep.subr.mxu0 0.0
    %v3946 = vand.u32 %v3777, 4294901760
    %v3947 = vsub.f32 %v3777, %v3946
    %v3948 = vand.u32 %v3947, 4294901760
    %v3949 = vsub.f32 %v3947, %v3948
    %v3950 = vand.u32 %v3949, 4294901760
    %3951 = vmatpush1.msra.mxu0 %v3950
    %3952 = vmatprep.subr.mxu0 0.0
    %v3953 = vand.u32 %v3778, 4294901760
    %v3954 = vsub.f32 %v3778, %v3953
    %v3955 = vand.u32 %v3954, 4294901760
    %v3956 = vsub.f32 %v3954, %v3955
    %v3957 = vand.u32 %v3956, 4294901760
    %3958 = vmatpush1.msra.mxu0 %v3957
    %3959 = vmatprep.subr.mxu0 0.0
    %v3960 = vand.u32 %v3779, 4294901760
    %v3961 = vsub.f32 %v3779, %v3960
    %v3962 = vand.u32 %v3961, 4294901760
    %v3963 = vsub.f32 %v3961, %v3962
    %v3964 = vand.u32 %v3963, 4294901760
    %3965 = vmatpush1.msra.mxu0 %v3964
    %3966 = vmatprep.subr.mxu0 0.0
    %v3967 = vand.u32 %v3780, 4294901760
    %v3968 = vsub.f32 %v3780, %v3967
    %v3969 = vand.u32 %v3968, 4294901760
    %v3970 = vsub.f32 %v3968, %v3969
    %v3971 = vand.u32 %v3970, 4294901760
    %3972 = vmatpush1.msra.mxu0 %v3971
    %3973 = vmatprep.subr.mxu0 0.0
    %v3974 = vand.u32 %v3781, 4294901760
    %v3975 = vsub.f32 %v3781, %v3974
    %v3976 = vand.u32 %v3975, 4294901760
    %v3977 = vsub.f32 %v3975, %v3976
    %v3978 = vand.u32 %v3977, 4294901760
    %3979 = vmatpush1.msra.mxu0 %v3978
    %3980 = vmatprep.subr.mxu0 0.0
    %v3981 = vand.u32 %v3782, 4294901760
    %v3982 = vsub.f32 %v3782, %v3981
    %v3983 = vand.u32 %v3982, 4294901760
    %v3984 = vsub.f32 %v3982, %v3983
    %v3985 = vand.u32 %v3984, 4294901760
    %3986 = vmatpush1.msra.mxu0 %v3985
    %3987 = vmatprep.subr.mxu0 0.0
    %v3988 = vand.u32 %v3783, 4294901760
    %v3989 = vsub.f32 %v3783, %v3988
    %v3990 = vand.u32 %v3989, 4294901760
    %v3991 = vsub.f32 %v3989, %v3990
    %v3992 = vand.u32 %v3991, 4294901760
    %3993 = vmatpush1.msra.mxu0 %v3992
    %3994 = vmatprep.subr.mxu0 0.0
    %3995 = vmatpush1.msra.mxu0 0.0
    %3996 = vmatprep.subr.mxu0 0.0
    %3997 = vmatpush1.msra.mxu0 0.0
    %3998 = vmatprep.subr.mxu0 0.0
    %3999 = vmatpush1.msra.mxu0 0.0
    %4000 = vmatprep.subr.mxu0 0.0
    %4001 = vmatpush1.msra.mxu0 0.0
    %4002 = vmatprep.subr.mxu0 0.0
    %4003 = vmatpush1.msra.mxu0 0.0
    %4004 = vmatprep.subr.mxu0 0.0
    %4005 = vmatpush1.msra.mxu0 0.0
    %4006 = vmatprep.subr.mxu0 0.0
    %4007 = vmatpush1.msra.mxu0 0.0
    %4008 = vmatprep.subr.mxu0 0.0
    %4009 = vmatpush1.msra.mxu0 0.0
    %4010 = vmatprep.subr.mxu0 0.0
    %4011 = vmatpush1.msra.mxu0 0.0
    %4012 = vmatprep.subr.mxu0 0.0
    %4013 = vmatpush1.msra.mxu0 0.0
    %4014 = vmatprep.subr.mxu0 0.0
    %4015 = vmatpush1.msra.mxu0 0.0
    %4016 = vmatprep.subr.mxu0 0.0
    %4017 = vmatpush1.msra.mxu0 0.0
    %4018 = vmatprep.subr.mxu0 0.0
    %4019 = vmatpush1.msra.mxu0 0.0
    %4020 = vmatprep.subr.mxu0 0.0
    %4021 = vmatpush1.msra.mxu0 0.0
    %4022 = vmatprep.subr.mxu0 0.0
    %4023 = vmatpush1.msra.mxu0 0.0
    %4024 = vmatprep.subr.mxu0 0.0
    %4025 = vmatpush1.msra.mxu0 0.0
    %4026 = vmatprep.mubr.f32.mxu0 0.0
    %v4027 = vand.u32 %v3767, 4294901760
    %4028 = vmatmul.mubr.f32.gmra.mrb[0].mxu0 %v4027
    %v4029 = vpop.f32.mrb[0].mxu0
    %v4030 = vadd.f32 %v3879, %v4029
    %v4031 = vpop.f32.mrb[0].mxu0
    %4032 = vdwg.mxu0
    %4033 = vmatprep.subr.mxu0 0.0
    %v4034 = vand.u32 %v3768, 4294901760
    %v4035 = vsub.f32 %v3768, %v4034
    %4036 = vmatpush1.msra.mxu0 %v4035
    %4037 = vmatprep.subr.mxu0 0.0
    %v4038 = vand.u32 %v3769, 4294901760
    %v4039 = vsub.f32 %v3769, %v4038
    %4040 = vmatpush1.msra.mxu0 %v4039
    %4041 = vmatprep.subr.mxu0 0.0
    %v4042 = vand.u32 %v3770, 4294901760
    %v4043 = vsub.f32 %v3770, %v4042
    %4044 = vmatpush1.msra.mxu0 %v4043
    %4045 = vmatprep.subr.mxu0 0.0
    %v4046 = vand.u32 %v3771, 4294901760
    %v4047 = vsub.f32 %v3771, %v4046
    %4048 = vmatpush1.msra.mxu0 %v4047
    %4049 = vmatprep.subr.mxu0 0.0
    %v4050 = vand.u32 %v3772, 4294901760
    %v4051 = vsub.f32 %v3772, %v4050
    %4052 = vmatpush1.msra.mxu0 %v4051
    %4053 = vmatprep.subr.mxu0 0.0
    %v4054 = vand.u32 %v3773, 4294901760
    %v4055 = vsub.f32 %v3773, %v4054
    %4056 = vmatpush1.msra.mxu0 %v4055
    %4057 = vmatprep.subr.mxu0 0.0
    %v4058 = vand.u32 %v3774, 4294901760
    %v4059 = vsub.f32 %v3774, %v4058
    %4060 = vmatpush1.msra.mxu0 %v4059
    %4061 = vmatprep.subr.mxu0 0.0
    %v4062 = vand.u32 %v3775, 4294901760
    %v4063 = vsub.f32 %v3775, %v4062
    %4064 = vmatpush1.msra.mxu0 %v4063
    %4065 = vmatprep.subr.mxu0 0.0
    %v4066 = vand.u32 %v3776, 4294901760
    %v4067 = vsub.f32 %v3776, %v4066
    %4068 = vmatpush1.msra.mxu0 %v4067
    %4069 = vmatprep.subr.mxu0 0.0
    %v4070 = vand.u32 %v3777, 4294901760
    %v4071 = vsub.f32 %v3777, %v4070
    %4072 = vmatpush1.msra.mxu0 %v4071
    %4073 = vmatprep.subr.mxu0 0.0
    %v4074 = vand.u32 %v3778, 4294901760
    %v4075 = vsub.f32 %v3778, %v4074
    %4076 = vmatpush1.msra.mxu0 %v4075
    %4077 = vmatprep.subr.mxu0 0.0
    %v4078 = vand.u32 %v3779, 4294901760
    %v4079 = vsub.f32 %v3779, %v4078
    %4080 = vmatpush1.msra.mxu0 %v4079
    %4081 = vmatprep.subr.mxu0 0.0
    %v4082 = vand.u32 %v3780, 4294901760
    %v4083 = vsub.f32 %v3780, %v4082
    %4084 = vmatpush1.msra.mxu0 %v4083
    %4085 = vmatprep.subr.mxu0 0.0
    %v4086 = vand.u32 %v3781, 4294901760
    %v4087 = vsub.f32 %v3781, %v4086
    %4088 = vmatpush1.msra.mxu0 %v4087
    %4089 = vmatprep.subr.mxu0 0.0
    %v4090 = vand.u32 %v3782, 4294901760
    %v4091 = vsub.f32 %v3782, %v4090
    %4092 = vmatpush1.msra.mxu0 %v4091
    %4093 = vmatprep.subr.mxu0 0.0
    %v4094 = vand.u32 %v3783, 4294901760
    %v4095 = vsub.f32 %v3783, %v4094
    %4096 = vmatpush1.msra.mxu0 %v4095
    %4097 = vmatprep.subr.mxu0 0.0
    %4098 = vmatpush1.msra.mxu0 0.0
    %4099 = vmatprep.subr.mxu0 0.0
    %4100 = vmatpush1.msra.mxu0 0.0
    %4101 = vmatprep.subr.mxu0 0.0
    %4102 = vmatpush1.msra.mxu0 0.0
    %4103 = vmatprep.subr.mxu0 0.0
    %4104 = vmatpush1.msra.mxu0 0.0
    %4105 = vmatprep.subr.mxu0 0.0
    %4106 = vmatpush1.msra.mxu0 0.0
    %4107 = vmatprep.subr.mxu0 0.0
    %4108 = vmatpush1.msra.mxu0 0.0
    %4109 = vmatprep.subr.mxu0 0.0
    %4110 = vmatpush1.msra.mxu0 0.0
    %4111 = vmatprep.subr.mxu0 0.0
    %4112 = vmatpush1.msra.mxu0 0.0
    %4113 = vmatprep.subr.mxu0 0.0
    %4114 = vmatpush1.msra.mxu0 0.0
    %4115 = vmatprep.subr.mxu0 0.0
    %4116 = vmatpush1.msra.mxu0 0.0
    %4117 = vmatprep.subr.mxu0 0.0
    %4118 = vmatpush1.msra.mxu0 0.0
    %4119 = vmatprep.subr.mxu0 0.0
    %4120 = vmatpush1.msra.mxu0 0.0
    %4121 = vmatprep.subr.mxu0 0.0
    %4122 = vmatpush1.msra.mxu0 0.0
    %4123 = vmatprep.subr.mxu0 0.0
    %4124 = vmatpush1.msra.mxu0 0.0
    %4125 = vmatprep.subr.mxu0 0.0
    %4126 = vmatpush1.msra.mxu0 0.0
    %4127 = vmatprep.subr.mxu0 0.0
    %4128 = vmatpush1.msra.mxu0 0.0
    %4129 = vmatprep.mubr.f32.mxu0 0.0
    %v4130 = vand.u32 %v3767, 4294901760
    %v4131 = vsub.f32 %v3767, %v4130
    %4132 = vmatmul.mubr.f32.gmra.mrb[0].mxu0 %v4131
    %v4133 = vpop.f32.mrb[0].mxu0
    %v4134 = vadd.f32 %v4030, %v4133
    %v4135 = vpop.f32.mrb[0].mxu0
    %4136 = vdwg.mxu0
    %4137 = vmatprep.subr.mxu0 0.0
    %v4138 = vand.u32 %v3768, 4294901760
    %4139 = vmatpush1.msra.mxu0 %v4138
    %4140 = vmatprep.subr.mxu0 0.0
    %v4141 = vand.u32 %v3769, 4294901760
    %4142 = vmatpush1.msra.mxu0 %v4141
    %4143 = vmatprep.subr.mxu0 0.0
    %v4144 = vand.u32 %v3770, 4294901760
    %4145 = vmatpush1.msra.mxu0 %v4144
    %4146 = vmatprep.subr.mxu0 0.0
    %v4147 = vand.u32 %v3771, 4294901760
    %4148 = vmatpush1.msra.mxu0 %v4147
    %4149 = vmatprep.subr.mxu0 0.0
    %v4150 = vand.u32 %v3772, 4294901760
    %4151 = vmatpush1.msra.mxu0 %v4150
    %4152 = vmatprep.subr.mxu0 0.0
    %v4153 = vand.u32 %v3773, 4294901760
    %4154 = vmatpush1.msra.mxu0 %v4153
    %4155 = vmatprep.subr.mxu0 0.0
    %v4156 = vand.u32 %v3774, 4294901760
    %4157 = vmatpush1.msra.mxu0 %v4156
    %4158 = vmatprep.subr.mxu0 0.0
    %v4159 = vand.u32 %v3775, 4294901760
    %4160 = vmatpush1.msra.mxu0 %v4159
    %4161 = vmatprep.subr.mxu0 0.0
    %v4162 = vand.u32 %v3776, 4294901760
    %4163 = vmatpush1.msra.mxu0 %v4162
    %4164 = vmatprep.subr.mxu0 0.0
    %v4165 = vand.u32 %v3777, 4294901760
    %4166 = vmatpush1.msra.mxu0 %v4165
    %4167 = vmatprep.subr.mxu0 0.0
    %v4168 = vand.u32 %v3778, 4294901760
    %4169 = vmatpush1.msra.mxu0 %v4168
    %4170 = vmatprep.subr.mxu0 0.0
    %v4171 = vand.u32 %v3779, 4294901760
    %4172 = vmatpush1.msra.mxu0 %v4171
    %4173 = vmatprep.subr.mxu0 0.0
    %v4174 = vand.u32 %v3780, 4294901760
    %4175 = vmatpush1.msra.mxu0 %v4174
    %4176 = vmatprep.subr.mxu0 0.0
    %v4177 = vand.u32 %v3781, 4294901760
    %4178 = vmatpush1.msra.mxu0 %v4177
    %4179 = vmatprep.subr.mxu0 0.0
    %v4180 = vand.u32 %v3782, 4294901760
    %4181 = vmatpush1.msra.mxu0 %v4180
    %4182 = vmatprep.subr.mxu0 0.0
    %v4183 = vand.u32 %v3783, 4294901760
    %4184 = vmatpush1.msra.mxu0 %v4183
    %4185 = vmatprep.subr.mxu0 0.0
    %4186 = vmatpush1.msra.mxu0 0.0
    %4187 = vmatprep.subr.mxu0 0.0
    %4188 = vmatpush1.msra.mxu0 0.0
    %4189 = vmatprep.subr.mxu0 0.0
    %4190 = vmatpush1.msra.mxu0 0.0
    %4191 = vmatprep.subr.mxu0 0.0
    %4192 = vmatpush1.msra.mxu0 0.0
    %4193 = vmatprep.subr.mxu0 0.0
    %4194 = vmatpush1.msra.mxu0 0.0
    %4195 = vmatprep.subr.mxu0 0.0
    %4196 = vmatpush1.msra.mxu0 0.0
    %4197 = vmatprep.subr.mxu0 0.0
    %4198 = vmatpush1.msra.mxu0 0.0
    %4199 = vmatprep.subr.mxu0 0.0
    %4200 = vmatpush1.msra.mxu0 0.0
    %4201 = vmatprep.subr.mxu0 0.0
    %4202 = vmatpush1.msra.mxu0 0.0
    %4203 = vmatprep.subr.mxu0 0.0
    %4204 = vmatpush1.msra.mxu0 0.0
    %4205 = vmatprep.subr.mxu0 0.0
    %4206 = vmatpush1.msra.mxu0 0.0
    %4207 = vmatprep.subr.mxu0 0.0
    %4208 = vmatpush1.msra.mxu0 0.0
    %4209 = vmatprep.subr.mxu0 0.0
    %4210 = vmatpush1.msra.mxu0 0.0
    %4211 = vmatprep.subr.mxu0 0.0
    %4212 = vmatpush1.msra.mxu0 0.0
    %4213 = vmatprep.subr.mxu0 0.0
    %4214 = vmatpush1.msra.mxu0 0.0
    %4215 = vmatprep.subr.mxu0 0.0
    %4216 = vmatpush1.msra.mxu0 0.0
    %4217 = vmatprep.mubr.f32.mxu0 0.0
    %v4218 = vand.u32 %v3767, 4294901760
    %v4219 = vsub.f32 %v3767, %v4218
    %v4220 = vand.u32 %v4219, 4294901760
    %4221 = vmatmul.mubr.f32.gmra.mrb[0].mxu0 %v4220
    %v4222 = vpop.f32.mrb[0].mxu0
    %v4223 = vadd.f32 %v4134, %v4222
    %v4224 = vpop.f32.mrb[0].mxu0
    %4225 = vdwg.mxu0
    %4226 = vmatprep.subr.mxu0 0.0
    %v4227 = vand.u32 %v3768, 4294901760
    %v4228 = vsub.f32 %v3768, %v4227
    %v4229 = vand.u32 %v4228, 4294901760
    %4230 = vmatpush1.msra.mxu0 %v4229
    %4231 = vmatprep.subr.mxu0 0.0
    %v4232 = vand.u32 %v3769, 4294901760
    %v4233 = vsub.f32 %v3769, %v4232
    %v4234 = vand.u32 %v4233, 4294901760
    %4235 = vmatpush1.msra.mxu0 %v4234
    %4236 = vmatprep.subr.mxu0 0.0
    %v4237 = vand.u32 %v3770, 4294901760
    %v4238 = vsub.f32 %v3770, %v4237
    %v4239 = vand.u32 %v4238, 4294901760
    %4240 = vmatpush1.msra.mxu0 %v4239
    %4241 = vmatprep.subr.mxu0 0.0
    %v4242 = vand.u32 %v3771, 4294901760
    %v4243 = vsub.f32 %v3771, %v4242
    %v4244 = vand.u32 %v4243, 4294901760
    %4245 = vmatpush1.msra.mxu0 %v4244
    %4246 = vmatprep.subr.mxu0 0.0
    %v4247 = vand.u32 %v3772, 4294901760
    %v4248 = vsub.f32 %v3772, %v4247
    %v4249 = vand.u32 %v4248, 4294901760
    %4250 = vmatpush1.msra.mxu0 %v4249
    %4251 = vmatprep.subr.mxu0 0.0
    %v4252 = vand.u32 %v3773, 4294901760
    %v4253 = vsub.f32 %v3773, %v4252
    %v4254 = vand.u32 %v4253, 4294901760
    %4255 = vmatpush1.msra.mxu0 %v4254
    %4256 = vmatprep.subr.mxu0 0.0
    %v4257 = vand.u32 %v3774, 4294901760
    %v4258 = vsub.f32 %v3774, %v4257
    %v4259 = vand.u32 %v4258, 4294901760
    %4260 = vmatpush1.msra.mxu0 %v4259
    %4261 = vmatprep.subr.mxu0 0.0
    %v4262 = vand.u32 %v3775, 4294901760
    %v4263 = vsub.f32 %v3775, %v4262
    %v4264 = vand.u32 %v4263, 4294901760
    %4265 = vmatpush1.msra.mxu0 %v4264
    %4266 = vmatprep.subr.mxu0 0.0
    %v4267 = vand.u32 %v3776, 4294901760
    %v4268 = vsub.f32 %v3776, %v4267
    %v4269 = vand.u32 %v4268, 4294901760
    %4270 = vmatpush1.msra.mxu0 %v4269
    %4271 = vmatprep.subr.mxu0 0.0
    %v4272 = vand.u32 %v3777, 4294901760
    %v4273 = vsub.f32 %v3777, %v4272
    %v4274 = vand.u32 %v4273, 4294901760
    %4275 = vmatpush1.msra.mxu0 %v4274
    %4276 = vmatprep.subr.mxu0 0.0
    %v4277 = vand.u32 %v3778, 4294901760
    %v4278 = vsub.f32 %v3778, %v4277
    %v4279 = vand.u32 %v4278, 4294901760
    %4280 = vmatpush1.msra.mxu0 %v4279
    %4281 = vmatprep.subr.mxu0 0.0
    %v4282 = vand.u32 %v3779, 4294901760
    %v4283 = vsub.f32 %v3779, %v4282
    %v4284 = vand.u32 %v4283, 4294901760
    %4285 = vmatpush1.msra.mxu0 %v4284
    %4286 = vmatprep.subr.mxu0 0.0
    %v4287 = vand.u32 %v3780, 4294901760
    %v4288 = vsub.f32 %v3780, %v4287
    %v4289 = vand.u32 %v4288, 4294901760
    %4290 = vmatpush1.msra.mxu0 %v4289
    %4291 = vmatprep.subr.mxu0 0.0
    %v4292 = vand.u32 %v3781, 4294901760
    %v4293 = vsub.f32 %v3781, %v4292
    %v4294 = vand.u32 %v4293, 4294901760
    %4295 = vmatpush1.msra.mxu0 %v4294
    %4296 = vmatprep.subr.mxu0 0.0
    %v4297 = vand.u32 %v3782, 4294901760
    %v4298 = vsub.f32 %v3782, %v4297
    %v4299 = vand.u32 %v4298, 4294901760
    %4300 = vmatpush1.msra.mxu0 %v4299
    %4301 = vmatprep.subr.mxu0 0.0
    %v4302 = vand.u32 %v3783, 4294901760
    %v4303 = vsub.f32 %v3783, %v4302
    %v4304 = vand.u32 %v4303, 4294901760
    %4305 = vmatpush1.msra.mxu0 %v4304
    %4306 = vmatprep.subr.mxu0 0.0
    %4307 = vmatpush1.msra.mxu0 0.0
    %4308 = vmatprep.subr.mxu0 0.0
    %4309 = vmatpush1.msra.mxu0 0.0
    %4310 = vmatprep.subr.mxu0 0.0
    %4311 = vmatpush1.msra.mxu0 0.0
    %4312 = vmatprep.subr.mxu0 0.0
    %4313 = vmatpush1.msra.mxu0 0.0
    %4314 = vmatprep.subr.mxu0 0.0
    %4315 = vmatpush1.msra.mxu0 0.0
    %4316 = vmatprep.subr.mxu0 0.0
    %4317 = vmatpush1.msra.mxu0 0.0
    %4318 = vmatprep.subr.mxu0 0.0
    %4319 = vmatpush1.msra.mxu0 0.0
    %4320 = vmatprep.subr.mxu0 0.0
    %4321 = vmatpush1.msra.mxu0 0.0
    %4322 = vmatprep.subr.mxu0 0.0
    %4323 = vmatpush1.msra.mxu0 0.0
    %4324 = vmatprep.subr.mxu0 0.0
    %4325 = vmatpush1.msra.mxu0 0.0
    %4326 = vmatprep.subr.mxu0 0.0
    %4327 = vmatpush1.msra.mxu0 0.0
    %4328 = vmatprep.subr.mxu0 0.0
    %4329 = vmatpush1.msra.mxu0 0.0
    %4330 = vmatprep.subr.mxu0 0.0
    %4331 = vmatpush1.msra.mxu0 0.0
    %4332 = vmatprep.subr.mxu0 0.0
    %4333 = vmatpush1.msra.mxu0 0.0
    %4334 = vmatprep.subr.mxu0 0.0
    %4335 = vmatpush1.msra.mxu0 0.0
    %4336 = vmatprep.subr.mxu0 0.0
    %4337 = vmatpush1.msra.mxu0 0.0
    %4338 = vmatprep.mubr.f32.mxu0 0.0
    %v4339 = vand.u32 %v3767, 4294901760
    %4340 = vmatmul.mubr.f32.gmra.mrb[0].mxu0 %v4339
    %v4341 = vpop.f32.mrb[0].mxu0
    %v4342 = vadd.f32 %v4223, %v4341
    %v4343 = vpop.f32.mrb[0].mxu0
    %4344 = vdwg.mxu0
    %4345 = vmatprep.subr.mxu0 0.0
    %v4346 = vand.u32 %v3768, 4294901760
    %4347 = vmatpush1.msra.mxu0 %v4346
    %4348 = vmatprep.subr.mxu0 0.0
    %v4349 = vand.u32 %v3769, 4294901760
    %4350 = vmatpush1.msra.mxu0 %v4349
    %4351 = vmatprep.subr.mxu0 0.0
    %v4352 = vand.u32 %v3770, 4294901760
    %4353 = vmatpush1.msra.mxu0 %v4352
    %4354 = vmatprep.subr.mxu0 0.0
    %v4355 = vand.u32 %v3771, 4294901760
    %4356 = vmatpush1.msra.mxu0 %v4355
    %4357 = vmatprep.subr.mxu0 0.0
    %v4358 = vand.u32 %v3772, 4294901760
    %4359 = vmatpush1.msra.mxu0 %v4358
    %4360 = vmatprep.subr.mxu0 0.0
    %v4361 = vand.u32 %v3773, 4294901760
    %4362 = vmatpush1.msra.mxu0 %v4361
    %4363 = vmatprep.subr.mxu0 0.0
    %v4364 = vand.u32 %v3774, 4294901760
    %4365 = vmatpush1.msra.mxu0 %v4364
    %4366 = vmatprep.subr.mxu0 0.0
    %v4367 = vand.u32 %v3775, 4294901760
    %4368 = vmatpush1.msra.mxu0 %v4367
    %4369 = vmatprep.subr.mxu0 0.0
    %v4370 = vand.u32 %v3776, 4294901760
    %4371 = vmatpush1.msra.mxu0 %v4370
    %4372 = vmatprep.subr.mxu0 0.0
    %v4373 = vand.u32 %v3777, 4294901760
    %4374 = vmatpush1.msra.mxu0 %v4373
    %4375 = vmatprep.subr.mxu0 0.0
    %v4376 = vand.u32 %v3778, 4294901760
    %4377 = vmatpush1.msra.mxu0 %v4376
    %4378 = vmatprep.subr.mxu0 0.0
    %v4379 = vand.u32 %v3779, 4294901760
    %4380 = vmatpush1.msra.mxu0 %v4379
    %4381 = vmatprep.subr.mxu0 0.0
    %v4382 = vand.u32 %v3780, 4294901760
    %4383 = vmatpush1.msra.mxu0 %v4382
    %4384 = vmatprep.subr.mxu0 0.0
    %v4385 = vand.u32 %v3781, 4294901760
    %4386 = vmatpush1.msra.mxu0 %v4385
    %4387 = vmatprep.subr.mxu0 0.0
    %v4388 = vand.u32 %v3782, 4294901760
    %4389 = vmatpush1.msra.mxu0 %v4388
    %4390 = vmatprep.subr.mxu0 0.0
    %v4391 = vand.u32 %v3783, 4294901760
    %4392 = vmatpush1.msra.mxu0 %v4391
    %4393 = vmatprep.subr.mxu0 0.0
    %4394 = vmatpush1.msra.mxu0 0.0
    %4395 = vmatprep.subr.mxu0 0.0
    %4396 = vmatpush1.msra.mxu0 0.0
    %4397 = vmatprep.subr.mxu0 0.0
    %4398 = vmatpush1.msra.mxu0 0.0
    %4399 = vmatprep.subr.mxu0 0.0
    %4400 = vmatpush1.msra.mxu0 0.0
    %4401 = vmatprep.subr.mxu0 0.0
    %4402 = vmatpush1.msra.mxu0 0.0
    %4403 = vmatprep.subr.mxu0 0.0
    %4404 = vmatpush1.msra.mxu0 0.0
    %4405 = vmatprep.subr.mxu0 0.0
    %4406 = vmatpush1.msra.mxu0 0.0
    %4407 = vmatprep.subr.mxu0 0.0
    %4408 = vmatpush1.msra.mxu0 0.0
    %4409 = vmatprep.subr.mxu0 0.0
    %4410 = vmatpush1.msra.mxu0 0.0
    %4411 = vmatprep.subr.mxu0 0.0
    %4412 = vmatpush1.msra.mxu0 0.0
    %4413 = vmatprep.subr.mxu0 0.0
    %4414 = vmatpush1.msra.mxu0 0.0
    %4415 = vmatprep.subr.mxu0 0.0
    %4416 = vmatpush1.msra.mxu0 0.0
    %4417 = vmatprep.subr.mxu0 0.0
    %4418 = vmatpush1.msra.mxu0 0.0
    %4419 = vmatprep.subr.mxu0 0.0
    %4420 = vmatpush1.msra.mxu0 0.0
    %4421 = vmatprep.subr.mxu0 0.0
    %4422 = vmatpush1.msra.mxu0 0.0
    %4423 = vmatprep.subr.mxu0 0.0
    %4424 = vmatpush1.msra.mxu0 0.0
    %4425 = vmatprep.mubr.f32.mxu0 0.0
    %v4426 = vand.u32 %v3767, 4294901760
    %4427 = vmatmul.mubr.f32.gmra.mrb[0].mxu0 %v4426
    %v4428 = vpop.f32.mrb[0].mxu0
    %v4429 = vadd.f32 %v4342, %v4428
    %v4430 = vpop.f32.mrb[0].mxu0
    %4431 = vdwg.mxu0
    %v4432 = vmul.f32 %v4429, %v4429
    %v4434 = vrot.slane %v4429, 1
    %v4436 = vadd.f32 %v4429, %v4434
    %v4438 = vrot.slane %v4432, 1
    %v4440 = vadd.f32 %v4432, %v4438
    %v4442 = vrot.slane %v4440, 7
    %v4444 = vsel %vm768, %v4436, %v4442
    %v4445 = vld [vmem:[%s15] sm:$0xff]
    %v4446 = vld [vmem:[%s15 + $0x8] sm:$0xff]
    %v4447 = vld [vmem:[%s15 + $0x10] sm:$0xff]
    %v4448 = vld [vmem:[%s15 + $0x18] sm:$0xff]
    %v4449 = vld [vmem:[%s15 + $0x20] sm:$0xff]
    %v4450 = vld [vmem:[%s15 + $0x28] sm:$0xff]
    %v4451 = vld [vmem:[%s15 + $0x30] sm:$0xff]
    %v4452 = vld [vmem:[%s15 + $0x38] sm:$0xff]
    %v4453 = vld [vmem:[%s15 + $0x40] sm:$0xff]
    %v4454 = vld [vmem:[%s15 + $0x48] sm:$0xff]
    %v4455 = vld [vmem:[%s15 + $0x50] sm:$0xff]
    %v4456 = vld [vmem:[%s15 + $0x58] sm:$0xff]
    %vm4457 = vcmask 785408
    %v4459 = vsel %vm4457, %v4444, 0
    %4461 = vmatprep.subr.mxu0 0.0
    %v4462 = vand.u32 %v4445, 4294901760
    %4463 = vmatpush1.msra.mxu0 %v4462
    %4464 = vmatprep.subr.mxu0 0.0
    %v4465 = vand.u32 %v4446, 4294901760
    %4466 = vmatpush1.msra.mxu0 %v4465
    %4467 = vmatprep.subr.mxu0 0.0
    %v4468 = vand.u32 %v4447, 4294901760
    %4469 = vmatpush1.msra.mxu0 %v4468
    %4470 = vmatprep.subr.mxu0 0.0
    %v4471 = vand.u32 %v4448, 4294901760
    %4472 = vmatpush1.msra.mxu0 %v4471
    %4473 = vmatprep.subr.mxu0 0.0
    %v4474 = vand.u32 %v4449, 4294901760
    %4475 = vmatpush1.msra.mxu0 %v4474
    %4476 = vmatprep.subr.mxu0 0.0
    %v4477 = vand.u32 %v4450, 4294901760
    %4478 = vmatpush1.msra.mxu0 %v4477
    %4479 = vmatprep.subr.mxu0 0.0
    %v4480 = vand.u32 %v4451, 4294901760
    %4481 = vmatpush1.msra.mxu0 %v4480
    %4482 = vmatprep.subr.mxu0 0.0
    %v4483 = vand.u32 %v4452, 4294901760
    %4484 = vmatpush1.msra.mxu0 %v4483
    %4485 = vmatprep.subr.mxu0 0.0
    %v4486 = vand.u32 %v4453, 4294901760
    %4487 = vmatpush1.msra.mxu0 %v4486
    %4488 = vmatprep.subr.mxu0 0.0
    %v4489 = vand.u32 %v4454, 4294901760
    %4490 = vmatpush1.msra.mxu0 %v4489
    %4491 = vmatprep.subr.mxu0 0.0
    %v4492 = vand.u32 %v4455, 4294901760
    %4493 = vmatpush1.msra.mxu0 %v4492
    %4494 = vmatprep.subr.mxu0 0.0
    %v4495 = vand.u32 %v4456, 4294901760
    %4496 = vmatpush1.msra.mxu0 %v4495
    %4497 = vmatprep.subr.mxu0 0.0
    %4498 = vmatpush1.msra.mxu0 0.0
    %4499 = vmatprep.subr.mxu0 0.0
    %4500 = vmatpush1.msra.mxu0 0.0
    %4501 = vmatprep.subr.mxu0 0.0
    %4502 = vmatpush1.msra.mxu0 0.0
    %4503 = vmatprep.subr.mxu0 0.0
    %4504 = vmatpush1.msra.mxu0 0.0
    %4505 = vmatprep.subr.mxu0 0.0
    %4506 = vmatpush1.msra.mxu0 0.0
    %4507 = vmatprep.subr.mxu0 0.0
    %4508 = vmatpush1.msra.mxu0 0.0
    %4509 = vmatprep.subr.mxu0 0.0
    %4510 = vmatpush1.msra.mxu0 0.0
    %4511 = vmatprep.subr.mxu0 0.0
    %4512 = vmatpush1.msra.mxu0 0.0
    %4513 = vmatprep.subr.mxu0 0.0
    %4514 = vmatpush1.msra.mxu0 0.0
    %4515 = vmatprep.subr.mxu0 0.0
    %4516 = vmatpush1.msra.mxu0 0.0
    %4517 = vmatprep.subr.mxu0 0.0
    %4518 = vmatpush1.msra.mxu0 0.0
    %4519 = vmatprep.subr.mxu0 0.0
    %4520 = vmatpush1.msra.mxu0 0.0
    %4521 = vmatprep.subr.mxu0 0.0
    %4522 = vmatpush1.msra.mxu0 0.0
    %4523 = vmatprep.subr.mxu0 0.0
    %4524 = vmatpush1.msra.mxu0 0.0
    %4525 = vmatprep.subr.mxu0 0.0
    %4526 = vmatpush1.msra.mxu0 0.0
    %4527 = vmatprep.subr.mxu0 0.0
    %4528 = vmatpush1.msra.mxu0 0.0
    %4529 = vmatprep.subr.mxu0 0.0
    %4530 = vmatpush1.msra.mxu0 0.0
    %4531 = vmatprep.subr.mxu0 0.0
    %4532 = vmatpush1.msra.mxu0 0.0
    %4533 = vmatprep.subr.mxu0 0.0
    %4534 = vmatpush1.msra.mxu0 0.0
    %4535 = vmatprep.subr.mxu0 0.0
    %4536 = vmatpush1.msra.mxu0 0.0
    %4537 = vmatprep.mubr.f32.mxu0 0.0
    %v4538 = vand.u32 %v4459, 4294901760
    %v4539 = vsub.f32 %v4459, %v4538
    %v4540 = vand.u32 %v4539, 4294901760
    %v4541 = vsub.f32 %v4539, %v4540
    %v4542 = vand.u32 %v4541, 4294901760
    %4543 = vmatmul.mubr.f32.gmra.mrb[0].mxu0 %v4542
    %v4544 = vpop.f32.mrb[0].mxu0
    %v4545 = vadd.f32 0.0, %v4544
    %v4546 = vpop.f32.mrb[0].mxu0
    %4547 = vdwg.mxu0
    %4548 = vmatprep.subr.mxu0 0.0
    %v4549 = vand.u32 %v4445, 4294901760
    %v4550 = vsub.f32 %v4445, %v4549
    %v4551 = vand.u32 %v4550, 4294901760
    %v4552 = vsub.f32 %v4550, %v4551
    %v4553 = vand.u32 %v4552, 4294901760
    %4554 = vmatpush1.msra.mxu0 %v4553
    %4555 = vmatprep.subr.mxu0 0.0
    %v4556 = vand.u32 %v4446, 4294901760
    %v4557 = vsub.f32 %v4446, %v4556
    %v4558 = vand.u32 %v4557, 4294901760
    %v4559 = vsub.f32 %v4557, %v4558
    %v4560 = vand.u32 %v4559, 4294901760
    %4561 = vmatpush1.msra.mxu0 %v4560
    %4562 = vmatprep.subr.mxu0 0.0
    %v4563 = vand.u32 %v4447, 4294901760
    %v4564 = vsub.f32 %v4447, %v4563
    %v4565 = vand.u32 %v4564, 4294901760
    %v4566 = vsub.f32 %v4564, %v4565
    %v4567 = vand.u32 %v4566, 4294901760
    %4568 = vmatpush1.msra.mxu0 %v4567
    %4569 = vmatprep.subr.mxu0 0.0
    %v4570 = vand.u32 %v4448, 4294901760
    %v4571 = vsub.f32 %v4448, %v4570
    %v4572 = vand.u32 %v4571, 4294901760
    %v4573 = vsub.f32 %v4571, %v4572
    %v4574 = vand.u32 %v4573, 4294901760
    %4575 = vmatpush1.msra.mxu0 %v4574
    %4576 = vmatprep.subr.mxu0 0.0
    %v4577 = vand.u32 %v4449, 4294901760
    %v4578 = vsub.f32 %v4449, %v4577
    %v4579 = vand.u32 %v4578, 4294901760
    %v4580 = vsub.f32 %v4578, %v4579
    %v4581 = vand.u32 %v4580, 4294901760
    %4582 = vmatpush1.msra.mxu0 %v4581
    %4583 = vmatprep.subr.mxu0 0.0
    %v4584 = vand.u32 %v4450, 4294901760
    %v4585 = vsub.f32 %v4450, %v4584
    %v4586 = vand.u32 %v4585, 4294901760
    %v4587 = vsub.f32 %v4585, %v4586
    %v4588 = vand.u32 %v4587, 4294901760
    %4589 = vmatpush1.msra.mxu0 %v4588
    %4590 = vmatprep.subr.mxu0 0.0
    %v4591 = vand.u32 %v4451, 4294901760
    %v4592 = vsub.f32 %v4451, %v4591
    %v4593 = vand.u32 %v4592, 4294901760
    %v4594 = vsub.f32 %v4592, %v4593
    %v4595 = vand.u32 %v4594, 4294901760
    %4596 = vmatpush1.msra.mxu0 %v4595
    %4597 = vmatprep.subr.mxu0 0.0
    %v4598 = vand.u32 %v4452, 4294901760
    %v4599 = vsub.f32 %v4452, %v4598
    %v4600 = vand.u32 %v4599, 4294901760
    %v4601 = vsub.f32 %v4599, %v4600
    %v4602 = vand.u32 %v4601, 4294901760
    %4603 = vmatpush1.msra.mxu0 %v4602
    %4604 = vmatprep.subr.mxu0 0.0
    %v4605 = vand.u32 %v4453, 4294901760
    %v4606 = vsub.f32 %v4453, %v4605
    %v4607 = vand.u32 %v4606, 4294901760
    %v4608 = vsub.f32 %v4606, %v4607
    %v4609 = vand.u32 %v4608, 4294901760
    %4610 = vmatpush1.msra.mxu0 %v4609
    %4611 = vmatprep.subr.mxu0 0.0
    %v4612 = vand.u32 %v4454, 4294901760
    %v4613 = vsub.f32 %v4454, %v4612
    %v4614 = vand.u32 %v4613, 4294901760
    %v4615 = vsub.f32 %v4613, %v4614
    %v4616 = vand.u32 %v4615, 4294901760
    %4617 = vmatpush1.msra.mxu0 %v4616
    %4618 = vmatprep.subr.mxu0 0.0
    %v4619 = vand.u32 %v4455, 4294901760
    %v4620 = vsub.f32 %v4455, %v4619
    %v4621 = vand.u32 %v4620, 4294901760
    %v4622 = vsub.f32 %v4620, %v4621
    %v4623 = vand.u32 %v4622, 4294901760
    %4624 = vmatpush1.msra.mxu0 %v4623
    %4625 = vmatprep.subr.mxu0 0.0
    %v4626 = vand.u32 %v4456, 4294901760
    %v4627 = vsub.f32 %v4456, %v4626
    %v4628 = vand.u32 %v4627, 4294901760
    %v4629 = vsub.f32 %v4627, %v4628
    %v4630 = vand.u32 %v4629, 4294901760
    %4631 = vmatpush1.msra.mxu0 %v4630
    %4632 = vmatprep.subr.mxu0 0.0
    %4633 = vmatpush1.msra.mxu0 0.0
    %4634 = vmatprep.subr.mxu0 0.0
    %4635 = vmatpush1.msra.mxu0 0.0
    %4636 = vmatprep.subr.mxu0 0.0
    %4637 = vmatpush1.msra.mxu0 0.0
    %4638 = vmatprep.subr.mxu0 0.0
    %4639 = vmatpush1.msra.mxu0 0.0
    %4640 = vmatprep.subr.mxu0 0.0
    %4641 = vmatpush1.msra.mxu0 0.0
    %4642 = vmatprep.subr.mxu0 0.0
    %4643 = vmatpush1.msra.mxu0 0.0
    %4644 = vmatprep.subr.mxu0 0.0
    %4645 = vmatpush1.msra.mxu0 0.0
    %4646 = vmatprep.subr.mxu0 0.0
    %4647 = vmatpush1.msra.mxu0 0.0
    %4648 = vmatprep.subr.mxu0 0.0
    %4649 = vmatpush1.msra.mxu0 0.0
    %4650 = vmatprep.subr.mxu0 0.0
    %4651 = vmatpush1.msra.mxu0 0.0
    %4652 = vmatprep.subr.mxu0 0.0
    %4653 = vmatpush1.msra.mxu0 0.0
    %4654 = vmatprep.subr.mxu0 0.0
    %4655 = vmatpush1.msra.mxu0 0.0
    %4656 = vmatprep.subr.mxu0 0.0
    %4657 = vmatpush1.msra.mxu0 0.0
    %4658 = vmatprep.subr.mxu0 0.0
    %4659 = vmatpush1.msra.mxu0 0.0
    %4660 = vmatprep.subr.mxu0 0.0
    %4661 = vmatpush1.msra.mxu0 0.0
    %4662 = vmatprep.subr.mxu0 0.0
    %4663 = vmatpush1.msra.mxu0 0.0
    %4664 = vmatprep.subr.mxu0 0.0
    %4665 = vmatpush1.msra.mxu0 0.0
    %4666 = vmatprep.subr.mxu0 0.0
    %4667 = vmatpush1.msra.mxu0 0.0
    %4668 = vmatprep.subr.mxu0 0.0
    %4669 = vmatpush1.msra.mxu0 0.0
    %4670 = vmatprep.subr.mxu0 0.0
    %4671 = vmatpush1.msra.mxu0 0.0
    %4672 = vmatprep.mubr.f32.mxu0 0.0
    %v4673 = vand.u32 %v4459, 4294901760
    %4674 = vmatmul.mubr.f32.gmra.mrb[0].mxu0 %v4673
    %v4675 = vpop.f32.mrb[0].mxu0
    %v4676 = vadd.f32 %v4545, %v4675
    %v4677 = vpop.f32.mrb[0].mxu0
    %4678 = vdwg.mxu0
    %4679 = vmatprep.subr.mxu0 0.0
    %v4680 = vand.u32 %v4445, 4294901760
    %v4681 = vsub.f32 %v4445, %v4680
    %4682 = vmatpush1.msra.mxu0 %v4681
    %4683 = vmatprep.subr.mxu0 0.0
    %v4684 = vand.u32 %v4446, 4294901760
    %v4685 = vsub.f32 %v4446, %v4684
    %4686 = vmatpush1.msra.mxu0 %v4685
    %4687 = vmatprep.subr.mxu0 0.0
    %v4688 = vand.u32 %v4447, 4294901760
    %v4689 = vsub.f32 %v4447, %v4688
    %4690 = vmatpush1.msra.mxu0 %v4689
    %4691 = vmatprep.subr.mxu0 0.0
    %v4692 = vand.u32 %v4448, 4294901760
    %v4693 = vsub.f32 %v4448, %v4692
    %4694 = vmatpush1.msra.mxu0 %v4693
    %4695 = vmatprep.subr.mxu0 0.0
    %v4696 = vand.u32 %v4449, 4294901760
    %v4697 = vsub.f32 %v4449, %v4696
    %4698 = vmatpush1.msra.mxu0 %v4697
    %4699 = vmatprep.subr.mxu0 0.0
    %v4700 = vand.u32 %v4450, 4294901760
    %v4701 = vsub.f32 %v4450, %v4700
    %4702 = vmatpush1.msra.mxu0 %v4701
    %4703 = vmatprep.subr.mxu0 0.0
    %v4704 = vand.u32 %v4451, 4294901760
    %v4705 = vsub.f32 %v4451, %v4704
    %4706 = vmatpush1.msra.mxu0 %v4705
    %4707 = vmatprep.subr.mxu0 0.0
    %v4708 = vand.u32 %v4452, 4294901760
    %v4709 = vsub.f32 %v4452, %v4708
    %4710 = vmatpush1.msra.mxu0 %v4709
    %4711 = vmatprep.subr.mxu0 0.0
    %v4712 = vand.u32 %v4453, 4294901760
    %v4713 = vsub.f32 %v4453, %v4712
    %4714 = vmatpush1.msra.mxu0 %v4713
    %4715 = vmatprep.subr.mxu0 0.0
    %v4716 = vand.u32 %v4454, 4294901760
    %v4717 = vsub.f32 %v4454, %v4716
    %4718 = vmatpush1.msra.mxu0 %v4717
    %4719 = vmatprep.subr.mxu0 0.0
    %v4720 = vand.u32 %v4455, 4294901760
    %v4721 = vsub.f32 %v4455, %v4720
    %4722 = vmatpush1.msra.mxu0 %v4721
    %4723 = vmatprep.subr.mxu0 0.0
    %v4724 = vand.u32 %v4456, 4294901760
    %v4725 = vsub.f32 %v4456, %v4724
    %4726 = vmatpush1.msra.mxu0 %v4725
    %4727 = vmatprep.subr.mxu0 0.0
    %4728 = vmatpush1.msra.mxu0 0.0
    %4729 = vmatprep.subr.mxu0 0.0
    %4730 = vmatpush1.msra.mxu0 0.0
    %4731 = vmatprep.subr.mxu0 0.0
    %4732 = vmatpush1.msra.mxu0 0.0
    %4733 = vmatprep.subr.mxu0 0.0
    %4734 = vmatpush1.msra.mxu0 0.0
    %4735 = vmatprep.subr.mxu0 0.0
    %4736 = vmatpush1.msra.mxu0 0.0
    %4737 = vmatprep.subr.mxu0 0.0
    %4738 = vmatpush1.msra.mxu0 0.0
    %4739 = vmatprep.subr.mxu0 0.0
    %4740 = vmatpush1.msra.mxu0 0.0
    %4741 = vmatprep.subr.mxu0 0.0
    %4742 = vmatpush1.msra.mxu0 0.0
    %4743 = vmatprep.subr.mxu0 0.0
    %4744 = vmatpush1.msra.mxu0 0.0
    %4745 = vmatprep.subr.mxu0 0.0
    %4746 = vmatpush1.msra.mxu0 0.0
    %4747 = vmatprep.subr.mxu0 0.0
    %4748 = vmatpush1.msra.mxu0 0.0
    %4749 = vmatprep.subr.mxu0 0.0
    %4750 = vmatpush1.msra.mxu0 0.0
    %4751 = vmatprep.subr.mxu0 0.0
    %4752 = vmatpush1.msra.mxu0 0.0
    %4753 = vmatprep.subr.mxu0 0.0
    %4754 = vmatpush1.msra.mxu0 0.0
    %4755 = vmatprep.subr.mxu0 0.0
    %4756 = vmatpush1.msra.mxu0 0.0
    %4757 = vmatprep.subr.mxu0 0.0
    %4758 = vmatpush1.msra.mxu0 0.0
    %4759 = vmatprep.subr.mxu0 0.0
    %4760 = vmatpush1.msra.mxu0 0.0
    %4761 = vmatprep.subr.mxu0 0.0
    %4762 = vmatpush1.msra.mxu0 0.0
    %4763 = vmatprep.subr.mxu0 0.0
    %4764 = vmatpush1.msra.mxu0 0.0
    %4765 = vmatprep.subr.mxu0 0.0
    %4766 = vmatpush1.msra.mxu0 0.0
    %4767 = vmatprep.mubr.f32.mxu0 0.0
    %v4768 = vand.u32 %v4459, 4294901760
    %v4769 = vsub.f32 %v4459, %v4768
    %4770 = vmatmul.mubr.f32.gmra.mrb[0].mxu0 %v4769
    %v4771 = vpop.f32.mrb[0].mxu0
    %v4772 = vadd.f32 %v4676, %v4771
    %v4773 = vpop.f32.mrb[0].mxu0
    %4774 = vdwg.mxu0
    %4775 = vmatprep.subr.mxu0 0.0
    %v4776 = vand.u32 %v4445, 4294901760
    %4777 = vmatpush1.msra.mxu0 %v4776
    %4778 = vmatprep.subr.mxu0 0.0
    %v4779 = vand.u32 %v4446, 4294901760
    %4780 = vmatpush1.msra.mxu0 %v4779
    %4781 = vmatprep.subr.mxu0 0.0
    %v4782 = vand.u32 %v4447, 4294901760
    %4783 = vmatpush1.msra.mxu0 %v4782
    %4784 = vmatprep.subr.mxu0 0.0
    %v4785 = vand.u32 %v4448, 4294901760
    %4786 = vmatpush1.msra.mxu0 %v4785
    %4787 = vmatprep.subr.mxu0 0.0
    %v4788 = vand.u32 %v4449, 4294901760
    %4789 = vmatpush1.msra.mxu0 %v4788
    %4790 = vmatprep.subr.mxu0 0.0
    %v4791 = vand.u32 %v4450, 4294901760
    %4792 = vmatpush1.msra.mxu0 %v4791
    %4793 = vmatprep.subr.mxu0 0.0
    %v4794 = vand.u32 %v4451, 4294901760
    %4795 = vmatpush1.msra.mxu0 %v4794
    %4796 = vmatprep.subr.mxu0 0.0
    %v4797 = vand.u32 %v4452, 4294901760
    %4798 = vmatpush1.msra.mxu0 %v4797
    %4799 = vmatprep.subr.mxu0 0.0
    %v4800 = vand.u32 %v4453, 4294901760
    %4801 = vmatpush1.msra.mxu0 %v4800
    %4802 = vmatprep.subr.mxu0 0.0
    %v4803 = vand.u32 %v4454, 4294901760
    %4804 = vmatpush1.msra.mxu0 %v4803
    %4805 = vmatprep.subr.mxu0 0.0
    %v4806 = vand.u32 %v4455, 4294901760
    %4807 = vmatpush1.msra.mxu0 %v4806
    %4808 = vmatprep.subr.mxu0 0.0
    %v4809 = vand.u32 %v4456, 4294901760
    %4810 = vmatpush1.msra.mxu0 %v4809
    %4811 = vmatprep.subr.mxu0 0.0
    %4812 = vmatpush1.msra.mxu0 0.0
    %4813 = vmatprep.subr.mxu0 0.0
    %4814 = vmatpush1.msra.mxu0 0.0
    %4815 = vmatprep.subr.mxu0 0.0
    %4816 = vmatpush1.msra.mxu0 0.0
    %4817 = vmatprep.subr.mxu0 0.0
    %4818 = vmatpush1.msra.mxu0 0.0
    %4819 = vmatprep.subr.mxu0 0.0
    %4820 = vmatpush1.msra.mxu0 0.0
    %4821 = vmatprep.subr.mxu0 0.0
    %4822 = vmatpush1.msra.mxu0 0.0
    %4823 = vmatprep.subr.mxu0 0.0
    %4824 = vmatpush1.msra.mxu0 0.0
    %4825 = vmatprep.subr.mxu0 0.0
    %4826 = vmatpush1.msra.mxu0 0.0
    %4827 = vmatprep.subr.mxu0 0.0
    %4828 = vmatpush1.msra.mxu0 0.0
    %4829 = vmatprep.subr.mxu0 0.0
    %4830 = vmatpush1.msra.mxu0 0.0
    %4831 = vmatprep.subr.mxu0 0.0
    %4832 = vmatpush1.msra.mxu0 0.0
    %4833 = vmatprep.subr.mxu0 0.0
    %4834 = vmatpush1.msra.mxu0 0.0
    %4835 = vmatprep.subr.mxu0 0.0
    %4836 = vmatpush1.msra.mxu0 0.0
    %4837 = vmatprep.subr.mxu0 0.0
    %4838 = vmatpush1.msra.mxu0 0.0
    %4839 = vmatprep.subr.mxu0 0.0
    %4840 = vmatpush1.msra.mxu0 0.0
    %4841 = vmatprep.subr.mxu0 0.0
    %4842 = vmatpush1.msra.mxu0 0.0
    %4843 = vmatprep.subr.mxu0 0.0
    %4844 = vmatpush1.msra.mxu0 0.0
    %4845 = vmatprep.subr.mxu0 0.0
    %4846 = vmatpush1.msra.mxu0 0.0
    %4847 = vmatprep.subr.mxu0 0.0
    %4848 = vmatpush1.msra.mxu0 0.0
    %4849 = vmatprep.subr.mxu0 0.0
    %4850 = vmatpush1.msra.mxu0 0.0
    %4851 = vmatprep.mubr.f32.mxu0 0.0
    %v4852 = vand.u32 %v4459, 4294901760
    %v4853 = vsub.f32 %v4459, %v4852
    %v4854 = vand.u32 %v4853, 4294901760
    %4855 = vmatmul.mubr.f32.gmra.mrb[0].mxu0 %v4854
    %v4856 = vpop.f32.mrb[0].mxu0
    %v4857 = vadd.f32 %v4772, %v4856
    %v4858 = vpop.f32.mrb[0].mxu0
    %4859 = vdwg.mxu0
    %4860 = vmatprep.subr.mxu0 0.0
    %v4861 = vand.u32 %v4445, 4294901760
    %v4862 = vsub.f32 %v4445, %v4861
    %v4863 = vand.u32 %v4862, 4294901760
    %4864 = vmatpush1.msra.mxu0 %v4863
    %4865 = vmatprep.subr.mxu0 0.0
    %v4866 = vand.u32 %v4446, 4294901760
    %v4867 = vsub.f32 %v4446, %v4866
    %v4868 = vand.u32 %v4867, 4294901760
    %4869 = vmatpush1.msra.mxu0 %v4868
    %4870 = vmatprep.subr.mxu0 0.0
    %v4871 = vand.u32 %v4447, 4294901760
    %v4872 = vsub.f32 %v4447, %v4871
    %v4873 = vand.u32 %v4872, 4294901760
    %4874 = vmatpush1.msra.mxu0 %v4873
    %4875 = vmatprep.subr.mxu0 0.0
    %v4876 = vand.u32 %v4448, 4294901760
    %v4877 = vsub.f32 %v4448, %v4876
    %v4878 = vand.u32 %v4877, 4294901760
    %4879 = vmatpush1.msra.mxu0 %v4878
    %4880 = vmatprep.subr.mxu0 0.0
    %v4881 = vand.u32 %v4449, 4294901760
    %v4882 = vsub.f32 %v4449, %v4881
    %v4883 = vand.u32 %v4882, 4294901760
    %4884 = vmatpush1.msra.mxu0 %v4883
    %4885 = vmatprep.subr.mxu0 0.0
    %v4886 = vand.u32 %v4450, 4294901760
    %v4887 = vsub.f32 %v4450, %v4886
    %v4888 = vand.u32 %v4887, 4294901760
    %4889 = vmatpush1.msra.mxu0 %v4888
    %4890 = vmatprep.subr.mxu0 0.0
    %v4891 = vand.u32 %v4451, 4294901760
    %v4892 = vsub.f32 %v4451, %v4891
    %v4893 = vand.u32 %v4892, 4294901760
    %4894 = vmatpush1.msra.mxu0 %v4893
    %4895 = vmatprep.subr.mxu0 0.0
    %v4896 = vand.u32 %v4452, 4294901760
    %v4897 = vsub.f32 %v4452, %v4896
    %v4898 = vand.u32 %v4897, 4294901760
    %4899 = vmatpush1.msra.mxu0 %v4898
    %4900 = vmatprep.subr.mxu0 0.0
    %v4901 = vand.u32 %v4453, 4294901760
    %v4902 = vsub.f32 %v4453, %v4901
    %v4903 = vand.u32 %v4902, 4294901760
    %4904 = vmatpush1.msra.mxu0 %v4903
    %4905 = vmatprep.subr.mxu0 0.0
    %v4906 = vand.u32 %v4454, 4294901760
    %v4907 = vsub.f32 %v4454, %v4906
    %v4908 = vand.u32 %v4907, 4294901760
    %4909 = vmatpush1.msra.mxu0 %v4908
    %4910 = vmatprep.subr.mxu0 0.0
    %v4911 = vand.u32 %v4455, 4294901760
    %v4912 = vsub.f32 %v4455, %v4911
    %v4913 = vand.u32 %v4912, 4294901760
    %4914 = vmatpush1.msra.mxu0 %v4913
    %4915 = vmatprep.subr.mxu0 0.0
    %v4916 = vand.u32 %v4456, 4294901760
    %v4917 = vsub.f32 %v4456, %v4916
    %v4918 = vand.u32 %v4917, 4294901760
    %4919 = vmatpush1.msra.mxu0 %v4918
    %4920 = vmatprep.subr.mxu0 0.0
    %4921 = vmatpush1.msra.mxu0 0.0
    %4922 = vmatprep.subr.mxu0 0.0
    %4923 = vmatpush1.msra.mxu0 0.0
    %4924 = vmatprep.subr.mxu0 0.0
    %4925 = vmatpush1.msra.mxu0 0.0
    %4926 = vmatprep.subr.mxu0 0.0
    %4927 = vmatpush1.msra.mxu0 0.0
    %4928 = vmatprep.subr.mxu0 0.0
    %4929 = vmatpush1.msra.mxu0 0.0
    %4930 = vmatprep.subr.mxu0 0.0
    %4931 = vmatpush1.msra.mxu0 0.0
    %4932 = vmatprep.subr.mxu0 0.0
    %4933 = vmatpush1.msra.mxu0 0.0
    %4934 = vmatprep.subr.mxu0 0.0
    %4935 = vmatpush1.msra.mxu0 0.0
    %4936 = vmatprep.subr.mxu0 0.0
    %4937 = vmatpush1.msra.mxu0 0.0
    %4938 = vmatprep.subr.mxu0 0.0
    %4939 = vmatpush1.msra.mxu0 0.0
    %4940 = vmatprep.subr.mxu0 0.0
    %4941 = vmatpush1.msra.mxu0 0.0
    %4942 = vmatprep.subr.mxu0 0.0
    %4943 = vmatpush1.msra.mxu0 0.0
    %4944 = vmatprep.subr.mxu0 0.0
    %4945 = vmatpush1.msra.mxu0 0.0
    %4946 = vmatprep.subr.mxu0 0.0
    %4947 = vmatpush1.msra.mxu0 0.0
    %4948 = vmatprep.subr.mxu0 0.0
    %4949 = vmatpush1.msra.mxu0 0.0
    %4950 = vmatprep.subr.mxu0 0.0
    %4951 = vmatpush1.msra.mxu0 0.0
    %4952 = vmatprep.subr.mxu0 0.0
    %4953 = vmatpush1.msra.mxu0 0.0
    %4954 = vmatprep.subr.mxu0 0.0
    %4955 = vmatpush1.msra.mxu0 0.0
    %4956 = vmatprep.subr.mxu0 0.0
    %4957 = vmatpush1.msra.mxu0 0.0
    %4958 = vmatprep.subr.mxu0 0.0
    %4959 = vmatpush1.msra.mxu0 0.0
    %4960 = vmatprep.mubr.f32.mxu0 0.0
    %v4961 = vand.u32 %v4459, 4294901760
    %4962 = vmatmul.mubr.f32.gmra.mrb[0].mxu0 %v4961
    %v4963 = vpop.f32.mrb[0].mxu0
    %v4964 = vadd.f32 %v4857, %v4963
    %v4965 = vpop.f32.mrb[0].mxu0
    %4966 = vdwg.mxu0
    %4967 = vmatprep.subr.mxu0 0.0
    %v4968 = vand.u32 %v4445, 4294901760
    %4969 = vmatpush1.msra.mxu0 %v4968
    %4970 = vmatprep.subr.mxu0 0.0
    %v4971 = vand.u32 %v4446, 4294901760
    %4972 = vmatpush1.msra.mxu0 %v4971
    %4973 = vmatprep.subr.mxu0 0.0
    %v4974 = vand.u32 %v4447, 4294901760
    %4975 = vmatpush1.msra.mxu0 %v4974
    %4976 = vmatprep.subr.mxu0 0.0
    %v4977 = vand.u32 %v4448, 4294901760
    %4978 = vmatpush1.msra.mxu0 %v4977
    %4979 = vmatprep.subr.mxu0 0.0
    %v4980 = vand.u32 %v4449, 4294901760
    %4981 = vmatpush1.msra.mxu0 %v4980
    %4982 = vmatprep.subr.mxu0 0.0
    %v4983 = vand.u32 %v4450, 4294901760
    %4984 = vmatpush1.msra.mxu0 %v4983
    %4985 = vmatprep.subr.mxu0 0.0
    %v4986 = vand.u32 %v4451, 4294901760
    %4987 = vmatpush1.msra.mxu0 %v4986
    %4988 = vmatprep.subr.mxu0 0.0
    %v4989 = vand.u32 %v4452, 4294901760
    %4990 = vmatpush1.msra.mxu0 %v4989
    %4991 = vmatprep.subr.mxu0 0.0
    %v4992 = vand.u32 %v4453, 4294901760
    %4993 = vmatpush1.msra.mxu0 %v4992
    %4994 = vmatprep.subr.mxu0 0.0
    %v4995 = vand.u32 %v4454, 4294901760
    %4996 = vmatpush1.msra.mxu0 %v4995
    %4997 = vmatprep.subr.mxu0 0.0
    %v4998 = vand.u32 %v4455, 4294901760
    %4999 = vmatpush1.msra.mxu0 %v4998
    %5000 = vmatprep.subr.mxu0 0.0
    %v5001 = vand.u32 %v4456, 4294901760
    %5002 = vmatpush1.msra.mxu0 %v5001
    %5003 = vmatprep.subr.mxu0 0.0
    %5004 = vmatpush1.msra.mxu0 0.0
    %5005 = vmatprep.subr.mxu0 0.0
    %5006 = vmatpush1.msra.mxu0 0.0
    %5007 = vmatprep.subr.mxu0 0.0
    %5008 = vmatpush1.msra.mxu0 0.0
    %5009 = vmatprep.subr.mxu0 0.0
    %5010 = vmatpush1.msra.mxu0 0.0
    %5011 = vmatprep.subr.mxu0 0.0
    %5012 = vmatpush1.msra.mxu0 0.0
    %5013 = vmatprep.subr.mxu0 0.0
    %5014 = vmatpush1.msra.mxu0 0.0
    %5015 = vmatprep.subr.mxu0 0.0
    %5016 = vmatpush1.msra.mxu0 0.0
    %5017 = vmatprep.subr.mxu0 0.0
    %5018 = vmatpush1.msra.mxu0 0.0
    %5019 = vmatprep.subr.mxu0 0.0
    %5020 = vmatpush1.msra.mxu0 0.0
    %5021 = vmatprep.subr.mxu0 0.0
    %5022 = vmatpush1.msra.mxu0 0.0
    %5023 = vmatprep.subr.mxu0 0.0
    %5024 = vmatpush1.msra.mxu0 0.0
    %5025 = vmatprep.subr.mxu0 0.0
    %5026 = vmatpush1.msra.mxu0 0.0
    %5027 = vmatprep.subr.mxu0 0.0
    %5028 = vmatpush1.msra.mxu0 0.0
    %5029 = vmatprep.subr.mxu0 0.0
    %5030 = vmatpush1.msra.mxu0 0.0
    %5031 = vmatprep.subr.mxu0 0.0
    %5032 = vmatpush1.msra.mxu0 0.0
    %5033 = vmatprep.subr.mxu0 0.0
    %5034 = vmatpush1.msra.mxu0 0.0
    %5035 = vmatprep.subr.mxu0 0.0
    %5036 = vmatpush1.msra.mxu0 0.0
    %5037 = vmatprep.subr.mxu0 0.0
    %5038 = vmatpush1.msra.mxu0 0.0
    %5039 = vmatprep.subr.mxu0 0.0
    %5040 = vmatpush1.msra.mxu0 0.0
    %5041 = vmatprep.subr.mxu0 0.0
    %5042 = vmatpush1.msra.mxu0 0.0
    %5043 = vmatprep.mubr.f32.mxu0 0.0
    %v5044 = vand.u32 %v4459, 4294901760
    %5045 = vmatmul.mubr.f32.gmra.mrb[0].mxu0 %v5044
    %v5046 = vpop.f32.mrb[0].mxu0
    %v5047 = vadd.f32 %v4964, %v5046
    %v5048 = vpop.f32.mrb[0].mxu0
    %5049 = vdwg.mxu0
    %v5050 = vmul.f32 %v5047, 0.015625
    %v5051 = vmul.f32 %v5050, %v5050
    %v5053 = vrot.slane %v5051, 7
    %v5055 = vsub.f32 %v5050, %v5053
    %v5056 = vld [vmem:[%s17] sm:$0x1]
    %v5057 = vadd.f32 %v5055, 1e-05
    %v5058 = vrsqrt.pop %v5057
    %v5061 = vunpack.c.l.s4 1966171168
    %v5062 = vunpack.c.0.s8 %v5061
    %v5063 = vlaneseq
    %v5064 = vshrl.u32 %v5063, 7
    %v5065 = vsub.s32 %v5062, %v5064
    %v5066 = vrot.slane %v5058, %v5065
    %v5067 = vcombine.high %v5066, %v5066
    %v5069 = vunpack.c.l.s4 1966171168
    %v5070 = vunpack.c.0.s8 %v5069
    %v5071 = vlaneseq
    %v5072 = vshrl.u32 %v5071, 7
    %v5073 = vsub.s32 %v5070, %v5072
    %v5074 = vrot.slane %v5067, %v5073
    %v5076 = vmul.f32 %v5056, %v5074
    %v5077 = vld [vmem:[%s18] sm:$0x1]
    %v5078 = vmul.f32 %v5050, %v5076
    %v5079 = vsub.f32 %v5077, %v5078
    %v5081 = vlaneseq
    %v5082 = vshrl.u32 %v5081, 7
    %v5083 = vsub.s32 0, %v5082
    %v5084 = vrot.slane %v5079, %v5083
    %v5086 = vsel %vm768, %v5076, %v5084
    %v5087 = vld [vmem:[%s16] sm:$0x7]
    %vm5088 = vcmask 23552
    %v5090 = vsel %vm5088, %v5086, 0
    %vm5092 = vcmask 1042432
    %v5094 = vsel %vm5092, %v5087, 0
    %5096 = vmatprep.subr.mxu0 0.0
    %v5097 = vand.u32 %v5094, 4294901760
    %5098 = vmatpush1.msra.mxu0 %v5097
    %5099 = vmatprep.subr.mxu0 0.0
    %5100 = vmatpush1.msra.mxu0 0.0
    %5101 = vmatprep.subr.mxu0 0.0
    %5102 = vmatpush1.msra.mxu0 0.0
    %5103 = vmatprep.subr.mxu0 0.0
    %5104 = vmatpush1.msra.mxu0 0.0
    %5105 = vmatprep.subr.mxu0 0.0
    %5106 = vmatpush1.msra.mxu0 0.0
    %5107 = vmatprep.subr.mxu0 0.0
    %5108 = vmatpush1.msra.mxu0 0.0
    %5109 = vmatprep.subr.mxu0 0.0
    %5110 = vmatpush1.msra.mxu0 0.0
    %5111 = vmatprep.subr.mxu0 0.0
    %5112 = vmatpush1.msra.mxu0 0.0
    %5113 = vmatprep.subr.mxu0 0.0
    %5114 = vmatpush1.msra.mxu0 0.0
    %5115 = vmatprep.subr.mxu0 0.0
    %5116 = vmatpush1.msra.mxu0 0.0
    %5117 = vmatprep.subr.mxu0 0.0
    %5118 = vmatpush1.msra.mxu0 0.0
    %5119 = vmatprep.subr.mxu0 0.0
    %5120 = vmatpush1.msra.mxu0 0.0
    %5121 = vmatprep.subr.mxu0 0.0
    %5122 = vmatpush1.msra.mxu0 0.0
    %5123 = vmatprep.subr.mxu0 0.0
    %5124 = vmatpush1.msra.mxu0 0.0
    %5125 = vmatprep.subr.mxu0 0.0
    %5126 = vmatpush1.msra.mxu0 0.0
    %5127 = vmatprep.subr.mxu0 0.0
    %5128 = vmatpush1.msra.mxu0 0.0
    %5129 = vmatprep.subr.mxu0 0.0
    %5130 = vmatpush1.msra.mxu0 0.0
    %5131 = vmatprep.subr.mxu0 0.0
    %5132 = vmatpush1.msra.mxu0 0.0
    %5133 = vmatprep.subr.mxu0 0.0
    %5134 = vmatpush1.msra.mxu0 0.0
    %5135 = vmatprep.subr.mxu0 0.0
    %5136 = vmatpush1.msra.mxu0 0.0
    %5137 = vmatprep.subr.mxu0 0.0
    %5138 = vmatpush1.msra.mxu0 0.0
    %5139 = vmatprep.subr.mxu0 0.0
    %5140 = vmatpush1.msra.mxu0 0.0
    %5141 = vmatprep.subr.mxu0 0.0
    %5142 = vmatpush1.msra.mxu0 0.0
    %5143 = vmatprep.subr.mxu0 0.0
    %5144 = vmatpush1.msra.mxu0 0.0
    %5145 = vmatprep.subr.mxu0 0.0
    %5146 = vmatpush1.msra.mxu0 0.0
    %5147 = vmatprep.subr.mxu0 0.0
    %5148 = vmatpush1.msra.mxu0 0.0
    %5149 = vmatprep.subr.mxu0 0.0
    %5150 = vmatpush1.msra.mxu0 0.0
    %5151 = vmatprep.subr.mxu0 0.0
    %5152 = vmatpush1.msra.mxu0 0.0
    %5153 = vmatprep.subr.mxu0 0.0
    %5154 = vmatpush1.msra.mxu0 0.0
    %5155 = vmatprep.subr.mxu0 0.0
    %5156 = vmatpush1.msra.mxu0 0.0
    %5157 = vmatprep.subr.mxu0 0.0
    %5158 = vmatpush1.msra.mxu0 0.0
    %5159 = vmatprep.subr.mxu0 0.0
    %5160 = vmatpush1.msra.mxu0 0.0
    %5161 = vmatprep.mubr.f32.mxu0 0.0
    %v5162 = vand.u32 %v5090, 4294901760
    %v5163 = vsub.f32 %v5090, %v5162
    %v5164 = vand.u32 %v5163, 4294901760
    %v5165 = vsub.f32 %v5163, %v5164
    %v5166 = vand.u32 %v5165, 4294901760
    %5167 = vmatmul.mubr.f32.gmra.mrb[0].mxu0 %v5166
    %v5168 = vpop.f32.mrb[0].mxu0
    %v5169 = vadd.f32 0.0, %v5168
    %v5170 = vpop.f32.mrb[0].mxu0
    %5171 = vdwg.mxu0
    %5172 = vmatprep.subr.mxu0 0.0
    %v5173 = vand.u32 %v5094, 4294901760
    %v5174 = vsub.f32 %v5094, %v5173
    %v5175 = vand.u32 %v5174, 4294901760
    %v5176 = vsub.f32 %v5174, %v5175
    %v5177 = vand.u32 %v5176, 4294901760
    %5178 = vmatpush1.msra.mxu0 %v5177
    %5179 = vmatprep.subr.mxu0 0.0
    %5180 = vmatpush1.msra.mxu0 0.0
    %5181 = vmatprep.subr.mxu0 0.0
    %5182 = vmatpush1.msra.mxu0 0.0
    %5183 = vmatprep.subr.mxu0 0.0
    %5184 = vmatpush1.msra.mxu0 0.0
    %5185 = vmatprep.subr.mxu0 0.0
    %5186 = vmatpush1.msra.mxu0 0.0
    %5187 = vmatprep.subr.mxu0 0.0
    %5188 = vmatpush1.msra.mxu0 0.0
    %5189 = vmatprep.subr.mxu0 0.0
    %5190 = vmatpush1.msra.mxu0 0.0
    %5191 = vmatprep.subr.mxu0 0.0
    %5192 = vmatpush1.msra.mxu0 0.0
    %5193 = vmatprep.subr.mxu0 0.0
    %5194 = vmatpush1.msra.mxu0 0.0
    %5195 = vmatprep.subr.mxu0 0.0
    %5196 = vmatpush1.msra.mxu0 0.0
    %5197 = vmatprep.subr.mxu0 0.0
    %5198 = vmatpush1.msra.mxu0 0.0
    %5199 = vmatprep.subr.mxu0 0.0
    %5200 = vmatpush1.msra.mxu0 0.0
    %5201 = vmatprep.subr.mxu0 0.0
    %5202 = vmatpush1.msra.mxu0 0.0
    %5203 = vmatprep.subr.mxu0 0.0
    %5204 = vmatpush1.msra.mxu0 0.0
    %5205 = vmatprep.subr.mxu0 0.0
    %5206 = vmatpush1.msra.mxu0 0.0
    %5207 = vmatprep.subr.mxu0 0.0
    %5208 = vmatpush1.msra.mxu0 0.0
    %5209 = vmatprep.subr.mxu0 0.0
    %5210 = vmatpush1.msra.mxu0 0.0
    %5211 = vmatprep.subr.mxu0 0.0
    %5212 = vmatpush1.msra.mxu0 0.0
    %5213 = vmatprep.subr.mxu0 0.0
    %5214 = vmatpush1.msra.mxu0 0.0
    %5215 = vmatprep.subr.mxu0 0.0
    %5216 = vmatpush1.msra.mxu0 0.0
    %5217 = vmatprep.subr.mxu0 0.0
    %5218 = vmatpush1.msra.mxu0 0.0
    %5219 = vmatprep.subr.mxu0 0.0
    %5220 = vmatpush1.msra.mxu0 0.0
    %5221 = vmatprep.subr.mxu0 0.0
    %5222 = vmatpush1.msra.mxu0 0.0
    %5223 = vmatprep.subr.mxu0 0.0
    %5224 = vmatpush1.msra.mxu0 0.0
    %5225 = vmatprep.subr.mxu0 0.0
    %5226 = vmatpush1.msra.mxu0 0.0
    %5227 = vmatprep.subr.mxu0 0.0
    %5228 = vmatpush1.msra.mxu0 0.0
    %5229 = vmatprep.subr.mxu0 0.0
    %5230 = vmatpush1.msra.mxu0 0.0
    %5231 = vmatprep.subr.mxu0 0.0
    %5232 = vmatpush1.msra.mxu0 0.0
    %5233 = vmatprep.subr.mxu0 0.0
    %5234 = vmatpush1.msra.mxu0 0.0
    %5235 = vmatprep.subr.mxu0 0.0
    %5236 = vmatpush1.msra.mxu0 0.0
    %5237 = vmatprep.subr.mxu0 0.0
    %5238 = vmatpush1.msra.mxu0 0.0
    %5239 = vmatprep.subr.mxu0 0.0
    %5240 = vmatpush1.msra.mxu0 0.0
    %5241 = vmatprep.mubr.f32.mxu0 0.0
    %v5242 = vand.u32 %v5090, 4294901760
    %5243 = vmatmul.mubr.f32.gmra.mrb[0].mxu0 %v5242
    %v5244 = vpop.f32.mrb[0].mxu0
    %v5245 = vadd.f32 %v5169, %v5244
    %v5246 = vpop.f32.mrb[0].mxu0
    %5247 = vdwg.mxu0
    %5248 = vmatprep.subr.mxu0 0.0
    %v5249 = vand.u32 %v5094, 4294901760
    %v5250 = vsub.f32 %v5094, %v5249
    %5251 = vmatpush1.msra.mxu0 %v5250
    %5252 = vmatprep.subr.mxu0 0.0
    %5253 = vmatpush1.msra.mxu0 0.0
    %5254 = vmatprep.subr.mxu0 0.0
    %5255 = vmatpush1.msra.mxu0 0.0
    %5256 = vmatprep.subr.mxu0 0.0
    %5257 = vmatpush1.msra.mxu0 0.0
    %5258 = vmatprep.subr.mxu0 0.0
    %5259 = vmatpush1.msra.mxu0 0.0
    %5260 = vmatprep.subr.mxu0 0.0
    %5261 = vmatpush1.msra.mxu0 0.0
    %5262 = vmatprep.subr.mxu0 0.0
    %5263 = vmatpush1.msra.mxu0 0.0
    %5264 = vmatprep.subr.mxu0 0.0
    %5265 = vmatpush1.msra.mxu0 0.0
    %5266 = vmatprep.subr.mxu0 0.0
    %5267 = vmatpush1.msra.mxu0 0.0
    %5268 = vmatprep.subr.mxu0 0.0
    %5269 = vmatpush1.msra.mxu0 0.0
    %5270 = vmatprep.subr.mxu0 0.0
    %5271 = vmatpush1.msra.mxu0 0.0
    %5272 = vmatprep.subr.mxu0 0.0
    %5273 = vmatpush1.msra.mxu0 0.0
    %5274 = vmatprep.subr.mxu0 0.0
    %5275 = vmatpush1.msra.mxu0 0.0
    %5276 = vmatprep.subr.mxu0 0.0
    %5277 = vmatpush1.msra.mxu0 0.0
    %5278 = vmatprep.subr.mxu0 0.0
    %5279 = vmatpush1.msra.mxu0 0.0
    %5280 = vmatprep.subr.mxu0 0.0
    %5281 = vmatpush1.msra.mxu0 0.0
    %5282 = vmatprep.subr.mxu0 0.0
    %5283 = vmatpush1.msra.mxu0 0.0
    %5284 = vmatprep.subr.mxu0 0.0
    %5285 = vmatpush1.msra.mxu0 0.0
    %5286 = vmatprep.subr.mxu0 0.0
    %5287 = vmatpush1.msra.mxu0 0.0
    %5288 = vmatprep.subr.mxu0 0.0
    %5289 = vmatpush1.msra.mxu0 0.0
    %5290 = vmatprep.subr.mxu0 0.0
    %5291 = vmatpush1.msra.mxu0 0.0
    %5292 = vmatprep.subr.mxu0 0.0
    %5293 = vmatpush1.msra.mxu0 0.0
    %5294 = vmatprep.subr.mxu0 0.0
    %5295 = vmatpush1.msra.mxu0 0.0
    %5296 = vmatprep.subr.mxu0 0.0
    %5297 = vmatpush1.msra.mxu0 0.0
    %5298 = vmatprep.subr.mxu0 0.0
    %5299 = vmatpush1.msra.mxu0 0.0
    %5300 = vmatprep.subr.mxu0 0.0
    %5301 = vmatpush1.msra.mxu0 0.0
    %5302 = vmatprep.subr.mxu0 0.0
    %5303 = vmatpush1.msra.mxu0 0.0
    %5304 = vmatprep.subr.mxu0 0.0
    %5305 = vmatpush1.msra.mxu0 0.0
    %5306 = vmatprep.subr.mxu0 0.0
    %5307 = vmatpush1.msra.mxu0 0.0
    %5308 = vmatprep.subr.mxu0 0.0
    %5309 = vmatpush1.msra.mxu0 0.0
    %5310 = vmatprep.subr.mxu0 0.0
    %5311 = vmatpush1.msra.mxu0 0.0
    %5312 = vmatprep.subr.mxu0 0.0
    %5313 = vmatpush1.msra.mxu0 0.0
    %5314 = vmatprep.mubr.f32.mxu0 0.0
    %v5315 = vand.u32 %v5090, 4294901760
    %v5316 = vsub.f32 %v5090, %v5315
    %5317 = vmatmul.mubr.f32.gmra.mrb[0].mxu0 %v5316
    %v5318 = vpop.f32.mrb[0].mxu0
    %v5319 = vadd.f32 %v5245, %v5318
    %v5320 = vpop.f32.mrb[0].mxu0
    %5321 = vdwg.mxu0
    %5322 = vmatprep.subr.mxu0 0.0
    %v5323 = vand.u32 %v5094, 4294901760
    %5324 = vmatpush1.msra.mxu0 %v5323
    %5325 = vmatprep.subr.mxu0 0.0
    %5326 = vmatpush1.msra.mxu0 0.0
    %5327 = vmatprep.subr.mxu0 0.0
    %5328 = vmatpush1.msra.mxu0 0.0
    %5329 = vmatprep.subr.mxu0 0.0
    %5330 = vmatpush1.msra.mxu0 0.0
    %5331 = vmatprep.subr.mxu0 0.0
    %5332 = vmatpush1.msra.mxu0 0.0
    %5333 = vmatprep.subr.mxu0 0.0
    %5334 = vmatpush1.msra.mxu0 0.0
    %5335 = vmatprep.subr.mxu0 0.0
    %5336 = vmatpush1.msra.mxu0 0.0
    %5337 = vmatprep.subr.mxu0 0.0
    %5338 = vmatpush1.msra.mxu0 0.0
    %5339 = vmatprep.subr.mxu0 0.0
    %5340 = vmatpush1.msra.mxu0 0.0
    %5341 = vmatprep.subr.mxu0 0.0
    %5342 = vmatpush1.msra.mxu0 0.0
    %5343 = vmatprep.subr.mxu0 0.0
    %5344 = vmatpush1.msra.mxu0 0.0
    %5345 = vmatprep.subr.mxu0 0.0
    %5346 = vmatpush1.msra.mxu0 0.0
    %5347 = vmatprep.subr.mxu0 0.0
    %5348 = vmatpush1.msra.mxu0 0.0
    %5349 = vmatprep.subr.mxu0 0.0
    %5350 = vmatpush1.msra.mxu0 0.0
    %5351 = vmatprep.subr.mxu0 0.0
    %5352 = vmatpush1.msra.mxu0 0.0
    %5353 = vmatprep.subr.mxu0 0.0
    %5354 = vmatpush1.msra.mxu0 0.0
    %5355 = vmatprep.subr.mxu0 0.0
    %5356 = vmatpush1.msra.mxu0 0.0
    %5357 = vmatprep.subr.mxu0 0.0
    %5358 = vmatpush1.msra.mxu0 0.0
    %5359 = vmatprep.subr.mxu0 0.0
    %5360 = vmatpush1.msra.mxu0 0.0
    %5361 = vmatprep.subr.mxu0 0.0
    %5362 = vmatpush1.msra.mxu0 0.0
    %5363 = vmatprep.subr.mxu0 0.0
    %5364 = vmatpush1.msra.mxu0 0.0
    %5365 = vmatprep.subr.mxu0 0.0
    %5366 = vmatpush1.msra.mxu0 0.0
    %5367 = vmatprep.subr.mxu0 0.0
    %5368 = vmatpush1.msra.mxu0 0.0
    %5369 = vmatprep.subr.mxu0 0.0
    %5370 = vmatpush1.msra.mxu0 0.0
    %5371 = vmatprep.subr.mxu0 0.0
    %5372 = vmatpush1.msra.mxu0 0.0
    %5373 = vmatprep.subr.mxu0 0.0
    %5374 = vmatpush1.msra.mxu0 0.0
    %5375 = vmatprep.subr.mxu0 0.0
    %5376 = vmatpush1.msra.mxu0 0.0
    %5377 = vmatprep.subr.mxu0 0.0
    %5378 = vmatpush1.msra.mxu0 0.0
    %5379 = vmatprep.subr.mxu0 0.0
    %5380 = vmatpush1.msra.mxu0 0.0
    %5381 = vmatprep.subr.mxu0 0.0
    %5382 = vmatpush1.msra.mxu0 0.0
    %5383 = vmatprep.subr.mxu0 0.0
    %5384 = vmatpush1.msra.mxu0 0.0
    %5385 = vmatprep.subr.mxu0 0.0
    %5386 = vmatpush1.msra.mxu0 0.0
    %5387 = vmatprep.mubr.f32.mxu0 0.0
    %v5388 = vand.u32 %v5090, 4294901760
    %v5389 = vsub.f32 %v5090, %v5388
    %v5390 = vand.u32 %v5389, 4294901760
    %5391 = vmatmul.mubr.f32.gmra.mrb[0].mxu0 %v5390
    %v5392 = vpop.f32.mrb[0].mxu0
    %v5393 = vadd.f32 %v5319, %v5392
    %v5394 = vpop.f32.mrb[0].mxu0
    %5395 = vdwg.mxu0
    %5396 = vmatprep.subr.mxu0 0.0
    %v5397 = vand.u32 %v5094, 4294901760
    %v5398 = vsub.f32 %v5094, %v5397
    %v5399 = vand.u32 %v5398, 4294901760
    %5400 = vmatpush1.msra.mxu0 %v5399
    %5401 = vmatprep.subr.mxu0 0.0
    %5402 = vmatpush1.msra.mxu0 0.0
    %5403 = vmatprep.subr.mxu0 0.0
    %5404 = vmatpush1.msra.mxu0 0.0
    %5405 = vmatprep.subr.mxu0 0.0
    %5406 = vmatpush1.msra.mxu0 0.0
    %5407 = vmatprep.subr.mxu0 0.0
    %5408 = vmatpush1.msra.mxu0 0.0
    %5409 = vmatprep.subr.mxu0 0.0
    %5410 = vmatpush1.msra.mxu0 0.0
    %5411 = vmatprep.subr.mxu0 0.0
    %5412 = vmatpush1.msra.mxu0 0.0
    %5413 = vmatprep.subr.mxu0 0.0
    %5414 = vmatpush1.msra.mxu0 0.0
    %5415 = vmatprep.subr.mxu0 0.0
    %5416 = vmatpush1.msra.mxu0 0.0
    %5417 = vmatprep.subr.mxu0 0.0
    %5418 = vmatpush1.msra.mxu0 0.0
    %5419 = vmatprep.subr.mxu0 0.0
    %5420 = vmatpush1.msra.mxu0 0.0
    %5421 = vmatprep.subr.mxu0 0.0
    %5422 = vmatpush1.msra.mxu0 0.0
    %5423 = vmatprep.subr.mxu0 0.0
    %5424 = vmatpush1.msra.mxu0 0.0
    %5425 = vmatprep.subr.mxu0 0.0
    %5426 = vmatpush1.msra.mxu0 0.0
    %5427 = vmatprep.subr.mxu0 0.0
    %5428 = vmatpush1.msra.mxu0 0.0
    %5429 = vmatprep.subr.mxu0 0.0
    %5430 = vmatpush1.msra.mxu0 0.0
    %5431 = vmatprep.subr.mxu0 0.0
    %5432 = vmatpush1.msra.mxu0 0.0
    %5433 = vmatprep.subr.mxu0 0.0
    %5434 = vmatpush1.msra.mxu0 0.0
    %5435 = vmatprep.subr.mxu0 0.0
    %5436 = vmatpush1.msra.mxu0 0.0
    %5437 = vmatprep.subr.mxu0 0.0
    %5438 = vmatpush1.msra.mxu0 0.0
    %5439 = vmatprep.subr.mxu0 0.0
    %5440 = vmatpush1.msra.mxu0 0.0
    %5441 = vmatprep.subr.mxu0 0.0
    %5442 = vmatpush1.msra.mxu0 0.0
    %5443 = vmatprep.subr.mxu0 0.0
    %5444 = vmatpush1.msra.mxu0 0.0
    %5445 = vmatprep.subr.mxu0 0.0
    %5446 = vmatpush1.msra.mxu0 0.0
    %5447 = vmatprep.subr.mxu0 0.0
    %5448 = vmatpush1.msra.mxu0 0.0
    %5449 = vmatprep.subr.mxu0 0.0
    %5450 = vmatpush1.msra.mxu0 0.0
    %5451 = vmatprep.subr.mxu0 0.0
    %5452 = vmatpush1.msra.mxu0 0.0
    %5453 = vmatprep.subr.mxu0 0.0
    %5454 = vmatpush1.msra.mxu0 0.0
    %5455 = vmatprep.subr.mxu0 0.0
    %5456 = vmatpush1.msra.mxu0 0.0
    %5457 = vmatprep.subr.mxu0 0.0
    %5458 = vmatpush1.msra.mxu0 0.0
    %5459 = vmatprep.subr.mxu0 0.0
    %5460 = vmatpush1.msra.mxu0 0.0
    %5461 = vmatprep.subr.mxu0 0.0
    %5462 = vmatpush1.msra.mxu0 0.0
    %5463 = vmatprep.mubr.f32.mxu0 0.0
    %v5464 = vand.u32 %v5090, 4294901760
    %5465 = vmatmul.mubr.f32.gmra.mrb[0].mxu0 %v5464
    %v5466 = vpop.f32.mrb[0].mxu0
    %v5467 = vadd.f32 %v5393, %v5466
    %v5468 = vpop.f32.mrb[0].mxu0
    %5469 = vdwg.mxu0
    %5470 = vmatprep.subr.mxu0 0.0
    %v5471 = vand.u32 %v5094, 4294901760
    %5472 = vmatpush1.msra.mxu0 %v5471
    %5473 = vmatprep.subr.mxu0 0.0
    %5474 = vmatpush1.msra.mxu0 0.0
    %5475 = vmatprep.subr.mxu0 0.0
    %5476 = vmatpush1.msra.mxu0 0.0
    %5477 = vmatprep.subr.mxu0 0.0
    %5478 = vmatpush1.msra.mxu0 0.0
    %5479 = vmatprep.subr.mxu0 0.0
    %5480 = vmatpush1.msra.mxu0 0.0
    %5481 = vmatprep.subr.mxu0 0.0
    %5482 = vmatpush1.msra.mxu0 0.0
    %5483 = vmatprep.subr.mxu0 0.0
    %5484 = vmatpush1.msra.mxu0 0.0
    %5485 = vmatprep.subr.mxu0 0.0
    %5486 = vmatpush1.msra.mxu0 0.0
    %5487 = vmatprep.subr.mxu0 0.0
    %5488 = vmatpush1.msra.mxu0 0.0
    %5489 = vmatprep.subr.mxu0 0.0
    %5490 = vmatpush1.msra.mxu0 0.0
    %5491 = vmatprep.subr.mxu0 0.0
    %5492 = vmatpush1.msra.mxu0 0.0
    %5493 = vmatprep.subr.mxu0 0.0
    %5494 = vmatpush1.msra.mxu0 0.0
    %5495 = vmatprep.subr.mxu0 0.0
    %5496 = vmatpush1.msra.mxu0 0.0
    %5497 = vmatprep.subr.mxu0 0.0
    %5498 = vmatpush1.msra.mxu0 0.0
    %5499 = vmatprep.subr.mxu0 0.0
    %5500 = vmatpush1.msra.mxu0 0.0
    %5501 = vmatprep.subr.mxu0 0.0
    %5502 = vmatpush1.msra.mxu0 0.0
    %5503 = vmatprep.subr.mxu0 0.0
    %5504 = vmatpush1.msra.mxu0 0.0
    %5505 = vmatprep.subr.mxu0 0.0
    %5506 = vmatpush1.msra.mxu0 0.0
    %5507 = vmatprep.subr.mxu0 0.0
    %5508 = vmatpush1.msra.mxu0 0.0
    %5509 = vmatprep.subr.mxu0 0.0
    %5510 = vmatpush1.msra.mxu0 0.0
    %5511 = vmatprep.subr.mxu0 0.0
    %5512 = vmatpush1.msra.mxu0 0.0
    %5513 = vmatprep.subr.mxu0 0.0
    %5514 = vmatpush1.msra.mxu0 0.0
    %5515 = vmatprep.subr.mxu0 0.0
    %5516 = vmatpush1.msra.mxu0 0.0
    %5517 = vmatprep.subr.mxu0 0.0
    %5518 = vmatpush1.msra.mxu0 0.0
    %5519 = vmatprep.subr.mxu0 0.0
    %5520 = vmatpush1.msra.mxu0 0.0
    %5521 = vmatprep.subr.mxu0 0.0
    %5522 = vmatpush1.msra.mxu0 0.0
    %5523 = vmatprep.subr.mxu0 0.0
    %5524 = vmatpush1.msra.mxu0 0.0
    %5525 = vmatprep.subr.mxu0 0.0
    %5526 = vmatpush1.msra.mxu0 0.0
    %5527 = vmatprep.subr.mxu0 0.0
    %5528 = vmatpush1.msra.mxu0 0.0
    %5529 = vmatprep.subr.mxu0 0.0
    %5530 = vmatpush1.msra.mxu0 0.0
    %5531 = vmatprep.subr.mxu0 0.0
    %5532 = vmatpush1.msra.mxu0 0.0
    %5533 = vmatprep.subr.mxu0 0.0
    %5534 = vmatpush1.msra.mxu0 0.0
    %5535 = vmatprep.mubr.f32.mxu0 0.0
    %v5536 = vand.u32 %v5090, 4294901760
    %5537 = vmatmul.mubr.f32.gmra.mrb[0].mxu0 %v5536
    %v5538 = vpop.f32.mrb[0].mxu0
    %v5539 = vadd.f32 %v5467, %v5538
    %v5540 = vpop.f32.mrb[0].mxu0
    %5541 = vdwg.mxu0
    %v5542 = vlaneseq
    %v5543 = vshrl.u32 %v5542, 7
    %v5544 = vsub.s32 0, %v5543
    %v5545 = vrot.slane %v5539, %v5544
    %v5546 = vmul.f32 %v4429, %v5545
    %v5547 = vlaneseq
    %v5548 = vshrl.u32 %v5547, 7
    %v5549 = vsub.s32 1, %v5548
    %v5550 = vrot.slane %v5539, %v5549
    %v5551 = vadd.f32 %v5546, %v5550
    %v5552 = vmul.f32 %v5551, 0.1
    %v5553 = vmax.f32 %v5551, %v5552
    %v5554 = vld [vmem:[%s19] sm:$0xff]
    %v5555 = vld [vmem:[%s19 + $0x8] sm:$0xff]
    %v5556 = vld [vmem:[%s19 + $0x10] sm:$0xff]
    %v5557 = vld [vmem:[%s19 + $0x18] sm:$0xff]
    %v5558 = vld [vmem:[%s19 + $0x20] sm:$0xff]
    %v5559 = vld [vmem:[%s19 + $0x28] sm:$0xff]
    %v5560 = vld [vmem:[%s19 + $0x30] sm:$0xff]
    %v5561 = vld [vmem:[%s19 + $0x38] sm:$0xff]
    %v5562 = vld [vmem:[%s19 + $0x40] sm:$0xff]
    %v5563 = vld [vmem:[%s19 + $0x48] sm:$0xff]
    %v5564 = vld [vmem:[%s19 + $0x50] sm:$0xff]
    %v5565 = vld [vmem:[%s19 + $0x58] sm:$0xff]
    %v5566 = vld [vmem:[%s20] sm:$0x1]
    %v5568 = vlaneseq
    %v5569 = vshrl.u32 %v5568, 7
    %v5570 = vsub.s32 0, %v5569
    %v5571 = vrot.slane %v5566, %v5570
    %v5574 = vsel %vm4457, %v5553, 0
    %5576 = vmatprep.subr.mxu0 0.0
    %v5577 = vand.u32 %v5554, 4294901760
    %5578 = vmatpush1.msra.mxu0 %v5577
    %5579 = vmatprep.subr.mxu0 0.0
    %v5580 = vand.u32 %v5555, 4294901760
    %5581 = vmatpush1.msra.mxu0 %v5580
    %5582 = vmatprep.subr.mxu0 0.0
    %v5583 = vand.u32 %v5556, 4294901760
    %5584 = vmatpush1.msra.mxu0 %v5583
    %5585 = vmatprep.subr.mxu0 0.0
    %v5586 = vand.u32 %v5557, 4294901760
    %5587 = vmatpush1.msra.mxu0 %v5586
    %5588 = vmatprep.subr.mxu0 0.0
    %v5589 = vand.u32 %v5558, 4294901760
    %5590 = vmatpush1.msra.mxu0 %v5589
    %5591 = vmatprep.subr.mxu0 0.0
    %v5592 = vand.u32 %v5559, 4294901760
    %5593 = vmatpush1.msra.mxu0 %v5592
    %5594 = vmatprep.subr.mxu0 0.0
    %v5595 = vand.u32 %v5560, 4294901760
    %5596 = vmatpush1.msra.mxu0 %v5595
    %5597 = vmatprep.subr.mxu0 0.0
    %v5598 = vand.u32 %v5561, 4294901760
    %5599 = vmatpush1.msra.mxu0 %v5598
    %5600 = vmatprep.subr.mxu0 0.0
    %v5601 = vand.u32 %v5562, 4294901760
    %5602 = vmatpush1.msra.mxu0 %v5601
    %5603 = vmatprep.subr.mxu0 0.0
    %v5604 = vand.u32 %v5563, 4294901760
    %5605 = vmatpush1.msra.mxu0 %v5604
    %5606 = vmatprep.subr.mxu0 0.0
    %v5607 = vand.u32 %v5564, 4294901760
    %5608 = vmatpush1.msra.mxu0 %v5607
    %5609 = vmatprep.subr.mxu0 0.0
    %v5610 = vand.u32 %v5565, 4294901760
    %5611 = vmatpush1.msra.mxu0 %v5610
    %5612 = vmatprep.subr.mxu0 0.0
    %5613 = vmatpush1.msra.mxu0 0.0
    %5614 = vmatprep.subr.mxu0 0.0
    %5615 = vmatpush1.msra.mxu0 0.0
    %5616 = vmatprep.subr.mxu0 0.0
    %5617 = vmatpush1.msra.mxu0 0.0
    %5618 = vmatprep.subr.mxu0 0.0
    %5619 = vmatpush1.msra.mxu0 0.0
    %5620 = vmatprep.subr.mxu0 0.0
    %5621 = vmatpush1.msra.mxu0 0.0
    %5622 = vmatprep.subr.mxu0 0.0
    %5623 = vmatpush1.msra.mxu0 0.0
    %5624 = vmatprep.subr.mxu0 0.0
    %5625 = vmatpush1.msra.mxu0 0.0
    %5626 = vmatprep.subr.mxu0 0.0
    %5627 = vmatpush1.msra.mxu0 0.0
    %5628 = vmatprep.subr.mxu0 0.0
    %5629 = vmatpush1.msra.mxu0 0.0
    %5630 = vmatprep.subr.mxu0 0.0
    %5631 = vmatpush1.msra.mxu0 0.0
    %5632 = vmatprep.subr.mxu0 0.0
    %5633 = vmatpush1.msra.mxu0 0.0
    %5634 = vmatprep.subr.mxu0 0.0
    %5635 = vmatpush1.msra.mxu0 0.0
    %5636 = vmatprep.subr.mxu0 0.0
    %5637 = vmatpush1.msra.mxu0 0.0
    %5638 = vmatprep.subr.mxu0 0.0
    %5639 = vmatpush1.msra.mxu0 0.0
    %5640 = vmatprep.subr.mxu0 0.0
    %5641 = vmatpush1.msra.mxu0 0.0
    %5642 = vmatprep.subr.mxu0 0.0
    %5643 = vmatpush1.msra.mxu0 0.0
    %5644 = vmatprep.subr.mxu0 0.0
    %5645 = vmatpush1.msra.mxu0 0.0
    %5646 = vmatprep.subr.mxu0 0.0
    %5647 = vmatpush1.msra.mxu0 0.0
    %5648 = vmatprep.subr.mxu0 0.0
    %5649 = vmatpush1.msra.mxu0 0.0
    %5650 = vmatprep.subr.mxu0 0.0
    %5651 = vmatpush1.msra.mxu0 0.0
    %5652 = vmatprep.mubr.f32.mxu0 0.0
    %v5653 = vand.u32 %v5574, 4294901760
    %v5654 = vsub.f32 %v5574, %v5653
    %v5655 = vand.u32 %v5654, 4294901760
    %v5656 = vsub.f32 %v5654, %v5655
    %v5657 = vand.u32 %v5656, 4294901760
    %5658 = vmatmul.mubr.f32.gmra.mrb[0].mxu0 %v5657
    %v5659 = vpop.f32.mrb[0].mxu0
    %v5660 = vadd.f32 %v5571, %v5659
    %v5661 = vpop.f32.mrb[0].mxu0
    %5662 = vdwg.mxu0
    %5663 = vmatprep.subr.mxu0 0.0
    %v5664 = vand.u32 %v5554, 4294901760
    %v5665 = vsub.f32 %v5554, %v5664
    %v5666 = vand.u32 %v5665, 4294901760
    %v5667 = vsub.f32 %v5665, %v5666
    %v5668 = vand.u32 %v5667, 4294901760
    %5669 = vmatpush1.msra.mxu0 %v5668
    %5670 = vmatprep.subr.mxu0 0.0
    %v5671 = vand.u32 %v5555, 4294901760
    %v5672 = vsub.f32 %v5555, %v5671
    %v5673 = vand.u32 %v5672, 4294901760
    %v5674 = vsub.f32 %v5672, %v5673
    %v5675 = vand.u32 %v5674, 4294901760
    %5676 = vmatpush1.msra.mxu0 %v5675
    %5677 = vmatprep.subr.mxu0 0.0
    %v5678 = vand.u32 %v5556, 4294901760
    %v5679 = vsub.f32 %v5556, %v5678
    %v5680 = vand.u32 %v5679, 4294901760
    %v5681 = vsub.f32 %v5679, %v5680
    %v5682 = vand.u32 %v5681, 4294901760
    %5683 = vmatpush1.msra.mxu0 %v5682
    %5684 = vmatprep.subr.mxu0 0.0
    %v5685 = vand.u32 %v5557, 4294901760
    %v5686 = vsub.f32 %v5557, %v5685
    %v5687 = vand.u32 %v5686, 4294901760
    %v5688 = vsub.f32 %v5686, %v5687
    %v5689 = vand.u32 %v5688, 4294901760
    %5690 = vmatpush1.msra.mxu0 %v5689
    %5691 = vmatprep.subr.mxu0 0.0
    %v5692 = vand.u32 %v5558, 4294901760
    %v5693 = vsub.f32 %v5558, %v5692
    %v5694 = vand.u32 %v5693, 4294901760
    %v5695 = vsub.f32 %v5693, %v5694
    %v5696 = vand.u32 %v5695, 4294901760
    %5697 = vmatpush1.msra.mxu0 %v5696
    %5698 = vmatprep.subr.mxu0 0.0
    %v5699 = vand.u32 %v5559, 4294901760
    %v5700 = vsub.f32 %v5559, %v5699
    %v5701 = vand.u32 %v5700, 4294901760
    %v5702 = vsub.f32 %v5700, %v5701
    %v5703 = vand.u32 %v5702, 4294901760
    %5704 = vmatpush1.msra.mxu0 %v5703
    %5705 = vmatprep.subr.mxu0 0.0
    %v5706 = vand.u32 %v5560, 4294901760
    %v5707 = vsub.f32 %v5560, %v5706
    %v5708 = vand.u32 %v5707, 4294901760
    %v5709 = vsub.f32 %v5707, %v5708
    %v5710 = vand.u32 %v5709, 4294901760
    %5711 = vmatpush1.msra.mxu0 %v5710
    %5712 = vmatprep.subr.mxu0 0.0
    %v5713 = vand.u32 %v5561, 4294901760
    %v5714 = vsub.f32 %v5561, %v5713
    %v5715 = vand.u32 %v5714, 4294901760
    %v5716 = vsub.f32 %v5714, %v5715
    %v5717 = vand.u32 %v5716, 4294901760
    %5718 = vmatpush1.msra.mxu0 %v5717
    %5719 = vmatprep.subr.mxu0 0.0
    %v5720 = vand.u32 %v5562, 4294901760
    %v5721 = vsub.f32 %v5562, %v5720
    %v5722 = vand.u32 %v5721, 4294901760
    %v5723 = vsub.f32 %v5721, %v5722
    %v5724 = vand.u32 %v5723, 4294901760
    %5725 = vmatpush1.msra.mxu0 %v5724
    %5726 = vmatprep.subr.mxu0 0.0
    %v5727 = vand.u32 %v5563, 4294901760
    %v5728 = vsub.f32 %v5563, %v5727
    %v5729 = vand.u32 %v5728, 4294901760
    %v5730 = vsub.f32 %v5728, %v5729
    %v5731 = vand.u32 %v5730, 4294901760
    %5732 = vmatpush1.msra.mxu0 %v5731
    %5733 = vmatprep.subr.mxu0 0.0
    %v5734 = vand.u32 %v5564, 4294901760
    %v5735 = vsub.f32 %v5564, %v5734
    %v5736 = vand.u32 %v5735, 4294901760
    %v5737 = vsub.f32 %v5735, %v5736
    %v5738 = vand.u32 %v5737, 4294901760
    %5739 = vmatpush1.msra.mxu0 %v5738
    %5740 = vmatprep.subr.mxu0 0.0
    %v5741 = vand.u32 %v5565, 4294901760
    %v5742 = vsub.f32 %v5565, %v5741
    %v5743 = vand.u32 %v5742, 4294901760
    %v5744 = vsub.f32 %v5742, %v5743
    %v5745 = vand.u32 %v5744, 4294901760
    %5746 = vmatpush1.msra.mxu0 %v5745
    %5747 = vmatprep.subr.mxu0 0.0
    %5748 = vmatpush1.msra.mxu0 0.0
    %5749 = vmatprep.subr.mxu0 0.0
    %5750 = vmatpush1.msra.mxu0 0.0
    %5751 = vmatprep.subr.mxu0 0.0
    %5752 = vmatpush1.msra.mxu0 0.0
    %5753 = vmatprep.subr.mxu0 0.0
    %5754 = vmatpush1.msra.mxu0 0.0
    %5755 = vmatprep.subr.mxu0 0.0
    %5756 = vmatpush1.msra.mxu0 0.0
    %5757 = vmatprep.subr.mxu0 0.0
    %5758 = vmatpush1.msra.mxu0 0.0
    %5759 = vmatprep.subr.mxu0 0.0
    %5760 = vmatpush1.msra.mxu0 0.0
    %5761 = vmatprep.subr.mxu0 0.0
    %5762 = vmatpush1.msra.mxu0 0.0
    %5763 = vmatprep.subr.mxu0 0.0
    %5764 = vmatpush1.msra.mxu0 0.0
    %5765 = vmatprep.subr.mxu0 0.0
    %5766 = vmatpush1.msra.mxu0 0.0
    %5767 = vmatprep.subr.mxu0 0.0
    %5768 = vmatpush1.msra.mxu0 0.0
    %5769 = vmatprep.subr.mxu0 0.0
    %5770 = vmatpush1.msra.mxu0 0.0
    %5771 = vmatprep.subr.mxu0 0.0
    %5772 = vmatpush1.msra.mxu0 0.0
    %5773 = vmatprep.subr.mxu0 0.0
    %5774 = vmatpush1.msra.mxu0 0.0
    %5775 = vmatprep.subr.mxu0 0.0
    %5776 = vmatpush1.msra.mxu0 0.0
    %5777 = vmatprep.subr.mxu0 0.0
    %5778 = vmatpush1.msra.mxu0 0.0
    %5779 = vmatprep.subr.mxu0 0.0
    %5780 = vmatpush1.msra.mxu0 0.0
    %5781 = vmatprep.subr.mxu0 0.0
    %5782 = vmatpush1.msra.mxu0 0.0
    %5783 = vmatprep.subr.mxu0 0.0
    %5784 = vmatpush1.msra.mxu0 0.0
    %5785 = vmatprep.subr.mxu0 0.0
    %5786 = vmatpush1.msra.mxu0 0.0
    %5787 = vmatprep.mubr.f32.mxu0 0.0
    %v5788 = vand.u32 %v5574, 4294901760
    %5789 = vmatmul.mubr.f32.gmra.mrb[0].mxu0 %v5788
    %v5790 = vpop.f32.mrb[0].mxu0
    %v5791 = vadd.f32 %v5660, %v5790
    %v5792 = vpop.f32.mrb[0].mxu0
    %5793 = vdwg.mxu0
    %5794 = vmatprep.subr.mxu0 0.0
    %v5795 = vand.u32 %v5554, 4294901760
    %v5796 = vsub.f32 %v5554, %v5795
    %5797 = vmatpush1.msra.mxu0 %v5796
    %5798 = vmatprep.subr.mxu0 0.0
    %v5799 = vand.u32 %v5555, 4294901760
    %v5800 = vsub.f32 %v5555, %v5799
    %5801 = vmatpush1.msra.mxu0 %v5800
    %5802 = vmatprep.subr.mxu0 0.0
    %v5803 = vand.u32 %v5556, 4294901760
    %v5804 = vsub.f32 %v5556, %v5803
    %5805 = vmatpush1.msra.mxu0 %v5804
    %5806 = vmatprep.subr.mxu0 0.0
    %v5807 = vand.u32 %v5557, 4294901760
    %v5808 = vsub.f32 %v5557, %v5807
    %5809 = vmatpush1.msra.mxu0 %v5808
    %5810 = vmatprep.subr.mxu0 0.0
    %v5811 = vand.u32 %v5558, 4294901760
    %v5812 = vsub.f32 %v5558, %v5811
    %5813 = vmatpush1.msra.mxu0 %v5812
    %5814 = vmatprep.subr.mxu0 0.0
    %v5815 = vand.u32 %v5559, 4294901760
    %v5816 = vsub.f32 %v5559, %v5815
    %5817 = vmatpush1.msra.mxu0 %v5816
    %5818 = vmatprep.subr.mxu0 0.0
    %v5819 = vand.u32 %v5560, 4294901760
    %v5820 = vsub.f32 %v5560, %v5819
    %5821 = vmatpush1.msra.mxu0 %v5820
    %5822 = vmatprep.subr.mxu0 0.0
    %v5823 = vand.u32 %v5561, 4294901760
    %v5824 = vsub.f32 %v5561, %v5823
    %5825 = vmatpush1.msra.mxu0 %v5824
    %5826 = vmatprep.subr.mxu0 0.0
    %v5827 = vand.u32 %v5562, 4294901760
    %v5828 = vsub.f32 %v5562, %v5827
    %5829 = vmatpush1.msra.mxu0 %v5828
    %5830 = vmatprep.subr.mxu0 0.0
    %v5831 = vand.u32 %v5563, 4294901760
    %v5832 = vsub.f32 %v5563, %v5831
    %5833 = vmatpush1.msra.mxu0 %v5832
    %5834 = vmatprep.subr.mxu0 0.0
    %v5835 = vand.u32 %v5564, 4294901760
    %v5836 = vsub.f32 %v5564, %v5835
    %5837 = vmatpush1.msra.mxu0 %v5836
    %5838 = vmatprep.subr.mxu0 0.0
    %v5839 = vand.u32 %v5565, 4294901760
    %v5840 = vsub.f32 %v5565, %v5839
    %5841 = vmatpush1.msra.mxu0 %v5840
    %5842 = vmatprep.subr.mxu0 0.0
    %5843 = vmatpush1.msra.mxu0 0.0
    %5844 = vmatprep.subr.mxu0 0.0
    %5845 = vmatpush1.msra.mxu0 0.0
    %5846 = vmatprep.subr.mxu0 0.0
    %5847 = vmatpush1.msra.mxu0 0.0
    %5848 = vmatprep.subr.mxu0 0.0
    %5849 = vmatpush1.msra.mxu0 0.0
    %5850 = vmatprep.subr.mxu0 0.0
    %5851 = vmatpush1.msra.mxu0 0.0
    %5852 = vmatprep.subr.mxu0 0.0
    %5853 = vmatpush1.msra.mxu0 0.0
    %5854 = vmatprep.subr.mxu0 0.0
    %5855 = vmatpush1.msra.mxu0 0.0
    %5856 = vmatprep.subr.mxu0 0.0
    %5857 = vmatpush1.msra.mxu0 0.0
    %5858 = vmatprep.subr.mxu0 0.0
    %5859 = vmatpush1.msra.mxu0 0.0
    %5860 = vmatprep.subr.mxu0 0.0
    %5861 = vmatpush1.msra.mxu0 0.0
    %5862 = vmatprep.subr.mxu0 0.0
    %5863 = vmatpush1.msra.mxu0 0.0
    %5864 = vmatprep.subr.mxu0 0.0
    %5865 = vmatpush1.msra.mxu0 0.0
    %5866 = vmatprep.subr.mxu0 0.0
    %5867 = vmatpush1.msra.mxu0 0.0
    %5868 = vmatprep.subr.mxu0 0.0
    %5869 = vmatpush1.msra.mxu0 0.0
    %5870 = vmatprep.subr.mxu0 0.0
    %5871 = vmatpush1.msra.mxu0 0.0
    %5872 = vmatprep.subr.mxu0 0.0
    %5873 = vmatpush1.msra.mxu0 0.0
    %5874 = vmatprep.subr.mxu0 0.0
    %5875 = vmatpush1.msra.mxu0 0.0
    %5876 = vmatprep.subr.mxu0 0.0
    %5877 = vmatpush1.msra.mxu0 0.0
    %5878 = vmatprep.subr.mxu0 0.0
    %5879 = vmatpush1.msra.mxu0 0.0
    %5880 = vmatprep.subr.mxu0 0.0
    %5881 = vmatpush1.msra.mxu0 0.0
    %5882 = vmatprep.mubr.f32.mxu0 0.0
    %v5883 = vand.u32 %v5574, 4294901760
    %v5884 = vsub.f32 %v5574, %v5883
    %5885 = vmatmul.mubr.f32.gmra.mrb[0].mxu0 %v5884
    %v5886 = vpop.f32.mrb[0].mxu0
    %v5887 = vadd.f32 %v5791, %v5886
    %v5888 = vpop.f32.mrb[0].mxu0
    %5889 = vdwg.mxu0
    %5890 = vmatprep.subr.mxu0 0.0
    %v5891 = vand.u32 %v5554, 4294901760
    %5892 = vmatpush1.msra.mxu0 %v5891
    %5893 = vmatprep.subr.mxu0 0.0
    %v5894 = vand.u32 %v5555, 4294901760
    %5895 = vmatpush1.msra.mxu0 %v5894
    %5896 = vmatprep.subr.mxu0 0.0
    %v5897 = vand.u32 %v5556, 4294901760
    %5898 = vmatpush1.msra.mxu0 %v5897
    %5899 = vmatprep.subr.mxu0 0.0
    %v5900 = vand.u32 %v5557, 4294901760
    %5901 = vmatpush1.msra.mxu0 %v5900
    %5902 = vmatprep.subr.mxu0 0.0
    %v5903 = vand.u32 %v5558, 4294901760
    %5904 = vmatpush1.msra.mxu0 %v5903
    %5905 = vmatprep.subr.mxu0 0.0
    %v5906 = vand.u32 %v5559, 4294901760
    %5907 = vmatpush1.msra.mxu0 %v5906
    %5908 = vmatprep.subr.mxu0 0.0
    %v5909 = vand.u32 %v5560, 4294901760
    %5910 = vmatpush1.msra.mxu0 %v5909
    %5911 = vmatprep.subr.mxu0 0.0
    %v5912 = vand.u32 %v5561, 4294901760
    %5913 = vmatpush1.msra.mxu0 %v5912
    %5914 = vmatprep.subr.mxu0 0.0
    %v5915 = vand.u32 %v5562, 4294901760
    %5916 = vmatpush1.msra.mxu0 %v5915
    %5917 = vmatprep.subr.mxu0 0.0
    %v5918 = vand.u32 %v5563, 4294901760
    %5919 = vmatpush1.msra.mxu0 %v5918
    %5920 = vmatprep.subr.mxu0 0.0
    %v5921 = vand.u32 %v5564, 4294901760
    %5922 = vmatpush1.msra.mxu0 %v5921
    %5923 = vmatprep.subr.mxu0 0.0
    %v5924 = vand.u32 %v5565, 4294901760
    %5925 = vmatpush1.msra.mxu0 %v5924
    %5926 = vmatprep.subr.mxu0 0.0
    %5927 = vmatpush1.msra.mxu0 0.0
    %5928 = vmatprep.subr.mxu0 0.0
    %5929 = vmatpush1.msra.mxu0 0.0
    %5930 = vmatprep.subr.mxu0 0.0
    %5931 = vmatpush1.msra.mxu0 0.0
    %5932 = vmatprep.subr.mxu0 0.0
    %5933 = vmatpush1.msra.mxu0 0.0
    %5934 = vmatprep.subr.mxu0 0.0
    %5935 = vmatpush1.msra.mxu0 0.0
    %5936 = vmatprep.subr.mxu0 0.0
    %5937 = vmatpush1.msra.mxu0 0.0
    %5938 = vmatprep.subr.mxu0 0.0
    %5939 = vmatpush1.msra.mxu0 0.0
    %5940 = vmatprep.subr.mxu0 0.0
    %5941 = vmatpush1.msra.mxu0 0.0
    %5942 = vmatprep.subr.mxu0 0.0
    %5943 = vmatpush1.msra.mxu0 0.0
    %5944 = vmatprep.subr.mxu0 0.0
    %5945 = vmatpush1.msra.mxu0 0.0
    %5946 = vmatprep.subr.mxu0 0.0
    %5947 = vmatpush1.msra.mxu0 0.0
    %5948 = vmatprep.subr.mxu0 0.0
    %5949 = vmatpush1.msra.mxu0 0.0
    %5950 = vmatprep.subr.mxu0 0.0
    %5951 = vmatpush1.msra.mxu0 0.0
    %5952 = vmatprep.subr.mxu0 0.0
    %5953 = vmatpush1.msra.mxu0 0.0
    %5954 = vmatprep.subr.mxu0 0.0
    %5955 = vmatpush1.msra.mxu0 0.0
    %5956 = vmatprep.subr.mxu0 0.0
    %5957 = vmatpush1.msra.mxu0 0.0
    %5958 = vmatprep.subr.mxu0 0.0
    %5959 = vmatpush1.msra.mxu0 0.0
    %5960 = vmatprep.subr.mxu0 0.0
    %5961 = vmatpush1.msra.mxu0 0.0
    %5962 = vmatprep.subr.mxu0 0.0
    %5963 = vmatpush1.msra.mxu0 0.0
    %5964 = vmatprep.subr.mxu0 0.0
    %5965 = vmatpush1.msra.mxu0 0.0
    %5966 = vmatprep.mubr.f32.mxu0 0.0
    %v5967 = vand.u32 %v5574, 4294901760
    %v5968 = vsub.f32 %v5574, %v5967
    %v5969 = vand.u32 %v5968, 4294901760
    %5970 = vmatmul.mubr.f32.gmra.mrb[0].mxu0 %v5969
    %v5971 = vpop.f32.mrb[0].mxu0
    %v5972 = vadd.f32 %v5887, %v5971
    %v5973 = vpop.f32.mrb[0].mxu0
    %5974 = vdwg.mxu0
    %5975 = vmatprep.subr.mxu0 0.0
    %v5976 = vand.u32 %v5554, 4294901760
    %v5977 = vsub.f32 %v5554, %v5976
    %v5978 = vand.u32 %v5977, 4294901760
    %5979 = vmatpush1.msra.mxu0 %v5978
    %5980 = vmatprep.subr.mxu0 0.0
    %v5981 = vand.u32 %v5555, 4294901760
    %v5982 = vsub.f32 %v5555, %v5981
    %v5983 = vand.u32 %v5982, 4294901760
    %5984 = vmatpush1.msra.mxu0 %v5983
    %5985 = vmatprep.subr.mxu0 0.0
    %v5986 = vand.u32 %v5556, 4294901760
    %v5987 = vsub.f32 %v5556, %v5986
    %v5988 = vand.u32 %v5987, 4294901760
    %5989 = vmatpush1.msra.mxu0 %v5988
    %5990 = vmatprep.subr.mxu0 0.0
    %v5991 = vand.u32 %v5557, 4294901760
    %v5992 = vsub.f32 %v5557, %v5991
    %v5993 = vand.u32 %v5992, 4294901760
    %5994 = vmatpush1.msra.mxu0 %v5993
    %5995 = vmatprep.subr.mxu0 0.0
    %v5996 = vand.u32 %v5558, 4294901760
    %v5997 = vsub.f32 %v5558, %v5996
    %v5998 = vand.u32 %v5997, 4294901760
    %5999 = vmatpush1.msra.mxu0 %v5998
    %6000 = vmatprep.subr.mxu0 0.0
    %v6001 = vand.u32 %v5559, 4294901760
    %v6002 = vsub.f32 %v5559, %v6001
    %v6003 = vand.u32 %v6002, 4294901760
    %6004 = vmatpush1.msra.mxu0 %v6003
    %6005 = vmatprep.subr.mxu0 0.0
    %v6006 = vand.u32 %v5560, 4294901760
    %v6007 = vsub.f32 %v5560, %v6006
    %v6008 = vand.u32 %v6007, 4294901760
    %6009 = vmatpush1.msra.mxu0 %v6008
    %6010 = vmatprep.subr.mxu0 0.0
    %v6011 = vand.u32 %v5561, 4294901760
    %v6012 = vsub.f32 %v5561, %v6011
    %v6013 = vand.u32 %v6012, 4294901760
    %6014 = vmatpush1.msra.mxu0 %v6013
    %6015 = vmatprep.subr.mxu0 0.0
    %v6016 = vand.u32 %v5562, 4294901760
    %v6017 = vsub.f32 %v5562, %v6016
    %v6018 = vand.u32 %v6017, 4294901760
    %6019 = vmatpush1.msra.mxu0 %v6018
    %6020 = vmatprep.subr.mxu0 0.0
    %v6021 = vand.u32 %v5563, 4294901760
    %v6022 = vsub.f32 %v5563, %v6021
    %v6023 = vand.u32 %v6022, 4294901760
    %6024 = vmatpush1.msra.mxu0 %v6023
    %6025 = vmatprep.subr.mxu0 0.0
    %v6026 = vand.u32 %v5564, 4294901760
    %v6027 = vsub.f32 %v5564, %v6026
    %v6028 = vand.u32 %v6027, 4294901760
    %6029 = vmatpush1.msra.mxu0 %v6028
    %6030 = vmatprep.subr.mxu0 0.0
    %v6031 = vand.u32 %v5565, 4294901760
    %v6032 = vsub.f32 %v5565, %v6031
    %v6033 = vand.u32 %v6032, 4294901760
    %6034 = vmatpush1.msra.mxu0 %v6033
    %6035 = vmatprep.subr.mxu0 0.0
    %6036 = vmatpush1.msra.mxu0 0.0
    %6037 = vmatprep.subr.mxu0 0.0
    %6038 = vmatpush1.msra.mxu0 0.0
    %6039 = vmatprep.subr.mxu0 0.0
    %6040 = vmatpush1.msra.mxu0 0.0
    %6041 = vmatprep.subr.mxu0 0.0
    %6042 = vmatpush1.msra.mxu0 0.0
    %6043 = vmatprep.subr.mxu0 0.0
    %6044 = vmatpush1.msra.mxu0 0.0
    %6045 = vmatprep.subr.mxu0 0.0
    %6046 = vmatpush1.msra.mxu0 0.0
    %6047 = vmatprep.subr.mxu0 0.0
    %6048 = vmatpush1.msra.mxu0 0.0
    %6049 = vmatprep.subr.mxu0 0.0
    %6050 = vmatpush1.msra.mxu0 0.0
    %6051 = vmatprep.subr.mxu0 0.0
    %6052 = vmatpush1.msra.mxu0 0.0
    %6053 = vmatprep.subr.mxu0 0.0
    %6054 = vmatpush1.msra.mxu0 0.0
    %6055 = vmatprep.subr.mxu0 0.0
    %6056 = vmatpush1.msra.mxu0 0.0
    %6057 = vmatprep.subr.mxu0 0.0
    %6058 = vmatpush1.msra.mxu0 0.0
    %6059 = vmatprep.subr.mxu0 0.0
    %6060 = vmatpush1.msra.mxu0 0.0
    %6061 = vmatprep.subr.mxu0 0.0
    %6062 = vmatpush1.msra.mxu0 0.0
    %6063 = vmatprep.subr.mxu0 0.0
    %6064 = vmatpush1.msra.mxu0 0.0
    %6065 = vmatprep.subr.mxu0 0.0
    %6066 = vmatpush1.msra.mxu0 0.0
    %6067 = vmatprep.subr.mxu0 0.0
    %6068 = vmatpush1.msra.mxu0 0.0
    %6069 = vmatprep.subr.mxu0 0.0
    %6070 = vmatpush1.msra.mxu0 0.0
    %6071 = vmatprep.subr.mxu0 0.0
    %6072 = vmatpush1.msra.mxu0 0.0
    %6073 = vmatprep.subr.mxu0 0.0
    %6074 = vmatpush1.msra.mxu0 0.0
    %6075 = vmatprep.mubr.f32.mxu0 0.0
    %v6076 = vand.u32 %v5574, 4294901760
    %6077 = vmatmul.mubr.f32.gmra.mrb[0].mxu0 %v6076
    %v6078 = vpop.f32.mrb[0].mxu0
    %v6079 = vadd.f32 %v5972, %v6078
    %v6080 = vpop.f32.mrb[0].mxu0
    %6081 = vdwg.mxu0
    %6082 = vmatprep.subr.mxu0 0.0
    %v6083 = vand.u32 %v5554, 4294901760
    %6084 = vmatpush1.msra.mxu0 %v6083
    %6085 = vmatprep.subr.mxu0 0.0
    %v6086 = vand.u32 %v5555, 4294901760
    %6087 = vmatpush1.msra.mxu0 %v6086
    %6088 = vmatprep.subr.mxu0 0.0
    %v6089 = vand.u32 %v5556, 4294901760
    %6090 = vmatpush1.msra.mxu0 %v6089
    %6091 = vmatprep.subr.mxu0 0.0
    %v6092 = vand.u32 %v5557, 4294901760
    %6093 = vmatpush1.msra.mxu0 %v6092
    %6094 = vmatprep.subr.mxu0 0.0
    %v6095 = vand.u32 %v5558, 4294901760
    %6096 = vmatpush1.msra.mxu0 %v6095
    %6097 = vmatprep.subr.mxu0 0.0
    %v6098 = vand.u32 %v5559, 4294901760
    %6099 = vmatpush1.msra.mxu0 %v6098
    %6100 = vmatprep.subr.mxu0 0.0
    %v6101 = vand.u32 %v5560, 4294901760
    %6102 = vmatpush1.msra.mxu0 %v6101
    %6103 = vmatprep.subr.mxu0 0.0
    %v6104 = vand.u32 %v5561, 4294901760
    %6105 = vmatpush1.msra.mxu0 %v6104
    %6106 = vmatprep.subr.mxu0 0.0
    %v6107 = vand.u32 %v5562, 4294901760
    %6108 = vmatpush1.msra.mxu0 %v6107
    %6109 = vmatprep.subr.mxu0 0.0
    %v6110 = vand.u32 %v5563, 4294901760
    %6111 = vmatpush1.msra.mxu0 %v6110
    %6112 = vmatprep.subr.mxu0 0.0
    %v6113 = vand.u32 %v5564, 4294901760
    %6114 = vmatpush1.msra.mxu0 %v6113
    %6115 = vmatprep.subr.mxu0 0.0
    %v6116 = vand.u32 %v5565, 4294901760
    %6117 = vmatpush1.msra.mxu0 %v6116
    %6118 = vmatprep.subr.mxu0 0.0
    %6119 = vmatpush1.msra.mxu0 0.0
    %6120 = vmatprep.subr.mxu0 0.0
    %6121 = vmatpush1.msra.mxu0 0.0
    %6122 = vmatprep.subr.mxu0 0.0
    %6123 = vmatpush1.msra.mxu0 0.0
    %6124 = vmatprep.subr.mxu0 0.0
    %6125 = vmatpush1.msra.mxu0 0.0
    %6126 = vmatprep.subr.mxu0 0.0
    %6127 = vmatpush1.msra.mxu0 0.0
    %6128 = vmatprep.subr.mxu0 0.0
    %6129 = vmatpush1.msra.mxu0 0.0
    %6130 = vmatprep.subr.mxu0 0.0
    %6131 = vmatpush1.msra.mxu0 0.0
    %6132 = vmatprep.subr.mxu0 0.0
    %6133 = vmatpush1.msra.mxu0 0.0
    %6134 = vmatprep.subr.mxu0 0.0
    %6135 = vmatpush1.msra.mxu0 0.0
    %6136 = vmatprep.subr.mxu0 0.0
    %6137 = vmatpush1.msra.mxu0 0.0
    %6138 = vmatprep.subr.mxu0 0.0
    %6139 = vmatpush1.msra.mxu0 0.0
    %6140 = vmatprep.subr.mxu0 0.0
    %6141 = vmatpush1.msra.mxu0 0.0
    %6142 = vmatprep.subr.mxu0 0.0
    %6143 = vmatpush1.msra.mxu0 0.0
    %6144 = vmatprep.subr.mxu0 0.0
    %6145 = vmatpush1.msra.mxu0 0.0
    %6146 = vmatprep.subr.mxu0 0.0
    %6147 = vmatpush1.msra.mxu0 0.0
    %6148 = vmatprep.subr.mxu0 0.0
    %6149 = vmatpush1.msra.mxu0 0.0
    %6150 = vmatprep.subr.mxu0 0.0
    %6151 = vmatpush1.msra.mxu0 0.0
    %6152 = vmatprep.subr.mxu0 0.0
    %6153 = vmatpush1.msra.mxu0 0.0
    %6154 = vmatprep.subr.mxu0 0.0
    %6155 = vmatpush1.msra.mxu0 0.0
    %6156 = vmatprep.subr.mxu0 0.0
    %6157 = vmatpush1.msra.mxu0 0.0
    %6158 = vmatprep.mubr.f32.mxu0 0.0
    %v6159 = vand.u32 %v5574, 4294901760
    %6160 = vmatmul.mubr.f32.gmra.mrb[0].mxu0 %v6159
    %v6161 = vpop.f32.mrb[0].mxu0
    %v6162 = vadd.f32 %v6079, %v6161
    %v6163 = vpop.f32.mrb[0].mxu0
    %6164 = vdwg.mxu0
    %v6165 = vmul.f32 %v6162, %v6162
    %v6167 = vrot.slane %v6162, 1
    %v6169 = vadd.f32 %v6162, %v6167
    %v6171 = vrot.slane %v6165, 1
    %v6173 = vadd.f32 %v6165, %v6171
    %v6175 = vrot.slane %v6173, 7
    %v6177 = vsel %vm768, %v6169, %v6175
    %v6178 = vld [vmem:[%s21] sm:$0xff]
    %v6179 = vld [vmem:[%s21 + $0x8] sm:$0xff]
    %v6180 = vld [vmem:[%s21 + $0x10] sm:$0xff]
    %v6181 = vld [vmem:[%s21 + $0x18] sm:$0xff]
    %v6182 = vld [vmem:[%s21 + $0x20] sm:$0xff]
    %v6183 = vld [vmem:[%s21 + $0x28] sm:$0xff]
    %v6184 = vld [vmem:[%s21 + $0x30] sm:$0xff]
    %v6185 = vld [vmem:[%s21 + $0x38] sm:$0xff]
    %vm6186 = vcmask 523264
    %v6188 = vsel %vm6186, %v6177, 0
    %6190 = vmatprep.subr.mxu0 0.0
    %v6191 = vand.u32 %v6178, 4294901760
    %6192 = vmatpush1.msra.mxu0 %v6191
    %6193 = vmatprep.subr.mxu0 0.0
    %v6194 = vand.u32 %v6179, 4294901760
    %6195 = vmatpush1.msra.mxu0 %v6194
    %6196 = vmatprep.subr.mxu0 0.0
    %v6197 = vand.u32 %v6180, 4294901760
    %6198 = vmatpush1.msra.mxu0 %v6197
    %6199 = vmatprep.subr.mxu0 0.0
    %v6200 = vand.u32 %v6181, 4294901760
    %6201 = vmatpush1.msra.mxu0 %v6200
    %6202 = vmatprep.subr.mxu0 0.0
    %v6203 = vand.u32 %v6182, 4294901760
    %6204 = vmatpush1.msra.mxu0 %v6203
    %6205 = vmatprep.subr.mxu0 0.0
    %v6206 = vand.u32 %v6183, 4294901760
    %6207 = vmatpush1.msra.mxu0 %v6206
    %6208 = vmatprep.subr.mxu0 0.0
    %v6209 = vand.u32 %v6184, 4294901760
    %6210 = vmatpush1.msra.mxu0 %v6209
    %6211 = vmatprep.subr.mxu0 0.0
    %v6212 = vand.u32 %v6185, 4294901760
    %6213 = vmatpush1.msra.mxu0 %v6212
    %6214 = vmatprep.subr.mxu0 0.0
    %6215 = vmatpush1.msra.mxu0 0.0
    %6216 = vmatprep.subr.mxu0 0.0
    %6217 = vmatpush1.msra.mxu0 0.0
    %6218 = vmatprep.subr.mxu0 0.0
    %6219 = vmatpush1.msra.mxu0 0.0
    %6220 = vmatprep.subr.mxu0 0.0
    %6221 = vmatpush1.msra.mxu0 0.0
    %6222 = vmatprep.subr.mxu0 0.0
    %6223 = vmatpush1.msra.mxu0 0.0
    %6224 = vmatprep.subr.mxu0 0.0
    %6225 = vmatpush1.msra.mxu0 0.0
    %6226 = vmatprep.subr.mxu0 0.0
    %6227 = vmatpush1.msra.mxu0 0.0
    %6228 = vmatprep.subr.mxu0 0.0
    %6229 = vmatpush1.msra.mxu0 0.0
    %6230 = vmatprep.subr.mxu0 0.0
    %6231 = vmatpush1.msra.mxu0 0.0
    %6232 = vmatprep.subr.mxu0 0.0
    %6233 = vmatpush1.msra.mxu0 0.0
    %6234 = vmatprep.subr.mxu0 0.0
    %6235 = vmatpush1.msra.mxu0 0.0
    %6236 = vmatprep.subr.mxu0 0.0
    %6237 = vmatpush1.msra.mxu0 0.0
    %6238 = vmatprep.subr.mxu0 0.0
    %6239 = vmatpush1.msra.mxu0 0.0
    %6240 = vmatprep.subr.mxu0 0.0
    %6241 = vmatpush1.msra.mxu0 0.0
    %6242 = vmatprep.subr.mxu0 0.0
    %6243 = vmatpush1.msra.mxu0 0.0
    %6244 = vmatprep.subr.mxu0 0.0
    %6245 = vmatpush1.msra.mxu0 0.0
    %6246 = vmatprep.subr.mxu0 0.0
    %6247 = vmatpush1.msra.mxu0 0.0
    %6248 = vmatprep.subr.mxu0 0.0
    %6249 = vmatpush1.msra.mxu0 0.0
    %6250 = vmatprep.subr.mxu0 0.0
    %6251 = vmatpush1.msra.mxu0 0.0
    %6252 = vmatprep.subr.mxu0 0.0
    %6253 = vmatpush1.msra.mxu0 0.0
    %6254 = vmatprep.subr.mxu0 0.0
    %6255 = vmatpush1.msra.mxu0 0.0
    %6256 = vmatprep.subr.mxu0 0.0
    %6257 = vmatpush1.msra.mxu0 0.0
    %6258 = vmatprep.subr.mxu0 0.0
    %6259 = vmatpush1.msra.mxu0 0.0
    %6260 = vmatprep.subr.mxu0 0.0
    %6261 = vmatpush1.msra.mxu0 0.0
    %6262 = vmatprep.mubr.f32.mxu0 0.0
    %v6263 = vand.u32 %v6188, 4294901760
    %v6264 = vsub.f32 %v6188, %v6263
    %v6265 = vand.u32 %v6264, 4294901760
    %v6266 = vsub.f32 %v6264, %v6265
    %v6267 = vand.u32 %v6266, 4294901760
    %6268 = vmatmul.mubr.f32.gmra.mrb[0].mxu0 %v6267
    %v6269 = vpop.f32.mrb[0].mxu0
    %v6270 = vadd.f32 0.0, %v6269
    %v6271 = vpop.f32.mrb[0].mxu0
    %6272 = vdwg.mxu0
    %6273 = vmatprep.subr.mxu0 0.0
    %v6274 = vand.u32 %v6178, 4294901760
    %v6275 = vsub.f32 %v6178, %v6274
    %v6276 = vand.u32 %v6275, 4294901760
    %v6277 = vsub.f32 %v6275, %v6276
    %v6278 = vand.u32 %v6277, 4294901760
    %6279 = vmatpush1.msra.mxu0 %v6278
    %6280 = vmatprep.subr.mxu0 0.0
    %v6281 = vand.u32 %v6179, 4294901760
    %v6282 = vsub.f32 %v6179, %v6281
    %v6283 = vand.u32 %v6282, 4294901760
    %v6284 = vsub.f32 %v6282, %v6283
    %v6285 = vand.u32 %v6284, 4294901760
    %6286 = vmatpush1.msra.mxu0 %v6285
    %6287 = vmatprep.subr.mxu0 0.0
    %v6288 = vand.u32 %v6180, 4294901760
    %v6289 = vsub.f32 %v6180, %v6288
    %v6290 = vand.u32 %v6289, 4294901760
    %v6291 = vsub.f32 %v6289, %v6290
    %v6292 = vand.u32 %v6291, 4294901760
    %6293 = vmatpush1.msra.mxu0 %v6292
    %6294 = vmatprep.subr.mxu0 0.0
    %v6295 = vand.u32 %v6181, 4294901760
    %v6296 = vsub.f32 %v6181, %v6295
    %v6297 = vand.u32 %v6296, 4294901760
    %v6298 = vsub.f32 %v6296, %v6297
    %v6299 = vand.u32 %v6298, 4294901760
    %6300 = vmatpush1.msra.mxu0 %v6299
    %6301 = vmatprep.subr.mxu0 0.0
    %v6302 = vand.u32 %v6182, 4294901760
    %v6303 = vsub.f32 %v6182, %v6302
    %v6304 = vand.u32 %v6303, 4294901760
    %v6305 = vsub.f32 %v6303, %v6304
    %v6306 = vand.u32 %v6305, 4294901760
    %6307 = vmatpush1.msra.mxu0 %v6306
    %6308 = vmatprep.subr.mxu0 0.0
    %v6309 = vand.u32 %v6183, 4294901760
    %v6310 = vsub.f32 %v6183, %v6309
    %v6311 = vand.u32 %v6310, 4294901760
    %v6312 = vsub.f32 %v6310, %v6311
    %v6313 = vand.u32 %v6312, 4294901760
    %6314 = vmatpush1.msra.mxu0 %v6313
    %6315 = vmatprep.subr.mxu0 0.0
    %v6316 = vand.u32 %v6184, 4294901760
    %v6317 = vsub.f32 %v6184, %v6316
    %v6318 = vand.u32 %v6317, 4294901760
    %v6319 = vsub.f32 %v6317, %v6318
    %v6320 = vand.u32 %v6319, 4294901760
    %6321 = vmatpush1.msra.mxu0 %v6320
    %6322 = vmatprep.subr.mxu0 0.0
    %v6323 = vand.u32 %v6185, 4294901760
    %v6324 = vsub.f32 %v6185, %v6323
    %v6325 = vand.u32 %v6324, 4294901760
    %v6326 = vsub.f32 %v6324, %v6325
    %v6327 = vand.u32 %v6326, 4294901760
    %6328 = vmatpush1.msra.mxu0 %v6327
    %6329 = vmatprep.subr.mxu0 0.0
    %6330 = vmatpush1.msra.mxu0 0.0
    %6331 = vmatprep.subr.mxu0 0.0
    %6332 = vmatpush1.msra.mxu0 0.0
    %6333 = vmatprep.subr.mxu0 0.0
    %6334 = vmatpush1.msra.mxu0 0.0
    %6335 = vmatprep.subr.mxu0 0.0
    %6336 = vmatpush1.msra.mxu0 0.0
    %6337 = vmatprep.subr.mxu0 0.0
    %6338 = vmatpush1.msra.mxu0 0.0
    %6339 = vmatprep.subr.mxu0 0.0
    %6340 = vmatpush1.msra.mxu0 0.0
    %6341 = vmatprep.subr.mxu0 0.0
    %6342 = vmatpush1.msra.mxu0 0.0
    %6343 = vmatprep.subr.mxu0 0.0
    %6344 = vmatpush1.msra.mxu0 0.0
    %6345 = vmatprep.subr.mxu0 0.0
    %6346 = vmatpush1.msra.mxu0 0.0
    %6347 = vmatprep.subr.mxu0 0.0
    %6348 = vmatpush1.msra.mxu0 0.0
    %6349 = vmatprep.subr.mxu0 0.0
    %6350 = vmatpush1.msra.mxu0 0.0
    %6351 = vmatprep.subr.mxu0 0.0
    %6352 = vmatpush1.msra.mxu0 0.0
    %6353 = vmatprep.subr.mxu0 0.0
    %6354 = vmatpush1.msra.mxu0 0.0
    %6355 = vmatprep.subr.mxu0 0.0
    %6356 = vmatpush1.msra.mxu0 0.0
    %6357 = vmatprep.subr.mxu0 0.0
    %6358 = vmatpush1.msra.mxu0 0.0
    %6359 = vmatprep.subr.mxu0 0.0
    %6360 = vmatpush1.msra.mxu0 0.0
    %6361 = vmatprep.subr.mxu0 0.0
    %6362 = vmatpush1.msra.mxu0 0.0
    %6363 = vmatprep.subr.mxu0 0.0
    %6364 = vmatpush1.msra.mxu0 0.0
    %6365 = vmatprep.subr.mxu0 0.0
    %6366 = vmatpush1.msra.mxu0 0.0
    %6367 = vmatprep.subr.mxu0 0.0
    %6368 = vmatpush1.msra.mxu0 0.0
    %6369 = vmatprep.subr.mxu0 0.0
    %6370 = vmatpush1.msra.mxu0 0.0
    %6371 = vmatprep.subr.mxu0 0.0
    %6372 = vmatpush1.msra.mxu0 0.0
    %6373 = vmatprep.subr.mxu0 0.0
    %6374 = vmatpush1.msra.mxu0 0.0
    %6375 = vmatprep.subr.mxu0 0.0
    %6376 = vmatpush1.msra.mxu0 0.0
    %6377 = vmatprep.mubr.f32.mxu0 0.0
    %v6378 = vand.u32 %v6188, 4294901760
    %6379 = vmatmul.mubr.f32.gmra.mrb[0].mxu0 %v6378
    %v6380 = vpop.f32.mrb[0].mxu0
    %v6381 = vadd.f32 %v6270, %v6380
    %v6382 = vpop.f32.mrb[0].mxu0
    %6383 = vdwg.mxu0
    %6384 = vmatprep.subr.mxu0 0.0
    %v6385 = vand.u32 %v6178, 4294901760
    %v6386 = vsub.f32 %v6178, %v6385
    %6387 = vmatpush1.msra.mxu0 %v6386
    %6388 = vmatprep.subr.mxu0 0.0
    %v6389 = vand.u32 %v6179, 4294901760
    %v6390 = vsub.f32 %v6179, %v6389
    %6391 = vmatpush1.msra.mxu0 %v6390
    %6392 = vmatprep.subr.mxu0 0.0
    %v6393 = vand.u32 %v6180, 4294901760
    %v6394 = vsub.f32 %v6180, %v6393
    %6395 = vmatpush1.msra.mxu0 %v6394
    %6396 = vmatprep.subr.mxu0 0.0
    %v6397 = vand.u32 %v6181, 4294901760
    %v6398 = vsub.f32 %v6181, %v6397
    %6399 = vmatpush1.msra.mxu0 %v6398
    %6400 = vmatprep.subr.mxu0 0.0
    %v6401 = vand.u32 %v6182, 4294901760
    %v6402 = vsub.f32 %v6182, %v6401
    %6403 = vmatpush1.msra.mxu0 %v6402
    %6404 = vmatprep.subr.mxu0 0.0
    %v6405 = vand.u32 %v6183, 4294901760
    %v6406 = vsub.f32 %v6183, %v6405
    %6407 = vmatpush1.msra.mxu0 %v6406
    %6408 = vmatprep.subr.mxu0 0.0
    %v6409 = vand.u32 %v6184, 4294901760
    %v6410 = vsub.f32 %v6184, %v6409
    %6411 = vmatpush1.msra.mxu0 %v6410
    %6412 = vmatprep.subr.mxu0 0.0
    %v6413 = vand.u32 %v6185, 4294901760
    %v6414 = vsub.f32 %v6185, %v6413
    %6415 = vmatpush1.msra.mxu0 %v6414
    %6416 = vmatprep.subr.mxu0 0.0
    %6417 = vmatpush1.msra.mxu0 0.0
    %6418 = vmatprep.subr.mxu0 0.0
    %6419 = vmatpush1.msra.mxu0 0.0
    %6420 = vmatprep.subr.mxu0 0.0
    %6421 = vmatpush1.msra.mxu0 0.0
    %6422 = vmatprep.subr.mxu0 0.0
    %6423 = vmatpush1.msra.mxu0 0.0
    %6424 = vmatprep.subr.mxu0 0.0
    %6425 = vmatpush1.msra.mxu0 0.0
    %6426 = vmatprep.subr.mxu0 0.0
    %6427 = vmatpush1.msra.mxu0 0.0
    %6428 = vmatprep.subr.mxu0 0.0
    %6429 = vmatpush1.msra.mxu0 0.0
    %6430 = vmatprep.subr.mxu0 0.0
    %6431 = vmatpush1.msra.mxu0 0.0
    %6432 = vmatprep.subr.mxu0 0.0
    %6433 = vmatpush1.msra.mxu0 0.0
    %6434 = vmatprep.subr.mxu0 0.0
    %6435 = vmatpush1.msra.mxu0 0.0
    %6436 = vmatprep.subr.mxu0 0.0
    %6437 = vmatpush1.msra.mxu0 0.0
    %6438 = vmatprep.subr.mxu0 0.0
    %6439 = vmatpush1.msra.mxu0 0.0
    %6440 = vmatprep.subr.mxu0 0.0
    %6441 = vmatpush1.msra.mxu0 0.0
    %6442 = vmatprep.subr.mxu0 0.0
    %6443 = vmatpush1.msra.mxu0 0.0
    %6444 = vmatprep.subr.mxu0 0.0
    %6445 = vmatpush1.msra.mxu0 0.0
    %6446 = vmatprep.subr.mxu0 0.0
    %6447 = vmatpush1.msra.mxu0 0.0
    %6448 = vmatprep.subr.mxu0 0.0
    %6449 = vmatpush1.msra.mxu0 0.0
    %6450 = vmatprep.subr.mxu0 0.0
    %6451 = vmatpush1.msra.mxu0 0.0
    %6452 = vmatprep.subr.mxu0 0.0
    %6453 = vmatpush1.msra.mxu0 0.0
    %6454 = vmatprep.subr.mxu0 0.0
    %6455 = vmatpush1.msra.mxu0 0.0
    %6456 = vmatprep.subr.mxu0 0.0
    %6457 = vmatpush1.msra.mxu0 0.0
    %6458 = vmatprep.subr.mxu0 0.0
    %6459 = vmatpush1.msra.mxu0 0.0
    %6460 = vmatprep.subr.mxu0 0.0
    %6461 = vmatpush1.msra.mxu0 0.0
    %6462 = vmatprep.subr.mxu0 0.0
    %6463 = vmatpush1.msra.mxu0 0.0
    %6464 = vmatprep.mubr.f32.mxu0 0.0
    %v6465 = vand.u32 %v6188, 4294901760
    %v6466 = vsub.f32 %v6188, %v6465
    %6467 = vmatmul.mubr.f32.gmra.mrb[0].mxu0 %v6466
    %v6468 = vpop.f32.mrb[0].mxu0
    %v6469 = vadd.f32 %v6381, %v6468
    %v6470 = vpop.f32.mrb[0].mxu0
    %6471 = vdwg.mxu0
    %6472 = vmatprep.subr.mxu0 0.0
    %v6473 = vand.u32 %v6178, 4294901760
    %6474 = vmatpush1.msra.mxu0 %v6473
    %6475 = vmatprep.subr.mxu0 0.0
    %v6476 = vand.u32 %v6179, 4294901760
    %6477 = vmatpush1.msra.mxu0 %v6476
    %6478 = vmatprep.subr.mxu0 0.0
    %v6479 = vand.u32 %v6180, 4294901760
    %6480 = vmatpush1.msra.mxu0 %v6479
    %6481 = vmatprep.subr.mxu0 0.0
    %v6482 = vand.u32 %v6181, 4294901760
    %6483 = vmatpush1.msra.mxu0 %v6482
    %6484 = vmatprep.subr.mxu0 0.0
    %v6485 = vand.u32 %v6182, 4294901760
    %6486 = vmatpush1.msra.mxu0 %v6485
    %6487 = vmatprep.subr.mxu0 0.0
    %v6488 = vand.u32 %v6183, 4294901760
    %6489 = vmatpush1.msra.mxu0 %v6488
    %6490 = vmatprep.subr.mxu0 0.0
    %v6491 = vand.u32 %v6184, 4294901760
    %6492 = vmatpush1.msra.mxu0 %v6491
    %6493 = vmatprep.subr.mxu0 0.0
    %v6494 = vand.u32 %v6185, 4294901760
    %6495 = vmatpush1.msra.mxu0 %v6494
    %6496 = vmatprep.subr.mxu0 0.0
    %6497 = vmatpush1.msra.mxu0 0.0
    %6498 = vmatprep.subr.mxu0 0.0
    %6499 = vmatpush1.msra.mxu0 0.0
    %6500 = vmatprep.subr.mxu0 0.0
    %6501 = vmatpush1.msra.mxu0 0.0
    %6502 = vmatprep.subr.mxu0 0.0
    %6503 = vmatpush1.msra.mxu0 0.0
    %6504 = vmatprep.subr.mxu0 0.0
    %6505 = vmatpush1.msra.mxu0 0.0
    %6506 = vmatprep.subr.mxu0 0.0
    %6507 = vmatpush1.msra.mxu0 0.0
    %6508 = vmatprep.subr.mxu0 0.0
    %6509 = vmatpush1.msra.mxu0 0.0
    %6510 = vmatprep.subr.mxu0 0.0
    %6511 = vmatpush1.msra.mxu0 0.0
    %6512 = vmatprep.subr.mxu0 0.0
    %6513 = vmatpush1.msra.mxu0 0.0
    %6514 = vmatprep.subr.mxu0 0.0
    %6515 = vmatpush1.msra.mxu0 0.0
    %6516 = vmatprep.subr.mxu0 0.0
    %6517 = vmatpush1.msra.mxu0 0.0
    %6518 = vmatprep.subr.mxu0 0.0
    %6519 = vmatpush1.msra.mxu0 0.0
    %6520 = vmatprep.subr.mxu0 0.0
    %6521 = vmatpush1.msra.mxu0 0.0
    %6522 = vmatprep.subr.mxu0 0.0
    %6523 = vmatpush1.msra.mxu0 0.0
    %6524 = vmatprep.subr.mxu0 0.0
    %6525 = vmatpush1.msra.mxu0 0.0
    %6526 = vmatprep.subr.mxu0 0.0
    %6527 = vmatpush1.msra.mxu0 0.0
    %6528 = vmatprep.subr.mxu0 0.0
    %6529 = vmatpush1.msra.mxu0 0.0
    %6530 = vmatprep.subr.mxu0 0.0
    %6531 = vmatpush1.msra.mxu0 0.0
    %6532 = vmatprep.subr.mxu0 0.0
    %6533 = vmatpush1.msra.mxu0 0.0
    %6534 = vmatprep.subr.mxu0 0.0
    %6535 = vmatpush1.msra.mxu0 0.0
    %6536 = vmatprep.subr.mxu0 0.0
    %6537 = vmatpush1.msra.mxu0 0.0
    %6538 = vmatprep.subr.mxu0 0.0
    %6539 = vmatpush1.msra.mxu0 0.0
    %6540 = vmatprep.subr.mxu0 0.0
    %6541 = vmatpush1.msra.mxu0 0.0
    %6542 = vmatprep.subr.mxu0 0.0
    %6543 = vmatpush1.msra.mxu0 0.0
    %6544 = vmatprep.mubr.f32.mxu0 0.0
    %v6545 = vand.u32 %v6188, 4294901760
    %v6546 = vsub.f32 %v6188, %v6545
    %v6547 = vand.u32 %v6546, 4294901760
    %6548 = vmatmul.mubr.f32.gmra.mrb[0].mxu0 %v6547
    %v6549 = vpop.f32.mrb[0].mxu0
    %v6550 = vadd.f32 %v6469, %v6549
    %v6551 = vpop.f32.mrb[0].mxu0
    %6552 = vdwg.mxu0
    %6553 = vmatprep.subr.mxu0 0.0
    %v6554 = vand.u32 %v6178, 4294901760
    %v6555 = vsub.f32 %v6178, %v6554
    %v6556 = vand.u32 %v6555, 4294901760
    %6557 = vmatpush1.msra.mxu0 %v6556
    %6558 = vmatprep.subr.mxu0 0.0
    %v6559 = vand.u32 %v6179, 4294901760
    %v6560 = vsub.f32 %v6179, %v6559
    %v6561 = vand.u32 %v6560, 4294901760
    %6562 = vmatpush1.msra.mxu0 %v6561
    %6563 = vmatprep.subr.mxu0 0.0
    %v6564 = vand.u32 %v6180, 4294901760
    %v6565 = vsub.f32 %v6180, %v6564
    %v6566 = vand.u32 %v6565, 4294901760
    %6567 = vmatpush1.msra.mxu0 %v6566
    %6568 = vmatprep.subr.mxu0 0.0
    %v6569 = vand.u32 %v6181, 4294901760
    %v6570 = vsub.f32 %v6181, %v6569
    %v6571 = vand.u32 %v6570, 4294901760
    %6572 = vmatpush1.msra.mxu0 %v6571
    %6573 = vmatprep.subr.mxu0 0.0
    %v6574 = vand.u32 %v6182, 4294901760
    %v6575 = vsub.f32 %v6182, %v6574
    %v6576 = vand.u32 %v6575, 4294901760
    %6577 = vmatpush1.msra.mxu0 %v6576
    %6578 = vmatprep.subr.mxu0 0.0
    %v6579 = vand.u32 %v6183, 4294901760
    %v6580 = vsub.f32 %v6183, %v6579
    %v6581 = vand.u32 %v6580, 4294901760
    %6582 = vmatpush1.msra.mxu0 %v6581
    %6583 = vmatprep.subr.mxu0 0.0
    %v6584 = vand.u32 %v6184, 4294901760
    %v6585 = vsub.f32 %v6184, %v6584
    %v6586 = vand.u32 %v6585, 4294901760
    %6587 = vmatpush1.msra.mxu0 %v6586
    %6588 = vmatprep.subr.mxu0 0.0
    %v6589 = vand.u32 %v6185, 4294901760
    %v6590 = vsub.f32 %v6185, %v6589
    %v6591 = vand.u32 %v6590, 4294901760
    %6592 = vmatpush1.msra.mxu0 %v6591
    %6593 = vmatprep.subr.mxu0 0.0
    %6594 = vmatpush1.msra.mxu0 0.0
    %6595 = vmatprep.subr.mxu0 0.0
    %6596 = vmatpush1.msra.mxu0 0.0
    %6597 = vmatprep.subr.mxu0 0.0
    %6598 = vmatpush1.msra.mxu0 0.0
    %6599 = vmatprep.subr.mxu0 0.0
    %6600 = vmatpush1.msra.mxu0 0.0
    %6601 = vmatprep.subr.mxu0 0.0
    %6602 = vmatpush1.msra.mxu0 0.0
    %6603 = vmatprep.subr.mxu0 0.0
    %6604 = vmatpush1.msra.mxu0 0.0
    %6605 = vmatprep.subr.mxu0 0.0
    %6606 = vmatpush1.msra.mxu0 0.0
    %6607 = vmatprep.subr.mxu0 0.0
    %6608 = vmatpush1.msra.mxu0 0.0
    %6609 = vmatprep.subr.mxu0 0.0
    %6610 = vmatpush1.msra.mxu0 0.0
    %6611 = vmatprep.subr.mxu0 0.0
    %6612 = vmatpush1.msra.mxu0 0.0
    %6613 = vmatprep.subr.mxu0 0.0
    %6614 = vmatpush1.msra.mxu0 0.0
    %6615 = vmatprep.subr.mxu0 0.0
    %6616 = vmatpush1.msra.mxu0 0.0
    %6617 = vmatprep.subr.mxu0 0.0
    %6618 = vmatpush1.msra.mxu0 0.0
    %6619 = vmatprep.subr.mxu0 0.0
    %6620 = vmatpush1.msra.mxu0 0.0
    %6621 = vmatprep.subr.mxu0 0.0
    %6622 = vmatpush1.msra.mxu0 0.0
    %6623 = vmatprep.subr.mxu0 0.0
    %6624 = vmatpush1.msra.mxu0 0.0
    %6625 = vmatprep.subr.mxu0 0.0
    %6626 = vmatpush1.msra.mxu0 0.0
    %6627 = vmatprep.subr.mxu0 0.0
    %6628 = vmatpush1.msra.mxu0 0.0
    %6629 = vmatprep.subr.mxu0 0.0
    %6630 = vmatpush1.msra.mxu0 0.0
    %6631 = vmatprep.subr.mxu0 0.0
    %6632 = vmatpush1.msra.mxu0 0.0
    %6633 = vmatprep.subr.mxu0 0.0
    %6634 = vmatpush1.msra.mxu0 0.0
    %6635 = vmatprep.subr.mxu0 0.0
    %6636 = vmatpush1.msra.mxu0 0.0
    %6637 = vmatprep.subr.mxu0 0.0
    %6638 = vmatpush1.msra.mxu0 0.0
    %6639 = vmatprep.subr.mxu0 0.0
    %6640 = vmatpush1.msra.mxu0 0.0
    %6641 = vmatprep.mubr.f32.mxu0 0.0
    %v6642 = vand.u32 %v6188, 4294901760
    %6643 = vmatmul.mubr.f32.gmra.mrb[0].mxu0 %v6642
    %v6644 = vpop.f32.mrb[0].mxu0
    %v6645 = vadd.f32 %v6550, %v6644
    %v6646 = vpop.f32.mrb[0].mxu0
    %6647 = vdwg.mxu0
    %6648 = vmatprep.subr.mxu0 0.0
    %v6649 = vand.u32 %v6178, 4294901760
    %6650 = vmatpush1.msra.mxu0 %v6649
    %6651 = vmatprep.subr.mxu0 0.0
    %v6652 = vand.u32 %v6179, 4294901760
    %6653 = vmatpush1.msra.mxu0 %v6652
    %6654 = vmatprep.subr.mxu0 0.0
    %v6655 = vand.u32 %v6180, 4294901760
    %6656 = vmatpush1.msra.mxu0 %v6655
    %6657 = vmatprep.subr.mxu0 0.0
    %v6658 = vand.u32 %v6181, 4294901760
    %6659 = vmatpush1.msra.mxu0 %v6658
    %6660 = vmatprep.subr.mxu0 0.0
    %v6661 = vand.u32 %v6182, 4294901760
    %6662 = vmatpush1.msra.mxu0 %v6661
    %6663 = vmatprep.subr.mxu0 0.0
    %v6664 = vand.u32 %v6183, 4294901760
    %6665 = vmatpush1.msra.mxu0 %v6664
    %6666 = vmatprep.subr.mxu0 0.0
    %v6667 = vand.u32 %v6184, 4294901760
    %6668 = vmatpush1.msra.mxu0 %v6667
    %6669 = vmatprep.subr.mxu0 0.0
    %v6670 = vand.u32 %v6185, 4294901760
    %6671 = vmatpush1.msra.mxu0 %v6670
    %6672 = vmatprep.subr.mxu0 0.0
    %6673 = vmatpush1.msra.mxu0 0.0
    %6674 = vmatprep.subr.mxu0 0.0
    %6675 = vmatpush1.msra.mxu0 0.0
    %6676 = vmatprep.subr.mxu0 0.0
    %6677 = vmatpush1.msra.mxu0 0.0
    %6678 = vmatprep.subr.mxu0 0.0
    %6679 = vmatpush1.msra.mxu0 0.0
    %6680 = vmatprep.subr.mxu0 0.0
    %6681 = vmatpush1.msra.mxu0 0.0
    %6682 = vmatprep.subr.mxu0 0.0
    %6683 = vmatpush1.msra.mxu0 0.0
    %6684 = vmatprep.subr.mxu0 0.0
    %6685 = vmatpush1.msra.mxu0 0.0
    %6686 = vmatprep.subr.mxu0 0.0
    %6687 = vmatpush1.msra.mxu0 0.0
    %6688 = vmatprep.subr.mxu0 0.0
    %6689 = vmatpush1.msra.mxu0 0.0
    %6690 = vmatprep.subr.mxu0 0.0
    %6691 = vmatpush1.msra.mxu0 0.0
    %6692 = vmatprep.subr.mxu0 0.0
    %6693 = vmatpush1.msra.mxu0 0.0
    %6694 = vmatprep.subr.mxu0 0.0
    %6695 = vmatpush1.msra.mxu0 0.0
    %6696 = vmatprep.subr.mxu0 0.0
    %6697 = vmatpush1.msra.mxu0 0.0
    %6698 = vmatprep.subr.mxu0 0.0
    %6699 = vmatpush1.msra.mxu0 0.0
    %6700 = vmatprep.subr.mxu0 0.0
    %6701 = vmatpush1.msra.mxu0 0.0
    %6702 = vmatprep.subr.mxu0 0.0
    %6703 = vmatpush1.msra.mxu0 0.0
    %6704 = vmatprep.subr.mxu0 0.0
    %6705 = vmatpush1.msra.mxu0 0.0
    %6706 = vmatprep.subr.mxu0 0.0
    %6707 = vmatpush1.msra.mxu0 0.0
    %6708 = vmatprep.subr.mxu0 0.0
    %6709 = vmatpush1.msra.mxu0 0.0
    %6710 = vmatprep.subr.mxu0 0.0
    %6711 = vmatpush1.msra.mxu0 0.0
    %6712 = vmatprep.subr.mxu0 0.0
    %6713 = vmatpush1.msra.mxu0 0.0
    %6714 = vmatprep.subr.mxu0 0.0
    %6715 = vmatpush1.msra.mxu0 0.0
    %6716 = vmatprep.subr.mxu0 0.0
    %6717 = vmatpush1.msra.mxu0 0.0
    %6718 = vmatprep.subr.mxu0 0.0
    %6719 = vmatpush1.msra.mxu0 0.0
    %6720 = vmatprep.mubr.f32.mxu0 0.0
    %v6721 = vand.u32 %v6188, 4294901760
    %6722 = vmatmul.mubr.f32.gmra.mrb[0].mxu0 %v6721
    %v6723 = vpop.f32.mrb[0].mxu0
    %v6724 = vadd.f32 %v6645, %v6723
    %v6725 = vpop.f32.mrb[0].mxu0
    %6726 = vdwg.mxu0
    %v6727 = vmul.f32 %v6724, 0.03125
    %v6728 = vmul.f32 %v6727, %v6727
    %v6730 = vrot.slane %v6728, 7
    %v6732 = vsub.f32 %v6727, %v6730
    %v6733 = vld [vmem:[%s23] sm:$0x1]
    %v6734 = vadd.f32 %v6732, 1e-05
    %v6735 = vrsqrt.pop %v6734
    %v6738 = vunpack.c.l.s4 1966171168
    %v6739 = vunpack.c.0.s8 %v6738
    %v6740 = vlaneseq
    %v6741 = vshrl.u32 %v6740, 7
    %v6742 = vsub.s32 %v6739, %v6741
    %v6743 = vrot.slane %v6735, %v6742
    %v6744 = vcombine.high %v6743, %v6743
    %v6746 = vunpack.c.l.s4 1966171168
    %v6747 = vunpack.c.0.s8 %v6746
    %v6748 = vlaneseq
    %v6749 = vshrl.u32 %v6748, 7
    %v6750 = vsub.s32 %v6747, %v6749
    %v6751 = vrot.slane %v6744, %v6750
    %v6753 = vmul.f32 %v6733, %v6751
    %v6754 = vld [vmem:[%s24] sm:$0x1]
    %v6755 = vmul.f32 %v6727, %v6753
    %v6756 = vsub.f32 %v6754, %v6755
    %v6758 = vlaneseq
    %v6759 = vshrl.u32 %v6758, 7
    %v6760 = vsub.s32 0, %v6759
    %v6761 = vrot.slane %v6756, %v6760
    %v6763 = vsel %vm768, %v6753, %v6761
    %v6764 = vld [vmem:[%s22] sm:$0xf]
    %vm6765 = vcmask 31744
    %v6767 = vsel %vm6765, %v6763, 0
    %vm6769 = vcmask 1043456
    %v6771 = vsel %vm6769, %v6764, 0
    %6773 = vmatprep.subr.mxu0 0.0
    %v6774 = vand.u32 %v6771, 4294901760
    %6775 = vmatpush1.msra.mxu0 %v6774
    %6776 = vmatprep.subr.mxu0 0.0
    %6777 = vmatpush1.msra.mxu0 0.0
    %6778 = vmatprep.subr.mxu0 0.0
    %6779 = vmatpush1.msra.mxu0 0.0
    %6780 = vmatprep.subr.mxu0 0.0
    %6781 = vmatpush1.msra.mxu0 0.0
    %6782 = vmatprep.subr.mxu0 0.0
    %6783 = vmatpush1.msra.mxu0 0.0
    %6784 = vmatprep.subr.mxu0 0.0
    %6785 = vmatpush1.msra.mxu0 0.0
    %6786 = vmatprep.subr.mxu0 0.0
    %6787 = vmatpush1.msra.mxu0 0.0
    %6788 = vmatprep.subr.mxu0 0.0
    %6789 = vmatpush1.msra.mxu0 0.0
    %6790 = vmatprep.subr.mxu0 0.0
    %6791 = vmatpush1.msra.mxu0 0.0
    %6792 = vmatprep.subr.mxu0 0.0
    %6793 = vmatpush1.msra.mxu0 0.0
    %6794 = vmatprep.subr.mxu0 0.0
    %6795 = vmatpush1.msra.mxu0 0.0
    %6796 = vmatprep.subr.mxu0 0.0
    %6797 = vmatpush1.msra.mxu0 0.0
    %6798 = vmatprep.subr.mxu0 0.0
    %6799 = vmatpush1.msra.mxu0 0.0
    %6800 = vmatprep.subr.mxu0 0.0
    %6801 = vmatpush1.msra.mxu0 0.0
    %6802 = vmatprep.subr.mxu0 0.0
    %6803 = vmatpush1.msra.mxu0 0.0
    %6804 = vmatprep.subr.mxu0 0.0
    %6805 = vmatpush1.msra.mxu0 0.0
    %6806 = vmatprep.subr.mxu0 0.0
    %6807 = vmatpush1.msra.mxu0 0.0
    %6808 = vmatprep.subr.mxu0 0.0
    %6809 = vmatpush1.msra.mxu0 0.0
    %6810 = vmatprep.subr.mxu0 0.0
    %6811 = vmatpush1.msra.mxu0 0.0
    %6812 = vmatprep.subr.mxu0 0.0
    %6813 = vmatpush1.msra.mxu0 0.0
    %6814 = vmatprep.subr.mxu0 0.0
    %6815 = vmatpush1.msra.mxu0 0.0
    %6816 = vmatprep.subr.mxu0 0.0
    %6817 = vmatpush1.msra.mxu0 0.0
    %6818 = vmatprep.subr.mxu0 0.0
    %6819 = vmatpush1.msra.mxu0 0.0
    %6820 = vmatprep.subr.mxu0 0.0
    %6821 = vmatpush1.msra.mxu0 0.0
    %6822 = vmatprep.subr.mxu0 0.0
    %6823 = vmatpush1.msra.mxu0 0.0
    %6824 = vmatprep.subr.mxu0 0.0
    %6825 = vmatpush1.msra.mxu0 0.0
    %6826 = vmatprep.subr.mxu0 0.0
    %6827 = vmatpush1.msra.mxu0 0.0
    %6828 = vmatprep.subr.mxu0 0.0
    %6829 = vmatpush1.msra.mxu0 0.0
    %6830 = vmatprep.subr.mxu0 0.0
    %6831 = vmatpush1.msra.mxu0 0.0
    %6832 = vmatprep.subr.mxu0 0.0
    %6833 = vmatpush1.msra.mxu0 0.0
    %6834 = vmatprep.subr.mxu0 0.0
    %6835 = vmatpush1.msra.mxu0 0.0
    %6836 = vmatprep.subr.mxu0 0.0
    %6837 = vmatpush1.msra.mxu0 0.0
    %6838 = vmatprep.mubr.f32.mxu0 0.0
    %v6839 = vand.u32 %v6767, 4294901760
    %v6840 = vsub.f32 %v6767, %v6839
    %v6841 = vand.u32 %v6840, 4294901760
    %v6842 = vsub.f32 %v6840, %v6841
    %v6843 = vand.u32 %v6842, 4294901760
    %6844 = vmatmul.mubr.f32.gmra.mrb[0].mxu0 %v6843
    %v6845 = vpop.f32.mrb[0].mxu0
    %v6846 = vadd.f32 0.0, %v6845
    %v6847 = vpop.f32.mrb[0].mxu0
    %6848 = vdwg.mxu0
    %6849 = vmatprep.subr.mxu0 0.0
    %v6850 = vand.u32 %v6771, 4294901760
    %v6851 = vsub.f32 %v6771, %v6850
    %v6852 = vand.u32 %v6851, 4294901760
    %v6853 = vsub.f32 %v6851, %v6852
    %v6854 = vand.u32 %v6853, 4294901760
    %6855 = vmatpush1.msra.mxu0 %v6854
    %6856 = vmatprep.subr.mxu0 0.0
    %6857 = vmatpush1.msra.mxu0 0.0
    %6858 = vmatprep.subr.mxu0 0.0
    %6859 = vmatpush1.msra.mxu0 0.0
    %6860 = vmatprep.subr.mxu0 0.0
    %6861 = vmatpush1.msra.mxu0 0.0
    %6862 = vmatprep.subr.mxu0 0.0
    %6863 = vmatpush1.msra.mxu0 0.0
    %6864 = vmatprep.subr.mxu0 0.0
    %6865 = vmatpush1.msra.mxu0 0.0
    %6866 = vmatprep.subr.mxu0 0.0
    %6867 = vmatpush1.msra.mxu0 0.0
    %6868 = vmatprep.subr.mxu0 0.0
    %6869 = vmatpush1.msra.mxu0 0.0
    %6870 = vmatprep.subr.mxu0 0.0
    %6871 = vmatpush1.msra.mxu0 0.0
    %6872 = vmatprep.subr.mxu0 0.0
    %6873 = vmatpush1.msra.mxu0 0.0
    %6874 = vmatprep.subr.mxu0 0.0
    %6875 = vmatpush1.msra.mxu0 0.0
    %6876 = vmatprep.subr.mxu0 0.0
    %6877 = vmatpush1.msra.mxu0 0.0
    %6878 = vmatprep.subr.mxu0 0.0
    %6879 = vmatpush1.msra.mxu0 0.0
    %6880 = vmatprep.subr.mxu0 0.0
    %6881 = vmatpush1.msra.mxu0 0.0
    %6882 = vmatprep.subr.mxu0 0.0
    %6883 = vmatpush1.msra.mxu0 0.0
    %6884 = vmatprep.subr.mxu0 0.0
    %6885 = vmatpush1.msra.mxu0 0.0
    %6886 = vmatprep.subr.mxu0 0.0
    %6887 = vmatpush1.msra.mxu0 0.0
    %6888 = vmatprep.subr.mxu0 0.0
    %6889 = vmatpush1.msra.mxu0 0.0
    %6890 = vmatprep.subr.mxu0 0.0
    %6891 = vmatpush1.msra.mxu0 0.0
    %6892 = vmatprep.subr.mxu0 0.0
    %6893 = vmatpush1.msra.mxu0 0.0
    %6894 = vmatprep.subr.mxu0 0.0
    %6895 = vmatpush1.msra.mxu0 0.0
    %6896 = vmatprep.subr.mxu0 0.0
    %6897 = vmatpush1.msra.mxu0 0.0
    %6898 = vmatprep.subr.mxu0 0.0
    %6899 = vmatpush1.msra.mxu0 0.0
    %6900 = vmatprep.subr.mxu0 0.0
    %6901 = vmatpush1.msra.mxu0 0.0
    %6902 = vmatprep.subr.mxu0 0.0
    %6903 = vmatpush1.msra.mxu0 0.0
    %6904 = vmatprep.subr.mxu0 0.0
    %6905 = vmatpush1.msra.mxu0 0.0
    %6906 = vmatprep.subr.mxu0 0.0
    %6907 = vmatpush1.msra.mxu0 0.0
    %6908 = vmatprep.subr.mxu0 0.0
    %6909 = vmatpush1.msra.mxu0 0.0
    %6910 = vmatprep.subr.mxu0 0.0
    %6911 = vmatpush1.msra.mxu0 0.0
    %6912 = vmatprep.subr.mxu0 0.0
    %6913 = vmatpush1.msra.mxu0 0.0
    %6914 = vmatprep.subr.mxu0 0.0
    %6915 = vmatpush1.msra.mxu0 0.0
    %6916 = vmatprep.subr.mxu0 0.0
    %6917 = vmatpush1.msra.mxu0 0.0
    %6918 = vmatprep.mubr.f32.mxu0 0.0
    %v6919 = vand.u32 %v6767, 4294901760
    %6920 = vmatmul.mubr.f32.gmra.mrb[0].mxu0 %v6919
    %v6921 = vpop.f32.mrb[0].mxu0
    %v6922 = vadd.f32 %v6846, %v6921
    %v6923 = vpop.f32.mrb[0].mxu0
    %6924 = vdwg.mxu0
    %6925 = vmatprep.subr.mxu0 0.0
    %v6926 = vand.u32 %v6771, 4294901760
    %v6927 = vsub.f32 %v6771, %v6926
    %6928 = vmatpush1.msra.mxu0 %v6927
    %6929 = vmatprep.subr.mxu0 0.0
    %6930 = vmatpush1.msra.mxu0 0.0
    %6931 = vmatprep.subr.mxu0 0.0
    %6932 = vmatpush1.msra.mxu0 0.0
    %6933 = vmatprep.subr.mxu0 0.0
    %6934 = vmatpush1.msra.mxu0 0.0
    %6935 = vmatprep.subr.mxu0 0.0
    %6936 = vmatpush1.msra.mxu0 0.0
    %6937 = vmatprep.subr.mxu0 0.0
    %6938 = vmatpush1.msra.mxu0 0.0
    %6939 = vmatprep.subr.mxu0 0.0
    %6940 = vmatpush1.msra.mxu0 0.0
    %6941 = vmatprep.subr.mxu0 0.0
    %6942 = vmatpush1.msra.mxu0 0.0
    %6943 = vmatprep.subr.mxu0 0.0
    %6944 = vmatpush1.msra.mxu0 0.0
    %6945 = vmatprep.subr.mxu0 0.0
    %6946 = vmatpush1.msra.mxu0 0.0
    %6947 = vmatprep.subr.mxu0 0.0
    %6948 = vmatpush1.msra.mxu0 0.0
    %6949 = vmatprep.subr.mxu0 0.0
    %6950 = vmatpush1.msra.mxu0 0.0
    %6951 = vmatprep.subr.mxu0 0.0
    %6952 = vmatpush1.msra.mxu0 0.0
    %6953 = vmatprep.subr.mxu0 0.0
    %6954 = vmatpush1.msra.mxu0 0.0
    %6955 = vmatprep.subr.mxu0 0.0
    %6956 = vmatpush1.msra.mxu0 0.0
    %6957 = vmatprep.subr.mxu0 0.0
    %6958 = vmatpush1.msra.mxu0 0.0
    %6959 = vmatprep.subr.mxu0 0.0
    %6960 = vmatpush1.msra.mxu0 0.0
    %6961 = vmatprep.subr.mxu0 0.0
    %6962 = vmatpush1.msra.mxu0 0.0
    %6963 = vmatprep.subr.mxu0 0.0
    %6964 = vmatpush1.msra.mxu0 0.0
    %6965 = vmatprep.subr.mxu0 0.0
    %6966 = vmatpush1.msra.mxu0 0.0
    %6967 = vmatprep.subr.mxu0 0.0
    %6968 = vmatpush1.msra.mxu0 0.0
    %6969 = vmatprep.subr.mxu0 0.0
    %6970 = vmatpush1.msra.mxu0 0.0
    %6971 = vmatprep.subr.mxu0 0.0
    %6972 = vmatpush1.msra.mxu0 0.0
    %6973 = vmatprep.subr.mxu0 0.0
    %6974 = vmatpush1.msra.mxu0 0.0
    %6975 = vmatprep.subr.mxu0 0.0
    %6976 = vmatpush1.msra.mxu0 0.0
    %6977 = vmatprep.subr.mxu0 0.0
    %6978 = vmatpush1.msra.mxu0 0.0
    %6979 = vmatprep.subr.mxu0 0.0
    %6980 = vmatpush1.msra.mxu0 0.0
    %6981 = vmatprep.subr.mxu0 0.0
    %6982 = vmatpush1.msra.mxu0 0.0
    %6983 = vmatprep.subr.mxu0 0.0
    %6984 = vmatpush1.msra.mxu0 0.0
    %6985 = vmatprep.subr.mxu0 0.0
    %6986 = vmatpush1.msra.mxu0 0.0
    %6987 = vmatprep.subr.mxu0 0.0
    %6988 = vmatpush1.msra.mxu0 0.0
    %6989 = vmatprep.subr.mxu0 0.0
    %6990 = vmatpush1.msra.mxu0 0.0
    %6991 = vmatprep.mubr.f32.mxu0 0.0
    %v6992 = vand.u32 %v6767, 4294901760
    %v6993 = vsub.f32 %v6767, %v6992
    %6994 = vmatmul.mubr.f32.gmra.mrb[0].mxu0 %v6993
    %v6995 = vpop.f32.mrb[0].mxu0
    %v6996 = vadd.f32 %v6922, %v6995
    %v6997 = vpop.f32.mrb[0].mxu0
    %6998 = vdwg.mxu0
    %6999 = vmatprep.subr.mxu0 0.0
    %v7000 = vand.u32 %v6771, 4294901760
    %7001 = vmatpush1.msra.mxu0 %v7000
    %7002 = vmatprep.subr.mxu0 0.0
    %7003 = vmatpush1.msra.mxu0 0.0
    %7004 = vmatprep.subr.mxu0 0.0
    %7005 = vmatpush1.msra.mxu0 0.0
    %7006 = vmatprep.subr.mxu0 0.0
    %7007 = vmatpush1.msra.mxu0 0.0
    %7008 = vmatprep.subr.mxu0 0.0
    %7009 = vmatpush1.msra.mxu0 0.0
    %7010 = vmatprep.subr.mxu0 0.0
    %7011 = vmatpush1.msra.mxu0 0.0
    %7012 = vmatprep.subr.mxu0 0.0
    %7013 = vmatpush1.msra.mxu0 0.0
    %7014 = vmatprep.subr.mxu0 0.0
    %7015 = vmatpush1.msra.mxu0 0.0
    %7016 = vmatprep.subr.mxu0 0.0
    %7017 = vmatpush1.msra.mxu0 0.0
    %7018 = vmatprep.subr.mxu0 0.0
    %7019 = vmatpush1.msra.mxu0 0.0
    %7020 = vmatprep.subr.mxu0 0.0
    %7021 = vmatpush1.msra.mxu0 0.0
    %7022 = vmatprep.subr.mxu0 0.0
    %7023 = vmatpush1.msra.mxu0 0.0
    %7024 = vmatprep.subr.mxu0 0.0
    %7025 = vmatpush1.msra.mxu0 0.0
    %7026 = vmatprep.subr.mxu0 0.0
    %7027 = vmatpush1.msra.mxu0 0.0
    %7028 = vmatprep.subr.mxu0 0.0
    %7029 = vmatpush1.msra.mxu0 0.0
    %7030 = vmatprep.subr.mxu0 0.0
    %7031 = vmatpush1.msra.mxu0 0.0
    %7032 = vmatprep.subr.mxu0 0.0
    %7033 = vmatpush1.msra.mxu0 0.0
    %7034 = vmatprep.subr.mxu0 0.0
    %7035 = vmatpush1.msra.mxu0 0.0
    %7036 = vmatprep.subr.mxu0 0.0
    %7037 = vmatpush1.msra.mxu0 0.0
    %7038 = vmatprep.subr.mxu0 0.0
    %7039 = vmatpush1.msra.mxu0 0.0
    %7040 = vmatprep.subr.mxu0 0.0
    %7041 = vmatpush1.msra.mxu0 0.0
    %7042 = vmatprep.subr.mxu0 0.0
    %7043 = vmatpush1.msra.mxu0 0.0
    %7044 = vmatprep.subr.mxu0 0.0
    %7045 = vmatpush1.msra.mxu0 0.0
    %7046 = vmatprep.subr.mxu0 0.0
    %7047 = vmatpush1.msra.mxu0 0.0
    %7048 = vmatprep.subr.mxu0 0.0
    %7049 = vmatpush1.msra.mxu0 0.0
    %7050 = vmatprep.subr.mxu0 0.0
    %7051 = vmatpush1.msra.mxu0 0.0
    %7052 = vmatprep.subr.mxu0 0.0
    %7053 = vmatpush1.msra.mxu0 0.0
    %7054 = vmatprep.subr.mxu0 0.0
    %7055 = vmatpush1.msra.mxu0 0.0
    %7056 = vmatprep.subr.mxu0 0.0
    %7057 = vmatpush1.msra.mxu0 0.0
    %7058 = vmatprep.subr.mxu0 0.0
    %7059 = vmatpush1.msra.mxu0 0.0
    %7060 = vmatprep.subr.mxu0 0.0
    %7061 = vmatpush1.msra.mxu0 0.0
    %7062 = vmatprep.subr.mxu0 0.0
    %7063 = vmatpush1.msra.mxu0 0.0
    %7064 = vmatprep.mubr.f32.mxu0 0.0
    %v7065 = vand.u32 %v6767, 4294901760
    %v7066 = vsub.f32 %v6767, %v7065
    %v7067 = vand.u32 %v7066, 4294901760
    %7068 = vmatmul.mubr.f32.gmra.mrb[0].mxu0 %v7067
    %v7069 = vpop.f32.mrb[0].mxu0
    %v7070 = vadd.f32 %v6996, %v7069
    %v7071 = vpop.f32.mrb[0].mxu0
    %7072 = vdwg.mxu0
    %7073 = vmatprep.subr.mxu0 0.0
    %v7074 = vand.u32 %v6771, 4294901760
    %v7075 = vsub.f32 %v6771, %v7074
    %v7076 = vand.u32 %v7075, 4294901760
    %7077 = vmatpush1.msra.mxu0 %v7076
    %7078 = vmatprep.subr.mxu0 0.0
    %7079 = vmatpush1.msra.mxu0 0.0
    %7080 = vmatprep.subr.mxu0 0.0
    %7081 = vmatpush1.msra.mxu0 0.0
    %7082 = vmatprep.subr.mxu0 0.0
    %7083 = vmatpush1.msra.mxu0 0.0
    %7084 = vmatprep.subr.mxu0 0.0
    %7085 = vmatpush1.msra.mxu0 0.0
    %7086 = vmatprep.subr.mxu0 0.0
    %7087 = vmatpush1.msra.mxu0 0.0
    %7088 = vmatprep.subr.mxu0 0.0
    %7089 = vmatpush1.msra.mxu0 0.0
    %7090 = vmatprep.subr.mxu0 0.0
    %7091 = vmatpush1.msra.mxu0 0.0
    %7092 = vmatprep.subr.mxu0 0.0
    %7093 = vmatpush1.msra.mxu0 0.0
    %7094 = vmatprep.subr.mxu0 0.0
    %7095 = vmatpush1.msra.mxu0 0.0
    %7096 = vmatprep.subr.mxu0 0.0
    %7097 = vmatpush1.msra.mxu0 0.0
    %7098 = vmatprep.subr.mxu0 0.0
    %7099 = vmatpush1.msra.mxu0 0.0
    %7100 = vmatprep.subr.mxu0 0.0
    %7101 = vmatpush1.msra.mxu0 0.0
    %7102 = vmatprep.subr.mxu0 0.0
    %7103 = vmatpush1.msra.mxu0 0.0
    %7104 = vmatprep.subr.mxu0 0.0
    %7105 = vmatpush1.msra.mxu0 0.0
    %7106 = vmatprep.subr.mxu0 0.0
    %7107 = vmatpush1.msra.mxu0 0.0
    %7108 = vmatprep.subr.mxu0 0.0
    %7109 = vmatpush1.msra.mxu0 0.0
    %7110 = vmatprep.subr.mxu0 0.0
    %7111 = vmatpush1.msra.mxu0 0.0
    %7112 = vmatprep.subr.mxu0 0.0
    %7113 = vmatpush1.msra.mxu0 0.0
    %7114 = vmatprep.subr.mxu0 0.0
    %7115 = vmatpush1.msra.mxu0 0.0
    %7116 = vmatprep.subr.mxu0 0.0
    %7117 = vmatpush1.msra.mxu0 0.0
    %7118 = vmatprep.subr.mxu0 0.0
    %7119 = vmatpush1.msra.mxu0 0.0
    %7120 = vmatprep.subr.mxu0 0.0
    %7121 = vmatpush1.msra.mxu0 0.0
    %7122 = vmatprep.subr.mxu0 0.0
    %7123 = vmatpush1.msra.mxu0 0.0
    %7124 = vmatprep.subr.mxu0 0.0
    %7125 = vmatpush1.msra.mxu0 0.0
    %7126 = vmatprep.subr.mxu0 0.0
    %7127 = vmatpush1.msra.mxu0 0.0
    %7128 = vmatprep.subr.mxu0 0.0
    %7129 = vmatpush1.msra.mxu0 0.0
    %7130 = vmatprep.subr.mxu0 0.0
    %7131 = vmatpush1.msra.mxu0 0.0
    %7132 = vmatprep.subr.mxu0 0.0
    %7133 = vmatpush1.msra.mxu0 0.0
    %7134 = vmatprep.subr.mxu0 0.0
    %7135 = vmatpush1.msra.mxu0 0.0
    %7136 = vmatprep.subr.mxu0 0.0
    %7137 = vmatpush1.msra.mxu0 0.0
    %7138 = vmatprep.subr.mxu0 0.0
    %7139 = vmatpush1.msra.mxu0 0.0
    %7140 = vmatprep.mubr.f32.mxu0 0.0
    %v7141 = vand.u32 %v6767, 4294901760
    %7142 = vmatmul.mubr.f32.gmra.mrb[0].mxu0 %v7141
    %v7143 = vpop.f32.mrb[0].mxu0
    %v7144 = vadd.f32 %v7070, %v7143
    %v7145 = vpop.f32.mrb[0].mxu0
    %7146 = vdwg.mxu0
    %7147 = vmatprep.subr.mxu0 0.0
    %v7148 = vand.u32 %v6771, 4294901760
    %7149 = vmatpush1.msra.mxu0 %v7148
    %7150 = vmatprep.subr.mxu0 0.0
    %7151 = vmatpush1.msra.mxu0 0.0
    %7152 = vmatprep.subr.mxu0 0.0
    %7153 = vmatpush1.msra.mxu0 0.0
    %7154 = vmatprep.subr.mxu0 0.0
    %7155 = vmatpush1.msra.mxu0 0.0
    %7156 = vmatprep.subr.mxu0 0.0
    %7157 = vmatpush1.msra.mxu0 0.0
    %7158 = vmatprep.subr.mxu0 0.0
    %7159 = vmatpush1.msra.mxu0 0.0
    %7160 = vmatprep.subr.mxu0 0.0
    %7161 = vmatpush1.msra.mxu0 0.0
    %7162 = vmatprep.subr.mxu0 0.0
    %7163 = vmatpush1.msra.mxu0 0.0
    %7164 = vmatprep.subr.mxu0 0.0
    %7165 = vmatpush1.msra.mxu0 0.0
    %7166 = vmatprep.subr.mxu0 0.0
    %7167 = vmatpush1.msra.mxu0 0.0
    %7168 = vmatprep.subr.mxu0 0.0
    %7169 = vmatpush1.msra.mxu0 0.0
    %7170 = vmatprep.subr.mxu0 0.0
    %7171 = vmatpush1.msra.mxu0 0.0
    %7172 = vmatprep.subr.mxu0 0.0
    %7173 = vmatpush1.msra.mxu0 0.0
    %7174 = vmatprep.subr.mxu0 0.0
    %7175 = vmatpush1.msra.mxu0 0.0
    %7176 = vmatprep.subr.mxu0 0.0
    %7177 = vmatpush1.msra.mxu0 0.0
    %7178 = vmatprep.subr.mxu0 0.0
    %7179 = vmatpush1.msra.mxu0 0.0
    %7180 = vmatprep.subr.mxu0 0.0
    %7181 = vmatpush1.msra.mxu0 0.0
    %7182 = vmatprep.subr.mxu0 0.0
    %7183 = vmatpush1.msra.mxu0 0.0
    %7184 = vmatprep.subr.mxu0 0.0
    %7185 = vmatpush1.msra.mxu0 0.0
    %7186 = vmatprep.subr.mxu0 0.0
    %7187 = vmatpush1.msra.mxu0 0.0
    %7188 = vmatprep.subr.mxu0 0.0
    %7189 = vmatpush1.msra.mxu0 0.0
    %7190 = vmatprep.subr.mxu0 0.0
    %7191 = vmatpush1.msra.mxu0 0.0
    %7192 = vmatprep.subr.mxu0 0.0
    %7193 = vmatpush1.msra.mxu0 0.0
    %7194 = vmatprep.subr.mxu0 0.0
    %7195 = vmatpush1.msra.mxu0 0.0
    %7196 = vmatprep.subr.mxu0 0.0
    %7197 = vmatpush1.msra.mxu0 0.0
    %7198 = vmatprep.subr.mxu0 0.0
    %7199 = vmatpush1.msra.mxu0 0.0
    %7200 = vmatprep.subr.mxu0 0.0
    %7201 = vmatpush1.msra.mxu0 0.0
    %7202 = vmatprep.subr.mxu0 0.0
    %7203 = vmatpush1.msra.mxu0 0.0
    %7204 = vmatprep.subr.mxu0 0.0
    %7205 = vmatpush1.msra.mxu0 0.0
    %7206 = vmatprep.subr.mxu0 0.0
    %7207 = vmatpush1.msra.mxu0 0.0
    %7208 = vmatprep.subr.mxu0 0.0
    %7209 = vmatpush1.msra.mxu0 0.0
    %7210 = vmatprep.subr.mxu0 0.0
    %7211 = vmatpush1.msra.mxu0 0.0
    %7212 = vmatprep.mubr.f32.mxu0 0.0
    %v7213 = vand.u32 %v6767, 4294901760
    %7214 = vmatmul.mubr.f32.gmra.mrb[0].mxu0 %v7213
    %v7215 = vpop.f32.mrb[0].mxu0
    %v7216 = vadd.f32 %v7144, %v7215
    %v7217 = vpop.f32.mrb[0].mxu0
    %7218 = vdwg.mxu0
    %v7219 = vlaneseq
    %v7220 = vshrl.u32 %v7219, 7
    %v7221 = vsub.s32 0, %v7220
    %v7222 = vrot.slane %v7216, %v7221
    %v7223 = vmul.f32 %v6162, %v7222
    %v7224 = vlaneseq
    %v7225 = vshrl.u32 %v7224, 7
    %v7226 = vsub.s32 1, %v7225
    %v7227 = vrot.slane %v7216, %v7226
    %v7228 = vadd.f32 %v7223, %v7227
    %v7229 = vmul.f32 %v7228, 0.1
    %v7230 = vmax.f32 %v7228, %v7229
    %v7231 = vld [vmem:[%s25] sm:$0xff]
    %v7232 = vld [vmem:[%s25 + $0x8] sm:$0xff]
    %v7233 = vld [vmem:[%s25 + $0x10] sm:$0xff]
    %v7234 = vld [vmem:[%s25 + $0x18] sm:$0xff]
    %v7235 = vld [vmem:[%s25 + $0x20] sm:$0xff]
    %v7236 = vld [vmem:[%s25 + $0x28] sm:$0xff]
    %v7237 = vld [vmem:[%s25 + $0x30] sm:$0xff]
    %v7238 = vld [vmem:[%s25 + $0x38] sm:$0xff]
    %v7239 = vld [vmem:[%s26] sm:$0x1]
    %v7241 = vlaneseq
    %v7242 = vshrl.u32 %v7241, 7
    %v7243 = vsub.s32 0, %v7242
    %v7244 = vrot.slane %v7239, %v7243
    %v7247 = vsel %vm6186, %v7230, 0
    %7249 = vmatprep.subr.mxu0 0.0
    %v7250 = vand.u32 %v7231, 4294901760
    %7251 = vmatpush1.msra.mxu0 %v7250
    %7252 = vmatprep.subr.mxu0 0.0
    %v7253 = vand.u32 %v7232, 4294901760
    %7254 = vmatpush1.msra.mxu0 %v7253
    %7255 = vmatprep.subr.mxu0 0.0
    %v7256 = vand.u32 %v7233, 4294901760
    %7257 = vmatpush1.msra.mxu0 %v7256
    %7258 = vmatprep.subr.mxu0 0.0
    %v7259 = vand.u32 %v7234, 4294901760
    %7260 = vmatpush1.msra.mxu0 %v7259
    %7261 = vmatprep.subr.mxu0 0.0
    %v7262 = vand.u32 %v7235, 4294901760
    %7263 = vmatpush1.msra.mxu0 %v7262
    %7264 = vmatprep.subr.mxu0 0.0
    %v7265 = vand.u32 %v7236, 4294901760
    %7266 = vmatpush1.msra.mxu0 %v7265
    %7267 = vmatprep.subr.mxu0 0.0
    %v7268 = vand.u32 %v7237, 4294901760
    %7269 = vmatpush1.msra.mxu0 %v7268
    %7270 = vmatprep.subr.mxu0 0.0
    %v7271 = vand.u32 %v7238, 4294901760
    %7272 = vmatpush1.msra.mxu0 %v7271
    %7273 = vmatprep.subr.mxu0 0.0
    %7274 = vmatpush1.msra.mxu0 0.0
    %7275 = vmatprep.subr.mxu0 0.0
    %7276 = vmatpush1.msra.mxu0 0.0
    %7277 = vmatprep.subr.mxu0 0.0
    %7278 = vmatpush1.msra.mxu0 0.0
    %7279 = vmatprep.subr.mxu0 0.0
    %7280 = vmatpush1.msra.mxu0 0.0
    %7281 = vmatprep.subr.mxu0 0.0
    %7282 = vmatpush1.msra.mxu0 0.0
    %7283 = vmatprep.subr.mxu0 0.0
    %7284 = vmatpush1.msra.mxu0 0.0
    %7285 = vmatprep.subr.mxu0 0.0
    %7286 = vmatpush1.msra.mxu0 0.0
    %7287 = vmatprep.subr.mxu0 0.0
    %7288 = vmatpush1.msra.mxu0 0.0
    %7289 = vmatprep.subr.mxu0 0.0
    %7290 = vmatpush1.msra.mxu0 0.0
    %7291 = vmatprep.subr.mxu0 0.0
    %7292 = vmatpush1.msra.mxu0 0.0
    %7293 = vmatprep.subr.mxu0 0.0
    %7294 = vmatpush1.msra.mxu0 0.0
    %7295 = vmatprep.subr.mxu0 0.0
    %7296 = vmatpush1.msra.mxu0 0.0
    %7297 = vmatprep.subr.mxu0 0.0
    %7298 = vmatpush1.msra.mxu0 0.0
    %7299 = vmatprep.subr.mxu0 0.0
    %7300 = vmatpush1.msra.mxu0 0.0
    %7301 = vmatprep.subr.mxu0 0.0
    %7302 = vmatpush1.msra.mxu0 0.0
    %7303 = vmatprep.subr.mxu0 0.0
    %7304 = vmatpush1.msra.mxu0 0.0
    %7305 = vmatprep.subr.mxu0 0.0
    %7306 = vmatpush1.msra.mxu0 0.0
    %7307 = vmatprep.subr.mxu0 0.0
    %7308 = vmatpush1.msra.mxu0 0.0
    %7309 = vmatprep.subr.mxu0 0.0
    %7310 = vmatpush1.msra.mxu0 0.0
    %7311 = vmatprep.subr.mxu0 0.0
    %7312 = vmatpush1.msra.mxu0 0.0
    %7313 = vmatprep.subr.mxu0 0.0
    %7314 = vmatpush1.msra.mxu0 0.0
    %7315 = vmatprep.subr.mxu0 0.0
    %7316 = vmatpush1.msra.mxu0 0.0
    %7317 = vmatprep.subr.mxu0 0.0
    %7318 = vmatpush1.msra.mxu0 0.0
    %7319 = vmatprep.subr.mxu0 0.0
    %7320 = vmatpush1.msra.mxu0 0.0
    %7321 = vmatprep.mubr.f32.mxu0 0.0
    %v7322 = vand.u32 %v7247, 4294901760
    %v7323 = vsub.f32 %v7247, %v7322
    %v7324 = vand.u32 %v7323, 4294901760
    %v7325 = vsub.f32 %v7323, %v7324
    %v7326 = vand.u32 %v7325, 4294901760
    %7327 = vmatmul.mubr.f32.gmra.mrb[0].mxu0 %v7326
    %v7328 = vpop.f32.mrb[0].mxu0
    %v7329 = vadd.f32 %v7244, %v7328
    %v7330 = vpop.f32.mrb[0].mxu0
    %7331 = vdwg.mxu0
    %7332 = vmatprep.subr.mxu0 0.0
    %v7333 = vand.u32 %v7231, 4294901760
    %v7334 = vsub.f32 %v7231, %v7333
    %v7335 = vand.u32 %v7334, 4294901760
    %v7336 = vsub.f32 %v7334, %v7335
    %v7337 = vand.u32 %v7336, 4294901760
    %7338 = vmatpush1.msra.mxu0 %v7337
    %7339 = vmatprep.subr.mxu0 0.0
    %v7340 = vand.u32 %v7232, 4294901760
    %v7341 = vsub.f32 %v7232, %v7340
    %v7342 = vand.u32 %v7341, 4294901760
    %v7343 = vsub.f32 %v7341, %v7342
    %v7344 = vand.u32 %v7343, 4294901760
    %7345 = vmatpush1.msra.mxu0 %v7344
    %7346 = vmatprep.subr.mxu0 0.0
    %v7347 = vand.u32 %v7233, 4294901760
    %v7348 = vsub.f32 %v7233, %v7347
    %v7349 = vand.u32 %v7348, 4294901760
    %v7350 = vsub.f32 %v7348, %v7349
    %v7351 = vand.u32 %v7350, 4294901760
    %7352 = vmatpush1.msra.mxu0 %v7351
    %7353 = vmatprep.subr.mxu0 0.0
    %v7354 = vand.u32 %v7234, 4294901760
    %v7355 = vsub.f32 %v7234, %v7354
    %v7356 = vand.u32 %v7355, 4294901760
    %v7357 = vsub.f32 %v7355, %v7356
    %v7358 = vand.u32 %v7357, 4294901760
    %7359 = vmatpush1.msra.mxu0 %v7358
    %7360 = vmatprep.subr.mxu0 0.0
    %v7361 = vand.u32 %v7235, 4294901760
    %v7362 = vsub.f32 %v7235, %v7361
    %v7363 = vand.u32 %v7362, 4294901760
    %v7364 = vsub.f32 %v7362, %v7363
    %v7365 = vand.u32 %v7364, 4294901760
    %7366 = vmatpush1.msra.mxu0 %v7365
    %7367 = vmatprep.subr.mxu0 0.0
    %v7368 = vand.u32 %v7236, 4294901760
    %v7369 = vsub.f32 %v7236, %v7368
    %v7370 = vand.u32 %v7369, 4294901760
    %v7371 = vsub.f32 %v7369, %v7370
    %v7372 = vand.u32 %v7371, 4294901760
    %7373 = vmatpush1.msra.mxu0 %v7372
    %7374 = vmatprep.subr.mxu0 0.0
    %v7375 = vand.u32 %v7237, 4294901760
    %v7376 = vsub.f32 %v7237, %v7375
    %v7377 = vand.u32 %v7376, 4294901760
    %v7378 = vsub.f32 %v7376, %v7377
    %v7379 = vand.u32 %v7378, 4294901760
    %7380 = vmatpush1.msra.mxu0 %v7379
    %7381 = vmatprep.subr.mxu0 0.0
    %v7382 = vand.u32 %v7238, 4294901760
    %v7383 = vsub.f32 %v7238, %v7382
    %v7384 = vand.u32 %v7383, 4294901760
    %v7385 = vsub.f32 %v7383, %v7384
    %v7386 = vand.u32 %v7385, 4294901760
    %7387 = vmatpush1.msra.mxu0 %v7386
    %7388 = vmatprep.subr.mxu0 0.0
    %7389 = vmatpush1.msra.mxu0 0.0
    %7390 = vmatprep.subr.mxu0 0.0
    %7391 = vmatpush1.msra.mxu0 0.0
    %7392 = vmatprep.subr.mxu0 0.0
    %7393 = vmatpush1.msra.mxu0 0.0
    %7394 = vmatprep.subr.mxu0 0.0
    %7395 = vmatpush1.msra.mxu0 0.0
    %7396 = vmatprep.subr.mxu0 0.0
    %7397 = vmatpush1.msra.mxu0 0.0
    %7398 = vmatprep.subr.mxu0 0.0
    %7399 = vmatpush1.msra.mxu0 0.0
    %7400 = vmatprep.subr.mxu0 0.0
    %7401 = vmatpush1.msra.mxu0 0.0
    %7402 = vmatprep.subr.mxu0 0.0
    %7403 = vmatpush1.msra.mxu0 0.0
    %7404 = vmatprep.subr.mxu0 0.0
    %7405 = vmatpush1.msra.mxu0 0.0
    %7406 = vmatprep.subr.mxu0 0.0
    %7407 = vmatpush1.msra.mxu0 0.0
    %7408 = vmatprep.subr.mxu0 0.0
    %7409 = vmatpush1.msra.mxu0 0.0
    %7410 = vmatprep.subr.mxu0 0.0
    %7411 = vmatpush1.msra.mxu0 0.0
    %7412 = vmatprep.subr.mxu0 0.0
    %7413 = vmatpush1.msra.mxu0 0.0
    %7414 = vmatprep.subr.mxu0 0.0
    %7415 = vmatpush1.msra.mxu0 0.0
    %7416 = vmatprep.subr.mxu0 0.0
    %7417 = vmatpush1.msra.mxu0 0.0
    %7418 = vmatprep.subr.mxu0 0.0
    %7419 = vmatpush1.msra.mxu0 0.0
    %7420 = vmatprep.subr.mxu0 0.0
    %7421 = vmatpush1.msra.mxu0 0.0
    %7422 = vmatprep.subr.mxu0 0.0
    %7423 = vmatpush1.msra.mxu0 0.0
    %7424 = vmatprep.subr.mxu0 0.0
    %7425 = vmatpush1.msra.mxu0 0.0
    %7426 = vmatprep.subr.mxu0 0.0
    %7427 = vmatpush1.msra.mxu0 0.0
    %7428 = vmatprep.subr.mxu0 0.0
    %7429 = vmatpush1.msra.mxu0 0.0
    %7430 = vmatprep.subr.mxu0 0.0
    %7431 = vmatpush1.msra.mxu0 0.0
    %7432 = vmatprep.subr.mxu0 0.0
    %7433 = vmatpush1.msra.mxu0 0.0
    %7434 = vmatprep.subr.mxu0 0.0
    %7435 = vmatpush1.msra.mxu0 0.0
    %7436 = vmatprep.mubr.f32.mxu0 0.0
    %v7437 = vand.u32 %v7247, 4294901760
    %7438 = vmatmul.mubr.f32.gmra.mrb[0].mxu0 %v7437
    %v7439 = vpop.f32.mrb[0].mxu0
    %v7440 = vadd.f32 %v7329, %v7439
    %v7441 = vpop.f32.mrb[0].mxu0
    %7442 = vdwg.mxu0
    %7443 = vmatprep.subr.mxu0 0.0
    %v7444 = vand.u32 %v7231, 4294901760
    %v7445 = vsub.f32 %v7231, %v7444
    %7446 = vmatpush1.msra.mxu0 %v7445
    %7447 = vmatprep.subr.mxu0 0.0
    %v7448 = vand.u32 %v7232, 4294901760
    %v7449 = vsub.f32 %v7232, %v7448
    %7450 = vmatpush1.msra.mxu0 %v7449
    %7451 = vmatprep.subr.mxu0 0.0
    %v7452 = vand.u32 %v7233, 4294901760
    %v7453 = vsub.f32 %v7233, %v7452
    %7454 = vmatpush1.msra.mxu0 %v7453
    %7455 = vmatprep.subr.mxu0 0.0
    %v7456 = vand.u32 %v7234, 4294901760
    %v7457 = vsub.f32 %v7234, %v7456
    %7458 = vmatpush1.msra.mxu0 %v7457
    %7459 = vmatprep.subr.mxu0 0.0
    %v7460 = vand.u32 %v7235, 4294901760
    %v7461 = vsub.f32 %v7235, %v7460
    %7462 = vmatpush1.msra.mxu0 %v7461
    %7463 = vmatprep.subr.mxu0 0.0
    %v7464 = vand.u32 %v7236, 4294901760
    %v7465 = vsub.f32 %v7236, %v7464
    %7466 = vmatpush1.msra.mxu0 %v7465
    %7467 = vmatprep.subr.mxu0 0.0
    %v7468 = vand.u32 %v7237, 4294901760
    %v7469 = vsub.f32 %v7237, %v7468
    %7470 = vmatpush1.msra.mxu0 %v7469
    %7471 = vmatprep.subr.mxu0 0.0
    %v7472 = vand.u32 %v7238, 4294901760
    %v7473 = vsub.f32 %v7238, %v7472
    %7474 = vmatpush1.msra.mxu0 %v7473
    %7475 = vmatprep.subr.mxu0 0.0
    %7476 = vmatpush1.msra.mxu0 0.0
    %7477 = vmatprep.subr.mxu0 0.0
    %7478 = vmatpush1.msra.mxu0 0.0
    %7479 = vmatprep.subr.mxu0 0.0
    %7480 = vmatpush1.msra.mxu0 0.0
    %7481 = vmatprep.subr.mxu0 0.0
    %7482 = vmatpush1.msra.mxu0 0.0
    %7483 = vmatprep.subr.mxu0 0.0
    %7484 = vmatpush1.msra.mxu0 0.0
    %7485 = vmatprep.subr.mxu0 0.0
    %7486 = vmatpush1.msra.mxu0 0.0
    %7487 = vmatprep.subr.mxu0 0.0
    %7488 = vmatpush1.msra.mxu0 0.0
    %7489 = vmatprep.subr.mxu0 0.0
    %7490 = vmatpush1.msra.mxu0 0.0
    %7491 = vmatprep.subr.mxu0 0.0
    %7492 = vmatpush1.msra.mxu0 0.0
    %7493 = vmatprep.subr.mxu0 0.0
    %7494 = vmatpush1.msra.mxu0 0.0
    %7495 = vmatprep.subr.mxu0 0.0
    %7496 = vmatpush1.msra.mxu0 0.0
    %7497 = vmatprep.subr.mxu0 0.0
    %7498 = vmatpush1.msra.mxu0 0.0
    %7499 = vmatprep.subr.mxu0 0.0
    %7500 = vmatpush1.msra.mxu0 0.0
    %7501 = vmatprep.subr.mxu0 0.0
    %7502 = vmatpush1.msra.mxu0 0.0
    %7503 = vmatprep.subr.mxu0 0.0
    %7504 = vmatpush1.msra.mxu0 0.0
    %7505 = vmatprep.subr.mxu0 0.0
    %7506 = vmatpush1.msra.mxu0 0.0
    %7507 = vmatprep.subr.mxu0 0.0
    %7508 = vmatpush1.msra.mxu0 0.0
    %7509 = vmatprep.subr.mxu0 0.0
    %7510 = vmatpush1.msra.mxu0 0.0
    %7511 = vmatprep.subr.mxu0 0.0
    %7512 = vmatpush1.msra.mxu0 0.0
    %7513 = vmatprep.subr.mxu0 0.0
    %7514 = vmatpush1.msra.mxu0 0.0
    %7515 = vmatprep.subr.mxu0 0.0
    %7516 = vmatpush1.msra.mxu0 0.0
    %7517 = vmatprep.subr.mxu0 0.0
    %7518 = vmatpush1.msra.mxu0 0.0
    %7519 = vmatprep.subr.mxu0 0.0
    %7520 = vmatpush1.msra.mxu0 0.0
    %7521 = vmatprep.subr.mxu0 0.0
    %7522 = vmatpush1.msra.mxu0 0.0
    %7523 = vmatprep.mubr.f32.mxu0 0.0
    %v7524 = vand.u32 %v7247, 4294901760
    %v7525 = vsub.f32 %v7247, %v7524
    %7526 = vmatmul.mubr.f32.gmra.mrb[0].mxu0 %v7525
    %v7527 = vpop.f32.mrb[0].mxu0
    %v7528 = vadd.f32 %v7440, %v7527
    %v7529 = vpop.f32.mrb[0].mxu0
    %7530 = vdwg.mxu0
    %7531 = vmatprep.subr.mxu0 0.0
    %v7532 = vand.u32 %v7231, 4294901760
    %7533 = vmatpush1.msra.mxu0 %v7532
    %7534 = vmatprep.subr.mxu0 0.0
    %v7535 = vand.u32 %v7232, 4294901760
    %7536 = vmatpush1.msra.mxu0 %v7535
    %7537 = vmatprep.subr.mxu0 0.0
    %v7538 = vand.u32 %v7233, 4294901760
    %7539 = vmatpush1.msra.mxu0 %v7538
    %7540 = vmatprep.subr.mxu0 0.0
    %v7541 = vand.u32 %v7234, 4294901760
    %7542 = vmatpush1.msra.mxu0 %v7541
    %7543 = vmatprep.subr.mxu0 0.0
    %v7544 = vand.u32 %v7235, 4294901760
    %7545 = vmatpush1.msra.mxu0 %v7544
    %7546 = vmatprep.subr.mxu0 0.0
    %v7547 = vand.u32 %v7236, 4294901760
    %7548 = vmatpush1.msra.mxu0 %v7547
    %7549 = vmatprep.subr.mxu0 0.0
    %v7550 = vand.u32 %v7237, 4294901760
    %7551 = vmatpush1.msra.mxu0 %v7550
    %7552 = vmatprep.subr.mxu0 0.0
    %v7553 = vand.u32 %v7238, 4294901760
    %7554 = vmatpush1.msra.mxu0 %v7553
    %7555 = vmatprep.subr.mxu0 0.0
    %7556 = vmatpush1.msra.mxu0 0.0
    %7557 = vmatprep.subr.mxu0 0.0
    %7558 = vmatpush1.msra.mxu0 0.0
    %7559 = vmatprep.subr.mxu0 0.0
    %7560 = vmatpush1.msra.mxu0 0.0
    %7561 = vmatprep.subr.mxu0 0.0
    %7562 = vmatpush1.msra.mxu0 0.0
    %7563 = vmatprep.subr.mxu0 0.0
    %7564 = vmatpush1.msra.mxu0 0.0
    %7565 = vmatprep.subr.mxu0 0.0
    %7566 = vmatpush1.msra.mxu0 0.0
    %7567 = vmatprep.subr.mxu0 0.0
    %7568 = vmatpush1.msra.mxu0 0.0
    %7569 = vmatprep.subr.mxu0 0.0
    %7570 = vmatpush1.msra.mxu0 0.0
    %7571 = vmatprep.subr.mxu0 0.0
    %7572 = vmatpush1.msra.mxu0 0.0
    %7573 = vmatprep.subr.mxu0 0.0
    %7574 = vmatpush1.msra.mxu0 0.0
    %7575 = vmatprep.subr.mxu0 0.0
    %7576 = vmatpush1.msra.mxu0 0.0
    %7577 = vmatprep.subr.mxu0 0.0
    %7578 = vmatpush1.msra.mxu0 0.0
    %7579 = vmatprep.subr.mxu0 0.0
    %7580 = vmatpush1.msra.mxu0 0.0
    %7581 = vmatprep.subr.mxu0 0.0
    %7582 = vmatpush1.msra.mxu0 0.0
    %7583 = vmatprep.subr.mxu0 0.0
    %7584 = vmatpush1.msra.mxu0 0.0
    %7585 = vmatprep.subr.mxu0 0.0
    %7586 = vmatpush1.msra.mxu0 0.0
    %7587 = vmatprep.subr.mxu0 0.0
    %7588 = vmatpush1.msra.mxu0 0.0
    %7589 = vmatprep.subr.mxu0 0.0
    %7590 = vmatpush1.msra.mxu0 0.0
    %7591 = vmatprep.subr.mxu0 0.0
    %7592 = vmatpush1.msra.mxu0 0.0
    %7593 = vmatprep.subr.mxu0 0.0
    %7594 = vmatpush1.msra.mxu0 0.0
    %7595 = vmatprep.subr.mxu0 0.0
    %7596 = vmatpush1.msra.mxu0 0.0
    %7597 = vmatprep.subr.mxu0 0.0
    %7598 = vmatpush1.msra.mxu0 0.0
    %7599 = vmatprep.subr.mxu0 0.0
    %7600 = vmatpush1.msra.mxu0 0.0
    %7601 = vmatprep.subr.mxu0 0.0
    %7602 = vmatpush1.msra.mxu0 0.0
    %7603 = vmatprep.mubr.f32.mxu0 0.0
    %v7604 = vand.u32 %v7247, 4294901760
    %v7605 = vsub.f32 %v7247, %v7604
    %v7606 = vand.u32 %v7605, 4294901760
    %7607 = vmatmul.mubr.f32.gmra.mrb[0].mxu0 %v7606
    %v7608 = vpop.f32.mrb[0].mxu0
    %v7609 = vadd.f32 %v7528, %v7608
    %v7610 = vpop.f32.mrb[0].mxu0
    %7611 = vdwg.mxu0
    %7612 = vmatprep.subr.mxu0 0.0
    %v7613 = vand.u32 %v7231, 4294901760
    %v7614 = vsub.f32 %v7231, %v7613
    %v7615 = vand.u32 %v7614, 4294901760
    %7616 = vmatpush1.msra.mxu0 %v7615
    %7617 = vmatprep.subr.mxu0 0.0
    %v7618 = vand.u32 %v7232, 4294901760
    %v7619 = vsub.f32 %v7232, %v7618
    %v7620 = vand.u32 %v7619, 4294901760
    %7621 = vmatpush1.msra.mxu0 %v7620
    %7622 = vmatprep.subr.mxu0 0.0
    %v7623 = vand.u32 %v7233, 4294901760
    %v7624 = vsub.f32 %v7233, %v7623
    %v7625 = vand.u32 %v7624, 4294901760
    %7626 = vmatpush1.msra.mxu0 %v7625
    %7627 = vmatprep.subr.mxu0 0.0
    %v7628 = vand.u32 %v7234, 4294901760
    %v7629 = vsub.f32 %v7234, %v7628
    %v7630 = vand.u32 %v7629, 4294901760
    %7631 = vmatpush1.msra.mxu0 %v7630
    %7632 = vmatprep.subr.mxu0 0.0
    %v7633 = vand.u32 %v7235, 4294901760
    %v7634 = vsub.f32 %v7235, %v7633
    %v7635 = vand.u32 %v7634, 4294901760
    %7636 = vmatpush1.msra.mxu0 %v7635
    %7637 = vmatprep.subr.mxu0 0.0
    %v7638 = vand.u32 %v7236, 4294901760
    %v7639 = vsub.f32 %v7236, %v7638
    %v7640 = vand.u32 %v7639, 4294901760
    %7641 = vmatpush1.msra.mxu0 %v7640
    %7642 = vmatprep.subr.mxu0 0.0
    %v7643 = vand.u32 %v7237, 4294901760
    %v7644 = vsub.f32 %v7237, %v7643
    %v7645 = vand.u32 %v7644, 4294901760
    %7646 = vmatpush1.msra.mxu0 %v7645
    %7647 = vmatprep.subr.mxu0 0.0
    %v7648 = vand.u32 %v7238, 4294901760
    %v7649 = vsub.f32 %v7238, %v7648
    %v7650 = vand.u32 %v7649, 4294901760
    %7651 = vmatpush1.msra.mxu0 %v7650
    %7652 = vmatprep.subr.mxu0 0.0
    %7653 = vmatpush1.msra.mxu0 0.0
    %7654 = vmatprep.subr.mxu0 0.0
    %7655 = vmatpush1.msra.mxu0 0.0
    %7656 = vmatprep.subr.mxu0 0.0
    %7657 = vmatpush1.msra.mxu0 0.0
    %7658 = vmatprep.subr.mxu0 0.0
    %7659 = vmatpush1.msra.mxu0 0.0
    %7660 = vmatprep.subr.mxu0 0.0
    %7661 = vmatpush1.msra.mxu0 0.0
    %7662 = vmatprep.subr.mxu0 0.0
    %7663 = vmatpush1.msra.mxu0 0.0
    %7664 = vmatprep.subr.mxu0 0.0
    %7665 = vmatpush1.msra.mxu0 0.0
    %7666 = vmatprep.subr.mxu0 0.0
    %7667 = vmatpush1.msra.mxu0 0.0
    %7668 = vmatprep.subr.mxu0 0.0
    %7669 = vmatpush1.msra.mxu0 0.0
    %7670 = vmatprep.subr.mxu0 0.0
    %7671 = vmatpush1.msra.mxu0 0.0
    %7672 = vmatprep.subr.mxu0 0.0
    %7673 = vmatpush1.msra.mxu0 0.0
    %7674 = vmatprep.subr.mxu0 0.0
    %7675 = vmatpush1.msra.mxu0 0.0
    %7676 = vmatprep.subr.mxu0 0.0
    %7677 = vmatpush1.msra.mxu0 0.0
    %7678 = vmatprep.subr.mxu0 0.0
    %7679 = vmatpush1.msra.mxu0 0.0
    %7680 = vmatprep.subr.mxu0 0.0
    %7681 = vmatpush1.msra.mxu0 0.0
    %7682 = vmatprep.subr.mxu0 0.0
    %7683 = vmatpush1.msra.mxu0 0.0
    %7684 = vmatprep.subr.mxu0 0.0
    %7685 = vmatpush1.msra.mxu0 0.0
    %7686 = vmatprep.subr.mxu0 0.0
    %7687 = vmatpush1.msra.mxu0 0.0
    %7688 = vmatprep.subr.mxu0 0.0
    %7689 = vmatpush1.msra.mxu0 0.0
    %7690 = vmatprep.subr.mxu0 0.0
    %7691 = vmatpush1.msra.mxu0 0.0
    %7692 = vmatprep.subr.mxu0 0.0
    %7693 = vmatpush1.msra.mxu0 0.0
    %7694 = vmatprep.subr.mxu0 0.0
    %7695 = vmatpush1.msra.mxu0 0.0
    %7696 = vmatprep.subr.mxu0 0.0
    %7697 = vmatpush1.msra.mxu0 0.0
    %7698 = vmatprep.subr.mxu0 0.0
    %7699 = vmatpush1.msra.mxu0 0.0
    %7700 = vmatprep.mubr.f32.mxu0 0.0
    %v7701 = vand.u32 %v7247, 4294901760
    %7702 = vmatmul.mubr.f32.gmra.mrb[0].mxu0 %v7701
    %v7703 = vpop.f32.mrb[0].mxu0
    %v7704 = vadd.f32 %v7609, %v7703
    %v7705 = vpop.f32.mrb[0].mxu0
    %7706 = vdwg.mxu0
    %7707 = vmatprep.subr.mxu0 0.0
    %v7708 = vand.u32 %v7231, 4294901760
    %7709 = vmatpush1.msra.mxu0 %v7708
    %7710 = vmatprep.subr.mxu0 0.0
    %v7711 = vand.u32 %v7232, 4294901760
    %7712 = vmatpush1.msra.mxu0 %v7711
    %7713 = vmatprep.subr.mxu0 0.0
    %v7714 = vand.u32 %v7233, 4294901760
    %7715 = vmatpush1.msra.mxu0 %v7714
    %7716 = vmatprep.subr.mxu0 0.0
    %v7717 = vand.u32 %v7234, 4294901760
    %7718 = vmatpush1.msra.mxu0 %v7717
    %7719 = vmatprep.subr.mxu0 0.0
    %v7720 = vand.u32 %v7235, 4294901760
    %7721 = vmatpush1.msra.mxu0 %v7720
    %7722 = vmatprep.subr.mxu0 0.0
    %v7723 = vand.u32 %v7236, 4294901760
    %7724 = vmatpush1.msra.mxu0 %v7723
    %7725 = vmatprep.subr.mxu0 0.0
    %v7726 = vand.u32 %v7237, 4294901760
    %7727 = vmatpush1.msra.mxu0 %v7726
    %7728 = vmatprep.subr.mxu0 0.0
    %v7729 = vand.u32 %v7238, 4294901760
    %7730 = vmatpush1.msra.mxu0 %v7729
    %7731 = vmatprep.subr.mxu0 0.0
    %7732 = vmatpush1.msra.mxu0 0.0
    %7733 = vmatprep.subr.mxu0 0.0
    %7734 = vmatpush1.msra.mxu0 0.0
    %7735 = vmatprep.subr.mxu0 0.0
    %7736 = vmatpush1.msra.mxu0 0.0
    %7737 = vmatprep.subr.mxu0 0.0
    %7738 = vmatpush1.msra.mxu0 0.0
    %7739 = vmatprep.subr.mxu0 0.0
    %7740 = vmatpush1.msra.mxu0 0.0
    %7741 = vmatprep.subr.mxu0 0.0
    %7742 = vmatpush1.msra.mxu0 0.0
    %7743 = vmatprep.subr.mxu0 0.0
    %7744 = vmatpush1.msra.mxu0 0.0
    %7745 = vmatprep.subr.mxu0 0.0
    %7746 = vmatpush1.msra.mxu0 0.0
    %7747 = vmatprep.subr.mxu0 0.0
    %7748 = vmatpush1.msra.mxu0 0.0
    %7749 = vmatprep.subr.mxu0 0.0
    %7750 = vmatpush1.msra.mxu0 0.0
    %7751 = vmatprep.subr.mxu0 0.0
    %7752 = vmatpush1.msra.mxu0 0.0
    %7753 = vmatprep.subr.mxu0 0.0
    %7754 = vmatpush1.msra.mxu0 0.0
    %7755 = vmatprep.subr.mxu0 0.0
    %7756 = vmatpush1.msra.mxu0 0.0
    %7757 = vmatprep.subr.mxu0 0.0
    %7758 = vmatpush1.msra.mxu0 0.0
    %7759 = vmatprep.subr.mxu0 0.0
    %7760 = vmatpush1.msra.mxu0 0.0
    %7761 = vmatprep.subr.mxu0 0.0
    %7762 = vmatpush1.msra.mxu0 0.0
    %7763 = vmatprep.subr.mxu0 0.0
    %7764 = vmatpush1.msra.mxu0 0.0
    %7765 = vmatprep.subr.mxu0 0.0
    %7766 = vmatpush1.msra.mxu0 0.0
    %7767 = vmatprep.subr.mxu0 0.0
    %7768 = vmatpush1.msra.mxu0 0.0
    %7769 = vmatprep.subr.mxu0 0.0
    %7770 = vmatpush1.msra.mxu0 0.0
    %7771 = vmatprep.subr.mxu0 0.0
    %7772 = vmatpush1.msra.mxu0 0.0
    %7773 = vmatprep.subr.mxu0 0.0
    %7774 = vmatpush1.msra.mxu0 0.0
    %7775 = vmatprep.subr.mxu0 0.0
    %7776 = vmatpush1.msra.mxu0 0.0
    %7777 = vmatprep.subr.mxu0 0.0
    %7778 = vmatpush1.msra.mxu0 0.0
    %7779 = vmatprep.mubr.f32.mxu0 0.0
    %v7780 = vand.u32 %v7247, 4294901760
    %7781 = vmatmul.mubr.f32.gmra.mrb[0].mxu0 %v7780
    %v7782 = vpop.f32.mrb[0].mxu0
    %v7783 = vadd.f32 %v7704, %v7782
    %v7784 = vpop.f32.mrb[0].mxu0
    %7785 = vdwg.mxu0
    %v7786 = vmul.f32 %v7783, 0.1
    %v7787 = vmax.f32 %v7783, %v7786
    %vm7788 = vcmask 33792
    %7789 = vst.msk [vmem:[#allocation4] sm:$0x3] %vm7788, %v7787
    // Predicated region
    $region110: #{netd_forward.1} parent=1 // pred_check
      _
    $region111: #{netd_forward.1} parent=1 // pred_check_branch
      %7791 = sbr.rel (0) target = $region113
    $region112: #{netd_forward.1} parent=1 // pred_region
      %s7793 = ssub.s32 32, 32
      %7794 = vsyncadd [#allocation5], %s7793
      %s7796 = sshll.u32 [#allocation4], 4
      %s7797 = int_to_ptr.vmem [resolvable:$true] %s7796
      %7799 = dma.vmem_to_hbm [thread:$0]  %s7797, 32, %s27, [#allocation5]
    $region113: #{netd_forward.1} parent=1 // pred_fallthru
      _
    // Predicated region
    $region114: #{netd_forward.1} parent=1 // pred_check
      _
    $region115: #{netd_forward.1} parent=1 // pred_check_branch
      %7801 = sbr.rel (0) target = $region117
    $region116: #{netd_forward.1} parent=1 // pred_region
      %7802 = dma.done [#allocation5], 32
    $region117: #{netd_forward.1} parent=1 // pred_fallthru
      _
    %7803 = vsyncpa [#allocation5], 1

</llo_original>
